<compile_context>
chip_gen: v5e
topology: v5e:2x2
jax: 0.10.0
libtpu: 0.0.40
codegen_flags: <defaults>
</compile_context>

<pallas_src>
import functools
import math

import jax
import jax.numpy as jnp
from jax.experimental import pallas as pl
from jax.experimental.pallas import tpu as pltpu

# ------------------------- synthetic "config" -------------------------------
N_CLASS = 3                       # foreground classes (background = class 0)
RATIOS = (0.5, 1.0, 2.0)
SCALES = (4.0, 8.0)
N_ANCHOR = len(RATIOS) * len(SCALES)
POOL = 2                          # RoI pooled spatial size (POOL x POOL)
SCORE_THRESHOLD = 0.05
NMS_THRESHOLD = 0.5
PROPOSAL_NMS_THRESHOLD = 0.7
N_PRE_NMS = 64
N_POST_NMS = 32
MIN_SIZE = 2.0
OFFSET_NORM_MEAN = jnp.array([0.0, 0.0, 0.0, 0.0], jnp.float32)
OFFSET_NORM_STD = jnp.array([0.1, 0.1, 0.2, 0.2], jnp.float32)

LANE = 128                        # TPU lane width
C1 = 8                            # conv1 output channels
C2 = 16                           # conv2 / RPN conv channels
VMEM = pltpu.MemorySpace.VMEM


def _pad_axis(x, size, axis):
    pads = [(0, 0)] * x.ndim
    pads[axis] = (0, size - x.shape[axis])
    return jnp.pad(x, pads)


def _round_up(v, m):
    return ((v + m - 1) // m) * m


# ------------------------------ Pallas kernels -------------------------------
def backbone_kernel(patches_ref, w1_ref, b1_ref, w2_ref, b2_ref, w3_ref, b3_ref,
                    hw_ref, hb_ref, o_feat_ref, o_rpn_ref, pad2_ref, pad3_ref,
                    *, H2, W2, H4, W4):
    """Fused conv1+pool -> conv2+pool -> RPN conv -> score/loc heads (1 image)."""
    f32 = jnp.float32
    bf16 = jnp.bfloat16

    # conv1 + ReLU + 2x2 maxpool: block-diagonal matmul over the pooling group
    # (patches come in grouped by 2x2 window), pool = max over 4 lane groups.
    y1 = jnp.dot(patches_ref[...], w1_ref[...], preferred_element_type=f32)
    y1 = jnp.maximum(y1 + b1_ref[...], 0.0)                   # (H2*W2, 4*C1)
    a2 = jnp.maximum(jnp.maximum(y1[:, 0:C1], y1[:, C1:2 * C1]),
                     jnp.maximum(y1[:, 2 * C1:3 * C1], y1[:, 3 * C1:4 * C1]))

    # conv2 (3x3 'same', Cin=8 -> Cout=16): 9 shifted bf16 MXU matmuls off a
    # zero-padded VMEM scratch (interior stored at a tile-aligned offset).
    pad2_ref[...] = jnp.zeros(pad2_ref.shape, f32)
    pad2_ref[1:H2 + 1, 8:8 + W2, :] = a2.reshape(H2, W2, C1)
    acc2 = jnp.zeros((H2 * W2, C2), f32)
    for k in range(9):
        dh, dw = k // 3, k % 3
        blk = pad2_ref[dh:dh + H2, 7 + dw:7 + dw + W2, :]
        blk = blk.reshape(H2 * W2, C1).astype(bf16)
        acc2 = acc2 + jnp.dot(blk, w2_ref[k * C1:(k + 1) * C1, :],
                              preferred_element_type=f32)
    y2 = jnp.maximum(acc2 + b2_ref[...], 0.0)                 # (H2*W2, C2)

    # 2x2 maxpool of y2: w-pairs via two selection matmuls (avoids strided /
    # layout-changing ops), h-pairs via a leading-dim split.
    HW = H2 * W2
    ri = jax.lax.broadcasted_iota(jnp.int32, (HW // 2, HW), 0)
    ci = jax.lax.broadcasted_iota(jnp.int32, (HW // 2, HW), 1)
    s_even = (ci == 2 * ri).astype(f32)
    s_odd = (ci == 2 * ri + 1).astype(f32)
    m = jnp.maximum(jnp.dot(s_even, y2, preferred_element_type=f32),
                    jnp.dot(s_odd, y2, preferred_element_type=f32))   # (H2*W4, C2)
    t = m.reshape(H2, W4, C2).reshape(H4, 2, W4, C2)
    feat = jnp.maximum(t[:, 0], t[:, 1])                      # (H4, W4, C2)
    o_feat_ref[...] = feat.reshape(H4 * W4, C2)

    # RPN 3x3 conv (+ReLU) fused with the 1x1 score/loc heads.
    pad3_ref[...] = jnp.zeros(pad3_ref.shape, f32)
    pad3_ref[1:H4 + 1, 8:8 + W4, :] = feat
    acc3 = jnp.zeros((H4 * W4, C2), f32)
    for k in range(9):
        dh, dw = k // 3, k % 3
        blk = pad3_ref[dh:dh + H4, 7 + dw:7 + dw + W4, :]
        blk = blk.reshape(H4 * W4, C2).astype(bf16)
        acc3 = acc3 + jnp.dot(blk, w3_ref[k * C2:(k + 1) * C2, :],
                              preferred_element_type=f32)
    mid = jnp.maximum(acc3 + b3_ref[...], 0.0)
    o_rpn_ref[...] = (jnp.dot(mid.astype(bf16), hw_ref[...],
                              preferred_element_type=f32) + hb_ref[...])


def backbone_rpn_forward(patches, kp, H, W):
    """patches: (B, (H/2)*(W/2), 108) bf16.  Returns (feat, rpn_raw)."""
    B = patches.shape[0]
    H2, W2, H4, W4 = H // 2, W // 2, H // 4, W // 4
    sub2 = _round_up(W2 + 9, 8)
    sub3 = _round_up(W4 + 9, 8)
    kernel = functools.partial(backbone_kernel, H2=H2, W2=W2, H4=H4, W4=W4)
    return pl.pallas_call(
        kernel,
        out_shape=(jax.ShapeDtypeStruct((B, H4 * W4, C2), jnp.float32),
                   jax.ShapeDtypeStruct((B, H4 * W4, LANE), jnp.float32)),
        grid=(B,),
        in_specs=[
            pl.BlockSpec((None, H2 * W2, 4 * 9 * 3), lambda b: (b, 0, 0)),
            pl.BlockSpec((4 * 9 * 3, 4 * C1), lambda b: (0, 0)),
            pl.BlockSpec((1, 4 * C1), lambda b: (0, 0)),
            pl.BlockSpec((9 * C1, C2), lambda b: (0, 0)),
            pl.BlockSpec((1, C2), lambda b: (0, 0)),
            pl.BlockSpec((9 * C2, C2), lambda b: (0, 0)),
            pl.BlockSpec((1, C2), lambda b: (0, 0)),
            pl.BlockSpec((C2, LANE), lambda b: (0, 0)),
            pl.BlockSpec((1, LANE), lambda b: (0, 0)),
        ],
        out_specs=(pl.BlockSpec((None, H4 * W4, C2), lambda b: (b, 0, 0)),
                   pl.BlockSpec((None, H4 * W4, LANE), lambda b: (b, 0, 0))),
        scratch_shapes=[pltpu.VMEM((H2 + 2, sub2, C1), jnp.float32),
                        pltpu.VMEM((H4 + 2, sub3, C2), jnp.float32)],
        compiler_params=pltpu.CompilerParams(dimension_semantics=("parallel",)),
    )(patches, kp["conv1_w"], kp["conv1_b"], kp["conv2_w"], kp["conv2_b"],
      kp["rpn_conv_w"], kp["rpn_conv_b"], kp["rpn_head_w"], kp["rpn_head_b"])


def proposal_kernel(anchors_ref, scores_ref, locs_ref, o_ref, *, img_h, img_w):
    # lane-dense (4, A) layout; output rows: y1,x1,y2,x2,fg,0,0,0.
    a = anchors_ref[...]
    s = scores_ref[...]
    l = locs_ref[...]
    h = a[2:3] - a[0:1]
    w = a[3:4] - a[1:2]
    cy = a[0:1] + 0.5 * h
    cx = a[1:2] + 0.5 * w
    ncy = l[0:1] * h + cy
    ncx = l[1:2] * w + cx
    nh = jnp.exp(l[2:3]) * h
    nw = jnp.exp(l[3:4]) * w
    y1 = jnp.clip(ncy - 0.5 * nh, 0.0, img_h)
    x1 = jnp.clip(ncx - 0.5 * nw, 0.0, img_w)
    y2 = jnp.clip(ncy + 0.5 * nh, 0.0, img_h)
    x2 = jnp.clip(ncx + 0.5 * nw, 0.0, img_w)
    # fg prob = softmax(scores)[1] = sigmoid(s1 - s0); exact for parity.
    fg = 1.0 / (1.0 + jnp.exp(s[0:1] - s[1:2]))
    valid = ((y2 - y1) >= MIN_SIZE) & ((x2 - x1) >= MIN_SIZE)
    fg = jnp.where(valid, fg, -1.0)
    pad = jnp.zeros((3, y1.shape[1]), jnp.float32)
    o_ref[...] = jnp.concatenate([y1, x1, y2, x2, fg, pad], axis=0)


def proposal_prep(anchors_t, scores_t, locs_t, img_h, img_w):
    B, _, A = scores_t.shape
    return pl.pallas_call(
        functools.partial(proposal_kernel, img_h=float(img_h), img_w=float(img_w)),
        out_shape=jax.ShapeDtypeStruct((B, 8, A), jnp.float32),
        grid=(B,),
        in_specs=[
            pl.BlockSpec((4, A), lambda bi: (0, 0)),
            pl.BlockSpec((None, 2, A), lambda bi: (bi, 0, 0)),
            pl.BlockSpec((None, 4, A), lambda bi: (bi, 0, 0)),
        ],
        out_specs=pl.BlockSpec((None, 8, A), lambda bi: (bi, 0, 0)),
        compiler_params=pltpu.CompilerParams(dimension_semantics=("parallel",)),
    )(anchors_t, scores_t, locs_t)


def nms_kernel(b_ref, bt_ref, valid_ref, o_ref, iou_ref, *, thresh):
    """Fused pairwise IoU + greedy suppression; rows pre-sorted by score."""
    b = b_ref[...]        # (N, 4)
    bt = bt_ref[...]      # (4, N) lane-dense copy
    # TODO(synk): derive the (N,1) columns from the lane-dense operand alone
    #             (in-kernel transpose) instead of loading the 2 KiB (N,4) copy.
    y1, x1, y2, x2 = b[:, 0:1], b[:, 1:2], b[:, 2:3], b[:, 3:4]
    y1r, x1r, y2r, x2r = bt[0:1, :], bt[1:2, :], bt[2:3, :], bt[3:4, :]
    area = (y2 - y1) * (x2 - x1)
    area_r = (y2r - y1r) * (x2r - x1r)
    ih = jnp.maximum(jnp.minimum(y2, y2r) - jnp.maximum(y1, y1r), 0.0)
    iw = jnp.maximum(jnp.minimum(x2, x2r) - jnp.maximum(x1, x1r), 0.0)
    inter = ih * iw
    union = jnp.maximum(area + area_r - inter, 1e-9)
    iou_ref[...] = inter / union                      # exact division (parity)

    n = b.shape[0]
    lane = jax.lax.broadcasted_iota(jnp.int32, (1, n), 1)

    def body(i, keep):                                # keep: (1, N) f32 in {0,1}
        row = iou_ref[pl.ds(i, 1), :]                 # (1, N)
        alive = jnp.sum(keep * (lane == i).astype(jnp.float32),
                        axis=1, keepdims=True)        # keep[i] without lane gather
        sup = jnp.where((row > thresh) & (lane > i), 1.0, 0.0) * alive
        return keep * (1.0 - sup)

    o_ref[...] = jax.lax.fori_loop(0, n, body, valid_ref[...])


def nms_keep(boxes, valid, thresh):
    """boxes: (G, N, 4) sorted by descending score; valid: (G, N) bool."""
    G, N, _ = boxes.shape
    boxes_t = jnp.transpose(boxes, (0, 2, 1))
    valid_f = valid.astype(jnp.float32)[:, None, :]
    keep = pl.pallas_call(
        functools.partial(nms_kernel, thresh=float(thresh)),
        out_shape=jax.ShapeDtypeStruct((G, 1, N), jnp.float32),
        grid=(G,),
        in_specs=[
            pl.BlockSpec((None, N, 4), lambda g: (g, 0, 0)),
            pl.BlockSpec((None, 4, N), lambda g: (g, 0, 0)),
            pl.BlockSpec((None, 1, N), lambda g: (g, 0, 0)),
        ],
        out_specs=pl.BlockSpec((None, 1, N), lambda g: (g, 0, 0)),
        scratch_shapes=[pltpu.VMEM((N, N), jnp.float32)],
        compiler_params=pltpu.CompilerParams(dimension_semantics=("parallel",)),
    )(boxes, boxes_t, valid_f)
    return keep[:, 0, :] > 0.5


def det_head_kernel(x_ref, valid_ref, rois_ref, w1_ref, b1_ref, w2_ref, b2_ref,
                    wo_ref, bo_ref, o_ref, *, img_h, img_w):
    """fc1 -> fc2 -> (cls|loc) -> softmax(cls) -> per-class box decode, fused."""
    f32 = jnp.float32
    bf16 = jnp.bfloat16
    NC1 = N_CLASS + 1
    x = x_ref[...].astype(bf16)
    h = jnp.maximum(jnp.dot(x, w1_ref[...], preferred_element_type=f32)
                    + b1_ref[...], 0.0)
    h = jnp.maximum(jnp.dot(h.astype(bf16), w2_ref[...], preferred_element_type=f32)
                    + b2_ref[...], 0.0)
    out = (jnp.dot(h.astype(bf16), wo_ref[...], preferred_element_type=f32)
           + bo_ref[...])                                   # (R, 5*NC1)

    logits = out[:, :NC1]
    mx = jnp.max(logits, axis=-1, keepdims=True)
    e = jnp.exp(logits - mx)
    probs = e / jnp.sum(e, axis=-1, keepdims=True)          # exact softmax
    probs = probs * valid_ref[...]                          # kill invalid proposals

    # coordinate-major loc columns -> decode vectorised over all classes.
    r = rois_ref[...]                                       # (R, 4)
    rh = r[:, 2:3] - r[:, 0:1]
    rw = r[:, 3:4] - r[:, 1:2]
    cy = r[:, 0:1] + 0.5 * rh
    cx = r[:, 1:2] + 0.5 * rw
    dy = out[:, NC1:2 * NC1]
    dx = out[:, 2 * NC1:3 * NC1]
    dh = out[:, 3 * NC1:4 * NC1]
    dw = out[:, 4 * NC1:5 * NC1]
    ncy = dy * rh + cy
    ncx = dx * rw + cx
    nh = jnp.exp(dh) * rh
    nw = jnp.exp(dw) * rw
    y1a = jnp.clip(ncy - 0.5 * nh, 0.0, img_h)
    x1a = jnp.clip(ncx - 0.5 * nw, 0.0, img_w)
    y2a = jnp.clip(ncy + 0.5 * nh, 0.0, img_h)
    x2a = jnp.clip(ncx + 0.5 * nw, 0.0, img_w)

    pad = jnp.zeros((out.shape[0], LANE - 5 * NC1), f32)
    o_ref[...] = jnp.concatenate([probs, y1a, x1a, y2a, x2a, pad], axis=1)


def det_head(pooled, valid_f, rois, kp, img_h, img_w):
    R = pooled.shape[0]
    return pl.pallas_call(
        functools.partial(det_head_kernel, img_h=float(img_h), img_w=float(img_w)),
        out_shape=jax.ShapeDtypeStruct((R, LANE), jnp.float32),
        in_specs=[pl.BlockSpec(memory_space=VMEM)] * 9,
        out_specs=pl.BlockSpec(memory_space=VMEM),
    )(pooled, valid_f, rois, kp["fc1_w"], kp["fc1_b"], kp["fc2_w"], kp["fc2_b"],
      kp["head_out_w"], kp["head_out_b"])


# ------------------------------- JAX glue ------------------------------------
def conv1_pool_patches(x):
    """conv1 im2col patches grouped by 2x2 pooling window (cheap XLA prep).

    Returns (B, (H/2)*(W/2), 4*9*Cin) bf16; row = h2*(W/2)+w2, column
    = (hh*2+ww)*9*Cin + (dh*3+dw)*Cin + c."""
    B, H, W, C = x.shape
    xp = jnp.pad(x, ((0, 0), (1, 1), (1, 1), (0, 0)))
    cols = [xp[:, dh:dh + H, dw:dw + W, :] for dh in range(3) for dw in range(3)]
    pat = jnp.concatenate(cols, axis=-1)                        # (B, H, W, 9C)
    pat = pat.reshape(B, H // 2, 2, W // 2, 2, 9 * C)
    pat = jnp.transpose(pat, (0, 1, 3, 2, 4, 5))
    return pat.reshape(B, (H // 2) * (W // 2), 4 * 9 * C).astype(jnp.bfloat16)


def create_anchors(fh, fw, stride):
    base = []
    for s in SCALES:
        for r in RATIOS:
            h = stride * s * math.sqrt(r)
            w = stride * s * math.sqrt(1.0 / r)
            base.append([-h / 2.0, -w / 2.0, h / 2.0, w / 2.0])
    base = jnp.array(base, jnp.float32)                         # (A, 4)
    ys = (jnp.arange(fh, dtype=jnp.float32) + 0.5) * stride
    xs = (jnp.arange(fw, dtype=jnp.float32) + 0.5) * stride
    ctr = jnp.stack(jnp.meshgrid(ys, xs, indexing="ij"), axis=-1).reshape(-1, 2)
    shifts = jnp.concatenate([ctr, ctr], axis=1)
    anchors = shifts[:, None, :] + base[None, :, :]
    return anchors.reshape(-1, 4)


def roi_align(feature, rois, stride, pool=POOL):
    # TODO(synk): data-dependent bilinear gather; stays in XLA at this size.
    H, W, C = feature.shape
    r = rois / float(stride)
    y1, x1, y2, x2 = r[:, 0], r[:, 1], r[:, 2], r[:, 3]
    bin_h = (y2 - y1) / pool
    bin_w = (x2 - x1) / pool
    grid = jnp.arange(pool, dtype=jnp.float32) + 0.5
    sy = jnp.clip(y1[:, None] + bin_h[:, None] * grid[None, :], 0.0, H - 1.0)
    sx = jnp.clip(x1[:, None] + bin_w[:, None] * grid[None, :], 0.0, W - 1.0)
    y0 = jnp.floor(sy)
    x0 = jnp.floor(sx)
    y1i = jnp.minimum(y0 + 1.0, H - 1.0)
    x1i = jnp.minimum(x0 + 1.0, W - 1.0)
    ly = sy - y0
    lx = sx - x0
    flat = feature.reshape(H * W, C)

    def gather(yy, xx):
        idx = yy.astype(jnp.int32)[:, :, None] * W + xx.astype(jnp.int32)[:, None, :]
        return flat[idx]

    f00 = gather(y0, x0)
    f01 = gather(y0, x1i)
    f10 = gather(y1i, x0)
    f11 = gather(y1i, x1i)
    wy = ly[:, :, None, None]
    wx = lx[:, None, :, None]
    out = (f00 * (1 - wy) * (1 - wx) + f01 * (1 - wy) * wx
           + f10 * wy * (1 - wx) + f11 * wy * wx)
    return out.reshape(rois.shape[0], pool * pool * C)


# ------------------------------ parameters -----------------------------------
def init_params(key):
    ks = jax.random.split(key, 10)

    def w(k, shape, scale=0.1):
        return jax.random.normal(k, shape, jnp.float32) * scale

    return {
        "conv1_w": w(ks[0], (3, 3, 3, C1)),   "conv1_b": jnp.zeros((1, C1), jnp.float32),
        "conv2_w": w(ks[1], (3, 3, C1, C2)),  "conv2_b": jnp.zeros((1, C2), jnp.float32),
        "rpn_conv_w": w(ks[2], (3, 3, C2, C2)), "rpn_conv_b": jnp.zeros((1, C2), jnp.float32),
        "rpn_score_w": w(ks[3], (C2, N_ANCHOR * 2)), "rpn_score_b": jnp.zeros((1, N_ANCHOR * 2), jnp.float32),
        "rpn_loc_w": w(ks[4], (C2, N_ANCHOR * 4), 0.01), "rpn_loc_b": jnp.zeros((1, N_ANCHOR * 4), jnp.float32),
        "fc1_w": w(ks[5], (POOL * POOL * C2, 32)), "fc1_b": jnp.zeros((1, 32), jnp.float32),
        "fc2_w": w(ks[6], (32, 32)), "fc2_b": jnp.zeros((1, 32), jnp.float32),
        "cls_w": w(ks[7], (32, N_CLASS + 1)), "cls_b": jnp.zeros((1, N_CLASS + 1), jnp.float32),
        "loc_w": w(ks[8], (32, (N_CLASS + 1) * 4), 0.01), "loc_b": jnp.zeros((1, (N_CLASS + 1) * 4), jnp.float32),
    }


def prepare_params(p):
    """Kernel-ready weights (bf16 MXU operands, fused/reordered heads).
    Called ONCE, outside the jitted forward."""
    bf16 = jnp.bfloat16
    NC1 = N_CLASS + 1

    w1 = p["conv1_w"].reshape(9 * 3, C1)
    kp = {
        # block-diagonal over the 2x2 pool group: one matmul does conv1 for all
        # four positions of the window; maxpool is then a lane-group max.
        "conv1_w": jnp.kron(jnp.eye(4, dtype=jnp.float32), w1).astype(bf16),
        "conv1_b": jnp.tile(p["conv1_b"], (1, 4)),
        "conv2_w": p["conv2_w"].reshape(9 * C1, C2).astype(bf16),
        "conv2_b": p["conv2_b"],
        "rpn_conv_w": p["rpn_conv_w"].reshape(9 * C2, C2).astype(bf16),
        "rpn_conv_b": p["rpn_conv_b"],
    }

    # fused RPN score+loc heads, N padded to 128 lanes (lane-dense output).
    head_w = jnp.concatenate([p["rpn_score_w"], p["rpn_loc_w"]], axis=1)
    head_b = jnp.concatenate([p["rpn_score_b"], p["rpn_loc_b"]], axis=1)
    kp["rpn_head_w"] = _pad_axis(head_w, LANE, 1).astype(bf16)
    kp["rpn_head_b"] = _pad_axis(head_b, LANE, 1)

    # detection head (no channel padding needed any more).
    kp["fc1_w"] = p["fc1_w"].astype(bf16)
    kp["fc1_b"] = p["fc1_b"]
    kp["fc2_w"] = p["fc2_w"].astype(bf16)
    kp["fc2_b"] = p["fc2_b"]

    # fused cls+loc head; loc columns reordered COORDINATE-major so the in-kernel
    # decode vectorises over classes; offset-norm std/mean pre-folded.
    loc_w_cm = jnp.transpose(p["loc_w"].reshape(-1, NC1, 4), (0, 2, 1)).reshape(-1, 4 * NC1)
    loc_b_cm = jnp.transpose(p["loc_b"].reshape(1, NC1, 4), (0, 2, 1)).reshape(1, 4 * NC1)
    std_cm = jnp.repeat(OFFSET_NORM_STD, NC1)[None, :]
    mean_cm = jnp.repeat(OFFSET_NORM_MEAN, NC1)[None, :]
    kp["head_out_w"] = jnp.concatenate([p["cls_w"], loc_w_cm * std_cm], axis=1).astype(bf16)
    kp["head_out_b"] = jnp.concatenate([p["cls_b"], loc_b_cm * std_cm + mean_cm], axis=1)
    return kp


# ------------------------------- forward -------------------------------------
@jax.jit
def _forward_device(kp, image_batch_nchw):
    """Whole batch, fully on device, fixed shapes."""
    x = jnp.transpose(image_batch_nchw, (0, 2, 3, 1)).astype(jnp.float32)
    B, img_h, img_w, _ = x.shape
    NC1 = N_CLASS + 1
    fh, fw = img_h // 4, img_w // 4
    feat_stride = img_h // fh

    # fused backbone + RPN (one Pallas launch, one image per grid step).
    patches = conv1_pool_patches(x)
    f_flat, raw = backbone_rpn_forward(patches, kp, img_h, img_w)
    f = f_flat.reshape(B, fh, fw, C2)

    A = fh * fw * N_ANCHOR
    scores_t = jnp.transpose(raw[:, :, :N_ANCHOR * 2].reshape(B, A, 2), (0, 2, 1))
    locs_t = jnp.transpose(
        raw[:, :, N_ANCHOR * 2:N_ANCHOR * 6].reshape(B, A, 4), (0, 2, 1))
    anchors_t = create_anchors(fh, fw, feat_stride).T

    # proposal creation (Pallas, lane-dense (4, A) layout).
    prop = proposal_prep(anchors_t, scores_t, locs_t, img_h, img_w)
    boxes_all = jnp.transpose(prop[:, 0:4, :], (0, 2, 1))
    fg = prop[:, 4, :]

    top_fg, top_idx = jax.lax.top_k(fg, N_PRE_NMS)
    top_boxes = jnp.take_along_axis(boxes_all, top_idx[..., None], axis=1)
    top_valid = top_fg > -0.5

    npad = LANE - N_PRE_NMS
    top_boxes_p = jnp.pad(top_boxes, ((0, 0), (0, npad), (0, 0)))
    top_valid_p = jnp.pad(top_valid, ((0, 0), (0, npad)))
    keep_p = nms_keep(top_boxes_p, top_valid_p, PROPOSAL_NMS_THRESHOLD)  # fused IoU+NMS

    order = jnp.argsort(jnp.where(keep_p, 0, 1), axis=-1)      # stable: keeps score order
    sel = order[:, :N_POST_NMS]
    proposals = jnp.take_along_axis(top_boxes_p, sel[..., None], axis=1)
    roi_valid = jnp.take_along_axis(keep_p, sel, axis=1)
    proposals = proposals * roi_valid[..., None].astype(jnp.float32)

    # RoIAlign (XLA gather) + fused detection head + box decode (one launch).
    pooled = jax.vmap(lambda fe, ro: roi_align(fe, ro, feat_stride))(f, proposals)
    R = B * N_POST_NMS
    pooled = pooled.reshape(R, POOL * POOL * C2)
    valid_f = roi_valid.reshape(R, 1).astype(jnp.float32)
    rois_flat = proposals.reshape(R, 4)

    head_out = det_head(pooled, valid_f, rois_flat, kp, img_h, img_w)   # (R, 128)
    probs = head_out[:, :NC1]
    decoded = jnp.transpose(head_out[:, NC1:5 * NC1].reshape(R, 4, NC1), (0, 2, 1))

    probs_b = probs.reshape(B, N_POST_NMS, NC1)
    decoded_b = decoded.reshape(B, N_POST_NMS, NC1, 4)

    # per-class NMS: one fused IoU+NMS launch over all (image, class) groups.
    cls_probs = jnp.transpose(probs_b[:, :, 1:], (0, 2, 1))             # (B, NC, 32)
    cls_boxes = jnp.transpose(decoded_b[:, :, 1:, :], (0, 2, 1, 3))     # (B, NC, 32, 4)
    order2 = jnp.argsort(-cls_probs, axis=-1)
    sp = jnp.take_along_axis(cls_probs, order2, axis=-1)
    sb = jnp.take_along_axis(cls_boxes, order2[..., None], axis=2)
    valid2 = sp > SCORE_THRESHOLD

    G = B * N_CLASS
    npad2 = LANE - N_POST_NMS
    sb_p = jnp.pad(sb.reshape(G, N_POST_NMS, 4), ((0, 0), (0, npad2), (0, 0)))
    valid2_p = jnp.pad(valid2.reshape(G, N_POST_NMS), ((0, 0), (0, npad2)))
    keep2 = nms_keep(sb_p, valid2_p, NMS_THRESHOLD)
    keep2 = keep2[:, :N_POST_NMS].reshape(B, N_CLASS, N_POST_NMS)

    labels = jnp.broadcast_to(
        jnp.arange(1, NC1, dtype=jnp.int32)[None, :, None],
        (B, N_CLASS, N_POST_NMS))

    n_cand = N_CLASS * N_POST_NMS
    return (sb.reshape(B, n_cand, 4), labels.reshape(B, n_cand),
            sp.reshape(B, n_cand), keep2.reshape(B, n_cand))


def faster_rcnn_forward(kernel_params, image_batch_nchw):
    """image_batch_nchw: (B, 3, H, W).  Returns per-image (bboxes, labels, scores)."""
    cand = _forward_device(kernel_params, image_batch_nchw)
    # single host transfer at the very end (no per-image / per-class syncs).
    boxes_h, labels_h, scores_h, keep_h = jax.device_get(cand)
    bboxes_batch, labels_batch, scores_batch = [], [], []
    for b in range(boxes_h.shape[0]):
        m = keep_h[b].astype(bool)
        bboxes_batch.append(jnp.asarray(boxes_h[b][m]))
        labels_batch.append(jnp.asarray(labels_h[b][m]))
        scores_batch.append(jnp.asarray(scores_h[b][m]))
    return bboxes_batch, labels_batch, scores_batch


# --------------------------------- main ---------------------------------------
if __name__ == "__main__":
    key = jax.random.PRNGKey(0)
    pkey, ikey = jax.random.split(key)
    params = init_params(pkey)
    kernel_params = prepare_params(params)        # hoisted: computed exactly once
    image_batch = jax.random.uniform(ikey, (2, 3, 32, 32), jnp.float32)

    bboxes_batch, labels_batch, scores_batch = faster_rcnn_forward(
        kernel_params, image_batch)

    for b, l, s in zip(bboxes_batch, labels_batch, scores_batch):
        jax.block_until_ready(b)
        jax.block_until_ready(l)
        jax.block_until_ready(s)
    print("KERNEL_OK")
</pallas_src>

<mosaic_0001>
module attributes {stable_mosaic.version = 11 : i64} {
  func.func @backbone_kernel(%arg0: i32, %arg1: memref<1x256x108xbf16, #tpu.memory_space<vmem>>, %arg2: memref<108x32xbf16, #tpu.memory_space<vmem>>, %arg3: memref<1x32xf32, #tpu.memory_space<vmem>>, %arg4: memref<72x16xbf16, #tpu.memory_space<vmem>>, %arg5: memref<1x16xf32, #tpu.memory_space<vmem>>, %arg6: memref<144x16xbf16, #tpu.memory_space<vmem>>, %arg7: memref<1x16xf32, #tpu.memory_space<vmem>>, %arg8: memref<16x128xbf16, #tpu.memory_space<vmem>>, %arg9: memref<1x128xf32, #tpu.memory_space<vmem>>, %arg10: memref<1x64x16xf32, #tpu.memory_space<vmem>>, %arg11: memref<1x64x128xf32, #tpu.memory_space<vmem>>, %arg12: memref<18x32x8xf32, #tpu.memory_space<vmem>>, %arg13: memref<10x24x16xf32, #tpu.memory_space<vmem>>) attributes {dimension_semantics = [#tpu.dimension_semantics<parallel>], iteration_bounds = array<i64: 2>, scalar_prefetch = 0 : i64, scratch_operands = 2 : i64, tpu.core_type = #tpu.core_type<tc>, window_params = [{transform_indices = @transform_0, window_bounds = array<i64: 1, 256, 108>}, {pipeline_mode = #tpu.pipeline_mode<synchronous>, transform_indices = @transform_1, window_bounds = array<i64: 108, 32>}, {pipeline_mode = #tpu.pipeline_mode<synchronous>, transform_indices = @transform_2, window_bounds = array<i64: 1, 32>}, {pipeline_mode = #tpu.pipeline_mode<synchronous>, transform_indices = @transform_3, window_bounds = array<i64: 72, 16>}, {pipeline_mode = #tpu.pipeline_mode<synchronous>, transform_indices = @transform_4, window_bounds = array<i64: 1, 16>}, {pipeline_mode = #tpu.pipeline_mode<synchronous>, transform_indices = @transform_5, window_bounds = array<i64: 144, 16>}, {pipeline_mode = #tpu.pipeline_mode<synchronous>, transform_indices = @transform_6, window_bounds = array<i64: 1, 16>}, {pipeline_mode = #tpu.pipeline_mode<synchronous>, transform_indices = @transform_7, window_bounds = array<i64: 16, 128>}, {pipeline_mode = #tpu.pipeline_mode<synchronous>, transform_indices = @transform_8, window_bounds = array<i64: 1, 128>}, {transform_indices = @transform_9, window_bounds = array<i64: 1, 64, 16>}, {transform_indices = @transform_10, window_bounds = array<i64: 1, 64, 128>}]} {
    %c0 = arith.constant 0 : index
    %c0_0 = arith.constant 0 : index
    %c0_1 = arith.constant 0 : index
    %0 = vector.load %arg1[%c0, %c0_0, %c0_1] : memref<1x256x108xbf16, #tpu.memory_space<vmem>>, vector<1x256x108xbf16>
    %1 = vector.shape_cast %0 : vector<1x256x108xbf16> to vector<256x108xbf16>
    %c0_2 = arith.constant 0 : index
    %c0_3 = arith.constant 0 : index
    %2 = vector.load %arg2[%c0_2, %c0_3] : memref<108x32xbf16, #tpu.memory_space<vmem>>, vector<108x32xbf16>
    %cst = arith.constant dense<0.000000e+00> : vector<256x32xf32>
    %3 = tpu.matmul %1, %2, %cst {dimension_numbers = #tpu.dot_dimension_numbers<[1], [0], [0], [1], [0, 0, 1, 1], [], []>} : vector<256x108xbf16>, vector<108x32xbf16>, vector<256x32xf32> -> vector<256x32xf32>
    %c0_4 = arith.constant 0 : index
    %c0_5 = arith.constant 0 : index
    %4 = vector.load %arg3[%c0_4, %c0_5] : memref<1x32xf32, #tpu.memory_space<vmem>>, vector<1x32xf32>
    %5 = vector.broadcast %4 : vector<1x32xf32> to vector<256x32xf32>
    %6 = arith.addf %3, %5 : vector<256x32xf32>
    %cst_6 = arith.constant 0.000000e+00 : f32
    %7 = vector.broadcast %cst_6 : f32 to vector<256x32xf32>
    %8 = arith.maximumf %6, %7 : vector<256x32xf32>
    %9 = vector.extract_strided_slice %8 {offsets = [0, 0], sizes = [256, 8], strides = [1, 1]} : vector<256x32xf32> to vector<256x8xf32>
    %10 = vector.extract_strided_slice %8 {offsets = [0, 8], sizes = [256, 8], strides = [1, 1]} : vector<256x32xf32> to vector<256x8xf32>
    %11 = arith.maximumf %9, %10 : vector<256x8xf32>
    %12 = vector.extract_strided_slice %8 {offsets = [0, 16], sizes = [256, 8], strides = [1, 1]} : vector<256x32xf32> to vector<256x8xf32>
    %13 = vector.extract_strided_slice %8 {offsets = [0, 24], sizes = [256, 8], strides = [1, 1]} : vector<256x32xf32> to vector<256x8xf32>
    %14 = arith.maximumf %12, %13 : vector<256x8xf32>
    %15 = arith.maximumf %11, %14 : vector<256x8xf32>
    %cst_7 = arith.constant 0.000000e+00 : f32
    %16 = vector.broadcast %cst_7 : f32 to vector<18x32x8xf32>
    %c0_8 = arith.constant 0 : index
    %c0_9 = arith.constant 0 : index
    %c0_10 = arith.constant 0 : index
    %17 = vector.load %arg12[%c0_8, %c0_9, %c0_10] : memref<18x32x8xf32, #tpu.memory_space<vmem>>, vector<18x32x8xf32>
    tpu.vector_store %arg12[%c0_8, %c0_9, %c0_10], %16 {strides = array<i32>} : memref<18x32x8xf32, #tpu.memory_space<vmem>>, vector<18x32x8xf32>,
    %18 = vector.shape_cast %15 : vector<256x8xf32> to vector<16x16x8xf32>
    %c1 = arith.constant 1 : index
    %c8 = arith.constant 8 : index
    %c0_11 = arith.constant 0 : index
    %19 = vector.load %arg12[%c1, %c8, %c0_11] : memref<18x32x8xf32, #tpu.memory_space<vmem>>, vector<16x16x8xf32>
    tpu.vector_store %arg12[%c1, %c8, %c0_11], %18 {strides = array<i32>} : memref<18x32x8xf32, #tpu.memory_space<vmem>>, vector<16x16x8xf32>,
    %cst_12 = arith.constant 0.000000e+00 : f32
    %20 = vector.broadcast %cst_12 : f32 to vector<256x16xf32>
    %c0_13 = arith.constant 0 : index
    %c7 = arith.constant 7 : index
    %c0_14 = arith.constant 0 : index
    %21 = vector.load %arg12[%c0_13, %c7, %c0_14] : memref<18x32x8xf32, #tpu.memory_space<vmem>>, vector<16x16x8xf32>
    %22 = vector.shape_cast %21 : vector<16x16x8xf32> to vector<256x8xf32>
    %23 = arith.truncf %22 : vector<256x8xf32> to vector<256x8xbf16>
    %c0_15 = arith.constant 0 : index
    %c0_16 = arith.constant 0 : index
    %24 = vector.load %arg4[%c0_15, %c0_16] : memref<72x16xbf16, #tpu.memory_space<vmem>>, vector<8x16xbf16>
    %cst_17 = arith.constant dense<0.000000e+00> : vector<256x16xf32>
    %25 = tpu.matmul %23, %24, %cst_17 {dimension_numbers = #tpu.dot_dimension_numbers<[1], [0], [0], [1], [0, 0, 1, 1], [], []>} : vector<256x8xbf16>, vector<8x16xbf16>, vector<256x16xf32> -> vector<256x16xf32>
    %26 = arith.addf %20, %25 : vector<256x16xf32>
    %c0_18 = arith.constant 0 : index
    %c8_19 = arith.constant 8 : index
    %c0_20 = arith.constant 0 : index
    %27 = vector.load %arg12[%c0_18, %c8_19, %c0_20] : memref<18x32x8xf32, #tpu.memory_space<vmem>>, vector<16x16x8xf32>
    %28 = vector.shape_cast %27 : vector<16x16x8xf32> to vector<256x8xf32>
    %29 = arith.truncf %28 : vector<256x8xf32> to vector<256x8xbf16>
    %c8_21 = arith.constant 8 : index
    %c0_22 = arith.constant 0 : index
    %30 = vector.load %arg4[%c8_21, %c0_22] : memref<72x16xbf16, #tpu.memory_space<vmem>>, vector<8x16xbf16>
    %cst_23 = arith.constant dense<0.000000e+00> : vector<256x16xf32>
    %31 = tpu.matmul %29, %30, %cst_23 {dimension_numbers = #tpu.dot_dimension_numbers<[1], [0], [0], [1], [0, 0, 1, 1], [], []>} : vector<256x8xbf16>, vector<8x16xbf16>, vector<256x16xf32> -> vector<256x16xf32>
    %32 = arith.addf %26, %31 : vector<256x16xf32>
    %c0_24 = arith.constant 0 : index
    %c9 = arith.constant 9 : index
    %c0_25 = arith.constant 0 : index
    %33 = vector.load %arg12[%c0_24, %c9, %c0_25] : memref<18x32x8xf32, #tpu.memory_space<vmem>>, vector<16x16x8xf32>
    %34 = vector.shape_cast %33 : vector<16x16x8xf32> to vector<256x8xf32>
    %35 = arith.truncf %34 : vector<256x8xf32> to vector<256x8xbf16>
    %c16 = arith.constant 16 : index
    %c0_26 = arith.constant 0 : index
    %36 = vector.load %arg4[%c16, %c0_26] : memref<72x16xbf16, #tpu.memory_space<vmem>>, vector<8x16xbf16>
    %cst_27 = arith.constant dense<0.000000e+00> : vector<256x16xf32>
    %37 = tpu.matmul %35, %36, %cst_27 {dimension_numbers = #tpu.dot_dimension_numbers<[1], [0], [0], [1], [0, 0, 1, 1], [], []>} : vector<256x8xbf16>, vector<8x16xbf16>, vector<256x16xf32> -> vector<256x16xf32>
    %38 = arith.addf %32, %37 : vector<256x16xf32>
    %c1_28 = arith.constant 1 : index
    %c7_29 = arith.constant 7 : index
    %c0_30 = arith.constant 0 : index
    %39 = vector.load %arg12[%c1_28, %c7_29, %c0_30] : memref<18x32x8xf32, #tpu.memory_space<vmem>>, vector<16x16x8xf32>
    %40 = vector.shape_cast %39 : vector<16x16x8xf32> to vector<256x8xf32>
    %41 = arith.truncf %40 : vector<256x8xf32> to vector<256x8xbf16>
    %c24 = arith.constant 24 : index
    %c0_31 = arith.constant 0 : index
    %42 = vector.load %arg4[%c24, %c0_31] : memref<72x16xbf16, #tpu.memory_space<vmem>>, vector<8x16xbf16>
    %cst_32 = arith.constant dense<0.000000e+00> : vector<256x16xf32>
    %43 = tpu.matmul %41, %42, %cst_32 {dimension_numbers = #tpu.dot_dimension_numbers<[1], [0], [0], [1], [0, 0, 1, 1], [], []>} : vector<256x8xbf16>, vector<8x16xbf16>, vector<256x16xf32> -> vector<256x16xf32>
    %44 = arith.addf %38, %43 : vector<256x16xf32>
    %c1_33 = arith.constant 1 : index
    %c8_34 = arith.constant 8 : index
    %c0_35 = arith.constant 0 : index
    %45 = vector.load %arg12[%c1_33, %c8_34, %c0_35] : memref<18x32x8xf32, #tpu.memory_space<vmem>>, vector<16x16x8xf32>
    %46 = vector.shape_cast %45 : vector<16x16x8xf32> to vector<256x8xf32>
    %47 = arith.truncf %46 : vector<256x8xf32> to vector<256x8xbf16>
    %c32 = arith.constant 32 : index
    %c0_36 = arith.constant 0 : index
    %48 = vector.load %arg4[%c32, %c0_36] : memref<72x16xbf16, #tpu.memory_space<vmem>>, vector<8x16xbf16>
    %cst_37 = arith.constant dense<0.000000e+00> : vector<256x16xf32>
    %49 = tpu.matmul %47, %48, %cst_37 {dimension_numbers = #tpu.dot_dimension_numbers<[1], [0], [0], [1], [0, 0, 1, 1], [], []>} : vector<256x8xbf16>, vector<8x16xbf16>, vector<256x16xf32> -> vector<256x16xf32>
    %50 = arith.addf %44, %49 : vector<256x16xf32>
    %c1_38 = arith.constant 1 : index
    %c9_39 = arith.constant 9 : index
    %c0_40 = arith.constant 0 : index
    %51 = vector.load %arg12[%c1_38, %c9_39, %c0_40] : memref<18x32x8xf32, #tpu.memory_space<vmem>>, vector<16x16x8xf32>
    %52 = vector.shape_cast %51 : vector<16x16x8xf32> to vector<256x8xf32>
    %53 = arith.truncf %52 : vector<256x8xf32> to vector<256x8xbf16>
    %c40 = arith.constant 40 : index
    %c0_41 = arith.constant 0 : index
    %54 = vector.load %arg4[%c40, %c0_41] : memref<72x16xbf16, #tpu.memory_space<vmem>>, vector<8x16xbf16>
    %cst_42 = arith.constant dense<0.000000e+00> : vector<256x16xf32>
    %55 = tpu.matmul %53, %54, %cst_42 {dimension_numbers = #tpu.dot_dimension_numbers<[1], [0], [0], [1], [0, 0, 1, 1], [], []>} : vector<256x8xbf16>, vector<8x16xbf16>, vector<256x16xf32> -> vector<256x16xf32>
    %56 = arith.addf %50, %55 : vector<256x16xf32>
    %c2 = arith.constant 2 : index
    %c7_43 = arith.constant 7 : index
    %c0_44 = arith.constant 0 : index
    %57 = vector.load %arg12[%c2, %c7_43, %c0_44] : memref<18x32x8xf32, #tpu.memory_space<vmem>>, vector<16x16x8xf32>
    %58 = vector.shape_cast %57 : vector<16x16x8xf32> to vector<256x8xf32>
    %59 = arith.truncf %58 : vector<256x8xf32> to vector<256x8xbf16>
    %c48 = arith.constant 48 : index
    %c0_45 = arith.constant 0 : index
    %60 = vector.load %arg4[%c48, %c0_45] : memref<72x16xbf16, #tpu.memory_space<vmem>>, vector<8x16xbf16>
    %cst_46 = arith.constant dense<0.000000e+00> : vector<256x16xf32>
    %61 = tpu.matmul %59, %60, %cst_46 {dimension_numbers = #tpu.dot_dimension_numbers<[1], [0], [0], [1], [0, 0, 1, 1], [], []>} : vector<256x8xbf16>, vector<8x16xbf16>, vector<256x16xf32> -> vector<256x16xf32>
    %62 = arith.addf %56, %61 : vector<256x16xf32>
    %c2_47 = arith.constant 2 : index
    %c8_48 = arith.constant 8 : index
    %c0_49 = arith.constant 0 : index
    %63 = vector.load %arg12[%c2_47, %c8_48, %c0_49] : memref<18x32x8xf32, #tpu.memory_space<vmem>>, vector<16x16x8xf32>
    %64 = vector.shape_cast %63 : vector<16x16x8xf32> to vector<256x8xf32>
    %65 = arith.truncf %64 : vector<256x8xf32> to vector<256x8xbf16>
    %c56 = arith.constant 56 : index
    %c0_50 = arith.constant 0 : index
    %66 = vector.load %arg4[%c56, %c0_50] : memref<72x16xbf16, #tpu.memory_space<vmem>>, vector<8x16xbf16>
    %cst_51 = arith.constant dense<0.000000e+00> : vector<256x16xf32>
    %67 = tpu.matmul %65, %66, %cst_51 {dimension_numbers = #tpu.dot_dimension_numbers<[1], [0], [0], [1], [0, 0, 1, 1], [], []>} : vector<256x8xbf16>, vector<8x16xbf16>, vector<256x16xf32> -> vector<256x16xf32>
    %68 = arith.addf %62, %67 : vector<256x16xf32>
    %c2_52 = arith.constant 2 : index
    %c9_53 = arith.constant 9 : index
    %c0_54 = arith.constant 0 : index
    %69 = vector.load %arg12[%c2_52, %c9_53, %c0_54] : memref<18x32x8xf32, #tpu.memory_space<vmem>>, vector<16x16x8xf32>
    %70 = vector.shape_cast %69 : vector<16x16x8xf32> to vector<256x8xf32>
    %71 = arith.truncf %70 : vector<256x8xf32> to vector<256x8xbf16>
    %c64 = arith.constant 64 : index
    %c0_55 = arith.constant 0 : index
    %72 = vector.load %arg4[%c64, %c0_55] : memref<72x16xbf16, #tpu.memory_space<vmem>>, vector<8x16xbf16>
    %cst_56 = arith.constant dense<0.000000e+00> : vector<256x16xf32>
    %73 = tpu.matmul %71, %72, %cst_56 {dimension_numbers = #tpu.dot_dimension_numbers<[1], [0], [0], [1], [0, 0, 1, 1], [], []>} : vector<256x8xbf16>, vector<8x16xbf16>, vector<256x16xf32> -> vector<256x16xf32>
    %74 = arith.addf %68, %73 : vector<256x16xf32>
    %c0_57 = arith.constant 0 : index
    %c0_58 = arith.constant 0 : index
    %75 = vector.load %arg5[%c0_57, %c0_58] : memref<1x16xf32, #tpu.memory_space<vmem>>, vector<1x16xf32>
    %76 = vector.broadcast %75 : vector<1x16xf32> to vector<256x16xf32>
    %77 = arith.addf %74, %76 : vector<256x16xf32>
    %cst_59 = arith.constant 0.000000e+00 : f32
    %78 = vector.broadcast %cst_59 : f32 to vector<256x16xf32>
    %79 = arith.maximumf %77, %78 : vector<256x16xf32>
    %80 = tpu.iota {dimensions = array<i32: 0>} : vector<128x256xi32>
    %81 = tpu.iota {dimensions = array<i32: 1>} : vector<128x256xi32>
    %c2_i32 = arith.constant 2 : i32
    %82 = vector.broadcast %c2_i32 : i32 to vector<128x256xi32>
    %83 = arith.muli %82, %80 : vector<128x256xi32>
    %84 = arith.cmpi eq, %81, %83 : vector<128x256xi32>
    %85 = arith.extui %84 : vector<128x256xi1> to vector<128x256xi32>
    %86 = arith.sitofp %85 : vector<128x256xi32> to vector<128x256xf32>
    %c2_i32_60 = arith.constant 2 : i32
    %87 = vector.broadcast %c2_i32_60 : i32 to vector<128x256xi32>
    %88 = arith.muli %87, %80 : vector<128x256xi32>
    %c1_i32 = arith.constant 1 : i32
    %89 = vector.broadcast %c1_i32 : i32 to vector<128x256xi32>
    %90 = arith.addi %88, %89 : vector<128x256xi32>
    %91 = arith.cmpi eq, %81, %90 : vector<128x256xi32>
    %92 = arith.extui %91 : vector<128x256xi1> to vector<128x256xi32>
    %93 = arith.sitofp %92 : vector<128x256xi32> to vector<128x256xf32>
    %cst_61 = arith.constant dense<0.000000e+00> : vector<128x16xf32>
    %94 = tpu.matmul %86, %79, %cst_61 {dimension_numbers = #tpu.dot_dimension_numbers<[1], [0], [0], [1], [0, 0, 1, 1], [], []>} : vector<128x256xf32>, vector<256x16xf32>, vector<128x16xf32> -> vector<128x16xf32>
    %cst_62 = arith.constant dense<0.000000e+00> : vector<128x16xf32>
    %95 = tpu.matmul %93, %79, %cst_62 {dimension_numbers = #tpu.dot_dimension_numbers<[1], [0], [0], [1], [0, 0, 1, 1], [], []>} : vector<128x256xf32>, vector<256x16xf32>, vector<128x16xf32> -> vector<128x16xf32>
    %96 = arith.maximumf %94, %95 : vector<128x16xf32>
    %97 = vector.shape_cast %96 : vector<128x16xf32> to vector<16x8x16xf32>
    %98 = vector.shape_cast %97 : vector<16x8x16xf32> to vector<8x2x8x16xf32>
    %99 = vector.extract_strided_slice %98 {offsets = [0, 0, 0, 0], sizes = [8, 1, 8, 16], strides = [1, 1, 1, 1]} : vector<8x2x8x16xf32> to vector<8x1x8x16xf32>
    %100 = vector.shape_cast %99 : vector<8x1x8x16xf32> to vector<8x8x16xf32>
    %101 = vector.extract_strided_slice %98 {offsets = [0, 1, 0, 0], sizes = [8, 1, 8, 16], strides = [1, 1, 1, 1]} : vector<8x2x8x16xf32> to vector<8x1x8x16xf32>
    %102 = vector.shape_cast %101 : vector<8x1x8x16xf32> to vector<8x8x16xf32>
    %103 = arith.maximumf %100, %102 : vector<8x8x16xf32>
    %104 = vector.shape_cast %103 : vector<8x8x16xf32> to vector<64x16xf32>
    %c0_63 = arith.constant 0 : index
    %c0_64 = arith.constant 0 : index
    %c0_65 = arith.constant 0 : index
    %105 = vector.load %arg10[%c0_63, %c0_64, %c0_65] : memref<1x64x16xf32, #tpu.memory_space<vmem>>, vector<1x64x16xf32>
    %106 = vector.shape_cast %105 : vector<1x64x16xf32> to vector<64x16xf32>
    %107 = vector.shape_cast %104 : vector<64x16xf32> to vector<1x64x16xf32>
    tpu.vector_store %arg10[%c0_63, %c0_64, %c0_65], %107 {strides = array<i32>} : memref<1x64x16xf32, #tpu.memory_space<vmem>>, vector<1x64x16xf32>,
    %cst_66 = arith.constant 0.000000e+00 : f32
    %108 = vector.broadcast %cst_66 : f32 to vector<10x24x16xf32>
    %c0_67 = arith.constant 0 : index
    %c0_68 = arith.constant 0 : index
    %c0_69 = arith.constant 0 : index
    %109 = vector.load %arg13[%c0_67, %c0_68, %c0_69] : memref<10x24x16xf32, #tpu.memory_space<vmem>>, vector<10x24x16xf32>
    tpu.vector_store %arg13[%c0_67, %c0_68, %c0_69], %108 {strides = array<i32>} : memref<10x24x16xf32, #tpu.memory_space<vmem>>, vector<10x24x16xf32>,
    %c1_70 = arith.constant 1 : index
    %c8_71 = arith.constant 8 : index
    %c0_72 = arith.constant 0 : index
    %110 = vector.load %arg13[%c1_70, %c8_71, %c0_72] : memref<10x24x16xf32, #tpu.memory_space<vmem>>, vector<8x8x16xf32>
    tpu.vector_store %arg13[%c1_70, %c8_71, %c0_72], %103 {strides = array<i32>} : memref<10x24x16xf32, #tpu.memory_space<vmem>>, vector<8x8x16xf32>,
    %cst_73 = arith.constant 0.000000e+00 : f32
    %111 = vector.broadcast %cst_73 : f32 to vector<64x16xf32>
    %c0_74 = arith.constant 0 : index
    %c7_75 = arith.constant 7 : index
    %c0_76 = arith.constant 0 : index
    %112 = vector.load %arg13[%c0_74, %c7_75, %c0_76] : memref<10x24x16xf32, #tpu.memory_space<vmem>>, vector<8x8x16xf32>
    %113 = vector.shape_cast %112 : vector<8x8x16xf32> to vector<64x16xf32>
    %114 = arith.truncf %113 : vector<64x16xf32> to vector<64x16xbf16>
    %c0_77 = arith.constant 0 : index
    %c0_78 = arith.constant 0 : index
    %115 = vector.load %arg6[%c0_77, %c0_78] : memref<144x16xbf16, #tpu.memory_space<vmem>>, vector<16x16xbf16>
    %cst_79 = arith.constant dense<0.000000e+00> : vector<64x16xf32>
    %116 = tpu.matmul %114, %115, %cst_79 {dimension_numbers = #tpu.dot_dimension_numbers<[1], [0], [0], [1], [0, 0, 1, 1], [], []>} : vector<64x16xbf16>, vector<16x16xbf16>, vector<64x16xf32> -> vector<64x16xf32>
    %117 = arith.addf %111, %116 : vector<64x16xf32>
    %c0_80 = arith.constant 0 : index
    %c8_81 = arith.constant 8 : index
    %c0_82 = arith.constant 0 : index
    %118 = vector.load %arg13[%c0_80, %c8_81, %c0_82] : memref<10x24x16xf32, #tpu.memory_space<vmem>>, vector<8x8x16xf32>
    %119 = vector.shape_cast %118 : vector<8x8x16xf32> to vector<64x16xf32>
    %120 = arith.truncf %119 : vector<64x16xf32> to vector<64x16xbf16>
    %c16_83 = arith.constant 16 : index
    %c0_84 = arith.constant 0 : index
    %121 = vector.load %arg6[%c16_83, %c0_84] : memref<144x16xbf16, #tpu.memory_space<vmem>>, vector<16x16xbf16>
    %cst_85 = arith.constant dense<0.000000e+00> : vector<64x16xf32>
    %122 = tpu.matmul %120, %121, %cst_85 {dimension_numbers = #tpu.dot_dimension_numbers<[1], [0], [0], [1], [0, 0, 1, 1], [], []>} : vector<64x16xbf16>, vector<16x16xbf16>, vector<64x16xf32> -> vector<64x16xf32>
    %123 = arith.addf %117, %122 : vector<64x16xf32>
    %c0_86 = arith.constant 0 : index
    %c9_87 = arith.constant 9 : index
    %c0_88 = arith.constant 0 : index
    %124 = vector.load %arg13[%c0_86, %c9_87, %c0_88] : memref<10x24x16xf32, #tpu.memory_space<vmem>>, vector<8x8x16xf32>
    %125 = vector.shape_cast %124 : vector<8x8x16xf32> to vector<64x16xf32>
    %126 = arith.truncf %125 : vector<64x16xf32> to vector<64x16xbf16>
    %c32_89 = arith.constant 32 : index
    %c0_90 = arith.constant 0 : index
    %127 = vector.load %arg6[%c32_89, %c0_90] : memref<144x16xbf16, #tpu.memory_space<vmem>>, vector<16x16xbf16>
    %cst_91 = arith.constant dense<0.000000e+00> : vector<64x16xf32>
    %128 = tpu.matmul %126, %127, %cst_91 {dimension_numbers = #tpu.dot_dimension_numbers<[1], [0], [0], [1], [0, 0, 1, 1], [], []>} : vector<64x16xbf16>, vector<16x16xbf16>, vector<64x16xf32> -> vector<64x16xf32>
    %129 = arith.addf %123, %128 : vector<64x16xf32>
    %c1_92 = arith.constant 1 : index
    %c7_93 = arith.constant 7 : index
    %c0_94 = arith.constant 0 : index
    %130 = vector.load %arg13[%c1_92, %c7_93, %c0_94] : memref<10x24x16xf32, #tpu.memory_space<vmem>>, vector<8x8x16xf32>
    %131 = vector.shape_cast %130 : vector<8x8x16xf32> to vector<64x16xf32>
    %132 = arith.truncf %131 : vector<64x16xf32> to vector<64x16xbf16>
    %c48_95 = arith.constant 48 : index
    %c0_96 = arith.constant 0 : index
    %133 = vector.load %arg6[%c48_95, %c0_96] : memref<144x16xbf16, #tpu.memory_space<vmem>>, vector<16x16xbf16>
    %cst_97 = arith.constant dense<0.000000e+00> : vector<64x16xf32>
    %134 = tpu.matmul %132, %133, %cst_97 {dimension_numbers = #tpu.dot_dimension_numbers<[1], [0], [0], [1], [0, 0, 1, 1], [], []>} : vector<64x16xbf16>, vector<16x16xbf16>, vector<64x16xf32> -> vector<64x16xf32>
    %135 = arith.addf %129, %134 : vector<64x16xf32>
    %c1_98 = arith.constant 1 : index
    %c8_99 = arith.constant 8 : index
    %c0_100 = arith.constant 0 : index
    %136 = vector.load %arg13[%c1_98, %c8_99, %c0_100] : memref<10x24x16xf32, #tpu.memory_space<vmem>>, vector<8x8x16xf32>
    %137 = vector.shape_cast %136 : vector<8x8x16xf32> to vector<64x16xf32>
    %138 = arith.truncf %137 : vector<64x16xf32> to vector<64x16xbf16>
    %c64_101 = arith.constant 64 : index
    %c0_102 = arith.constant 0 : index
    %139 = vector.load %arg6[%c64_101, %c0_102] : memref<144x16xbf16, #tpu.memory_space<vmem>>, vector<16x16xbf16>
    %cst_103 = arith.constant dense<0.000000e+00> : vector<64x16xf32>
    %140 = tpu.matmul %138, %139, %cst_103 {dimension_numbers = #tpu.dot_dimension_numbers<[1], [0], [0], [1], [0, 0, 1, 1], [], []>} : vector<64x16xbf16>, vector<16x16xbf16>, vector<64x16xf32> -> vector<64x16xf32>
    %141 = arith.addf %135, %140 : vector<64x16xf32>
    %c1_104 = arith.constant 1 : index
    %c9_105 = arith.constant 9 : index
    %c0_106 = arith.constant 0 : index
    %142 = vector.load %arg13[%c1_104, %c9_105, %c0_106] : memref<10x24x16xf32, #tpu.memory_space<vmem>>, vector<8x8x16xf32>
    %143 = vector.shape_cast %142 : vector<8x8x16xf32> to vector<64x16xf32>
    %144 = arith.truncf %143 : vector<64x16xf32> to vector<64x16xbf16>
    %c80 = arith.constant 80 : index
    %c0_107 = arith.constant 0 : index
    %145 = vector.load %arg6[%c80, %c0_107] : memref<144x16xbf16, #tpu.memory_space<vmem>>, vector<16x16xbf16>
    %cst_108 = arith.constant dense<0.000000e+00> : vector<64x16xf32>
    %146 = tpu.matmul %144, %145, %cst_108 {dimension_numbers = #tpu.dot_dimension_numbers<[1], [0], [0], [1], [0, 0, 1, 1], [], []>} : vector<64x16xbf16>, vector<16x16xbf16>, vector<64x16xf32> -> vector<64x16xf32>
    %147 = arith.addf %141, %146 : vector<64x16xf32>
    %c2_109 = arith.constant 2 : index
    %c7_110 = arith.constant 7 : index
    %c0_111 = arith.constant 0 : index
    %148 = vector.load %arg13[%c2_109, %c7_110, %c0_111] : memref<10x24x16xf32, #tpu.memory_space<vmem>>, vector<8x8x16xf32>
    %149 = vector.shape_cast %148 : vector<8x8x16xf32> to vector<64x16xf32>
    %150 = arith.truncf %149 : vector<64x16xf32> to vector<64x16xbf16>
    %c96 = arith.constant 96 : index
    %c0_112 = arith.constant 0 : index
    %151 = vector.load %arg6[%c96, %c0_112] : memref<144x16xbf16, #tpu.memory_space<vmem>>, vector<16x16xbf16>
    %cst_113 = arith.constant dense<0.000000e+00> : vector<64x16xf32>
    %152 = tpu.matmul %150, %151, %cst_113 {dimension_numbers = #tpu.dot_dimension_numbers<[1], [0], [0], [1], [0, 0, 1, 1], [], []>} : vector<64x16xbf16>, vector<16x16xbf16>, vector<64x16xf32> -> vector<64x16xf32>
    %153 = arith.addf %147, %152 : vector<64x16xf32>
    %c2_114 = arith.constant 2 : index
    %c8_115 = arith.constant 8 : index
    %c0_116 = arith.constant 0 : index
    %154 = vector.load %arg13[%c2_114, %c8_115, %c0_116] : memref<10x24x16xf32, #tpu.memory_space<vmem>>, vector<8x8x16xf32>
    %155 = vector.shape_cast %154 : vector<8x8x16xf32> to vector<64x16xf32>
    %156 = arith.truncf %155 : vector<64x16xf32> to vector<64x16xbf16>
    %c112 = arith.constant 112 : index
    %c0_117 = arith.constant 0 : index
    %157 = vector.load %arg6[%c112, %c0_117] : memref<144x16xbf16, #tpu.memory_space<vmem>>, vector<16x16xbf16>
    %cst_118 = arith.constant dense<0.000000e+00> : vector<64x16xf32>
    %158 = tpu.matmul %156, %157, %cst_118 {dimension_numbers = #tpu.dot_dimension_numbers<[1], [0], [0], [1], [0, 0, 1, 1], [], []>} : vector<64x16xbf16>, vector<16x16xbf16>, vector<64x16xf32> -> vector<64x16xf32>
    %159 = arith.addf %153, %158 : vector<64x16xf32>
    %c2_119 = arith.constant 2 : index
    %c9_120 = arith.constant 9 : index
    %c0_121 = arith.constant 0 : index
    %160 = vector.load %arg13[%c2_119, %c9_120, %c0_121] : memref<10x24x16xf32, #tpu.memory_space<vmem>>, vector<8x8x16xf32>
    %161 = vector.shape_cast %160 : vector<8x8x16xf32> to vector<64x16xf32>
    %162 = arith.truncf %161 : vector<64x16xf32> to vector<64x16xbf16>
    %c128 = arith.constant 128 : index
    %c0_122 = arith.constant 0 : index
    %163 = vector.load %arg6[%c128, %c0_122] : memref<144x16xbf16, #tpu.memory_space<vmem>>, vector<16x16xbf16>
    %cst_123 = arith.constant dense<0.000000e+00> : vector<64x16xf32>
    %164 = tpu.matmul %162, %163, %cst_123 {dimension_numbers = #tpu.dot_dimension_numbers<[1], [0], [0], [1], [0, 0, 1, 1], [], []>} : vector<64x16xbf16>, vector<16x16xbf16>, vector<64x16xf32> -> vector<64x16xf32>
    %165 = arith.addf %159, %164 : vector<64x16xf32>
    %c0_124 = arith.constant 0 : index
    %c0_125 = arith.constant 0 : index
    %166 = vector.load %arg7[%c0_124, %c0_125] : memref<1x16xf32, #tpu.memory_space<vmem>>, vector<1x16xf32>
    %167 = vector.broadcast %166 : vector<1x16xf32> to vector<64x16xf32>
    %168 = arith.addf %165, %167 : vector<64x16xf32>
    %cst_126 = arith.constant 0.000000e+00 : f32
    %169 = vector.broadcast %cst_126 : f32 to vector<64x16xf32>
    %170 = arith.maximumf %168, %169 : vector<64x16xf32>
    %171 = arith.truncf %170 : vector<64x16xf32> to vector<64x16xbf16>
    %c0_127 = arith.constant 0 : index
    %c0_128 = arith.constant 0 : index
    %172 = vector.load %arg8[%c0_127, %c0_128] : memref<16x128xbf16, #tpu.memory_space<vmem>>, vector<16x128xbf16>
    %cst_129 = arith.constant dense<0.000000e+00> : vector<64x128xf32>
    %173 = tpu.matmul %171, %172, %cst_129 {dimension_numbers = #tpu.dot_dimension_numbers<[1], [0], [0], [1], [0, 0, 1, 1], [], []>} : vector<64x16xbf16>, vector<16x128xbf16>, vector<64x128xf32> -> vector<64x128xf32>
    %c0_130 = arith.constant 0 : index
    %c0_131 = arith.constant 0 : index
    %174 = vector.load %arg9[%c0_130, %c0_131] : memref<1x128xf32, #tpu.memory_space<vmem>>, vector<1x128xf32>
    %175 = vector.broadcast %174 : vector<1x128xf32> to vector<64x128xf32>
    %176 = arith.addf %173, %175 : vector<64x128xf32>
    %c0_132 = arith.constant 0 : index
    %c0_133 = arith.constant 0 : index
    %c0_134 = arith.constant 0 : index
    %177 = vector.load %arg11[%c0_132, %c0_133, %c0_134] : memref<1x64x128xf32, #tpu.memory_space<vmem>>, vector<1x64x128xf32>
    %178 = vector.shape_cast %177 : vector<1x64x128xf32> to vector<64x128xf32>
    %179 = vector.shape_cast %176 : vector<64x128xf32> to vector<1x64x128xf32>
    tpu.vector_store %arg11[%c0_132, %c0_133, %c0_134], %179 {strides = array<i32>} : memref<1x64x128xf32, #tpu.memory_space<vmem>>, vector<1x64x128xf32>,
    return
  }
  func.func @transform_0(%arg0: i32) -> (i32, i32, i32) {
    %c0_i32 = arith.constant 0 : i32
    %c0_i32_0 = arith.constant 0 : i32
    %c0_i32_1 = arith.constant 0 : i32
    return %arg0, %c0_i32, %c0_i32_0 : i32, i32, i32
  }
  func.func @transform_1(%arg0: i32) -> (i32, i32) {
    %c0_i32 = arith.constant 0 : i32
    %c0_i32_0 = arith.constant 0 : i32
    %c0_i32_1 = arith.constant 0 : i32
    return %c0_i32, %c0_i32_0 : i32, i32
  }
  func.func @transform_2(%arg0: i32) -> (i32, i32) {
    %c0_i32 = arith.constant 0 : i32
    %c0_i32_0 = arith.constant 0 : i32
    %c0_i32_1 = arith.constant 0 : i32
    return %c0_i32, %c0_i32_0 : i32, i32
  }
  func.func @transform_3(%arg0: i32) -> (i32, i32) {
    %c0_i32 = arith.constant 0 : i32
    %c0_i32_0 = arith.constant 0 : i32
    %c0_i32_1 = arith.constant 0 : i32
    return %c0_i32, %c0_i32_0 : i32, i32
  }
  func.func @transform_4(%arg0: i32) -> (i32, i32) {
    %c0_i32 = arith.constant 0 : i32
    %c0_i32_0 = arith.constant 0 : i32
    %c0_i32_1 = arith.constant 0 : i32
    return %c0_i32, %c0_i32_0 : i32, i32
  }
  func.func @transform_5(%arg0: i32) -> (i32, i32) {
    %c0_i32 = arith.constant 0 : i32
    %c0_i32_0 = arith.constant 0 : i32
    %c0_i32_1 = arith.constant 0 : i32
    return %c0_i32, %c0_i32_0 : i32, i32
  }
  func.func @transform_6(%arg0: i32) -> (i32, i32) {
    %c0_i32 = arith.constant 0 : i32
    %c0_i32_0 = arith.constant 0 : i32
    %c0_i32_1 = arith.constant 0 : i32
    return %c0_i32, %c0_i32_0 : i32, i32
  }
  func.func @transform_7(%arg0: i32) -> (i32, i32) {
    %c0_i32 = arith.constant 0 : i32
    %c0_i32_0 = arith.constant 0 : i32
    %c0_i32_1 = arith.constant 0 : i32
    return %c0_i32, %c0_i32_0 : i32, i32
  }
  func.func @transform_8(%arg0: i32) -> (i32, i32) {
    %c0_i32 = arith.constant 0 : i32
    %c0_i32_0 = arith.constant 0 : i32
    %c0_i32_1 = arith.constant 0 : i32
    return %c0_i32, %c0_i32_0 : i32, i32
  }
  func.func @transform_9(%arg0: i32) -> (i32, i32, i32) {
    %c0_i32 = arith.constant 0 : i32
    %c0_i32_0 = arith.constant 0 : i32
    %c0_i32_1 = arith.constant 0 : i32
    return %arg0, %c0_i32, %c0_i32_0 : i32, i32, i32
  }
  func.func @transform_10(%arg0: i32) -> (i32, i32, i32) {
    %c0_i32 = arith.constant 0 : i32
    %c0_i32_0 = arith.constant 0 : i32
    %c0_i32_1 = arith.constant 0 : i32
    return %arg0, %c0_i32, %c0_i32_0 : i32, i32, i32
  }
}

module attributes {stable_mosaic.version = 11 : i64} {
  func.func @proposal_kernel(%arg0: i32, %arg1: memref<4x384xf32, #tpu.memory_space<vmem>>, %arg2: memref<1x2x384xf32, #tpu.memory_space<vmem>>, %arg3: memref<1x4x384xf32, #tpu.memory_space<vmem>>, %arg4: memref<1x8x384xf32, #tpu.memory_space<vmem>>) attributes {dimension_semantics = [#tpu.dimension_semantics<parallel>], iteration_bounds = array<i64: 2>, scalar_prefetch = 0 : i64, scratch_operands = 0 : i64, tpu.core_type = #tpu.core_type<tc>, window_params = [{pipeline_mode = #tpu.pipeline_mode<synchronous>, transform_indices = @transform_0, window_bounds = array<i64: 4, 384>}, {transform_indices = @transform_1, window_bounds = array<i64: 1, 2, 384>}, {transform_indices = @transform_2, window_bounds = array<i64: 1, 4, 384>}, {transform_indices = @transform_3, window_bounds = array<i64: 1, 8, 384>}]} {
    %c0 = arith.constant 0 : index
    %c0_0 = arith.constant 0 : index
    %0 = vector.load %arg1[%c0, %c0_0] : memref<4x384xf32, #tpu.memory_space<vmem>>, vector<4x384xf32>
    %c0_1 = arith.constant 0 : index
    %c0_2 = arith.constant 0 : index
    %c0_3 = arith.constant 0 : index
    %1 = vector.load %arg2[%c0_1, %c0_2, %c0_3] : memref<1x2x384xf32, #tpu.memory_space<vmem>>, vector<1x2x384xf32>
    %2 = vector.shape_cast %1 : vector<1x2x384xf32> to vector<2x384xf32>
    %c0_4 = arith.constant 0 : index
    %c0_5 = arith.constant 0 : index
    %c0_6 = arith.constant 0 : index
    %3 = vector.load %arg3[%c0_4, %c0_5, %c0_6] : memref<1x4x384xf32, #tpu.memory_space<vmem>>, vector<1x4x384xf32>
    %4 = vector.shape_cast %3 : vector<1x4x384xf32> to vector<4x384xf32>
    %5 = vector.extract_strided_slice %0 {offsets = [2, 0], sizes = [1, 384], strides = [1, 1]} : vector<4x384xf32> to vector<1x384xf32>
    %6 = vector.extract_strided_slice %0 {offsets = [0, 0], sizes = [1, 384], strides = [1, 1]} : vector<4x384xf32> to vector<1x384xf32>
    %7 = arith.subf %5, %6 : vector<1x384xf32>
    %8 = vector.extract_strided_slice %0 {offsets = [3, 0], sizes = [1, 384], strides = [1, 1]} : vector<4x384xf32> to vector<1x384xf32>
    %9 = vector.extract_strided_slice %0 {offsets = [1, 0], sizes = [1, 384], strides = [1, 1]} : vector<4x384xf32> to vector<1x384xf32>
    %10 = arith.subf %8, %9 : vector<1x384xf32>
    %11 = vector.extract_strided_slice %0 {offsets = [0, 0], sizes = [1, 384], strides = [1, 1]} : vector<4x384xf32> to vector<1x384xf32>
    %cst = arith.constant 5.000000e-01 : f32
    %12 = vector.broadcast %cst : f32 to vector<1x384xf32>
    %13 = arith.mulf %12, %7 : vector<1x384xf32>
    %14 = arith.addf %11, %13 : vector<1x384xf32>
    %15 = vector.extract_strided_slice %0 {offsets = [1, 0], sizes = [1, 384], strides = [1, 1]} : vector<4x384xf32> to vector<1x384xf32>
    %cst_7 = arith.constant 5.000000e-01 : f32
    %16 = vector.broadcast %cst_7 : f32 to vector<1x384xf32>
    %17 = arith.mulf %16, %10 : vector<1x384xf32>
    %18 = arith.addf %15, %17 : vector<1x384xf32>
    %19 = vector.extract_strided_slice %4 {offsets = [0, 0], sizes = [1, 384], strides = [1, 1]} : vector<4x384xf32> to vector<1x384xf32>
    %20 = arith.mulf %19, %7 : vector<1x384xf32>
    %21 = arith.addf %20, %14 : vector<1x384xf32>
    %22 = vector.extract_strided_slice %4 {offsets = [1, 0], sizes = [1, 384], strides = [1, 1]} : vector<4x384xf32> to vector<1x384xf32>
    %23 = arith.mulf %22, %10 : vector<1x384xf32>
    %24 = arith.addf %23, %18 : vector<1x384xf32>
    %25 = vector.extract_strided_slice %4 {offsets = [2, 0], sizes = [1, 384], strides = [1, 1]} : vector<4x384xf32> to vector<1x384xf32>
    %26 = math.exp %25 : vector<1x384xf32>
    %27 = arith.mulf %26, %7 : vector<1x384xf32>
    %28 = vector.extract_strided_slice %4 {offsets = [3, 0], sizes = [1, 384], strides = [1, 1]} : vector<4x384xf32> to vector<1x384xf32>
    %29 = math.exp %28 : vector<1x384xf32>
    %30 = arith.mulf %29, %10 : vector<1x384xf32>
    %cst_8 = arith.constant 5.000000e-01 : f32
    %31 = vector.broadcast %cst_8 : f32 to vector<1x384xf32>
    %32 = arith.mulf %31, %27 : vector<1x384xf32>
    %33 = arith.subf %21, %32 : vector<1x384xf32>
    %cst_9 = arith.constant 0.000000e+00 : f32
    %cst_10 = arith.constant 3.200000e+01 : f32
    %34 = vector.broadcast %cst_9 : f32 to vector<1x384xf32>
    %35 = arith.maximumf %34, %33 : vector<1x384xf32>
    %36 = vector.broadcast %cst_10 : f32 to vector<1x384xf32>
    %37 = arith.minimumf %36, %35 : vector<1x384xf32>
    %cst_11 = arith.constant 5.000000e-01 : f32
    %38 = vector.broadcast %cst_11 : f32 to vector<1x384xf32>
    %39 = arith.mulf %38, %30 : vector<1x384xf32>
    %40 = arith.subf %24, %39 : vector<1x384xf32>
    %cst_12 = arith.constant 0.000000e+00 : f32
    %cst_13 = arith.constant 3.200000e+01 : f32
    %41 = vector.broadcast %cst_12 : f32 to vector<1x384xf32>
    %42 = arith.maximumf %41, %40 : vector<1x384xf32>
    %43 = vector.broadcast %cst_13 : f32 to vector<1x384xf32>
    %44 = arith.minimumf %43, %42 : vector<1x384xf32>
    %cst_14 = arith.constant 5.000000e-01 : f32
    %45 = vector.broadcast %cst_14 : f32 to vector<1x384xf32>
    %46 = arith.mulf %45, %27 : vector<1x384xf32>
    %47 = arith.addf %21, %46 : vector<1x384xf32>
    %cst_15 = arith.constant 0.000000e+00 : f32
    %cst_16 = arith.constant 3.200000e+01 : f32
    %48 = vector.broadcast %cst_15 : f32 to vector<1x384xf32>
    %49 = arith.maximumf %48, %47 : vector<1x384xf32>
    %50 = vector.broadcast %cst_16 : f32 to vector<1x384xf32>
    %51 = arith.minimumf %50, %49 : vector<1x384xf32>
    %cst_17 = arith.constant 5.000000e-01 : f32
    %52 = vector.broadcast %cst_17 : f32 to vector<1x384xf32>
    %53 = arith.mulf %52, %30 : vector<1x384xf32>
    %54 = arith.addf %24, %53 : vector<1x384xf32>
    %cst_18 = arith.constant 0.000000e+00 : f32
    %cst_19 = arith.constant 3.200000e+01 : f32
    %55 = vector.broadcast %cst_18 : f32 to vector<1x384xf32>
    %56 = arith.maximumf %55, %54 : vector<1x384xf32>
    %57 = vector.broadcast %cst_19 : f32 to vector<1x384xf32>
    %58 = arith.minimumf %57, %56 : vector<1x384xf32>
    %59 = vector.extract_strided_slice %2 {offsets = [0, 0], sizes = [1, 384], strides = [1, 1]} : vector<2x384xf32> to vector<1x384xf32>
    %60 = vector.extract_strided_slice %2 {offsets = [1, 0], sizes = [1, 384], strides = [1, 1]} : vector<2x384xf32> to vector<1x384xf32>
    %61 = arith.subf %59, %60 : vector<1x384xf32>
    %62 = math.exp %61 : vector<1x384xf32>
    %cst_20 = arith.constant 1.000000e+00 : f32
    %63 = vector.broadcast %cst_20 : f32 to vector<1x384xf32>
    %64 = arith.addf %63, %62 : vector<1x384xf32>
    %cst_21 = arith.constant 1.000000e+00 : f32
    %65 = vector.broadcast %cst_21 : f32 to vector<1x384xf32>
    %66 = arith.divf %65, %64 : vector<1x384xf32>
    %67 = arith.subf %51, %37 : vector<1x384xf32>
    %cst_22 = arith.constant 2.000000e+00 : f32
    %68 = vector.broadcast %cst_22 : f32 to vector<1x384xf32>
    %69 = arith.cmpf oge, %67, %68 : vector<1x384xf32>
    %70 = arith.subf %58, %44 : vector<1x384xf32>
    %cst_23 = arith.constant 2.000000e+00 : f32
    %71 = vector.broadcast %cst_23 : f32 to vector<1x384xf32>
    %72 = arith.cmpf oge, %70, %71 : vector<1x384xf32>
    %73 = arith.andi %69, %72 : vector<1x384xi1>
    %cst_24 = arith.constant -1.000000e+00 : f32
    %74 = vector.broadcast %cst_24 : f32 to vector<1x384xf32>
    %75 = arith.select %73, %66, %74 : vector<1x384xi1>, vector<1x384xf32>
    %cst_25 = arith.constant 0.000000e+00 : f32
    %76 = vector.broadcast %cst_25 : f32 to vector<3x384xf32>
    %77 = tpu.concatenate %37, %44, %51, %58, %75, %76 in 0 : vector<1x384xf32>, vector<1x384xf32>, vector<1x384xf32>, vector<1x384xf32>, vector<1x384xf32>, vector<3x384xf32> -> vector<8x384xf32>
    %c0_26 = arith.constant 0 : index
    %c0_27 = arith.constant 0 : index
    %c0_28 = arith.constant 0 : index
    %78 = vector.load %arg4[%c0_26, %c0_27, %c0_28] : memref<1x8x384xf32, #tpu.memory_space<vmem>>, vector<1x8x384xf32>
    %79 = vector.shape_cast %78 : vector<1x8x384xf32> to vector<8x384xf32>
    %80 = vector.shape_cast %77 : vector<8x384xf32> to vector<1x8x384xf32>
    tpu.vector_store %arg4[%c0_26, %c0_27, %c0_28], %80 {strides = array<i32>} : memref<1x8x384xf32, #tpu.memory_space<vmem>>, vector<1x8x384xf32>,
    return
  }
  func.func @transform_0(%arg0: i32) -> (i32, i32) {
    %c0_i32 = arith.constant 0 : i32
    %c0_i32_0 = arith.constant 0 : i32
    %c0_i32_1 = arith.constant 0 : i32
    return %c0_i32, %c0_i32_0 : i32, i32
  }
  func.func @transform_1(%arg0: i32) -> (i32, i32, i32) {
    %c0_i32 = arith.constant 0 : i32
    %c0_i32_0 = arith.constant 0 : i32
    %c0_i32_1 = arith.constant 0 : i32
    return %arg0, %c0_i32, %c0_i32_0 : i32, i32, i32
  }
  func.func @transform_2(%arg0: i32) -> (i32, i32, i32) {
    %c0_i32 = arith.constant 0 : i32
    %c0_i32_0 = arith.constant 0 : i32
    %c0_i32_1 = arith.constant 0 : i32
    return %arg0, %c0_i32, %c0_i32_0 : i32, i32, i32
  }
  func.func @transform_3(%arg0: i32) -> (i32, i32, i32) {
    %c0_i32 = arith.constant 0 : i32
    %c0_i32_0 = arith.constant 0 : i32
    %c0_i32_1 = arith.constant 0 : i32
    return %arg0, %c0_i32, %c0_i32_0 : i32, i32, i32
  }
}

module attributes {stable_mosaic.version = 11 : i64} {
  func.func @nms_kernel(%arg0: i32, %arg1: memref<1x128x4xf32, #tpu.memory_space<vmem>>, %arg2: memref<1x4x128xf32, #tpu.memory_space<vmem>>, %arg3: memref<1x1x128xf32, #tpu.memory_space<vmem>>, %arg4: memref<1x1x128xf32, #tpu.memory_space<vmem>>, %arg5: memref<128x128xf32, #tpu.memory_space<vmem>>) attributes {dimension_semantics = [#tpu.dimension_semantics<parallel>], iteration_bounds = array<i64: 2>, scalar_prefetch = 0 : i64, scratch_operands = 1 : i64, tpu.core_type = #tpu.core_type<tc>, window_params = [{transform_indices = @transform_0, window_bounds = array<i64: 1, 128, 4>}, {transform_indices = @transform_1, window_bounds = array<i64: 1, 4, 128>}, {transform_indices = @transform_2, window_bounds = array<i64: 1, 1, 128>}, {transform_indices = @transform_3, window_bounds = array<i64: 1, 1, 128>}]} {
    %c0 = arith.constant 0 : index
    %c0_0 = arith.constant 0 : index
    %c0_1 = arith.constant 0 : index
    %0 = vector.load %arg1[%c0, %c0_0, %c0_1] : memref<1x128x4xf32, #tpu.memory_space<vmem>>, vector<1x128x4xf32>
    %1 = vector.shape_cast %0 : vector<1x128x4xf32> to vector<128x4xf32>
    %c0_2 = arith.constant 0 : index
    %c0_3 = arith.constant 0 : index
    %c0_4 = arith.constant 0 : index
    %2 = vector.load %arg2[%c0_2, %c0_3, %c0_4] : memref<1x4x128xf32, #tpu.memory_space<vmem>>, vector<1x4x128xf32>
    %3 = vector.shape_cast %2 : vector<1x4x128xf32> to vector<4x128xf32>
    %4 = vector.extract_strided_slice %1 {offsets = [0, 0], sizes = [128, 1], strides = [1, 1]} : vector<128x4xf32> to vector<128x1xf32>
    %5 = vector.extract_strided_slice %1 {offsets = [0, 1], sizes = [128, 1], strides = [1, 1]} : vector<128x4xf32> to vector<128x1xf32>
    %6 = vector.extract_strided_slice %1 {offsets = [0, 2], sizes = [128, 1], strides = [1, 1]} : vector<128x4xf32> to vector<128x1xf32>
    %7 = vector.extract_strided_slice %1 {offsets = [0, 3], sizes = [128, 1], strides = [1, 1]} : vector<128x4xf32> to vector<128x1xf32>
    %8 = vector.extract_strided_slice %3 {offsets = [0, 0], sizes = [1, 128], strides = [1, 1]} : vector<4x128xf32> to vector<1x128xf32>
    %9 = vector.extract_strided_slice %3 {offsets = [1, 0], sizes = [1, 128], strides = [1, 1]} : vector<4x128xf32> to vector<1x128xf32>
    %10 = vector.extract_strided_slice %3 {offsets = [2, 0], sizes = [1, 128], strides = [1, 1]} : vector<4x128xf32> to vector<1x128xf32>
    %11 = vector.extract_strided_slice %3 {offsets = [3, 0], sizes = [1, 128], strides = [1, 1]} : vector<4x128xf32> to vector<1x128xf32>
    %12 = arith.subf %6, %4 : vector<128x1xf32>
    %13 = arith.subf %7, %5 : vector<128x1xf32>
    %14 = arith.mulf %12, %13 : vector<128x1xf32>
    %15 = arith.subf %10, %8 : vector<1x128xf32>
    %16 = arith.subf %11, %9 : vector<1x128xf32>
    %17 = arith.mulf %15, %16 : vector<1x128xf32>
    %18 = vector.broadcast %6 : vector<128x1xf32> to vector<128x128xf32>
    %19 = vector.broadcast %10 : vector<1x128xf32> to vector<128x128xf32>
    %20 = arith.minimumf %18, %19 : vector<128x128xf32>
    %21 = vector.broadcast %4 : vector<128x1xf32> to vector<128x128xf32>
    %22 = vector.broadcast %8 : vector<1x128xf32> to vector<128x128xf32>
    %23 = arith.maximumf %21, %22 : vector<128x128xf32>
    %24 = arith.subf %20, %23 : vector<128x128xf32>
    %cst = arith.constant 0.000000e+00 : f32
    %25 = vector.broadcast %cst : f32 to vector<128x128xf32>
    %26 = arith.maximumf %24, %25 : vector<128x128xf32>
    %27 = vector.broadcast %7 : vector<128x1xf32> to vector<128x128xf32>
    %28 = vector.broadcast %11 : vector<1x128xf32> to vector<128x128xf32>
    %29 = arith.minimumf %27, %28 : vector<128x128xf32>
    %30 = vector.broadcast %5 : vector<128x1xf32> to vector<128x128xf32>
    %31 = vector.broadcast %9 : vector<1x128xf32> to vector<128x128xf32>
    %32 = arith.maximumf %30, %31 : vector<128x128xf32>
    %33 = arith.subf %29, %32 : vector<128x128xf32>
    %cst_5 = arith.constant 0.000000e+00 : f32
    %34 = vector.broadcast %cst_5 : f32 to vector<128x128xf32>
    %35 = arith.maximumf %33, %34 : vector<128x128xf32>
    %36 = arith.mulf %26, %35 : vector<128x128xf32>
    %37 = vector.broadcast %14 : vector<128x1xf32> to vector<128x128xf32>
    %38 = vector.broadcast %17 : vector<1x128xf32> to vector<128x128xf32>
    %39 = arith.addf %37, %38 : vector<128x128xf32>
    %40 = arith.subf %39, %36 : vector<128x128xf32>
    %cst_6 = arith.constant 9.99999971E-10 : f32
    %41 = vector.broadcast %cst_6 : f32 to vector<128x128xf32>
    %42 = arith.maximumf %40, %41 : vector<128x128xf32>
    %43 = arith.divf %36, %42 : vector<128x128xf32>
    %c0_7 = arith.constant 0 : index
    %c0_8 = arith.constant 0 : index
    %44 = vector.load %arg5[%c0_7, %c0_8] : memref<128x128xf32, #tpu.memory_space<vmem>>, vector<128x128xf32>
    tpu.vector_store %arg5[%c0_7, %c0_8], %43 {strides = array<i32>} : memref<128x128xf32, #tpu.memory_space<vmem>>, vector<128x128xf32>,
    %45 = tpu.iota {dimensions = array<i32: 1>} : vector<1x128xi32>
    %c0_9 = arith.constant 0 : index
    %c0_10 = arith.constant 0 : index
    %c0_11 = arith.constant 0 : index
    %46 = vector.load %arg3[%c0_9, %c0_10, %c0_11] : memref<1x1x128xf32, #tpu.memory_space<vmem>>, vector<1x1x128xf32>
    %47 = vector.shape_cast %46 : vector<1x1x128xf32> to vector<1x128xf32>
    %c0_i32 = arith.constant 0 : i32
    %c128_i32 = arith.constant 128 : i32
    %48 = arith.addi %c0_i32, %c128_i32 : i32
    %c1_i32 = arith.constant 1 : i32
    %49 = scf.for %arg6 = %c0_i32 to %48 step %c1_i32 iter_args(%arg7 = %47) -> (vector<1x128xf32>)  : i32 {
      %53 = arith.index_cast %arg6 : i32 to index
      %c0_16 = arith.constant 0 : index
      %54 = vector.load %arg5[%53, %c0_16] : memref<128x128xf32, #tpu.memory_space<vmem>>, vector<1x128xf32>
      %55 = vector.broadcast %arg6 : i32 to vector<1x128xi32>
      %56 = arith.cmpi eq, %45, %55 : vector<1x128xi32>
      %57 = arith.extui %56 : vector<1x128xi1> to vector<1x128xi32>
      %58 = arith.sitofp %57 : vector<1x128xi32> to vector<1x128xf32>
      %59 = arith.mulf %arg7, %58 : vector<1x128xf32>
      %cst_17 = arith.constant dense<0.000000e+00> : vector<1xf32>
      %60 = vector.multi_reduction <add>, %59, %cst_17 [1] : vector<1x128xf32> to vector<1xf32>
      %61 = vector.shape_cast %60 : vector<1xf32> to vector<1x1xf32>
      %cst_18 = arith.constant 0.699999988 : f32
      %62 = vector.broadcast %cst_18 : f32 to vector<1x128xf32>
      %63 = arith.cmpf ogt, %54, %62 : vector<1x128xf32>
      %64 = vector.broadcast %arg6 : i32 to vector<1x128xi32>
      %65 = arith.cmpi sgt, %45, %64 : vector<1x128xi32>
      %66 = arith.andi %63, %65 : vector<1x128xi1>
      %cst_19 = arith.constant 1.000000e+00 : f32
      %cst_20 = arith.constant 0.000000e+00 : f32
      %67 = vector.broadcast %cst_19 : f32 to vector<1x128xf32>
      %68 = vector.broadcast %cst_20 : f32 to vector<1x128xf32>
      %69 = arith.select %66, %67, %68 : vector<1x128xi1>, vector<1x128xf32>
      %70 = vector.broadcast %61 : vector<1x1xf32> to vector<1x128xf32>
      %71 = arith.mulf %69, %70 : vector<1x128xf32>
      %cst_21 = arith.constant 1.000000e+00 : f32
      %72 = vector.broadcast %cst_21 : f32 to vector<1x128xf32>
      %73 = arith.subf %72, %71 : vector<1x128xf32>
      %74 = arith.mulf %arg7, %73 : vector<1x128xf32>
      scf.yield %74 : vector<1x128xf32>
    }
    %c128_i32_12 = arith.constant 128 : i32
    %c0_13 = arith.constant 0 : index
    %c0_14 = arith.constant 0 : index
    %c0_15 = arith.constant 0 : index
    %50 = vector.load %arg4[%c0_13, %c0_14, %c0_15] : memref<1x1x128xf32, #tpu.memory_space<vmem>>, vector<1x1x128xf32>
    %51 = vector.shape_cast %50 : vector<1x1x128xf32> to vector<1x128xf32>
    %52 = vector.shape_cast %49 : vector<1x128xf32> to vector<1x1x128xf32>
    tpu.vector_store %arg4[%c0_13, %c0_14, %c0_15], %52 {strides = array<i32>} : memref<1x1x128xf32, #tpu.memory_space<vmem>>, vector<1x1x128xf32>,
    return
  }
  func.func @transform_0(%arg0: i32) -> (i32, i32, i32) {
    %c0_i32 = arith.constant 0 : i32
    %c0_i32_0 = arith.constant 0 : i32
    %c0_i32_1 = arith.constant 0 : i32
    return %arg0, %c0_i32, %c0_i32_0 : i32, i32, i32
  }
  func.func @transform_1(%arg0: i32) -> (i32, i32, i32) {
    %c0_i32 = arith.constant 0 : i32
    %c0_i32_0 = arith.constant 0 : i32
    %c0_i32_1 = arith.constant 0 : i32
    return %arg0, %c0_i32, %c0_i32_0 : i32, i32, i32
  }
  func.func @transform_2(%arg0: i32) -> (i32, i32, i32) {
    %c0_i32 = arith.constant 0 : i32
    %c0_i32_0 = arith.constant 0 : i32
    %c0_i32_1 = arith.constant 0 : i32
    return %arg0, %c0_i32, %c0_i32_0 : i32, i32, i32
  }
  func.func @transform_3(%arg0: i32) -> (i32, i32, i32) {
    %c0_i32 = arith.constant 0 : i32
    %c0_i32_0 = arith.constant 0 : i32
    %c0_i32_1 = arith.constant 0 : i32
    return %arg0, %c0_i32, %c0_i32_0 : i32, i32, i32
  }
}

module attributes {stable_mosaic.version = 11 : i64} {
  func.func @det_head_kernel(%arg0: memref<64x64xf32, #tpu.memory_space<vmem>>, %arg1: memref<64x1xf32, #tpu.memory_space<vmem>>, %arg2: memref<64x4xf32, #tpu.memory_space<vmem>>, %arg3: memref<64x32xbf16, #tpu.memory_space<vmem>>, %arg4: memref<1x32xf32, #tpu.memory_space<vmem>>, %arg5: memref<32x32xbf16, #tpu.memory_space<vmem>>, %arg6: memref<1x32xf32, #tpu.memory_space<vmem>>, %arg7: memref<32x20xbf16, #tpu.memory_space<vmem>>, %arg8: memref<1x20xf32, #tpu.memory_space<vmem>>, %arg9: memref<64x128xf32, #tpu.memory_space<vmem>>) attributes {dimension_semantics = [], scalar_prefetch = 0 : i64, scratch_operands = 0 : i64, tpu.core_type = #tpu.core_type<tc>} {
    %c0 = arith.constant 0 : index
    %c0_0 = arith.constant 0 : index
    %0 = vector.load %arg0[%c0, %c0_0] : memref<64x64xf32, #tpu.memory_space<vmem>>, vector<64x64xf32>
    %1 = arith.truncf %0 : vector<64x64xf32> to vector<64x64xbf16>
    %c0_1 = arith.constant 0 : index
    %c0_2 = arith.constant 0 : index
    %2 = vector.load %arg3[%c0_1, %c0_2] : memref<64x32xbf16, #tpu.memory_space<vmem>>, vector<64x32xbf16>
    %cst = arith.constant dense<0.000000e+00> : vector<64x32xf32>
    %3 = tpu.matmul %1, %2, %cst {dimension_numbers = #tpu.dot_dimension_numbers<[1], [0], [0], [1], [0, 0, 1, 1], [], []>} : vector<64x64xbf16>, vector<64x32xbf16>, vector<64x32xf32> -> vector<64x32xf32>
    %c0_3 = arith.constant 0 : index
    %c0_4 = arith.constant 0 : index
    %4 = vector.load %arg4[%c0_3, %c0_4] : memref<1x32xf32, #tpu.memory_space<vmem>>, vector<1x32xf32>
    %5 = vector.broadcast %4 : vector<1x32xf32> to vector<64x32xf32>
    %6 = arith.addf %3, %5 : vector<64x32xf32>
    %cst_5 = arith.constant 0.000000e+00 : f32
    %7 = vector.broadcast %cst_5 : f32 to vector<64x32xf32>
    %8 = arith.maximumf %6, %7 : vector<64x32xf32>
    %9 = arith.truncf %8 : vector<64x32xf32> to vector<64x32xbf16>
    %c0_6 = arith.constant 0 : index
    %c0_7 = arith.constant 0 : index
    %10 = vector.load %arg5[%c0_6, %c0_7] : memref<32x32xbf16, #tpu.memory_space<vmem>>, vector<32x32xbf16>
    %cst_8 = arith.constant dense<0.000000e+00> : vector<64x32xf32>
    %11 = tpu.matmul %9, %10, %cst_8 {dimension_numbers = #tpu.dot_dimension_numbers<[1], [0], [0], [1], [0, 0, 1, 1], [], []>} : vector<64x32xbf16>, vector<32x32xbf16>, vector<64x32xf32> -> vector<64x32xf32>
    %c0_9 = arith.constant 0 : index
    %c0_10 = arith.constant 0 : index
    %12 = vector.load %arg6[%c0_9, %c0_10] : memref<1x32xf32, #tpu.memory_space<vmem>>, vector<1x32xf32>
    %13 = vector.broadcast %12 : vector<1x32xf32> to vector<64x32xf32>
    %14 = arith.addf %11, %13 : vector<64x32xf32>
    %cst_11 = arith.constant 0.000000e+00 : f32
    %15 = vector.broadcast %cst_11 : f32 to vector<64x32xf32>
    %16 = arith.maximumf %14, %15 : vector<64x32xf32>
    %17 = arith.truncf %16 : vector<64x32xf32> to vector<64x32xbf16>
    %c0_12 = arith.constant 0 : index
    %c0_13 = arith.constant 0 : index
    %18 = vector.load %arg7[%c0_12, %c0_13] : memref<32x20xbf16, #tpu.memory_space<vmem>>, vector<32x20xbf16>
    %cst_14 = arith.constant dense<0.000000e+00> : vector<64x20xf32>
    %19 = tpu.matmul %17, %18, %cst_14 {dimension_numbers = #tpu.dot_dimension_numbers<[1], [0], [0], [1], [0, 0, 1, 1], [], []>} : vector<64x32xbf16>, vector<32x20xbf16>, vector<64x20xf32> -> vector<64x20xf32>
    %c0_15 = arith.constant 0 : index
    %c0_16 = arith.constant 0 : index
    %20 = vector.load %arg8[%c0_15, %c0_16] : memref<1x20xf32, #tpu.memory_space<vmem>>, vector<1x20xf32>
    %21 = vector.broadcast %20 : vector<1x20xf32> to vector<64x20xf32>
    %22 = arith.addf %19, %21 : vector<64x20xf32>
    %23 = vector.extract_strided_slice %22 {offsets = [0, 0], sizes = [64, 4], strides = [1, 1]} : vector<64x20xf32> to vector<64x4xf32>
    %cst_17 = arith.constant dense<0xFF800000> : vector<64xf32>
    %24 = vector.multi_reduction <maximumf>, %23, %cst_17 [1] : vector<64x4xf32> to vector<64xf32>
    %25 = vector.shape_cast %24 : vector<64xf32> to vector<64x1xf32>
    %26 = vector.broadcast %25 : vector<64x1xf32> to vector<64x4xf32>
    %27 = arith.subf %23, %26 : vector<64x4xf32>
    %28 = math.exp %27 : vector<64x4xf32>
    %cst_18 = arith.constant dense<0.000000e+00> : vector<64xf32>
    %29 = vector.multi_reduction <add>, %28, %cst_18 [1] : vector<64x4xf32> to vector<64xf32>
    %30 = vector.shape_cast %29 : vector<64xf32> to vector<64x1xf32>
    %31 = vector.broadcast %30 : vector<64x1xf32> to vector<64x4xf32>
    %32 = arith.divf %28, %31 : vector<64x4xf32>
    %c0_19 = arith.constant 0 : index
    %c0_20 = arith.constant 0 : index
    %33 = vector.load %arg1[%c0_19, %c0_20] : memref<64x1xf32, #tpu.memory_space<vmem>>, vector<64x1xf32>
    %34 = vector.broadcast %33 : vector<64x1xf32> to vector<64x4xf32>
    %35 = arith.mulf %32, %34 : vector<64x4xf32>
    %c0_21 = arith.constant 0 : index
    %c0_22 = arith.constant 0 : index
    %36 = vector.load %arg2[%c0_21, %c0_22] : memref<64x4xf32, #tpu.memory_space<vmem>>, vector<64x4xf32>
    %37 = vector.extract_strided_slice %36 {offsets = [0, 2], sizes = [64, 1], strides = [1, 1]} : vector<64x4xf32> to vector<64x1xf32>
    %38 = vector.extract_strided_slice %36 {offsets = [0, 0], sizes = [64, 1], strides = [1, 1]} : vector<64x4xf32> to vector<64x1xf32>
    %39 = arith.subf %37, %38 : vector<64x1xf32>
    %40 = vector.extract_strided_slice %36 {offsets = [0, 3], sizes = [64, 1], strides = [1, 1]} : vector<64x4xf32> to vector<64x1xf32>
    %41 = vector.extract_strided_slice %36 {offsets = [0, 1], sizes = [64, 1], strides = [1, 1]} : vector<64x4xf32> to vector<64x1xf32>
    %42 = arith.subf %40, %41 : vector<64x1xf32>
    %43 = vector.extract_strided_slice %36 {offsets = [0, 0], sizes = [64, 1], strides = [1, 1]} : vector<64x4xf32> to vector<64x1xf32>
    %cst_23 = arith.constant 5.000000e-01 : f32
    %44 = vector.broadcast %cst_23 : f32 to vector<64x1xf32>
    %45 = arith.mulf %44, %39 : vector<64x1xf32>
    %46 = arith.addf %43, %45 : vector<64x1xf32>
    %47 = vector.extract_strided_slice %36 {offsets = [0, 1], sizes = [64, 1], strides = [1, 1]} : vector<64x4xf32> to vector<64x1xf32>
    %cst_24 = arith.constant 5.000000e-01 : f32
    %48 = vector.broadcast %cst_24 : f32 to vector<64x1xf32>
    %49 = arith.mulf %48, %42 : vector<64x1xf32>
    %50 = arith.addf %47, %49 : vector<64x1xf32>
    %51 = vector.extract_strided_slice %22 {offsets = [0, 4], sizes = [64, 4], strides = [1, 1]} : vector<64x20xf32> to vector<64x4xf32>
    %52 = vector.extract_strided_slice %22 {offsets = [0, 8], sizes = [64, 4], strides = [1, 1]} : vector<64x20xf32> to vector<64x4xf32>
    %53 = vector.extract_strided_slice %22 {offsets = [0, 12], sizes = [64, 4], strides = [1, 1]} : vector<64x20xf32> to vector<64x4xf32>
    %54 = vector.extract_strided_slice %22 {offsets = [0, 16], sizes = [64, 4], strides = [1, 1]} : vector<64x20xf32> to vector<64x4xf32>
    %55 = vector.broadcast %39 : vector<64x1xf32> to vector<64x4xf32>
    %56 = arith.mulf %51, %55 : vector<64x4xf32>
    %57 = vector.broadcast %46 : vector<64x1xf32> to vector<64x4xf32>
    %58 = arith.addf %56, %57 : vector<64x4xf32>
    %59 = vector.broadcast %42 : vector<64x1xf32> to vector<64x4xf32>
    %60 = arith.mulf %52, %59 : vector<64x4xf32>
    %61 = vector.broadcast %50 : vector<64x1xf32> to vector<64x4xf32>
    %62 = arith.addf %60, %61 : vector<64x4xf32>
    %63 = math.exp %53 : vector<64x4xf32>
    %64 = vector.broadcast %39 : vector<64x1xf32> to vector<64x4xf32>
    %65 = arith.mulf %63, %64 : vector<64x4xf32>
    %66 = math.exp %54 : vector<64x4xf32>
    %67 = vector.broadcast %42 : vector<64x1xf32> to vector<64x4xf32>
    %68 = arith.mulf %66, %67 : vector<64x4xf32>
    %cst_25 = arith.constant 5.000000e-01 : f32
    %69 = vector.broadcast %cst_25 : f32 to vector<64x4xf32>
    %70 = arith.mulf %69, %65 : vector<64x4xf32>
    %71 = arith.subf %58, %70 : vector<64x4xf32>
    %cst_26 = arith.constant 0.000000e+00 : f32
    %cst_27 = arith.constant 3.200000e+01 : f32
    %72 = vector.broadcast %cst_26 : f32 to vector<64x4xf32>
    %73 = arith.maximumf %72, %71 : vector<64x4xf32>
    %74 = vector.broadcast %cst_27 : f32 to vector<64x4xf32>
    %75 = arith.minimumf %74, %73 : vector<64x4xf32>
    %cst_28 = arith.constant 5.000000e-01 : f32
    %76 = vector.broadcast %cst_28 : f32 to vector<64x4xf32>
    %77 = arith.mulf %76, %68 : vector<64x4xf32>
    %78 = arith.subf %62, %77 : vector<64x4xf32>
    %cst_29 = arith.constant 0.000000e+00 : f32
    %cst_30 = arith.constant 3.200000e+01 : f32
    %79 = vector.broadcast %cst_29 : f32 to vector<64x4xf32>
    %80 = arith.maximumf %79, %78 : vector<64x4xf32>
    %81 = vector.broadcast %cst_30 : f32 to vector<64x4xf32>
    %82 = arith.minimumf %81, %80 : vector<64x4xf32>
    %cst_31 = arith.constant 5.000000e-01 : f32
    %83 = vector.broadcast %cst_31 : f32 to vector<64x4xf32>
    %84 = arith.mulf %83, %65 : vector<64x4xf32>
    %85 = arith.addf %58, %84 : vector<64x4xf32>
    %cst_32 = arith.constant 0.000000e+00 : f32
    %cst_33 = arith.constant 3.200000e+01 : f32
    %86 = vector.broadcast %cst_32 : f32 to vector<64x4xf32>
    %87 = arith.maximumf %86, %85 : vector<64x4xf32>
    %88 = vector.broadcast %cst_33 : f32 to vector<64x4xf32>
    %89 = arith.minimumf %88, %87 : vector<64x4xf32>
    %cst_34 = arith.constant 5.000000e-01 : f32
    %90 = vector.broadcast %cst_34 : f32 to vector<64x4xf32>
    %91 = arith.mulf %90, %68 : vector<64x4xf32>
    %92 = arith.addf %62, %91 : vector<64x4xf32>
    %cst_35 = arith.constant 0.000000e+00 : f32
    %cst_36 = arith.constant 3.200000e+01 : f32
    %93 = vector.broadcast %cst_35 : f32 to vector<64x4xf32>
    %94 = arith.maximumf %93, %92 : vector<64x4xf32>
    %95 = vector.broadcast %cst_36 : f32 to vector<64x4xf32>
    %96 = arith.minimumf %95, %94 : vector<64x4xf32>
    %cst_37 = arith.constant 0.000000e+00 : f32
    %97 = vector.broadcast %cst_37 : f32 to vector<64x108xf32>
    %98 = tpu.concatenate %35, %75, %82, %89, %96, %97 in 1 : vector<64x4xf32>, vector<64x4xf32>, vector<64x4xf32>, vector<64x4xf32>, vector<64x4xf32>, vector<64x108xf32> -> vector<64x128xf32>
    %c0_38 = arith.constant 0 : index
    %c0_39 = arith.constant 0 : index
    %99 = vector.load %arg9[%c0_38, %c0_39] : memref<64x128xf32, #tpu.memory_space<vmem>>, vector<64x128xf32>
    tpu.vector_store %arg9[%c0_38, %c0_39], %98 {strides = array<i32>} : memref<64x128xf32, #tpu.memory_space<vmem>>, vector<64x128xf32>,
    return
  }
}

module attributes {stable_mosaic.version = 11 : i64} {
  func.func @nms_kernel(%arg0: i32, %arg1: memref<1x128x4xf32, #tpu.memory_space<vmem>>, %arg2: memref<1x4x128xf32, #tpu.memory_space<vmem>>, %arg3: memref<1x1x128xf32, #tpu.memory_space<vmem>>, %arg4: memref<1x1x128xf32, #tpu.memory_space<vmem>>, %arg5: memref<128x128xf32, #tpu.memory_space<vmem>>) attributes {dimension_semantics = [#tpu.dimension_semantics<parallel>], iteration_bounds = array<i64: 6>, scalar_prefetch = 0 : i64, scratch_operands = 1 : i64, tpu.core_type = #tpu.core_type<tc>, window_params = [{transform_indices = @transform_0, window_bounds = array<i64: 1, 128, 4>}, {transform_indices = @transform_1, window_bounds = array<i64: 1, 4, 128>}, {transform_indices = @transform_2, window_bounds = array<i64: 1, 1, 128>}, {transform_indices = @transform_3, window_bounds = array<i64: 1, 1, 128>}]} {
    %c0 = arith.constant 0 : index
    %c0_0 = arith.constant 0 : index
    %c0_1 = arith.constant 0 : index
    %0 = vector.load %arg1[%c0, %c0_0, %c0_1] : memref<1x128x4xf32, #tpu.memory_space<vmem>>, vector<1x128x4xf32>
    %1 = vector.shape_cast %0 : vector<1x128x4xf32> to vector<128x4xf32>
    %c0_2 = arith.constant 0 : index
    %c0_3 = arith.constant 0 : index
    %c0_4 = arith.constant 0 : index
    %2 = vector.load %arg2[%c0_2, %c0_3, %c0_4] : memref<1x4x128xf32, #tpu.memory_space<vmem>>, vector<1x4x128xf32>
    %3 = vector.shape_cast %2 : vector<1x4x128xf32> to vector<4x128xf32>
    %4 = vector.extract_strided_slice %1 {offsets = [0, 0], sizes = [128, 1], strides = [1, 1]} : vector<128x4xf32> to vector<128x1xf32>
    %5 = vector.extract_strided_slice %1 {offsets = [0, 1], sizes = [128, 1], strides = [1, 1]} : vector<128x4xf32> to vector<128x1xf32>
    %6 = vector.extract_strided_slice %1 {offsets = [0, 2], sizes = [128, 1], strides = [1, 1]} : vector<128x4xf32> to vector<128x1xf32>
    %7 = vector.extract_strided_slice %1 {offsets = [0, 3], sizes = [128, 1], strides = [1, 1]} : vector<128x4xf32> to vector<128x1xf32>
    %8 = vector.extract_strided_slice %3 {offsets = [0, 0], sizes = [1, 128], strides = [1, 1]} : vector<4x128xf32> to vector<1x128xf32>
    %9 = vector.extract_strided_slice %3 {offsets = [1, 0], sizes = [1, 128], strides = [1, 1]} : vector<4x128xf32> to vector<1x128xf32>
    %10 = vector.extract_strided_slice %3 {offsets = [2, 0], sizes = [1, 128], strides = [1, 1]} : vector<4x128xf32> to vector<1x128xf32>
    %11 = vector.extract_strided_slice %3 {offsets = [3, 0], sizes = [1, 128], strides = [1, 1]} : vector<4x128xf32> to vector<1x128xf32>
    %12 = arith.subf %6, %4 : vector<128x1xf32>
    %13 = arith.subf %7, %5 : vector<128x1xf32>
    %14 = arith.mulf %12, %13 : vector<128x1xf32>
    %15 = arith.subf %10, %8 : vector<1x128xf32>
    %16 = arith.subf %11, %9 : vector<1x128xf32>
    %17 = arith.mulf %15, %16 : vector<1x128xf32>
    %18 = vector.broadcast %6 : vector<128x1xf32> to vector<128x128xf32>
    %19 = vector.broadcast %10 : vector<1x128xf32> to vector<128x128xf32>
    %20 = arith.minimumf %18, %19 : vector<128x128xf32>
    %21 = vector.broadcast %4 : vector<128x1xf32> to vector<128x128xf32>
    %22 = vector.broadcast %8 : vector<1x128xf32> to vector<128x128xf32>
    %23 = arith.maximumf %21, %22 : vector<128x128xf32>
    %24 = arith.subf %20, %23 : vector<128x128xf32>
    %cst = arith.constant 0.000000e+00 : f32
    %25 = vector.broadcast %cst : f32 to vector<128x128xf32>
    %26 = arith.maximumf %24, %25 : vector<128x128xf32>
    %27 = vector.broadcast %7 : vector<128x1xf32> to vector<128x128xf32>
    %28 = vector.broadcast %11 : vector<1x128xf32> to vector<128x128xf32>
    %29 = arith.minimumf %27, %28 : vector<128x128xf32>
    %30 = vector.broadcast %5 : vector<128x1xf32> to vector<128x128xf32>
    %31 = vector.broadcast %9 : vector<1x128xf32> to vector<128x128xf32>
    %32 = arith.maximumf %30, %31 : vector<128x128xf32>
    %33 = arith.subf %29, %32 : vector<128x128xf32>
    %cst_5 = arith.constant 0.000000e+00 : f32
    %34 = vector.broadcast %cst_5 : f32 to vector<128x128xf32>
    %35 = arith.maximumf %33, %34 : vector<128x128xf32>
    %36 = arith.mulf %26, %35 : vector<128x128xf32>
    %37 = vector.broadcast %14 : vector<128x1xf32> to vector<128x128xf32>
    %38 = vector.broadcast %17 : vector<1x128xf32> to vector<128x128xf32>
    %39 = arith.addf %37, %38 : vector<128x128xf32>
    %40 = arith.subf %39, %36 : vector<128x128xf32>
    %cst_6 = arith.constant 9.99999971E-10 : f32
    %41 = vector.broadcast %cst_6 : f32 to vector<128x128xf32>
    %42 = arith.maximumf %40, %41 : vector<128x128xf32>
    %43 = arith.divf %36, %42 : vector<128x128xf32>
    %c0_7 = arith.constant 0 : index
    %c0_8 = arith.constant 0 : index
    %44 = vector.load %arg5[%c0_7, %c0_8] : memref<128x128xf32, #tpu.memory_space<vmem>>, vector<128x128xf32>
    tpu.vector_store %arg5[%c0_7, %c0_8], %43 {strides = array<i32>} : memref<128x128xf32, #tpu.memory_space<vmem>>, vector<128x128xf32>,
    %45 = tpu.iota {dimensions = array<i32: 1>} : vector<1x128xi32>
    %c0_9 = arith.constant 0 : index
    %c0_10 = arith.constant 0 : index
    %c0_11 = arith.constant 0 : index
    %46 = vector.load %arg3[%c0_9, %c0_10, %c0_11] : memref<1x1x128xf32, #tpu.memory_space<vmem>>, vector<1x1x128xf32>
    %47 = vector.shape_cast %46 : vector<1x1x128xf32> to vector<1x128xf32>
    %c0_i32 = arith.constant 0 : i32
    %c128_i32 = arith.constant 128 : i32
    %48 = arith.addi %c0_i32, %c128_i32 : i32
    %c1_i32 = arith.constant 1 : i32
    %49 = scf.for %arg6 = %c0_i32 to %48 step %c1_i32 iter_args(%arg7 = %47) -> (vector<1x128xf32>)  : i32 {
      %53 = arith.index_cast %arg6 : i32 to index
      %c0_16 = arith.constant 0 : index
      %54 = vector.load %arg5[%53, %c0_16] : memref<128x128xf32, #tpu.memory_space<vmem>>, vector<1x128xf32>
      %55 = vector.broadcast %arg6 : i32 to vector<1x128xi32>
      %56 = arith.cmpi eq, %45, %55 : vector<1x128xi32>
      %57 = arith.extui %56 : vector<1x128xi1> to vector<1x128xi32>
      %58 = arith.sitofp %57 : vector<1x128xi32> to vector<1x128xf32>
      %59 = arith.mulf %arg7, %58 : vector<1x128xf32>
      %cst_17 = arith.constant dense<0.000000e+00> : vector<1xf32>
      %60 = vector.multi_reduction <add>, %59, %cst_17 [1] : vector<1x128xf32> to vector<1xf32>
      %61 = vector.shape_cast %60 : vector<1xf32> to vector<1x1xf32>
      %cst_18 = arith.constant 5.000000e-01 : f32
      %62 = vector.broadcast %cst_18 : f32 to vector<1x128xf32>
      %63 = arith.cmpf ogt, %54, %62 : vector<1x128xf32>
      %64 = vector.broadcast %arg6 : i32 to vector<1x128xi32>
      %65 = arith.cmpi sgt, %45, %64 : vector<1x128xi32>
      %66 = arith.andi %63, %65 : vector<1x128xi1>
      %cst_19 = arith.constant 1.000000e+00 : f32
      %cst_20 = arith.constant 0.000000e+00 : f32
      %67 = vector.broadcast %cst_19 : f32 to vector<1x128xf32>
      %68 = vector.broadcast %cst_20 : f32 to vector<1x128xf32>
      %69 = arith.select %66, %67, %68 : vector<1x128xi1>, vector<1x128xf32>
      %70 = vector.broadcast %61 : vector<1x1xf32> to vector<1x128xf32>
      %71 = arith.mulf %69, %70 : vector<1x128xf32>
      %cst_21 = arith.constant 1.000000e+00 : f32
      %72 = vector.broadcast %cst_21 : f32 to vector<1x128xf32>
      %73 = arith.subf %72, %71 : vector<1x128xf32>
      %74 = arith.mulf %arg7, %73 : vector<1x128xf32>
      scf.yield %74 : vector<1x128xf32>
    }
    %c128_i32_12 = arith.constant 128 : i32
    %c0_13 = arith.constant 0 : index
    %c0_14 = arith.constant 0 : index
    %c0_15 = arith.constant 0 : index
    %50 = vector.load %arg4[%c0_13, %c0_14, %c0_15] : memref<1x1x128xf32, #tpu.memory_space<vmem>>, vector<1x1x128xf32>
    %51 = vector.shape_cast %50 : vector<1x1x128xf32> to vector<1x128xf32>
    %52 = vector.shape_cast %49 : vector<1x128xf32> to vector<1x1x128xf32>
    tpu.vector_store %arg4[%c0_13, %c0_14, %c0_15], %52 {strides = array<i32>} : memref<1x1x128xf32, #tpu.memory_space<vmem>>, vector<1x1x128xf32>,
    return
  }
  func.func @transform_0(%arg0: i32) -> (i32, i32, i32) {
    %c0_i32 = arith.constant 0 : i32
    %c0_i32_0 = arith.constant 0 : i32
    %c0_i32_1 = arith.constant 0 : i32
    return %arg0, %c0_i32, %c0_i32_0 : i32, i32, i32
  }
  func.func @transform_1(%arg0: i32) -> (i32, i32, i32) {
    %c0_i32 = arith.constant 0 : i32
    %c0_i32_0 = arith.constant 0 : i32
    %c0_i32_1 = arith.constant 0 : i32
    return %arg0, %c0_i32, %c0_i32_0 : i32, i32, i32
  }
  func.func @transform_2(%arg0: i32) -> (i32, i32, i32) {
    %c0_i32 = arith.constant 0 : i32
    %c0_i32_0 = arith.constant 0 : i32
    %c0_i32_1 = arith.constant 0 : i32
    return %arg0, %c0_i32, %c0_i32_0 : i32, i32, i32
  }
  func.func @transform_3(%arg0: i32) -> (i32, i32, i32) {
    %c0_i32 = arith.constant 0 : i32
    %c0_i32_0 = arith.constant 0 : i32
    %c0_i32_1 = arith.constant 0 : i32
    return %arg0, %c0_i32, %c0_i32_0 : i32, i32, i32
  }
}

</mosaic_0001>

<llo_original>
// kernel: _forward_device.6
$region0: #{_forward_device.6}
  #allocation0 [shape = 'u32[]', space=smem, size = 0x4, offset = 0x4, fixed_abs, tag = 'smem constant byte address 0x4 - core index']
  #allocation1 [shape = 'u32[72,128]{1,0:T(1,128)}', space=vmem, size = 0x9000, scoped, tag = 'internal scratch']
  %s0 = inlined_call_operand.vmem [shape: f32[4,384], index: 0, kind: input, shape index: {}]
  %s1 = inlined_call_operand.vmem [shape: f32[2,2,384], index: 1, kind: input, shape index: {}]
  %s2 = inlined_call_operand.vmem [shape: f32[2,4,384], index: 2, kind: input, shape index: {}]
  %s3 = inlined_call_operand.vmem [shape: f32[2,8,384], index: 3, kind: output, shape index: {}]
  %s4 = sld [smem:[#allocation0]]
  $region45: #{_forward_device.6} parent=0
    _
  %s6 = ssub.s32 1, %s4
  %s7 = scalar_select 0, %s6, %s4
  loop: start=0, step=1, limit=4
  $region2: #{_forward_device.6} parent=0 // loop_pre_header
    _
  $region3: #{_forward_device.6} parent=0 // loop_header
    %s9 = sphi 0, %s13
    %p10 = scmp.ge.s32.totalorder %s9, 4
    %s17 = sphi 0, %s17
    %s19 = sphi 0, %s17
    %s20 = sphi 0, %s19
    %s34 = sphi 0, %s20
    %s40 = sphi 0, %s42
    %s43 = sphi 0, %s40
    %s44 = sphi 0, %s43
    %s60 = sphi 0, %s44
    %s66 = sphi 0, %s68
    %s69 = sphi 0, %s66
    %s70 = sphi 0, %s69
    %s86 = sphi 0, %s70
    %s92 = sphi 0, %s94
    %s95 = sphi 0, %s92
    %s96 = sphi 0, %s95
    %s112 = sphi 0, %s96
  $region4: #{_forward_device.6} parent=0 // loop_header_branch
    %12 = sbr.rel (%p10) target = $region8
  $region5: #{_forward_device.6} parent=0 // loop_body
    %s14 = ssub.s32 %s9, 1
    %s15 = ssub.s32 %s9, 2
    %s16 = sadd.s32 %s9, 1
    %s18 = sadd.s32 %s17, 1
    %p21 = scmp.eq.s32.totalorder %s9, 1
    %p22 = scmp.ne.s32.totalorder %s17, %s19
    %p23 = scmp.eq.s32.totalorder %s9, 0
    %p24 = por %p22, %p23
    %p25 = scmp.ne.s32.totalorder %s17, %s19
    %p26 = scmp.eq.s32.totalorder %s14, 1
    %p27 = por %p25, %p26
    %p28 = scmp.ne.s32.totalorder %s19, %s20
    %p29 = scmp.eq.s32.totalorder %s14, 0
    %p30 = por %p28, %p29
    %p31 = scmp.ne.s32.totalorder %s19, %s20
    %p32 = scmp.eq.s32.totalorder %s15, 1
    %p33 = por %p31, %p32
    %p35 = scmp.ne.s32.totalorder %s20, %s34
    %p36 = scmp.eq.s32.totalorder %s15, 0
    %p37 = por %p35, %p36
    %s38 = ssub.s32 %s9, %s16
    %p39 = scmp.eq.s32.totalorder %s38, 0
    %s41 = sadd.s32 %s40, 1
    %s42 = scalar_select %p39, %s40, %s41
    %p45 = pneg %p39
    %p46 = scmp.eq.s32.totalorder %s9, 1
    %p47 = por %p45, %p46
    %p48 = scmp.ne.s32.totalorder %s40, %s43
    %p49 = scmp.eq.s32.totalorder %s9, 0
    %p50 = por %p48, %p49
    %p51 = scmp.ne.s32.totalorder %s40, %s43
    %p52 = scmp.eq.s32.totalorder %s14, 1
    %p53 = por %p51, %p52
    %p54 = scmp.ne.s32.totalorder %s43, %s44
    %p55 = scmp.eq.s32.totalorder %s14, 0
    %p56 = por %p54, %p55
    %p57 = scmp.ne.s32.totalorder %s43, %s44
    %p58 = scmp.eq.s32.totalorder %s15, 1
    %p59 = por %p57, %p58
    %p61 = scmp.ne.s32.totalorder %s44, %s60
    %p62 = scmp.eq.s32.totalorder %s15, 0
    %p63 = por %p61, %p62
    %s64 = ssub.s32 %s9, %s16
    %p65 = scmp.eq.s32.totalorder %s64, 0
    %s67 = sadd.s32 %s66, 1
    %s68 = scalar_select %p65, %s66, %s67
    %p71 = pneg %p65
    %p72 = scmp.eq.s32.totalorder %s9, 1
    %p73 = por %p71, %p72
    %p74 = scmp.ne.s32.totalorder %s66, %s69
    %p75 = scmp.eq.s32.totalorder %s9, 0
    %p76 = por %p74, %p75
    %p77 = scmp.ne.s32.totalorder %s66, %s69
    %p78 = scmp.eq.s32.totalorder %s14, 1
    %p79 = por %p77, %p78
    %p80 = scmp.ne.s32.totalorder %s69, %s70
    %p81 = scmp.eq.s32.totalorder %s14, 0
    %p82 = por %p80, %p81
    %p83 = scmp.ne.s32.totalorder %s69, %s70
    %p84 = scmp.eq.s32.totalorder %s15, 1
    %p85 = por %p83, %p84
    %p87 = scmp.ne.s32.totalorder %s70, %s86
    %p88 = scmp.eq.s32.totalorder %s15, 0
    %p89 = por %p87, %p88
    %s90 = ssub.s32 %s9, %s16
    %p91 = scmp.eq.s32.totalorder %s90, 0
    %s93 = sadd.s32 %s92, 1
    %s94 = scalar_select %p91, %s92, %s93
    %p97 = pneg %p91
    %p98 = scmp.eq.s32.totalorder %s9, 1
    %p99 = por %p97, %p98
    %p100 = scmp.ne.s32.totalorder %s92, %s95
    %p101 = scmp.eq.s32.totalorder %s9, 0
    %p102 = por %p100, %p101
    %p103 = scmp.ne.s32.totalorder %s92, %s95
    %p104 = scmp.eq.s32.totalorder %s14, 1
    %p105 = por %p103, %p104
    %p106 = scmp.ne.s32.totalorder %s95, %s96
    %p107 = scmp.eq.s32.totalorder %s14, 0
    %p108 = por %p106, %p107
    %p109 = scmp.ne.s32.totalorder %s95, %s96
    %p110 = scmp.eq.s32.totalorder %s15, 1
    %p111 = por %p109, %p110
    %p113 = scmp.ne.s32.totalorder %s96, %s112
    %p114 = scmp.eq.s32.totalorder %s15, 0
    %p115 = por %p113, %p114
    %p116 = scmp.le.s32.totalorder 1, %s9
    %p117 = scmp.lt.s32.totalorder %s9, 3
    %p118 = pnand %p116, %p117
    %p119 = pneg %p118
    // Predicated region
    $region9: #{_forward_device.6} parent=5 // pred_check
      _
    $region10: #{_forward_device.6} parent=5 // pred_check_branch
      %121 = sbr.rel (%p118) target = $region12
    $region11: #{_forward_device.6} parent=5 // pred_region
      %s122 = ssub.s32 %s9, 1
      // Predicated region
      $region13: #{_forward_device.6} parent=11 // pred_check
        %p123 = pneg %p30
      $region14: #{_forward_device.6} parent=11 // pred_check_branch
        %125 = sbr.rel (%p123) target = $region16
      $region15: #{_forward_device.6} parent=11 // pred_region
        _
      $region16: #{_forward_device.6} parent=11 // pred_fallthru
        _
    $region12: #{_forward_device.6} parent=5 // pred_fallthru
      _
    %p126 = scmp.lt.s32.totalorder %s9, 2
    // Predicated region
    $region17: #{_forward_device.6} parent=5 // pred_check
      %p127 = pneg %p126
    $region18: #{_forward_device.6} parent=5 // pred_check_branch
      %129 = sbr.rel (%p127) target = $region20
    $region19: #{_forward_device.6} parent=5 // pred_region
      // Predicated region
      $region21: #{_forward_device.6} parent=19 // pred_check
        %p130 = pneg %p50
      $region22: #{_forward_device.6} parent=19 // pred_check_branch
        %132 = sbr.rel (%p130) target = $region24
      $region23: #{_forward_device.6} parent=19 // pred_region
        %p133 = scmp.lt.s32.totalorder %s9, 1
        %s134 = scalar_select %p133, %s9, 1
        %s135 = smul.addr %s134, 3
        %s136 = smul.addr %s135, 2
        %s137 = scalar_lea.vmem %s1, %s136
      $region24: #{_forward_device.6} parent=19 // pred_fallthru
        _
      // Predicated region
      $region25: #{_forward_device.6} parent=19 // pred_check
        %p138 = pneg %p76
      $region26: #{_forward_device.6} parent=19 // pred_check_branch
        %140 = sbr.rel (%p138) target = $region28
      $region27: #{_forward_device.6} parent=19 // pred_region
        %p141 = scmp.lt.s32.totalorder %s9, 1
        %s142 = scalar_select %p141, %s9, 1
        %s143 = smul.addr %s142, 3
        %s144 = smul.addr %s143, 4
        %s145 = scalar_lea.vmem %s2, %s144
      $region28: #{_forward_device.6} parent=19 // pred_fallthru
        _
    $region20: #{_forward_device.6} parent=5 // pred_fallthru
      _
    %p146 = scmp.le.s32.totalorder 1, %s9
    %p147 = scmp.lt.s32.totalorder %s9, 3
    %p148 = pnand %p146, %p147
    %p149 = pneg %p148
    // Predicated region
    $region29: #{_forward_device.6} parent=5 // pred_check
      _
    $region30: #{_forward_device.6} parent=5 // pred_check_branch
      %151 = sbr.rel (%p148) target = $region32
    $region31: #{_forward_device.6} parent=5 // pred_region
      %s152 = ssub.s32 %s9, 1
      %p153 = pneg %p30
      %p154 = pneg %p27
      %p155 = scmp.lt.s32.totalorder %s14, 1
      %s156 = scalar_select %p155, %s14, 1
      %s157 = smul.addr %s156, 3
      %s158 = smul.addr %s157, 2
      %s159 = scalar_lea.vmem %s1, %s158
      %p160 = pneg %p56
      %p161 = pneg %p53
      %p162 = scmp.lt.s32.totalorder %s14, 1
      %s163 = scalar_select %p162, %s14, 1
      %s164 = smul.addr %s163, 3
      %s165 = smul.addr %s164, 4
      %s166 = scalar_lea.vmem %s2, %s165
      %p167 = pneg %p82
      %p168 = pneg %p79
      %p169 = pneg %p108
      %p170 = pneg %p105
      %p171 = scmp.lt.s32.totalorder %s14, 1
      %s172 = scalar_select %p171, %s14, 1
      %s173 = smul.addr %s172, 3
      %s174 = smul.addr %s173, 8
      %s175 = scalar_lea.vmem %s3, %s174
      %p176 = scmp.lt.s32.totalorder %s14, 1
      %s177 = scalar_select %p176, %s14, 1
      %s178 = smul.addr %s177, 3
      %s179 = smul.addr %s178, 2
      %s180 = scalar_lea.vmem %s1, %s179
      %p181 = scmp.lt.s32.totalorder %s14, 1
      %s182 = scalar_select %p181, %s14, 1
      %s183 = smul.addr %s182, 3
      %s184 = smul.addr %s183, 4
      %s185 = scalar_lea.vmem %s2, %s184
      %p186 = scmp.lt.s32.totalorder %s14, 1
      %s187 = scalar_select %p186, %s14, 1
      %s188 = smul.addr %s187, 3
      %s189 = smul.addr %s188, 8
      %s190 = scalar_lea.vmem %s3, %s189
      %v191 = vld [vmem:[%s0] sm:$0xff]
      %v192 = vld [vmem:[%s0 + $0x8] sm:$0xf]
      %v193 = vld [vmem:[%s180] sm:$0x3f]
      %v194 = vld [vmem:[%s185] sm:$0xff]
      %v195 = vld [vmem:[%s185 + $0x8] sm:$0xf]
      %v198 = vrot.slane %v191, 6
      %v199 = vrot.slane %v192, 6
      %v202 = vsub.f32 %v191, %v198
      %v203 = vsub.f32 %v192, %v199
      %v204 = vmul.f32 %v202, 0.5
      %v205 = vmul.f32 %v203, 0.5
      %v208 = vrot.slane %v204, 6
      %v209 = vrot.slane %v208, 4
      %v210 = vrot.slane %v205, 6
      %v211 = vrot.slane %v210, 4
      %v214 = vadd.f32 %v191, %v209
      %v215 = vadd.f32 %v192, %v211
      %v218 = vrot.slane %v202, 6
      %v219 = vrot.slane %v218, 4
      %v220 = vrot.slane %v203, 6
      %v221 = vrot.slane %v220, 4
      %v224 = vmul.f32 %v194, %v219
      %v225 = vmul.f32 %v195, %v221
      %v226 = vadd.f32 %v224, %v214
      %v227 = vadd.f32 %v225, %v215
      %v228 = vmul.f32 %v194, 1.442695
      %v229 = vpow.pop %v228
      %v230 = vmul.f32 %v195, 1.442695
      %v231 = vpow.pop %v230
      %v232 = vmul.f32 %v229, %v202
      %v233 = vmul.f32 %v231, %v203
      %v234 = vmul.f32 %v232, 0.5
      %v235 = vmul.f32 %v233, 0.5
      %v238 = vrot.slane %v234, 6
      %v239 = vrot.slane %v238, 4
      %v240 = vrot.slane %v235, 6
      %v241 = vrot.slane %v240, 4
      %v244 = vsub.f32 %v226, %v239
      %v245 = vsub.f32 %v227, %v241
      %v246 = vmax.f32 %v244, 0.0
      %v247 = vmax.f32 %v245, 0.0
      %v248 = vmin.f32 %v246, 32.0
      %v249 = vmin.f32 %v247, 32.0
      %v250 = vadd.f32 %v226, %v239
      %v251 = vadd.f32 %v227, %v241
      %v252 = vmax.f32 %v250, 0.0
      %v253 = vmax.f32 %v251, 0.0
      %v254 = vmin.f32 %v252, 32.0
      %v255 = vmin.f32 %v253, 32.0
      %v257 = vrot.slane %v193, 7
      %v258 = vrot.slane %v257, 2
      %v260 = vsub.f32 %v193, %v258
      %v261 = vmul.f32 %v260, 1.442695
      %v262 = vpow.pop %v261
      %v263 = vadd.f32 %v262, 1.0
      %v264 = vrcp.pop %v263
      %v265 = vmul.f32 %v263, %v264
      %v266 = vsub.f32 1.0, %v265
      %v267 = vmul.f32 %v264, %v266
      %v268 = vadd.f32 %v264, %v267
      %vm269 = vweird.f32 %v263
      %vm270 = vweird.f32 %v264
      %vm271 = vmor %vm269, %vm270
      %v272 = vsel %vm271, %v264, %v268
      %v273 = vand.u32 2147483647, %v263
      %vm274 = vcmp.eq.f32.partialorder %v273, 8.507059e+37
      %v275 = vand.u32 %v263, 2147483648
      %v276 = vor.u32 1.1754944e-38, %v275
      %v277 = vsel %vm274, %v276, %v272
      %v278 = vmul.f32 1.0, %v277
      %v279 = vsub.f32 %v254, %v248
      %v280 = vsub.f32 %v255, %v249
      %vm281 = vcmp.ge.f32.partialorder %v279, 2.0
      %vm282 = vcmp.ge.f32.partialorder %v280, 2.0
      %v283 = vsel %vm281, 1, 0
      %v284 = vsel %vm282, 1, 0
      %v285 = vrot.slane %v283, 5
      %v286 = vrot.slane %v285, 4
      %v287 = vrot.slane %v284, 5
      %v288 = vrot.slane %v287, 4
      %vm289 = vcmp.ne.s32.totalorder %v286, 0
      %vm290 = vcmp.ne.s32.totalorder %v288, 0
      %vm291 = vmand %vm281, %vm289
      %vm292 = vmand %vm282, %vm290
      %v295 = vunpack.c.l.s4 572653568
      %v296 = vunpack.c.0.s8 %v295
      %v297 = vperm.slane %v278, %v296
      %v299 = vunpack.c.l.s4 1717978180
      %v300 = vunpack.c.0.s8 %v299
      %v301 = vperm.slane %v278, %v300
      %v304 = vsel %vm291, %v297, -1.0
      %v305 = vsel %vm292, %v301, -1.0
      %v308 = vperm.slane %v248, 0
      %v309 = vperm.slane %v248, 4
      %v310 = vperm.slane %v249, 0
      %v314 = vperm.slane %v248, 1
      %v315 = vperm.slane %v248, 5
      %v316 = vperm.slane %v249, 1
      %v322 = vperm.slane %v254, 0
      %v323 = vperm.slane %v254, 4
      %v324 = vperm.slane %v255, 0
      %v328 = vperm.slane %v254, 1
      %v329 = vperm.slane %v254, 5
      %v330 = vperm.slane %v255, 1
      %v336 = vperm.slane %v304, 0
      %v337 = vperm.slane %v304, 4
      %v338 = vperm.slane %v305, 0
      %vm342 = vcmask 1040384
      %v343 = vsel %vm342, %v308, %v314
      %v344 = vsel %vm342, %v309, %v315
      %v345 = vsel %vm342, %v310, %v316
      %vm346 = vcmask 1041408
      %v347 = vsel %vm346, %v343, %v322
      %v348 = vsel %vm346, %v344, %v323
      %v349 = vsel %vm346, %v345, %v324
      %vm350 = vcmask 1042432
      %v351 = vsel %vm350, %v347, %v328
      %v352 = vsel %vm350, %v348, %v329
      %v353 = vsel %vm350, %v349, %v330
      %vm354 = vcmask 1043456
      %v355 = vsel %vm354, %v351, %v336
      %v356 = vsel %vm354, %v352, %v337
      %v357 = vsel %vm354, %v353, %v338
      %vm358 = vcmask 1044480
      %v359 = vsel %vm358, %v355, 0.0
      %v360 = vsel %vm358, %v356, 0.0
      %v361 = vsel %vm358, %v357, 0.0
      %362 = vst [vmem:[%s190] sm:$0xff] %v359
      %363 = vst [vmem:[%s190 + $0x8] sm:$0xff] %v360
      %364 = vst [vmem:[%s190 + $0x10] sm:$0xff] %v361
      %p365 = scmp.lt.s32.totalorder %s14, 1
      %s366 = scalar_select %p365, %s14, 1
      %s367 = smul.addr %s366, 3
      %s368 = smul.addr %s367, 8
      %s369 = scalar_lea.vmem %s3, %s368
      // Predicated region
      $region33: #{_forward_device.6} parent=31 // pred_check
        %p370 = pneg %p105
      $region34: #{_forward_device.6} parent=31 // pred_check_branch
        %372 = sbr.rel (%p370) target = $region36
      $region35: #{_forward_device.6} parent=31 // pred_region
        _
      $region36: #{_forward_device.6} parent=31 // pred_fallthru
        _
    $region32: #{_forward_device.6} parent=5 // pred_fallthru
      _
    %p373 = scmp.le.s32.totalorder 2, %s9
    // Predicated region
    $region37: #{_forward_device.6} parent=5 // pred_check
      %p374 = pneg %p373
    $region38: #{_forward_device.6} parent=5 // pred_check_branch
      %376 = sbr.rel (%p374) target = $region40
    $region39: #{_forward_device.6} parent=5 // pred_region
      %s377 = ssub.s32 %s9, 2
      // Predicated region
      $region41: #{_forward_device.6} parent=39 // pred_check
        %p378 = pneg %p111
      $region42: #{_forward_device.6} parent=39 // pred_check_branch
        %380 = sbr.rel (%p378) target = $region44
      $region43: #{_forward_device.6} parent=39 // pred_region
        %p381 = scmp.lt.s32.totalorder %s15, 1
        %s382 = scalar_select %p381, %s15, 1
        %s383 = smul.addr %s382, 3
        %s384 = smul.addr %s383, 8
        %s385 = scalar_lea.vmem %s3, %s384
      $region44: #{_forward_device.6} parent=39 // pred_fallthru
        _
    $region40: #{_forward_device.6} parent=5 // pred_fallthru
      _
  $region6: #{_forward_device.6} parent=0 // loop_footer
    %s13 = sadd.s32 1, %s9
  $region7: #{_forward_device.6} parent=0 // loop_footer_branch
    %8 = sbr.rel target = $region3
  $region8: #{_forward_device.6} parent=0 // loop_exit
    _

// kernel: _forward_device.5
$region0: #{_forward_device.5}
  #allocation0 [shape = 'u32[]', space=smem, size = 0x4, offset = 0x4, fixed_abs, tag = 'smem constant byte address 0x4 - core index']
  #allocation1 [shape = 'u32[72,128]{1,0:T(1,128)}', space=vmem, size = 0x9000, scoped, tag = 'internal scratch']
  #allocation2 [shape = 'f32[18,32,8]{2,1,0:T(8,128)}', space=vmem, size = 0x48000, scoped, tag = 'scratch operand']
  #allocation3 [shape = 'f32[10,24,16]{2,1,0:T(8,128)}', space=vmem, size = 0x1e000, scoped, tag = 'scratch operand']
  %s0 = inlined_call_operand.vmem [shape: bf16[2,256,108], index: 0, kind: input, shape index: {}]
  %s1 = inlined_call_operand.vmem [shape: bf16[108,32], index: 1, kind: input, shape index: {}]
  %s2 = inlined_call_operand.vmem [shape: f32[1,32], index: 2, kind: input, shape index: {}]
  %s3 = inlined_call_operand.vmem [shape: bf16[72,16], index: 3, kind: input, shape index: {}]
  %s4 = inlined_call_operand.vmem [shape: f32[1,16], index: 4, kind: input, shape index: {}]
  %s5 = inlined_call_operand.vmem [shape: bf16[144,16], index: 5, kind: input, shape index: {}]
  %s6 = inlined_call_operand.vmem [shape: f32[1,16], index: 6, kind: input, shape index: {}]
  %s7 = inlined_call_operand.vmem [shape: bf16[16,128], index: 7, kind: input, shape index: {}]
  %s8 = inlined_call_operand.vmem [shape: f32[1,128], index: 8, kind: input, shape index: {}]
  %s9 = inlined_call_operand.vmem [shape: f32[2,64,16], index: 9, kind: output, shape index: {0}]
  %s10 = inlined_call_operand.vmem [shape: f32[2,64,128], index: 10, kind: output, shape index: {1}]
  %11 = xla_tuple %s9, %s10
  %s12 = sld [smem:[#allocation0]]
  $region77: #{_forward_device.5} parent=0
    _
  %s14 = ssub.s32 1, %s12
  %s15 = scalar_select 0, %s14, %s12
  loop: start=0, step=1, limit=4
  $region2: #{_forward_device.5} parent=0 // loop_pre_header
    _
  $region3: #{_forward_device.5} parent=0 // loop_header
    %s17 = sphi 0, %s21
    %p18 = scmp.ge.s32.totalorder %s17, 4
    %s27 = sphi 0, %s29
    %s30 = sphi 0, %s27
    %s31 = sphi 0, %s30
    %s47 = sphi 0, %s31
    %s51 = sphi 0, %s51
    %s53 = sphi 0, %s51
    %s54 = sphi 0, %s53
    %s68 = sphi 0, %s54
    %s72 = sphi 0, %s72
    %s74 = sphi 0, %s72
    %s75 = sphi 0, %s74
    %s89 = sphi 0, %s75
    %s93 = sphi 0, %s93
    %s95 = sphi 0, %s93
    %s96 = sphi 0, %s95
    %s110 = sphi 0, %s96
    %s114 = sphi 0, %s114
    %s116 = sphi 0, %s114
    %s117 = sphi 0, %s116
    %s131 = sphi 0, %s117
    %s135 = sphi 0, %s135
    %s137 = sphi 0, %s135
    %s138 = sphi 0, %s137
    %s152 = sphi 0, %s138
    %s156 = sphi 0, %s156
    %s158 = sphi 0, %s156
    %s159 = sphi 0, %s158
    %s173 = sphi 0, %s159
    %s177 = sphi 0, %s177
    %s179 = sphi 0, %s177
    %s180 = sphi 0, %s179
    %s194 = sphi 0, %s180
    %s198 = sphi 0, %s198
    %s200 = sphi 0, %s198
    %s201 = sphi 0, %s200
    %s215 = sphi 0, %s201
    %s221 = sphi 0, %s223
    %s224 = sphi 0, %s221
    %s225 = sphi 0, %s224
    %s241 = sphi 0, %s225
    %s247 = sphi 0, %s249
    %s250 = sphi 0, %s247
    %s251 = sphi 0, %s250
    %s267 = sphi 0, %s251
  $region4: #{_forward_device.5} parent=0 // loop_header_branch
    %20 = sbr.rel (%p18) target = $region8
  $region5: #{_forward_device.5} parent=0 // loop_body
    %s22 = ssub.s32 %s17, 1
    %s23 = ssub.s32 %s17, 2
    %s24 = sadd.s32 %s17, 1
    %s25 = ssub.s32 %s17, %s24
    %p26 = scmp.eq.s32.totalorder %s25, 0
    %s28 = sadd.s32 %s27, 1
    %s29 = scalar_select %p26, %s27, %s28
    %p32 = pneg %p26
    %p33 = scmp.eq.s32.totalorder %s17, 1
    %p34 = por %p32, %p33
    %p35 = scmp.ne.s32.totalorder %s27, %s30
    %p36 = scmp.eq.s32.totalorder %s17, 0
    %p37 = por %p35, %p36
    %p38 = scmp.ne.s32.totalorder %s27, %s30
    %p39 = scmp.eq.s32.totalorder %s22, 1
    %p40 = por %p38, %p39
    %p41 = scmp.ne.s32.totalorder %s30, %s31
    %p42 = scmp.eq.s32.totalorder %s22, 0
    %p43 = por %p41, %p42
    %p44 = scmp.ne.s32.totalorder %s30, %s31
    %p45 = scmp.eq.s32.totalorder %s23, 1
    %p46 = por %p44, %p45
    %p48 = scmp.ne.s32.totalorder %s31, %s47
    %p49 = scmp.eq.s32.totalorder %s23, 0
    %p50 = por %p48, %p49
    %s52 = sadd.s32 %s51, 1
    %p55 = scmp.eq.s32.totalorder %s17, 1
    %p56 = scmp.ne.s32.totalorder %s51, %s53
    %p57 = scmp.eq.s32.totalorder %s17, 0
    %p58 = por %p56, %p57
    %p59 = scmp.ne.s32.totalorder %s51, %s53
    %p60 = scmp.eq.s32.totalorder %s22, 1
    %p61 = por %p59, %p60
    %p62 = scmp.ne.s32.totalorder %s53, %s54
    %p63 = scmp.eq.s32.totalorder %s22, 0
    %p64 = por %p62, %p63
    %p65 = scmp.ne.s32.totalorder %s53, %s54
    %p66 = scmp.eq.s32.totalorder %s23, 1
    %p67 = por %p65, %p66
    %p69 = scmp.ne.s32.totalorder %s54, %s68
    %p70 = scmp.eq.s32.totalorder %s23, 0
    %p71 = por %p69, %p70
    %s73 = sadd.s32 %s72, 1
    %p76 = scmp.eq.s32.totalorder %s17, 1
    %p77 = scmp.ne.s32.totalorder %s72, %s74
    %p78 = scmp.eq.s32.totalorder %s17, 0
    %p79 = por %p77, %p78
    %p80 = scmp.ne.s32.totalorder %s72, %s74
    %p81 = scmp.eq.s32.totalorder %s22, 1
    %p82 = por %p80, %p81
    %p83 = scmp.ne.s32.totalorder %s74, %s75
    %p84 = scmp.eq.s32.totalorder %s22, 0
    %p85 = por %p83, %p84
    %p86 = scmp.ne.s32.totalorder %s74, %s75
    %p87 = scmp.eq.s32.totalorder %s23, 1
    %p88 = por %p86, %p87
    %p90 = scmp.ne.s32.totalorder %s75, %s89
    %p91 = scmp.eq.s32.totalorder %s23, 0
    %p92 = por %p90, %p91
    %s94 = sadd.s32 %s93, 1
    %p97 = scmp.eq.s32.totalorder %s17, 1
    %p98 = scmp.ne.s32.totalorder %s93, %s95
    %p99 = scmp.eq.s32.totalorder %s17, 0
    %p100 = por %p98, %p99
    %p101 = scmp.ne.s32.totalorder %s93, %s95
    %p102 = scmp.eq.s32.totalorder %s22, 1
    %p103 = por %p101, %p102
    %p104 = scmp.ne.s32.totalorder %s95, %s96
    %p105 = scmp.eq.s32.totalorder %s22, 0
    %p106 = por %p104, %p105
    %p107 = scmp.ne.s32.totalorder %s95, %s96
    %p108 = scmp.eq.s32.totalorder %s23, 1
    %p109 = por %p107, %p108
    %p111 = scmp.ne.s32.totalorder %s96, %s110
    %p112 = scmp.eq.s32.totalorder %s23, 0
    %p113 = por %p111, %p112
    %s115 = sadd.s32 %s114, 1
    %p118 = scmp.eq.s32.totalorder %s17, 1
    %p119 = scmp.ne.s32.totalorder %s114, %s116
    %p120 = scmp.eq.s32.totalorder %s17, 0
    %p121 = por %p119, %p120
    %p122 = scmp.ne.s32.totalorder %s114, %s116
    %p123 = scmp.eq.s32.totalorder %s22, 1
    %p124 = por %p122, %p123
    %p125 = scmp.ne.s32.totalorder %s116, %s117
    %p126 = scmp.eq.s32.totalorder %s22, 0
    %p127 = por %p125, %p126
    %p128 = scmp.ne.s32.totalorder %s116, %s117
    %p129 = scmp.eq.s32.totalorder %s23, 1
    %p130 = por %p128, %p129
    %p132 = scmp.ne.s32.totalorder %s117, %s131
    %p133 = scmp.eq.s32.totalorder %s23, 0
    %p134 = por %p132, %p133
    %s136 = sadd.s32 %s135, 1
    %p139 = scmp.eq.s32.totalorder %s17, 1
    %p140 = scmp.ne.s32.totalorder %s135, %s137
    %p141 = scmp.eq.s32.totalorder %s17, 0
    %p142 = por %p140, %p141
    %p143 = scmp.ne.s32.totalorder %s135, %s137
    %p144 = scmp.eq.s32.totalorder %s22, 1
    %p145 = por %p143, %p144
    %p146 = scmp.ne.s32.totalorder %s137, %s138
    %p147 = scmp.eq.s32.totalorder %s22, 0
    %p148 = por %p146, %p147
    %p149 = scmp.ne.s32.totalorder %s137, %s138
    %p150 = scmp.eq.s32.totalorder %s23, 1
    %p151 = por %p149, %p150
    %p153 = scmp.ne.s32.totalorder %s138, %s152
    %p154 = scmp.eq.s32.totalorder %s23, 0
    %p155 = por %p153, %p154
    %s157 = sadd.s32 %s156, 1
    %p160 = scmp.eq.s32.totalorder %s17, 1
    %p161 = scmp.ne.s32.totalorder %s156, %s158
    %p162 = scmp.eq.s32.totalorder %s17, 0
    %p163 = por %p161, %p162
    %p164 = scmp.ne.s32.totalorder %s156, %s158
    %p165 = scmp.eq.s32.totalorder %s22, 1
    %p166 = por %p164, %p165
    %p167 = scmp.ne.s32.totalorder %s158, %s159
    %p168 = scmp.eq.s32.totalorder %s22, 0
    %p169 = por %p167, %p168
    %p170 = scmp.ne.s32.totalorder %s158, %s159
    %p171 = scmp.eq.s32.totalorder %s23, 1
    %p172 = por %p170, %p171
    %p174 = scmp.ne.s32.totalorder %s159, %s173
    %p175 = scmp.eq.s32.totalorder %s23, 0
    %p176 = por %p174, %p175
    %s178 = sadd.s32 %s177, 1
    %p181 = scmp.eq.s32.totalorder %s17, 1
    %p182 = scmp.ne.s32.totalorder %s177, %s179
    %p183 = scmp.eq.s32.totalorder %s17, 0
    %p184 = por %p182, %p183
    %p185 = scmp.ne.s32.totalorder %s177, %s179
    %p186 = scmp.eq.s32.totalorder %s22, 1
    %p187 = por %p185, %p186
    %p188 = scmp.ne.s32.totalorder %s179, %s180
    %p189 = scmp.eq.s32.totalorder %s22, 0
    %p190 = por %p188, %p189
    %p191 = scmp.ne.s32.totalorder %s179, %s180
    %p192 = scmp.eq.s32.totalorder %s23, 1
    %p193 = por %p191, %p192
    %p195 = scmp.ne.s32.totalorder %s180, %s194
    %p196 = scmp.eq.s32.totalorder %s23, 0
    %p197 = por %p195, %p196
    %s199 = sadd.s32 %s198, 1
    %p202 = scmp.eq.s32.totalorder %s17, 1
    %p203 = scmp.ne.s32.totalorder %s198, %s200
    %p204 = scmp.eq.s32.totalorder %s17, 0
    %p205 = por %p203, %p204
    %p206 = scmp.ne.s32.totalorder %s198, %s200
    %p207 = scmp.eq.s32.totalorder %s22, 1
    %p208 = por %p206, %p207
    %p209 = scmp.ne.s32.totalorder %s200, %s201
    %p210 = scmp.eq.s32.totalorder %s22, 0
    %p211 = por %p209, %p210
    %p212 = scmp.ne.s32.totalorder %s200, %s201
    %p213 = scmp.eq.s32.totalorder %s23, 1
    %p214 = por %p212, %p213
    %p216 = scmp.ne.s32.totalorder %s201, %s215
    %p217 = scmp.eq.s32.totalorder %s23, 0
    %p218 = por %p216, %p217
    %s219 = ssub.s32 %s17, %s24
    %p220 = scmp.eq.s32.totalorder %s219, 0
    %s222 = sadd.s32 %s221, 1
    %s223 = scalar_select %p220, %s221, %s222
    %p226 = pneg %p220
    %p227 = scmp.eq.s32.totalorder %s17, 1
    %p228 = por %p226, %p227
    %p229 = scmp.ne.s32.totalorder %s221, %s224
    %p230 = scmp.eq.s32.totalorder %s17, 0
    %p231 = por %p229, %p230
    %p232 = scmp.ne.s32.totalorder %s221, %s224
    %p233 = scmp.eq.s32.totalorder %s22, 1
    %p234 = por %p232, %p233
    %p235 = scmp.ne.s32.totalorder %s224, %s225
    %p236 = scmp.eq.s32.totalorder %s22, 0
    %p237 = por %p235, %p236
    %p238 = scmp.ne.s32.totalorder %s224, %s225
    %p239 = scmp.eq.s32.totalorder %s23, 1
    %p240 = por %p238, %p239
    %p242 = scmp.ne.s32.totalorder %s225, %s241
    %p243 = scmp.eq.s32.totalorder %s23, 0
    %p244 = por %p242, %p243
    %s245 = ssub.s32 %s17, %s24
    %p246 = scmp.eq.s32.totalorder %s245, 0
    %s248 = sadd.s32 %s247, 1
    %s249 = scalar_select %p246, %s247, %s248
    %p252 = pneg %p246
    %p253 = scmp.eq.s32.totalorder %s17, 1
    %p254 = por %p252, %p253
    %p255 = scmp.ne.s32.totalorder %s247, %s250
    %p256 = scmp.eq.s32.totalorder %s17, 0
    %p257 = por %p255, %p256
    %p258 = scmp.ne.s32.totalorder %s247, %s250
    %p259 = scmp.eq.s32.totalorder %s22, 1
    %p260 = por %p258, %p259
    %p261 = scmp.ne.s32.totalorder %s250, %s251
    %p262 = scmp.eq.s32.totalorder %s22, 0
    %p263 = por %p261, %p262
    %p264 = scmp.ne.s32.totalorder %s250, %s251
    %p265 = scmp.eq.s32.totalorder %s23, 1
    %p266 = por %p264, %p265
    %p268 = scmp.ne.s32.totalorder %s251, %s267
    %p269 = scmp.eq.s32.totalorder %s23, 0
    %p270 = por %p268, %p269
    %p271 = scmp.le.s32.totalorder 1, %s17
    %p272 = scmp.lt.s32.totalorder %s17, 3
    %p273 = pnand %p271, %p272
    %p274 = pneg %p273
    // Predicated region
    $region9: #{_forward_device.5} parent=5 // pred_check
      _
    $region10: #{_forward_device.5} parent=5 // pred_check_branch
      %276 = sbr.rel (%p273) target = $region12
    $region11: #{_forward_device.5} parent=5 // pred_region
      %s277 = ssub.s32 %s17, 1
      // Predicated region
      $region13: #{_forward_device.5} parent=11 // pred_check
        %p278 = pneg %p64
      $region14: #{_forward_device.5} parent=11 // pred_check_branch
        %280 = sbr.rel (%p278) target = $region16
      $region15: #{_forward_device.5} parent=11 // pred_region
        _
      $region16: #{_forward_device.5} parent=11 // pred_fallthru
        _
      // Predicated region
      $region17: #{_forward_device.5} parent=11 // pred_check
        %p281 = pneg %p85
      $region18: #{_forward_device.5} parent=11 // pred_check_branch
        %283 = sbr.rel (%p281) target = $region20
      $region19: #{_forward_device.5} parent=11 // pred_region
        _
      $region20: #{_forward_device.5} parent=11 // pred_fallthru
        _
      // Predicated region
      $region21: #{_forward_device.5} parent=11 // pred_check
        %p284 = pneg %p106
      $region22: #{_forward_device.5} parent=11 // pred_check_branch
        %286 = sbr.rel (%p284) target = $region24
      $region23: #{_forward_device.5} parent=11 // pred_region
        _
      $region24: #{_forward_device.5} parent=11 // pred_fallthru
        _
      // Predicated region
      $region25: #{_forward_device.5} parent=11 // pred_check
        %p287 = pneg %p127
      $region26: #{_forward_device.5} parent=11 // pred_check_branch
        %289 = sbr.rel (%p287) target = $region28
      $region27: #{_forward_device.5} parent=11 // pred_region
        _
      $region28: #{_forward_device.5} parent=11 // pred_fallthru
        _
      // Predicated region
      $region29: #{_forward_device.5} parent=11 // pred_check
        %p290 = pneg %p148
      $region30: #{_forward_device.5} parent=11 // pred_check_branch
        %292 = sbr.rel (%p290) target = $region32
      $region31: #{_forward_device.5} parent=11 // pred_region
        _
      $region32: #{_forward_device.5} parent=11 // pred_fallthru
        _
      // Predicated region
      $region33: #{_forward_device.5} parent=11 // pred_check
        %p293 = pneg %p169
      $region34: #{_forward_device.5} parent=11 // pred_check_branch
        %295 = sbr.rel (%p293) target = $region36
      $region35: #{_forward_device.5} parent=11 // pred_region
        _
      $region36: #{_forward_device.5} parent=11 // pred_fallthru
        _
      // Predicated region
      $region37: #{_forward_device.5} parent=11 // pred_check
        %p296 = pneg %p190
      $region38: #{_forward_device.5} parent=11 // pred_check_branch
        %298 = sbr.rel (%p296) target = $region40
      $region39: #{_forward_device.5} parent=11 // pred_region
        _
      $region40: #{_forward_device.5} parent=11 // pred_fallthru
        _
      // Predicated region
      $region41: #{_forward_device.5} parent=11 // pred_check
        %p299 = pneg %p211
      $region42: #{_forward_device.5} parent=11 // pred_check_branch
        %301 = sbr.rel (%p299) target = $region44
      $region43: #{_forward_device.5} parent=11 // pred_region
        _
      $region44: #{_forward_device.5} parent=11 // pred_fallthru
        _
    $region12: #{_forward_device.5} parent=5 // pred_fallthru
      _
    %p302 = scmp.lt.s32.totalorder %s17, 2
    // Predicated region
    $region45: #{_forward_device.5} parent=5 // pred_check
      %p303 = pneg %p302
    $region46: #{_forward_device.5} parent=5 // pred_check_branch
      %305 = sbr.rel (%p303) target = $region48
    $region47: #{_forward_device.5} parent=5 // pred_region
      // Predicated region
      $region49: #{_forward_device.5} parent=47 // pred_check
        %p306 = pneg %p37
      $region50: #{_forward_device.5} parent=47 // pred_check_branch
        %308 = sbr.rel (%p306) target = $region52
      $region51: #{_forward_device.5} parent=47 // pred_region
        %p309 = scmp.lt.s32.totalorder %s17, 1
        %s310 = scalar_select %p309, %s17, 1
        %s311 = smul.addr %s310, 32
        %s312 = smul.addr %s311, 4
        %s313 = scalar_lea.vmem %s0, %s312
      $region52: #{_forward_device.5} parent=47 // pred_fallthru
        _
    $region48: #{_forward_device.5} parent=5 // pred_fallthru
      _
    %p314 = scmp.le.s32.totalorder 1, %s17
    %p315 = scmp.lt.s32.totalorder %s17, 3
    %p316 = pnand %p314, %p315
    %p317 = pneg %p316
    // Predicated region
    $region53: #{_forward_device.5} parent=5 // pred_check
      _
    $region54: #{_forward_device.5} parent=5 // pred_check_branch
      %319 = sbr.rel (%p316) target = $region56
    $region55: #{_forward_device.5} parent=5 // pred_region
      %s320 = ssub.s32 %s17, 1
      %p321 = scmp.lt.s32.totalorder %s22, 1
      %s322 = scalar_select %p321, %s22, 1
      %s323 = smul.addr %s322, 32
      %s324 = smul.addr %s323, 4
      %s325 = scalar_lea.vmem %s0, %s324
      %p326 = pneg %p43
      %p327 = pneg %p40
      %p328 = pneg %p64
      %p329 = pneg %p61
      %p330 = pneg %p85
      %p331 = pneg %p82
      %p332 = pneg %p106
      %p333 = pneg %p103
      %p334 = pneg %p127
      %p335 = pneg %p124
      %p336 = pneg %p148
      %p337 = pneg %p145
      %p338 = pneg %p169
      %p339 = pneg %p166
      %p340 = pneg %p190
      %p341 = pneg %p187
      %p342 = pneg %p211
      %p343 = pneg %p208
      %p344 = pneg %p237
      %p345 = pneg %p234
      %p346 = scmp.lt.s32.totalorder %s22, 1
      %s347 = scalar_select %p346, %s22, 1
      %s348 = smul.addr %s347, 8
      %s349 = smul.addr %s348, 8
      %s350 = scalar_lea.vmem %s9, %s349
      %p351 = pneg %p263
      %p352 = pneg %p260
      %p353 = scmp.lt.s32.totalorder %s22, 1
      %s354 = scalar_select %p353, %s22, 1
      %s355 = smul.addr %s354, 8
      %s356 = smul.addr %s355, 8
      %s357 = scalar_lea.vmem %s10, %s356
      %p358 = scmp.lt.s32.totalorder %s22, 1
      %s359 = scalar_select %p358, %s22, 1
      %s360 = smul.addr %s359, 32
      %s361 = smul.addr %s360, 4
      %s362 = scalar_lea.vmem %s0, %s361
      %p363 = scmp.lt.s32.totalorder %s22, 1
      %s364 = scalar_select %p363, %s22, 1
      %s365 = smul.addr %s364, 8
      %s366 = smul.addr %s365, 8
      %s367 = scalar_lea.vmem %s9, %s366
      %p368 = scmp.lt.s32.totalorder %s22, 1
      %s369 = scalar_select %p368, %s22, 1
      %s370 = smul.addr %s369, 8
      %s371 = smul.addr %s370, 8
      %s372 = scalar_lea.vmem %s10, %s371
      %v374 = vld [vmem:[%s362] sm:$0xf]
      %v375 = vld [vmem:[%s362 + $0x4] sm:$0xf]
      %v376 = vld [vmem:[%s362 + $0x8] sm:$0xf]
      %v377 = vld [vmem:[%s362 + $0xc] sm:$0xf]
      %v378 = vld [vmem:[%s362 + $0x10] sm:$0xf]
      %v379 = vld [vmem:[%s362 + $0x14] sm:$0xf]
      %v380 = vld [vmem:[%s362 + $0x18] sm:$0xf]
      %v381 = vld [vmem:[%s362 + $0x1c] sm:$0xf]
      %v382 = vld [vmem:[%s362 + $0x20] sm:$0xf]
      %v383 = vld [vmem:[%s362 + $0x24] sm:$0xf]
      %v384 = vld [vmem:[%s362 + $0x28] sm:$0xf]
      %v385 = vld [vmem:[%s362 + $0x2c] sm:$0xf]
      %v386 = vld [vmem:[%s362 + $0x30] sm:$0xf]
      %v387 = vld [vmem:[%s362 + $0x34] sm:$0xf]
      %v388 = vld [vmem:[%s362 + $0x38] sm:$0xf]
      %v389 = vld [vmem:[%s362 + $0x3c] sm:$0xf]
      %v390 = vld [vmem:[%s362 + $0x40] sm:$0xf]
      %v391 = vld [vmem:[%s362 + $0x44] sm:$0xf]
      %v392 = vld [vmem:[%s362 + $0x48] sm:$0xf]
      %v393 = vld [vmem:[%s362 + $0x4c] sm:$0xf]
      %v394 = vld [vmem:[%s362 + $0x50] sm:$0xf]
      %v395 = vld [vmem:[%s362 + $0x54] sm:$0xf]
      %v396 = vld [vmem:[%s362 + $0x58] sm:$0xf]
      %v397 = vld [vmem:[%s362 + $0x5c] sm:$0xf]
      %v398 = vld [vmem:[%s362 + $0x60] sm:$0xf]
      %v399 = vld [vmem:[%s362 + $0x64] sm:$0xf]
      %v400 = vld [vmem:[%s362 + $0x68] sm:$0xf]
      %v401 = vld [vmem:[%s362 + $0x6c] sm:$0xf]
      %v402 = vld [vmem:[%s362 + $0x70] sm:$0xf]
      %v403 = vld [vmem:[%s362 + $0x74] sm:$0xf]
      %v404 = vld [vmem:[%s362 + $0x78] sm:$0xf]
      %v405 = vld [vmem:[%s362 + $0x7c] sm:$0xf]
      %v406 = vld [vmem:[%s1] sm:$0xf]
      %v407 = vld [vmem:[%s1 + $0x4] sm:$0xf]
      %v408 = vld [vmem:[%s1 + $0x8] sm:$0xf]
      %v409 = vld [vmem:[%s1 + $0xc] sm:$0xf]
      %v410 = vld [vmem:[%s1 + $0x10] sm:$0xf]
      %v411 = vld [vmem:[%s1 + $0x14] sm:$0xf]
      %v412 = vld [vmem:[%s1 + $0x18] sm:$0xf]
      %v413 = vld [vmem:[%s1 + $0x1c] sm:$0xf]
      %v414 = vld [vmem:[%s1 + $0x20] sm:$0xf]
      %v415 = vld [vmem:[%s1 + $0x24] sm:$0xf]
      %v416 = vld [vmem:[%s1 + $0x28] sm:$0xf]
      %v417 = vld [vmem:[%s1 + $0x2c] sm:$0xf]
      %v418 = vld [vmem:[%s1 + $0x30] sm:$0xf]
      %v419 = vld [vmem:[%s1 + $0x34] sm:$0x3]
      %v420 = vld [vmem:[%s2] sm:$0x1]
      %v422 = vperm.slane %v420, 0
      %v456 = vunpack.c.l.b16 %v374
      %v457 = vunpack.c.l.b16 %v375
      %v458 = vunpack.c.l.b16 %v376
      %v459 = vunpack.c.l.b16 %v377
      %v460 = vunpack.c.l.b16 %v378
      %v461 = vunpack.c.l.b16 %v379
      %v462 = vunpack.c.l.b16 %v380
      %v463 = vunpack.c.l.b16 %v381
      %v464 = vunpack.c.l.b16 %v382
      %v465 = vunpack.c.l.b16 %v383
      %v466 = vunpack.c.l.b16 %v384
      %v467 = vunpack.c.l.b16 %v385
      %v468 = vunpack.c.l.b16 %v386
      %v469 = vunpack.c.l.b16 %v387
      %v470 = vunpack.c.l.b16 %v388
      %v471 = vunpack.c.l.b16 %v389
      %v472 = vunpack.c.l.b16 %v390
      %v473 = vunpack.c.l.b16 %v391
      %v474 = vunpack.c.l.b16 %v392
      %v475 = vunpack.c.l.b16 %v393
      %v476 = vunpack.c.l.b16 %v394
      %v477 = vunpack.c.l.b16 %v395
      %v478 = vunpack.c.l.b16 %v396
      %v479 = vunpack.c.l.b16 %v397
      %v480 = vunpack.c.l.b16 %v398
      %v481 = vunpack.c.l.b16 %v399
      %v482 = vunpack.c.l.b16 %v400
      %v483 = vunpack.c.l.b16 %v401
      %v484 = vunpack.c.l.b16 %v402
      %v485 = vunpack.c.l.b16 %v403
      %v486 = vunpack.c.l.b16 %v404
      %v487 = vunpack.c.l.b16 %v405
      %v488 = vpack.c.b16 %v457, %v456
      %v489 = vpack.c.b16 %v459, %v458
      %v490 = vpack.c.b16 %v461, %v460
      %v491 = vpack.c.b16 %v463, %v462
      %v492 = vpack.c.b16 %v465, %v464
      %v493 = vpack.c.b16 %v467, %v466
      %v494 = vpack.c.b16 %v469, %v468
      %v495 = vpack.c.b16 %v471, %v470
      %v496 = vpack.c.b16 %v473, %v472
      %v497 = vpack.c.b16 %v475, %v474
      %v498 = vpack.c.b16 %v477, %v476
      %v499 = vpack.c.b16 %v479, %v478
      %v500 = vpack.c.b16 %v481, %v480
      %v501 = vpack.c.b16 %v483, %v482
      %v502 = vpack.c.b16 %v485, %v484
      %v503 = vpack.c.b16 %v487, %v486
      %v518 = vunpack.c.l.b16 %v406
      %v519 = vunpack.c.l.b16 %v407
      %v520 = vunpack.c.l.b16 %v408
      %v521 = vunpack.c.l.b16 %v409
      %v522 = vunpack.c.l.b16 %v410
      %v523 = vunpack.c.l.b16 %v411
      %v524 = vunpack.c.l.b16 %v412
      %v525 = vunpack.c.l.b16 %v413
      %v526 = vunpack.c.l.b16 %v414
      %v527 = vunpack.c.l.b16 %v415
      %v528 = vunpack.c.l.b16 %v416
      %v529 = vunpack.c.l.b16 %v417
      %v530 = vunpack.c.l.b16 %v418
      %v531 = vunpack.c.l.b16 %v419
      %v532 = vpack.c.b16 %v519, %v518
      %v533 = vpack.c.b16 %v521, %v520
      %v534 = vpack.c.b16 %v523, %v522
      %v535 = vpack.c.b16 %v525, %v524
      %v536 = vpack.c.b16 %v527, %v526
      %v537 = vpack.c.b16 %v529, %v528
      %v538 = vpack.c.b16 %v531, %v530
      %vm545 = vcmask 883712
      %v547 = vsel %vm545, %v488, 0
      %v550 = vsel %vm545, %v489, 0
      %v553 = vsel %vm545, %v490, 0
      %v556 = vsel %vm545, %v491, 0
      %v559 = vsel %vm545, %v492, 0
      %v562 = vsel %vm545, %v493, 0
      %v565 = vsel %vm545, %v494, 0
      %v568 = vsel %vm545, %v495, 0
      %v571 = vsel %vm545, %v496, 0
      %v574 = vsel %vm545, %v497, 0
      %v577 = vsel %vm545, %v498, 0
      %v580 = vsel %vm545, %v499, 0
      %v583 = vsel %vm545, %v500, 0
      %v586 = vsel %vm545, %v501, 0
      %v589 = vsel %vm545, %v502, 0
      %v592 = vsel %vm545, %v503, 0
      %vm594 = vcmask 1045504
      %v596 = vsel %vm594, %v538, 0
      %598 = vmatpush.bf16.msra.mxu0 0
      %599 = vmatpush.bf16.msra.mxu0 %v596
      %600 = vmatpush.bf16.msra.mxu0 %v537
      %601 = vmatpush.bf16.msra.mxu0 %v536
      %602 = vmatpush.bf16.msra.mxu0 %v535
      %603 = vmatpush.bf16.msra.mxu0 %v534
      %604 = vmatpush.bf16.msra.mxu0 %v533
      %605 = vmatpush.bf16.msra.mxu0 %v532
      %606 = vmatmul.bf16.gmra.mxu0 %v547
      %v607 = vpop.f32.mrf.mxu0
      %v608 = vadd.f32 %v422, %v607
      %v609 = vpop.f32.mrf.mxu0
      %v610 = vadd.f32 %v422, %v609
      %611 = vmatmul.bf16.gmra.mxu0 %v550
      %v612 = vpop.f32.mrf.mxu0
      %v613 = vadd.f32 %v422, %v612
      %v614 = vpop.f32.mrf.mxu0
      %v615 = vadd.f32 %v422, %v614
      %616 = vmatmul.bf16.gmra.mxu0 %v553
      %v617 = vpop.f32.mrf.mxu0
      %v618 = vadd.f32 %v422, %v617
      %v619 = vpop.f32.mrf.mxu0
      %v620 = vadd.f32 %v422, %v619
      %621 = vmatmul.bf16.gmra.mxu0 %v556
      %v622 = vpop.f32.mrf.mxu0
      %v623 = vadd.f32 %v422, %v622
      %v624 = vpop.f32.mrf.mxu0
      %v625 = vadd.f32 %v422, %v624
      %626 = vmatmul.bf16.gmra.mxu0 %v559
      %v627 = vpop.f32.mrf.mxu0
      %v628 = vadd.f32 %v422, %v627
      %v629 = vpop.f32.mrf.mxu0
      %v630 = vadd.f32 %v422, %v629
      %631 = vmatmul.bf16.gmra.mxu0 %v562
      %v632 = vpop.f32.mrf.mxu0
      %v633 = vadd.f32 %v422, %v632
      %v634 = vpop.f32.mrf.mxu0
      %v635 = vadd.f32 %v422, %v634
      %636 = vmatmul.bf16.gmra.mxu0 %v565
      %v637 = vpop.f32.mrf.mxu0
      %v638 = vadd.f32 %v422, %v637
      %v639 = vpop.f32.mrf.mxu0
      %v640 = vadd.f32 %v422, %v639
      %641 = vmatmul.bf16.gmra.mxu0 %v568
      %v642 = vpop.f32.mrf.mxu0
      %v643 = vadd.f32 %v422, %v642
      %v644 = vpop.f32.mrf.mxu0
      %v645 = vadd.f32 %v422, %v644
      %646 = vmatmul.bf16.gmra.mxu0 %v571
      %v647 = vpop.f32.mrf.mxu0
      %v648 = vadd.f32 %v422, %v647
      %v649 = vpop.f32.mrf.mxu0
      %v650 = vadd.f32 %v422, %v649
      %651 = vmatmul.bf16.gmra.mxu0 %v574
      %v652 = vpop.f32.mrf.mxu0
      %v653 = vadd.f32 %v422, %v652
      %v654 = vpop.f32.mrf.mxu0
      %v655 = vadd.f32 %v422, %v654
      %656 = vmatmul.bf16.gmra.mxu0 %v577
      %v657 = vpop.f32.mrf.mxu0
      %v658 = vadd.f32 %v422, %v657
      %v659 = vpop.f32.mrf.mxu0
      %v660 = vadd.f32 %v422, %v659
      %661 = vmatmul.bf16.gmra.mxu0 %v580
      %v662 = vpop.f32.mrf.mxu0
      %v663 = vadd.f32 %v422, %v662
      %v664 = vpop.f32.mrf.mxu0
      %v665 = vadd.f32 %v422, %v664
      %666 = vmatmul.bf16.gmra.mxu0 %v583
      %v667 = vpop.f32.mrf.mxu0
      %v668 = vadd.f32 %v422, %v667
      %v669 = vpop.f32.mrf.mxu0
      %v670 = vadd.f32 %v422, %v669
      %671 = vmatmul.bf16.gmra.mxu0 %v586
      %v672 = vpop.f32.mrf.mxu0
      %v673 = vadd.f32 %v422, %v672
      %v674 = vpop.f32.mrf.mxu0
      %v675 = vadd.f32 %v422, %v674
      %676 = vmatmul.bf16.gmra.mxu0 %v589
      %v677 = vpop.f32.mrf.mxu0
      %v678 = vadd.f32 %v422, %v677
      %v679 = vpop.f32.mrf.mxu0
      %v680 = vadd.f32 %v422, %v679
      %681 = vmatmul.bf16.gmra.mxu0 %v592
      %v682 = vpop.f32.mrf.mxu0
      %v683 = vadd.f32 %v422, %v682
      %v684 = vpop.f32.mrf.mxu0
      %v685 = vadd.f32 %v422, %v684
      %686 = vdwg.mxu0
      %v687 = vmax.f32 %v608, 0.0
      %v688 = vmax.f32 %v610, 0.0
      %v689 = vmax.f32 %v613, 0.0
      %v690 = vmax.f32 %v615, 0.0
      %v691 = vmax.f32 %v618, 0.0
      %v692 = vmax.f32 %v620, 0.0
      %v693 = vmax.f32 %v623, 0.0
      %v694 = vmax.f32 %v625, 0.0
      %v695 = vmax.f32 %v628, 0.0
      %v696 = vmax.f32 %v630, 0.0
      %v697 = vmax.f32 %v633, 0.0
      %v698 = vmax.f32 %v635, 0.0
      %v699 = vmax.f32 %v638, 0.0
      %v700 = vmax.f32 %v640, 0.0
      %v701 = vmax.f32 %v643, 0.0
      %v702 = vmax.f32 %v645, 0.0
      %v703 = vmax.f32 %v648, 0.0
      %v704 = vmax.f32 %v650, 0.0
      %v705 = vmax.f32 %v653, 0.0
      %v706 = vmax.f32 %v655, 0.0
      %v707 = vmax.f32 %v658, 0.0
      %v708 = vmax.f32 %v660, 0.0
      %v709 = vmax.f32 %v663, 0.0
      %v710 = vmax.f32 %v665, 0.0
      %v711 = vmax.f32 %v668, 0.0
      %v712 = vmax.f32 %v670, 0.0
      %v713 = vmax.f32 %v673, 0.0
      %v714 = vmax.f32 %v675, 0.0
      %v715 = vmax.f32 %v678, 0.0
      %v716 = vmax.f32 %v680, 0.0
      %v717 = vmax.f32 %v683, 0.0
      %v718 = vmax.f32 %v685, 0.0
      %751 = vrot.lane.b32.xlu0 %v687, 120
      %v752 = vpop.permute.xlu0 %751
      %753 = vrot.lane.b32.xlu0 %v688, 120
      %v754 = vpop.permute.xlu0 %753
      %755 = vrot.lane.b32.xlu0 %v689, 120
      %v756 = vpop.permute.xlu0 %755
      %757 = vrot.lane.b32.xlu0 %v690, 120
      %v758 = vpop.permute.xlu0 %757
      %759 = vrot.lane.b32.xlu0 %v691, 120
      %v760 = vpop.permute.xlu0 %759
      %761 = vrot.lane.b32.xlu0 %v692, 120
      %v762 = vpop.permute.xlu0 %761
      %763 = vrot.lane.b32.xlu0 %v693, 120
      %v764 = vpop.permute.xlu0 %763
      %765 = vrot.lane.b32.xlu0 %v694, 120
      %v766 = vpop.permute.xlu0 %765
      %767 = vrot.lane.b32.xlu0 %v695, 120
      %v768 = vpop.permute.xlu0 %767
      %769 = vrot.lane.b32.xlu0 %v696, 120
      %v770 = vpop.permute.xlu0 %769
      %771 = vrot.lane.b32.xlu0 %v697, 120
      %v772 = vpop.permute.xlu0 %771
      %773 = vrot.lane.b32.xlu0 %v698, 120
      %v774 = vpop.permute.xlu0 %773
      %775 = vrot.lane.b32.xlu0 %v699, 120
      %v776 = vpop.permute.xlu0 %775
      %777 = vrot.lane.b32.xlu0 %v700, 120
      %v778 = vpop.permute.xlu0 %777
      %779 = vrot.lane.b32.xlu0 %v701, 120
      %v780 = vpop.permute.xlu0 %779
      %781 = vrot.lane.b32.xlu0 %v702, 120
      %v782 = vpop.permute.xlu0 %781
      %783 = vrot.lane.b32.xlu0 %v703, 120
      %v784 = vpop.permute.xlu0 %783
      %785 = vrot.lane.b32.xlu0 %v704, 120
      %v786 = vpop.permute.xlu0 %785
      %787 = vrot.lane.b32.xlu0 %v705, 120
      %v788 = vpop.permute.xlu0 %787
      %789 = vrot.lane.b32.xlu0 %v706, 120
      %v790 = vpop.permute.xlu0 %789
      %791 = vrot.lane.b32.xlu0 %v707, 120
      %v792 = vpop.permute.xlu0 %791
      %793 = vrot.lane.b32.xlu0 %v708, 120
      %v794 = vpop.permute.xlu0 %793
      %795 = vrot.lane.b32.xlu0 %v709, 120
      %v796 = vpop.permute.xlu0 %795
      %797 = vrot.lane.b32.xlu0 %v710, 120
      %v798 = vpop.permute.xlu0 %797
      %799 = vrot.lane.b32.xlu0 %v711, 120
      %v800 = vpop.permute.xlu0 %799
      %801 = vrot.lane.b32.xlu0 %v712, 120
      %v802 = vpop.permute.xlu0 %801
      %803 = vrot.lane.b32.xlu0 %v713, 120
      %v804 = vpop.permute.xlu0 %803
      %805 = vrot.lane.b32.xlu0 %v714, 120
      %v806 = vpop.permute.xlu0 %805
      %807 = vrot.lane.b32.xlu0 %v715, 120
      %v808 = vpop.permute.xlu0 %807
      %809 = vrot.lane.b32.xlu0 %v716, 120
      %v810 = vpop.permute.xlu0 %809
      %811 = vrot.lane.b32.xlu0 %v717, 120
      %v812 = vpop.permute.xlu0 %811
      %813 = vrot.lane.b32.xlu0 %v718, 120
      %v814 = vpop.permute.xlu0 %813
      %v847 = vmax.f32 %v687, %v752
      %v848 = vmax.f32 %v688, %v754
      %v849 = vmax.f32 %v689, %v756
      %v850 = vmax.f32 %v690, %v758
      %v851 = vmax.f32 %v691, %v760
      %v852 = vmax.f32 %v692, %v762
      %v853 = vmax.f32 %v693, %v764
      %v854 = vmax.f32 %v694, %v766
      %v855 = vmax.f32 %v695, %v768
      %v856 = vmax.f32 %v696, %v770
      %v857 = vmax.f32 %v697, %v772
      %v858 = vmax.f32 %v698, %v774
      %v859 = vmax.f32 %v699, %v776
      %v860 = vmax.f32 %v700, %v778
      %v861 = vmax.f32 %v701, %v780
      %v862 = vmax.f32 %v702, %v782
      %v863 = vmax.f32 %v703, %v784
      %v864 = vmax.f32 %v704, %v786
      %v865 = vmax.f32 %v705, %v788
      %v866 = vmax.f32 %v706, %v790
      %v867 = vmax.f32 %v707, %v792
      %v868 = vmax.f32 %v708, %v794
      %v869 = vmax.f32 %v709, %v796
      %v870 = vmax.f32 %v710, %v798
      %v871 = vmax.f32 %v711, %v800
      %v872 = vmax.f32 %v712, %v802
      %v873 = vmax.f32 %v713, %v804
      %v874 = vmax.f32 %v714, %v806
      %v875 = vmax.f32 %v715, %v808
      %v876 = vmax.f32 %v716, %v810
      %v877 = vmax.f32 %v717, %v812
      %v878 = vmax.f32 %v718, %v814
      %911 = vrot.lane.b32.xlu0 %v847, 112
      %v912 = vpop.permute.xlu0 %911
      %913 = vrot.lane.b32.xlu0 %v848, 112
      %v914 = vpop.permute.xlu0 %913
      %915 = vrot.lane.b32.xlu0 %v849, 112
      %v916 = vpop.permute.xlu0 %915
      %917 = vrot.lane.b32.xlu0 %v850, 112
      %v918 = vpop.permute.xlu0 %917
      %919 = vrot.lane.b32.xlu0 %v851, 112
      %v920 = vpop.permute.xlu0 %919
      %921 = vrot.lane.b32.xlu0 %v852, 112
      %v922 = vpop.permute.xlu0 %921
      %923 = vrot.lane.b32.xlu0 %v853, 112
      %v924 = vpop.permute.xlu0 %923
      %925 = vrot.lane.b32.xlu0 %v854, 112
      %v926 = vpop.permute.xlu0 %925
      %927 = vrot.lane.b32.xlu0 %v855, 112
      %v928 = vpop.permute.xlu0 %927
      %929 = vrot.lane.b32.xlu0 %v856, 112
      %v930 = vpop.permute.xlu0 %929
      %931 = vrot.lane.b32.xlu0 %v857, 112
      %v932 = vpop.permute.xlu0 %931
      %933 = vrot.lane.b32.xlu0 %v858, 112
      %v934 = vpop.permute.xlu0 %933
      %935 = vrot.lane.b32.xlu0 %v859, 112
      %v936 = vpop.permute.xlu0 %935
      %937 = vrot.lane.b32.xlu0 %v860, 112
      %v938 = vpop.permute.xlu0 %937
      %939 = vrot.lane.b32.xlu0 %v861, 112
      %v940 = vpop.permute.xlu0 %939
      %941 = vrot.lane.b32.xlu0 %v862, 112
      %v942 = vpop.permute.xlu0 %941
      %943 = vrot.lane.b32.xlu0 %v863, 112
      %v944 = vpop.permute.xlu0 %943
      %945 = vrot.lane.b32.xlu0 %v864, 112
      %v946 = vpop.permute.xlu0 %945
      %947 = vrot.lane.b32.xlu0 %v865, 112
      %v948 = vpop.permute.xlu0 %947
      %949 = vrot.lane.b32.xlu0 %v866, 112
      %v950 = vpop.permute.xlu0 %949
      %951 = vrot.lane.b32.xlu0 %v867, 112
      %v952 = vpop.permute.xlu0 %951
      %953 = vrot.lane.b32.xlu0 %v868, 112
      %v954 = vpop.permute.xlu0 %953
      %955 = vrot.lane.b32.xlu0 %v869, 112
      %v956 = vpop.permute.xlu0 %955
      %957 = vrot.lane.b32.xlu0 %v870, 112
      %v958 = vpop.permute.xlu0 %957
      %959 = vrot.lane.b32.xlu0 %v871, 112
      %v960 = vpop.permute.xlu0 %959
      %961 = vrot.lane.b32.xlu0 %v872, 112
      %v962 = vpop.permute.xlu0 %961
      %963 = vrot.lane.b32.xlu0 %v873, 112
      %v964 = vpop.permute.xlu0 %963
      %965 = vrot.lane.b32.xlu0 %v874, 112
      %v966 = vpop.permute.xlu0 %965
      %967 = vrot.lane.b32.xlu0 %v875, 112
      %v968 = vpop.permute.xlu0 %967
      %969 = vrot.lane.b32.xlu0 %v876, 112
      %v970 = vpop.permute.xlu0 %969
      %971 = vrot.lane.b32.xlu0 %v877, 112
      %v972 = vpop.permute.xlu0 %971
      %973 = vrot.lane.b32.xlu0 %v878, 112
      %v974 = vpop.permute.xlu0 %973
      %v1007 = vmax.f32 %v847, %v912
      %v1008 = vmax.f32 %v848, %v914
      %v1009 = vmax.f32 %v849, %v916
      %v1010 = vmax.f32 %v850, %v918
      %v1011 = vmax.f32 %v851, %v920
      %v1012 = vmax.f32 %v852, %v922
      %v1013 = vmax.f32 %v853, %v924
      %v1014 = vmax.f32 %v854, %v926
      %v1015 = vmax.f32 %v855, %v928
      %v1016 = vmax.f32 %v856, %v930
      %v1017 = vmax.f32 %v857, %v932
      %v1018 = vmax.f32 %v858, %v934
      %v1019 = vmax.f32 %v859, %v936
      %v1020 = vmax.f32 %v860, %v938
      %v1021 = vmax.f32 %v861, %v940
      %v1022 = vmax.f32 %v862, %v942
      %v1023 = vmax.f32 %v863, %v944
      %v1024 = vmax.f32 %v864, %v946
      %v1025 = vmax.f32 %v865, %v948
      %v1026 = vmax.f32 %v866, %v950
      %v1027 = vmax.f32 %v867, %v952
      %v1028 = vmax.f32 %v868, %v954
      %v1029 = vmax.f32 %v869, %v956
      %v1030 = vmax.f32 %v870, %v958
      %v1031 = vmax.f32 %v871, %v960
      %v1032 = vmax.f32 %v872, %v962
      %v1033 = vmax.f32 %v873, %v964
      %v1034 = vmax.f32 %v874, %v966
      %v1035 = vmax.f32 %v875, %v968
      %v1036 = vmax.f32 %v876, %v970
      %v1037 = vmax.f32 %v877, %v972
      %v1038 = vmax.f32 %v878, %v974
      %vm1039 = vcmask 64512
      %1040 = vst.msk [vmem:[#allocation2] sm:$0xff] %vm1039, 0.0
      %1041 = vst.msk [vmem:[#allocation2 + $0x8] sm:$0xff] %vm1039, 0.0
      %1042 = vst.msk [vmem:[#allocation2 + $0x10] sm:$0xff] %vm1039, 0.0
      %1043 = vst.msk [vmem:[#allocation2 + $0x18] sm:$0xff] %vm1039, 0.0
      %1044 = vst.msk [vmem:[#allocation2 + $0x20] sm:$0xff] %vm1039, 0.0
      %1045 = vst.msk [vmem:[#allocation2 + $0x28] sm:$0xff] %vm1039, 0.0
      %1046 = vst.msk [vmem:[#allocation2 + $0x30] sm:$0xff] %vm1039, 0.0
      %1047 = vst.msk [vmem:[#allocation2 + $0x38] sm:$0xff] %vm1039, 0.0
      %1048 = vst.msk [vmem:[#allocation2 + $0x40] sm:$0xff] %vm1039, 0.0
      %1049 = vst.msk [vmem:[#allocation2 + $0x48] sm:$0xff] %vm1039, 0.0
      %1050 = vst.msk [vmem:[#allocation2 + $0x50] sm:$0xff] %vm1039, 0.0
      %1051 = vst.msk [vmem:[#allocation2 + $0x58] sm:$0xff] %vm1039, 0.0
      %1052 = vst.msk [vmem:[#allocation2 + $0x60] sm:$0xff] %vm1039, 0.0
      %1053 = vst.msk [vmem:[#allocation2 + $0x68] sm:$0xff] %vm1039, 0.0
      %1054 = vst.msk [vmem:[#allocation2 + $0x70] sm:$0xff] %vm1039, 0.0
      %1055 = vst.msk [vmem:[#allocation2 + $0x78] sm:$0xff] %vm1039, 0.0
      %1056 = vst.msk [vmem:[#allocation2 + $0x80] sm:$0xff] %vm1039, 0.0
      %1057 = vst.msk [vmem:[#allocation2 + $0x88] sm:$0xff] %vm1039, 0.0
      %1058 = vst.msk [vmem:[#allocation2 + $0x90] sm:$0xff] %vm1039, 0.0
      %1059 = vst.msk [vmem:[#allocation2 + $0x98] sm:$0xff] %vm1039, 0.0
      %1060 = vst.msk [vmem:[#allocation2 + $0xa0] sm:$0xff] %vm1039, 0.0
      %1061 = vst.msk [vmem:[#allocation2 + $0xa8] sm:$0xff] %vm1039, 0.0
      %1062 = vst.msk [vmem:[#allocation2 + $0xb0] sm:$0xff] %vm1039, 0.0
      %1063 = vst.msk [vmem:[#allocation2 + $0xb8] sm:$0xff] %vm1039, 0.0
      %1064 = vst.msk [vmem:[#allocation2 + $0xc0] sm:$0xff] %vm1039, 0.0
      %1065 = vst.msk [vmem:[#allocation2 + $0xc8] sm:$0xff] %vm1039, 0.0
      %1066 = vst.msk [vmem:[#allocation2 + $0xd0] sm:$0xff] %vm1039, 0.0
      %1067 = vst.msk [vmem:[#allocation2 + $0xd8] sm:$0xff] %vm1039, 0.0
      %1068 = vst.msk [vmem:[#allocation2 + $0xe0] sm:$0xff] %vm1039, 0.0
      %1069 = vst.msk [vmem:[#allocation2 + $0xe8] sm:$0xff] %vm1039, 0.0
      %1070 = vst.msk [vmem:[#allocation2 + $0xf0] sm:$0xff] %vm1039, 0.0
      %1071 = vst.msk [vmem:[#allocation2 + $0xf8] sm:$0xff] %vm1039, 0.0
      %1072 = vst.msk [vmem:[#allocation2 + $0x100] sm:$0xff] %vm1039, 0.0
      %1073 = vst.msk [vmem:[#allocation2 + $0x108] sm:$0xff] %vm1039, 0.0
      %1074 = vst.msk [vmem:[#allocation2 + $0x110] sm:$0xff] %vm1039, 0.0
      %1075 = vst.msk [vmem:[#allocation2 + $0x118] sm:$0xff] %vm1039, 0.0
      %1076 = vst.msk [vmem:[#allocation2 + $0x120] sm:$0xff] %vm1039, 0.0
      %1077 = vst.msk [vmem:[#allocation2 + $0x128] sm:$0xff] %vm1039, 0.0
      %1078 = vst.msk [vmem:[#allocation2 + $0x130] sm:$0xff] %vm1039, 0.0
      %1079 = vst.msk [vmem:[#allocation2 + $0x138] sm:$0xff] %vm1039, 0.0
      %1080 = vst.msk [vmem:[#allocation2 + $0x140] sm:$0xff] %vm1039, 0.0
      %1081 = vst.msk [vmem:[#allocation2 + $0x148] sm:$0xff] %vm1039, 0.0
      %1082 = vst.msk [vmem:[#allocation2 + $0x150] sm:$0xff] %vm1039, 0.0
      %1083 = vst.msk [vmem:[#allocation2 + $0x158] sm:$0xff] %vm1039, 0.0
      %1084 = vst.msk [vmem:[#allocation2 + $0x160] sm:$0xff] %vm1039, 0.0
      %1085 = vst.msk [vmem:[#allocation2 + $0x168] sm:$0xff] %vm1039, 0.0
      %1086 = vst.msk [vmem:[#allocation2 + $0x170] sm:$0xff] %vm1039, 0.0
      %1087 = vst.msk [vmem:[#allocation2 + $0x178] sm:$0xff] %vm1039, 0.0
      %1088 = vst.msk [vmem:[#allocation2 + $0x180] sm:$0xff] %vm1039, 0.0
      %1089 = vst.msk [vmem:[#allocation2 + $0x188] sm:$0xff] %vm1039, 0.0
      %1090 = vst.msk [vmem:[#allocation2 + $0x190] sm:$0xff] %vm1039, 0.0
      %1091 = vst.msk [vmem:[#allocation2 + $0x198] sm:$0xff] %vm1039, 0.0
      %1092 = vst.msk [vmem:[#allocation2 + $0x1a0] sm:$0xff] %vm1039, 0.0
      %1093 = vst.msk [vmem:[#allocation2 + $0x1a8] sm:$0xff] %vm1039, 0.0
      %1094 = vst.msk [vmem:[#allocation2 + $0x1b0] sm:$0xff] %vm1039, 0.0
      %1095 = vst.msk [vmem:[#allocation2 + $0x1b8] sm:$0xff] %vm1039, 0.0
      %1096 = vst.msk [vmem:[#allocation2 + $0x1c0] sm:$0xff] %vm1039, 0.0
      %1097 = vst.msk [vmem:[#allocation2 + $0x1c8] sm:$0xff] %vm1039, 0.0
      %1098 = vst.msk [vmem:[#allocation2 + $0x1d0] sm:$0xff] %vm1039, 0.0
      %1099 = vst.msk [vmem:[#allocation2 + $0x1d8] sm:$0xff] %vm1039, 0.0
      %1100 = vst.msk [vmem:[#allocation2 + $0x1e0] sm:$0xff] %vm1039, 0.0
      %1101 = vst.msk [vmem:[#allocation2 + $0x1e8] sm:$0xff] %vm1039, 0.0
      %1102 = vst.msk [vmem:[#allocation2 + $0x1f0] sm:$0xff] %vm1039, 0.0
      %1103 = vst.msk [vmem:[#allocation2 + $0x1f8] sm:$0xff] %vm1039, 0.0
      %1104 = vst.msk [vmem:[#allocation2 + $0x200] sm:$0xff] %vm1039, 0.0
      %1105 = vst.msk [vmem:[#allocation2 + $0x208] sm:$0xff] %vm1039, 0.0
      %1106 = vst.msk [vmem:[#allocation2 + $0x210] sm:$0xff] %vm1039, 0.0
      %1107 = vst.msk [vmem:[#allocation2 + $0x218] sm:$0xff] %vm1039, 0.0
      %1108 = vst.msk [vmem:[#allocation2 + $0x220] sm:$0xff] %vm1039, 0.0
      %1109 = vst.msk [vmem:[#allocation2 + $0x228] sm:$0xff] %vm1039, 0.0
      %1110 = vst.msk [vmem:[#allocation2 + $0x230] sm:$0xff] %vm1039, 0.0
      %1111 = vst.msk [vmem:[#allocation2 + $0x238] sm:$0xff] %vm1039, 0.0
      %s1112 = scalar_lea.vmem [#allocation2], 32
      %1113 = vst.msk [vmem:[%s1112 + $0x8] sm:$0xff] %vm1039, %v1007
      %1114 = vst.msk [vmem:[%s1112 + $0x10] sm:$0xff] %vm1039, %v1008
      %1115 = vst.msk [vmem:[%s1112 + $0x28] sm:$0xff] %vm1039, %v1009
      %1116 = vst.msk [vmem:[%s1112 + $0x30] sm:$0xff] %vm1039, %v1010
      %1117 = vst.msk [vmem:[%s1112 + $0x48] sm:$0xff] %vm1039, %v1011
      %1118 = vst.msk [vmem:[%s1112 + $0x50] sm:$0xff] %vm1039, %v1012
      %1119 = vst.msk [vmem:[%s1112 + $0x68] sm:$0xff] %vm1039, %v1013
      %1120 = vst.msk [vmem:[%s1112 + $0x70] sm:$0xff] %vm1039, %v1014
      %1121 = vst.msk [vmem:[%s1112 + $0x88] sm:$0xff] %vm1039, %v1015
      %1122 = vst.msk [vmem:[%s1112 + $0x90] sm:$0xff] %vm1039, %v1016
      %1123 = vst.msk [vmem:[%s1112 + $0xa8] sm:$0xff] %vm1039, %v1017
      %1124 = vst.msk [vmem:[%s1112 + $0xb0] sm:$0xff] %vm1039, %v1018
      %1125 = vst.msk [vmem:[%s1112 + $0xc8] sm:$0xff] %vm1039, %v1019
      %1126 = vst.msk [vmem:[%s1112 + $0xd0] sm:$0xff] %vm1039, %v1020
      %1127 = vst.msk [vmem:[%s1112 + $0xe8] sm:$0xff] %vm1039, %v1021
      %1128 = vst.msk [vmem:[%s1112 + $0xf0] sm:$0xff] %vm1039, %v1022
      %1129 = vst.msk [vmem:[%s1112 + $0x108] sm:$0xff] %vm1039, %v1023
      %1130 = vst.msk [vmem:[%s1112 + $0x110] sm:$0xff] %vm1039, %v1024
      %1131 = vst.msk [vmem:[%s1112 + $0x128] sm:$0xff] %vm1039, %v1025
      %1132 = vst.msk [vmem:[%s1112 + $0x130] sm:$0xff] %vm1039, %v1026
      %1133 = vst.msk [vmem:[%s1112 + $0x148] sm:$0xff] %vm1039, %v1027
      %1134 = vst.msk [vmem:[%s1112 + $0x150] sm:$0xff] %vm1039, %v1028
      %1135 = vst.msk [vmem:[%s1112 + $0x168] sm:$0xff] %vm1039, %v1029
      %1136 = vst.msk [vmem:[%s1112 + $0x170] sm:$0xff] %vm1039, %v1030
      %1137 = vst.msk [vmem:[%s1112 + $0x188] sm:$0xff] %vm1039, %v1031
      %1138 = vst.msk [vmem:[%s1112 + $0x190] sm:$0xff] %vm1039, %v1032
      %1139 = vst.msk [vmem:[%s1112 + $0x1a8] sm:$0xff] %vm1039, %v1033
      %1140 = vst.msk [vmem:[%s1112 + $0x1b0] sm:$0xff] %vm1039, %v1034
      %1141 = vst.msk [vmem:[%s1112 + $0x1c8] sm:$0xff] %vm1039, %v1035
      %1142 = vst.msk [vmem:[%s1112 + $0x1d0] sm:$0xff] %vm1039, %v1036
      %1143 = vst.msk [vmem:[%s1112 + $0x1e8] sm:$0xff] %vm1039, %v1037
      %1144 = vst.msk [vmem:[%s1112 + $0x1f0] sm:$0xff] %vm1039, %v1038
      %v1145 = vld [vmem:[#allocation2 + $0x7] sm:$0xff]
      %v1146 = vld [vmem:[#allocation2 + $0xf] sm:$0xff]
      %v1147 = vld [vmem:[#allocation2 + $0x27] sm:$0xff]
      %v1148 = vld [vmem:[#allocation2 + $0x2f] sm:$0xff]
      %v1149 = vld [vmem:[#allocation2 + $0x47] sm:$0xff]
      %v1150 = vld [vmem:[#allocation2 + $0x4f] sm:$0xff]
      %v1151 = vld [vmem:[#allocation2 + $0x67] sm:$0xff]
      %v1152 = vld [vmem:[#allocation2 + $0x6f] sm:$0xff]
      %v1153 = vld [vmem:[#allocation2 + $0x87] sm:$0xff]
      %v1154 = vld [vmem:[#allocation2 + $0x8f] sm:$0xff]
      %v1155 = vld [vmem:[#allocation2 + $0xa7] sm:$0xff]
      %v1156 = vld [vmem:[#allocation2 + $0xaf] sm:$0xff]
      %v1157 = vld [vmem:[#allocation2 + $0xc7] sm:$0xff]
      %v1158 = vld [vmem:[#allocation2 + $0xcf] sm:$0xff]
      %v1159 = vld [vmem:[#allocation2 + $0xe7] sm:$0xff]
      %v1160 = vld [vmem:[#allocation2 + $0xef] sm:$0xff]
      %v1161 = vld [vmem:[#allocation2 + $0x107] sm:$0xff]
      %v1162 = vld [vmem:[#allocation2 + $0x10f] sm:$0xff]
      %v1163 = vld [vmem:[#allocation2 + $0x127] sm:$0xff]
      %v1164 = vld [vmem:[#allocation2 + $0x12f] sm:$0xff]
      %v1165 = vld [vmem:[#allocation2 + $0x147] sm:$0xff]
      %v1166 = vld [vmem:[#allocation2 + $0x14f] sm:$0xff]
      %v1167 = vld [vmem:[#allocation2 + $0x167] sm:$0xff]
      %v1168 = vld [vmem:[#allocation2 + $0x16f] sm:$0xff]
      %v1169 = vld [vmem:[#allocation2 + $0x187] sm:$0xff]
      %v1170 = vld [vmem:[#allocation2 + $0x18f] sm:$0xff]
      %v1171 = vld [vmem:[#allocation2 + $0x1a7] sm:$0xff]
      %v1172 = vld [vmem:[#allocation2 + $0x1af] sm:$0xff]
      %v1173 = vld [vmem:[#allocation2 + $0x1c7] sm:$0xff]
      %v1174 = vld [vmem:[#allocation2 + $0x1cf] sm:$0xff]
      %v1175 = vld [vmem:[#allocation2 + $0x1e7] sm:$0xff]
      %v1176 = vld [vmem:[#allocation2 + $0x1ef] sm:$0xff]
      %v1177 = vpack.c.bf16 %v1146, %v1145
      %v1178 = vpack.c.bf16 %v1148, %v1147
      %v1179 = vpack.c.bf16 %v1150, %v1149
      %v1180 = vpack.c.bf16 %v1152, %v1151
      %v1181 = vpack.c.bf16 %v1154, %v1153
      %v1182 = vpack.c.bf16 %v1156, %v1155
      %v1183 = vpack.c.bf16 %v1158, %v1157
      %v1184 = vpack.c.bf16 %v1160, %v1159
      %v1185 = vpack.c.bf16 %v1162, %v1161
      %v1186 = vpack.c.bf16 %v1164, %v1163
      %v1187 = vpack.c.bf16 %v1166, %v1165
      %v1188 = vpack.c.bf16 %v1168, %v1167
      %v1189 = vpack.c.bf16 %v1170, %v1169
      %v1190 = vpack.c.bf16 %v1172, %v1171
      %v1191 = vpack.c.bf16 %v1174, %v1173
      %v1192 = vpack.c.bf16 %v1176, %v1175
      %v1193 = vld [vmem:[%s3] sm:$0xf]
      %v1194 = vld [vmem:[#allocation2 + $0x8] sm:$0xff]
      %v1195 = vld [vmem:[#allocation2 + $0x10] sm:$0xff]
      %v1196 = vld [vmem:[#allocation2 + $0x28] sm:$0xff]
      %v1197 = vld [vmem:[#allocation2 + $0x30] sm:$0xff]
      %v1198 = vld [vmem:[#allocation2 + $0x48] sm:$0xff]
      %v1199 = vld [vmem:[#allocation2 + $0x50] sm:$0xff]
      %v1200 = vld [vmem:[#allocation2 + $0x68] sm:$0xff]
      %v1201 = vld [vmem:[#allocation2 + $0x70] sm:$0xff]
      %v1202 = vld [vmem:[#allocation2 + $0x88] sm:$0xff]
      %v1203 = vld [vmem:[#allocation2 + $0x90] sm:$0xff]
      %v1204 = vld [vmem:[#allocation2 + $0xa8] sm:$0xff]
      %v1205 = vld [vmem:[#allocation2 + $0xb0] sm:$0xff]
      %v1206 = vld [vmem:[#allocation2 + $0xc8] sm:$0xff]
      %v1207 = vld [vmem:[#allocation2 + $0xd0] sm:$0xff]
      %v1208 = vld [vmem:[#allocation2 + $0xe8] sm:$0xff]
      %v1209 = vld [vmem:[#allocation2 + $0xf0] sm:$0xff]
      %v1210 = vld [vmem:[#allocation2 + $0x108] sm:$0xff]
      %v1211 = vld [vmem:[#allocation2 + $0x110] sm:$0xff]
      %v1212 = vld [vmem:[#allocation2 + $0x128] sm:$0xff]
      %v1213 = vld [vmem:[#allocation2 + $0x130] sm:$0xff]
      %v1214 = vld [vmem:[#allocation2 + $0x148] sm:$0xff]
      %v1215 = vld [vmem:[#allocation2 + $0x150] sm:$0xff]
      %v1216 = vld [vmem:[#allocation2 + $0x168] sm:$0xff]
      %v1217 = vld [vmem:[#allocation2 + $0x170] sm:$0xff]
      %v1218 = vld [vmem:[#allocation2 + $0x188] sm:$0xff]
      %v1219 = vld [vmem:[#allocation2 + $0x190] sm:$0xff]
      %v1220 = vld [vmem:[#allocation2 + $0x1a8] sm:$0xff]
      %v1221 = vld [vmem:[#allocation2 + $0x1b0] sm:$0xff]
      %v1222 = vld [vmem:[#allocation2 + $0x1c8] sm:$0xff]
      %v1223 = vld [vmem:[#allocation2 + $0x1d0] sm:$0xff]
      %v1224 = vld [vmem:[#allocation2 + $0x1e8] sm:$0xff]
      %v1225 = vld [vmem:[#allocation2 + $0x1f0] sm:$0xff]
      %v1226 = vpack.c.bf16 %v1195, %v1194
      %v1227 = vpack.c.bf16 %v1197, %v1196
      %v1228 = vpack.c.bf16 %v1199, %v1198
      %v1229 = vpack.c.bf16 %v1201, %v1200
      %v1230 = vpack.c.bf16 %v1203, %v1202
      %v1231 = vpack.c.bf16 %v1205, %v1204
      %v1232 = vpack.c.bf16 %v1207, %v1206
      %v1233 = vpack.c.bf16 %v1209, %v1208
      %v1234 = vpack.c.bf16 %v1211, %v1210
      %v1235 = vpack.c.bf16 %v1213, %v1212
      %v1236 = vpack.c.bf16 %v1215, %v1214
      %v1237 = vpack.c.bf16 %v1217, %v1216
      %v1238 = vpack.c.bf16 %v1219, %v1218
      %v1239 = vpack.c.bf16 %v1221, %v1220
      %v1240 = vpack.c.bf16 %v1223, %v1222
      %v1241 = vpack.c.bf16 %v1225, %v1224
      %v1242 = vld [vmem:[%s3 + $0x4] sm:$0xf]
      %v1244 = vsel %vm1039, %v1226, 0
      %v1247 = vsel %vm1039, %v1227, 0
      %v1250 = vsel %vm1039, %v1228, 0
      %v1253 = vsel %vm1039, %v1229, 0
      %v1256 = vsel %vm1039, %v1230, 0
      %v1259 = vsel %vm1039, %v1231, 0
      %v1262 = vsel %vm1039, %v1232, 0
      %v1265 = vsel %vm1039, %v1233, 0
      %v1268 = vsel %vm1039, %v1234, 0
      %v1271 = vsel %vm1039, %v1235, 0
      %v1274 = vsel %vm1039, %v1236, 0
      %v1277 = vsel %vm1039, %v1237, 0
      %v1280 = vsel %vm1039, %v1238, 0
      %v1283 = vsel %vm1039, %v1239, 0
      %v1286 = vsel %vm1039, %v1240, 0
      %v1289 = vsel %vm1039, %v1241, 0
      %vm1291 = vcmask 1043456
      %v1293 = vsel %vm1291, %v1242, 0
      %1295 = vmatpush.bf16.msra.mxu0 0
      %1296 = vmatpush.bf16.msra.mxu0 0
      %1297 = vmatpush.bf16.msra.mxu0 0
      %1298 = vmatpush.bf16.msra.mxu0 0
      %1299 = vmatpush.bf16.msra.mxu0 0
      %1300 = vmatpush.bf16.msra.mxu0 0
      %1301 = vmatpush.bf16.msra.mxu0 0
      %1302 = vmatpush.bf16.msra.mxu0 %v1293
      %1303 = vmatmul.bf16.gmra.mxu0 %v1244
      %v1304 = vpop.f32.mrf.mxu0
      %v1305 = vadd.f32 0.0, %v1304
      %v1306 = vpop.f32.mrf.mxu0
      %v1307 = vadd.f32 0.0, %v1306
      %1308 = vmatmul.bf16.gmra.mxu0 %v1247
      %v1309 = vpop.f32.mrf.mxu0
      %v1310 = vadd.f32 0.0, %v1309
      %v1311 = vpop.f32.mrf.mxu0
      %v1312 = vadd.f32 0.0, %v1311
      %1313 = vmatmul.bf16.gmra.mxu0 %v1250
      %v1314 = vpop.f32.mrf.mxu0
      %v1315 = vadd.f32 0.0, %v1314
      %v1316 = vpop.f32.mrf.mxu0
      %v1317 = vadd.f32 0.0, %v1316
      %1318 = vmatmul.bf16.gmra.mxu0 %v1253
      %v1319 = vpop.f32.mrf.mxu0
      %v1320 = vadd.f32 0.0, %v1319
      %v1321 = vpop.f32.mrf.mxu0
      %v1322 = vadd.f32 0.0, %v1321
      %1323 = vmatmul.bf16.gmra.mxu0 %v1256
      %v1324 = vpop.f32.mrf.mxu0
      %v1325 = vadd.f32 0.0, %v1324
      %v1326 = vpop.f32.mrf.mxu0
      %v1327 = vadd.f32 0.0, %v1326
      %1328 = vmatmul.bf16.gmra.mxu0 %v1259
      %v1329 = vpop.f32.mrf.mxu0
      %v1330 = vadd.f32 0.0, %v1329
      %v1331 = vpop.f32.mrf.mxu0
      %v1332 = vadd.f32 0.0, %v1331
      %1333 = vmatmul.bf16.gmra.mxu0 %v1262
      %v1334 = vpop.f32.mrf.mxu0
      %v1335 = vadd.f32 0.0, %v1334
      %v1336 = vpop.f32.mrf.mxu0
      %v1337 = vadd.f32 0.0, %v1336
      %1338 = vmatmul.bf16.gmra.mxu0 %v1265
      %v1339 = vpop.f32.mrf.mxu0
      %v1340 = vadd.f32 0.0, %v1339
      %v1341 = vpop.f32.mrf.mxu0
      %v1342 = vadd.f32 0.0, %v1341
      %1343 = vmatmul.bf16.gmra.mxu0 %v1268
      %v1344 = vpop.f32.mrf.mxu0
      %v1345 = vadd.f32 0.0, %v1344
      %v1346 = vpop.f32.mrf.mxu0
      %v1347 = vadd.f32 0.0, %v1346
      %1348 = vmatmul.bf16.gmra.mxu0 %v1271
      %v1349 = vpop.f32.mrf.mxu0
      %v1350 = vadd.f32 0.0, %v1349
      %v1351 = vpop.f32.mrf.mxu0
      %v1352 = vadd.f32 0.0, %v1351
      %1353 = vmatmul.bf16.gmra.mxu0 %v1274
      %v1354 = vpop.f32.mrf.mxu0
      %v1355 = vadd.f32 0.0, %v1354
      %v1356 = vpop.f32.mrf.mxu0
      %v1357 = vadd.f32 0.0, %v1356
      %1358 = vmatmul.bf16.gmra.mxu0 %v1277
      %v1359 = vpop.f32.mrf.mxu0
      %v1360 = vadd.f32 0.0, %v1359
      %v1361 = vpop.f32.mrf.mxu0
      %v1362 = vadd.f32 0.0, %v1361
      %1363 = vmatmul.bf16.gmra.mxu0 %v1280
      %v1364 = vpop.f32.mrf.mxu0
      %v1365 = vadd.f32 0.0, %v1364
      %v1366 = vpop.f32.mrf.mxu0
      %v1367 = vadd.f32 0.0, %v1366
      %1368 = vmatmul.bf16.gmra.mxu0 %v1283
      %v1369 = vpop.f32.mrf.mxu0
      %v1370 = vadd.f32 0.0, %v1369
      %v1371 = vpop.f32.mrf.mxu0
      %v1372 = vadd.f32 0.0, %v1371
      %1373 = vmatmul.bf16.gmra.mxu0 %v1286
      %v1374 = vpop.f32.mrf.mxu0
      %v1375 = vadd.f32 0.0, %v1374
      %v1376 = vpop.f32.mrf.mxu0
      %v1377 = vadd.f32 0.0, %v1376
      %1378 = vmatmul.bf16.gmra.mxu0 %v1289
      %v1379 = vpop.f32.mrf.mxu0
      %v1380 = vadd.f32 0.0, %v1379
      %v1381 = vpop.f32.mrf.mxu0
      %v1382 = vadd.f32 0.0, %v1381
      %1383 = vdwg.mxu0
      %v1385 = vsel %vm1039, %v1177, 0
      %v1388 = vsel %vm1039, %v1178, 0
      %v1391 = vsel %vm1039, %v1179, 0
      %v1394 = vsel %vm1039, %v1180, 0
      %v1397 = vsel %vm1039, %v1181, 0
      %v1400 = vsel %vm1039, %v1182, 0
      %v1403 = vsel %vm1039, %v1183, 0
      %v1406 = vsel %vm1039, %v1184, 0
      %v1409 = vsel %vm1039, %v1185, 0
      %v1412 = vsel %vm1039, %v1186, 0
      %v1415 = vsel %vm1039, %v1187, 0
      %v1418 = vsel %vm1039, %v1188, 0
      %v1421 = vsel %vm1039, %v1189, 0
      %v1424 = vsel %vm1039, %v1190, 0
      %v1427 = vsel %vm1039, %v1191, 0
      %v1430 = vsel %vm1039, %v1192, 0
      %v1433 = vsel %vm1291, %v1193, 0
      %1435 = vmatpush.bf16.msra.mxu0 0
      %1436 = vmatpush.bf16.msra.mxu0 0
      %1437 = vmatpush.bf16.msra.mxu0 0
      %1438 = vmatpush.bf16.msra.mxu0 0
      %1439 = vmatpush.bf16.msra.mxu0 0
      %1440 = vmatpush.bf16.msra.mxu0 0
      %1441 = vmatpush.bf16.msra.mxu0 0
      %1442 = vmatpush.bf16.msra.mxu0 %v1433
      %1443 = vmatmul.bf16.gmra.mxu0 %v1385
      %v1444 = vpop.f32.mrf.mxu0
      %v1445 = vadd.f32 %v1305, %v1444
      %v1446 = vpop.f32.mrf.mxu0
      %v1447 = vadd.f32 %v1307, %v1446
      %1448 = vmatmul.bf16.gmra.mxu0 %v1388
      %v1449 = vpop.f32.mrf.mxu0
      %v1450 = vadd.f32 %v1310, %v1449
      %v1451 = vpop.f32.mrf.mxu0
      %v1452 = vadd.f32 %v1312, %v1451
      %1453 = vmatmul.bf16.gmra.mxu0 %v1391
      %v1454 = vpop.f32.mrf.mxu0
      %v1455 = vadd.f32 %v1315, %v1454
      %v1456 = vpop.f32.mrf.mxu0
      %v1457 = vadd.f32 %v1317, %v1456
      %1458 = vmatmul.bf16.gmra.mxu0 %v1394
      %v1459 = vpop.f32.mrf.mxu0
      %v1460 = vadd.f32 %v1320, %v1459
      %v1461 = vpop.f32.mrf.mxu0
      %v1462 = vadd.f32 %v1322, %v1461
      %1463 = vmatmul.bf16.gmra.mxu0 %v1397
      %v1464 = vpop.f32.mrf.mxu0
      %v1465 = vadd.f32 %v1325, %v1464
      %v1466 = vpop.f32.mrf.mxu0
      %v1467 = vadd.f32 %v1327, %v1466
      %1468 = vmatmul.bf16.gmra.mxu0 %v1400
      %v1469 = vpop.f32.mrf.mxu0
      %v1470 = vadd.f32 %v1330, %v1469
      %v1471 = vpop.f32.mrf.mxu0
      %v1472 = vadd.f32 %v1332, %v1471
      %1473 = vmatmul.bf16.gmra.mxu0 %v1403
      %v1474 = vpop.f32.mrf.mxu0
      %v1475 = vadd.f32 %v1335, %v1474
      %v1476 = vpop.f32.mrf.mxu0
      %v1477 = vadd.f32 %v1337, %v1476
      %1478 = vmatmul.bf16.gmra.mxu0 %v1406
      %v1479 = vpop.f32.mrf.mxu0
      %v1480 = vadd.f32 %v1340, %v1479
      %v1481 = vpop.f32.mrf.mxu0
      %v1482 = vadd.f32 %v1342, %v1481
      %1483 = vmatmul.bf16.gmra.mxu0 %v1409
      %v1484 = vpop.f32.mrf.mxu0
      %v1485 = vadd.f32 %v1345, %v1484
      %v1486 = vpop.f32.mrf.mxu0
      %v1487 = vadd.f32 %v1347, %v1486
      %1488 = vmatmul.bf16.gmra.mxu0 %v1412
      %v1489 = vpop.f32.mrf.mxu0
      %v1490 = vadd.f32 %v1350, %v1489
      %v1491 = vpop.f32.mrf.mxu0
      %v1492 = vadd.f32 %v1352, %v1491
      %1493 = vmatmul.bf16.gmra.mxu0 %v1415
      %v1494 = vpop.f32.mrf.mxu0
      %v1495 = vadd.f32 %v1355, %v1494
      %v1496 = vpop.f32.mrf.mxu0
      %v1497 = vadd.f32 %v1357, %v1496
      %1498 = vmatmul.bf16.gmra.mxu0 %v1418
      %v1499 = vpop.f32.mrf.mxu0
      %v1500 = vadd.f32 %v1360, %v1499
      %v1501 = vpop.f32.mrf.mxu0
      %v1502 = vadd.f32 %v1362, %v1501
      %1503 = vmatmul.bf16.gmra.mxu0 %v1421
      %v1504 = vpop.f32.mrf.mxu0
      %v1505 = vadd.f32 %v1365, %v1504
      %v1506 = vpop.f32.mrf.mxu0
      %v1507 = vadd.f32 %v1367, %v1506
      %1508 = vmatmul.bf16.gmra.mxu0 %v1424
      %v1509 = vpop.f32.mrf.mxu0
      %v1510 = vadd.f32 %v1370, %v1509
      %v1511 = vpop.f32.mrf.mxu0
      %v1512 = vadd.f32 %v1372, %v1511
      %1513 = vmatmul.bf16.gmra.mxu0 %v1427
      %v1514 = vpop.f32.mrf.mxu0
      %v1515 = vadd.f32 %v1375, %v1514
      %v1516 = vpop.f32.mrf.mxu0
      %v1517 = vadd.f32 %v1377, %v1516
      %1518 = vmatmul.bf16.gmra.mxu0 %v1430
      %v1519 = vpop.f32.mrf.mxu0
      %v1520 = vadd.f32 %v1380, %v1519
      %v1521 = vpop.f32.mrf.mxu0
      %v1522 = vadd.f32 %v1382, %v1521
      %1523 = vdwg.mxu0
      %v1524 = vld [vmem:[#allocation2 + $0x9] sm:$0xff]
      %v1525 = vld [vmem:[#allocation2 + $0x11] sm:$0xff]
      %v1526 = vld [vmem:[#allocation2 + $0x29] sm:$0xff]
      %v1527 = vld [vmem:[#allocation2 + $0x31] sm:$0xff]
      %v1528 = vld [vmem:[#allocation2 + $0x49] sm:$0xff]
      %v1529 = vld [vmem:[#allocation2 + $0x51] sm:$0xff]
      %v1530 = vld [vmem:[#allocation2 + $0x69] sm:$0xff]
      %v1531 = vld [vmem:[#allocation2 + $0x71] sm:$0xff]
      %v1532 = vld [vmem:[#allocation2 + $0x89] sm:$0xff]
      %v1533 = vld [vmem:[#allocation2 + $0x91] sm:$0xff]
      %v1534 = vld [vmem:[#allocation2 + $0xa9] sm:$0xff]
      %v1535 = vld [vmem:[#allocation2 + $0xb1] sm:$0xff]
      %v1536 = vld [vmem:[#allocation2 + $0xc9] sm:$0xff]
      %v1537 = vld [vmem:[#allocation2 + $0xd1] sm:$0xff]
      %v1538 = vld [vmem:[#allocation2 + $0xe9] sm:$0xff]
      %v1539 = vld [vmem:[#allocation2 + $0xf1] sm:$0xff]
      %v1540 = vld [vmem:[#allocation2 + $0x109] sm:$0xff]
      %v1541 = vld [vmem:[#allocation2 + $0x111] sm:$0xff]
      %v1542 = vld [vmem:[#allocation2 + $0x129] sm:$0xff]
      %v1543 = vld [vmem:[#allocation2 + $0x131] sm:$0xff]
      %v1544 = vld [vmem:[#allocation2 + $0x149] sm:$0xff]
      %v1545 = vld [vmem:[#allocation2 + $0x151] sm:$0xff]
      %v1546 = vld [vmem:[#allocation2 + $0x169] sm:$0xff]
      %v1547 = vld [vmem:[#allocation2 + $0x171] sm:$0xff]
      %v1548 = vld [vmem:[#allocation2 + $0x189] sm:$0xff]
      %v1549 = vld [vmem:[#allocation2 + $0x191] sm:$0xff]
      %v1550 = vld [vmem:[#allocation2 + $0x1a9] sm:$0xff]
      %v1551 = vld [vmem:[#allocation2 + $0x1b1] sm:$0xff]
      %v1552 = vld [vmem:[#allocation2 + $0x1c9] sm:$0xff]
      %v1553 = vld [vmem:[#allocation2 + $0x1d1] sm:$0xff]
      %v1554 = vld [vmem:[#allocation2 + $0x1e9] sm:$0xff]
      %v1555 = vld [vmem:[#allocation2 + $0x1f1] sm:$0xff]
      %v1556 = vpack.c.bf16 %v1525, %v1524
      %v1557 = vpack.c.bf16 %v1527, %v1526
      %v1558 = vpack.c.bf16 %v1529, %v1528
      %v1559 = vpack.c.bf16 %v1531, %v1530
      %v1560 = vpack.c.bf16 %v1533, %v1532
      %v1561 = vpack.c.bf16 %v1535, %v1534
      %v1562 = vpack.c.bf16 %v1537, %v1536
      %v1563 = vpack.c.bf16 %v1539, %v1538
      %v1564 = vpack.c.bf16 %v1541, %v1540
      %v1565 = vpack.c.bf16 %v1543, %v1542
      %v1566 = vpack.c.bf16 %v1545, %v1544
      %v1567 = vpack.c.bf16 %v1547, %v1546
      %v1568 = vpack.c.bf16 %v1549, %v1548
      %v1569 = vpack.c.bf16 %v1551, %v1550
      %v1570 = vpack.c.bf16 %v1553, %v1552
      %v1571 = vpack.c.bf16 %v1555, %v1554
      %v1572 = vld [vmem:[%s3 + $0x8] sm:$0xf]
      %v1574 = vsel %vm1039, %v1556, 0
      %v1577 = vsel %vm1039, %v1557, 0
      %v1580 = vsel %vm1039, %v1558, 0
      %v1583 = vsel %vm1039, %v1559, 0
      %v1586 = vsel %vm1039, %v1560, 0
      %v1589 = vsel %vm1039, %v1561, 0
      %v1592 = vsel %vm1039, %v1562, 0
      %v1595 = vsel %vm1039, %v1563, 0
      %v1598 = vsel %vm1039, %v1564, 0
      %v1601 = vsel %vm1039, %v1565, 0
      %v1604 = vsel %vm1039, %v1566, 0
      %v1607 = vsel %vm1039, %v1567, 0
      %v1610 = vsel %vm1039, %v1568, 0
      %v1613 = vsel %vm1039, %v1569, 0
      %v1616 = vsel %vm1039, %v1570, 0
      %v1619 = vsel %vm1039, %v1571, 0
      %v1622 = vsel %vm1291, %v1572, 0
      %1624 = vmatpush.bf16.msra.mxu0 0
      %1625 = vmatpush.bf16.msra.mxu0 0
      %1626 = vmatpush.bf16.msra.mxu0 0
      %1627 = vmatpush.bf16.msra.mxu0 0
      %1628 = vmatpush.bf16.msra.mxu0 0
      %1629 = vmatpush.bf16.msra.mxu0 0
      %1630 = vmatpush.bf16.msra.mxu0 0
      %1631 = vmatpush.bf16.msra.mxu0 %v1622
      %1632 = vmatmul.bf16.gmra.mxu0 %v1574
      %v1633 = vpop.f32.mrf.mxu0
      %v1634 = vadd.f32 0.0, %v1633
      %v1635 = vpop.f32.mrf.mxu0
      %v1636 = vadd.f32 0.0, %v1635
      %1637 = vmatmul.bf16.gmra.mxu0 %v1577
      %v1638 = vpop.f32.mrf.mxu0
      %v1639 = vadd.f32 0.0, %v1638
      %v1640 = vpop.f32.mrf.mxu0
      %v1641 = vadd.f32 0.0, %v1640
      %1642 = vmatmul.bf16.gmra.mxu0 %v1580
      %v1643 = vpop.f32.mrf.mxu0
      %v1644 = vadd.f32 0.0, %v1643
      %v1645 = vpop.f32.mrf.mxu0
      %v1646 = vadd.f32 0.0, %v1645
      %1647 = vmatmul.bf16.gmra.mxu0 %v1583
      %v1648 = vpop.f32.mrf.mxu0
      %v1649 = vadd.f32 0.0, %v1648
      %v1650 = vpop.f32.mrf.mxu0
      %v1651 = vadd.f32 0.0, %v1650
      %1652 = vmatmul.bf16.gmra.mxu0 %v1586
      %v1653 = vpop.f32.mrf.mxu0
      %v1654 = vadd.f32 0.0, %v1653
      %v1655 = vpop.f32.mrf.mxu0
      %v1656 = vadd.f32 0.0, %v1655
      %1657 = vmatmul.bf16.gmra.mxu0 %v1589
      %v1658 = vpop.f32.mrf.mxu0
      %v1659 = vadd.f32 0.0, %v1658
      %v1660 = vpop.f32.mrf.mxu0
      %v1661 = vadd.f32 0.0, %v1660
      %1662 = vmatmul.bf16.gmra.mxu0 %v1592
      %v1663 = vpop.f32.mrf.mxu0
      %v1664 = vadd.f32 0.0, %v1663
      %v1665 = vpop.f32.mrf.mxu0
      %v1666 = vadd.f32 0.0, %v1665
      %1667 = vmatmul.bf16.gmra.mxu0 %v1595
      %v1668 = vpop.f32.mrf.mxu0
      %v1669 = vadd.f32 0.0, %v1668
      %v1670 = vpop.f32.mrf.mxu0
      %v1671 = vadd.f32 0.0, %v1670
      %1672 = vmatmul.bf16.gmra.mxu0 %v1598
      %v1673 = vpop.f32.mrf.mxu0
      %v1674 = vadd.f32 0.0, %v1673
      %v1675 = vpop.f32.mrf.mxu0
      %v1676 = vadd.f32 0.0, %v1675
      %1677 = vmatmul.bf16.gmra.mxu0 %v1601
      %v1678 = vpop.f32.mrf.mxu0
      %v1679 = vadd.f32 0.0, %v1678
      %v1680 = vpop.f32.mrf.mxu0
      %v1681 = vadd.f32 0.0, %v1680
      %1682 = vmatmul.bf16.gmra.mxu0 %v1604
      %v1683 = vpop.f32.mrf.mxu0
      %v1684 = vadd.f32 0.0, %v1683
      %v1685 = vpop.f32.mrf.mxu0
      %v1686 = vadd.f32 0.0, %v1685
      %1687 = vmatmul.bf16.gmra.mxu0 %v1607
      %v1688 = vpop.f32.mrf.mxu0
      %v1689 = vadd.f32 0.0, %v1688
      %v1690 = vpop.f32.mrf.mxu0
      %v1691 = vadd.f32 0.0, %v1690
      %1692 = vmatmul.bf16.gmra.mxu0 %v1610
      %v1693 = vpop.f32.mrf.mxu0
      %v1694 = vadd.f32 0.0, %v1693
      %v1695 = vpop.f32.mrf.mxu0
      %v1696 = vadd.f32 0.0, %v1695
      %1697 = vmatmul.bf16.gmra.mxu0 %v1613
      %v1698 = vpop.f32.mrf.mxu0
      %v1699 = vadd.f32 0.0, %v1698
      %v1700 = vpop.f32.mrf.mxu0
      %v1701 = vadd.f32 0.0, %v1700
      %1702 = vmatmul.bf16.gmra.mxu0 %v1616
      %v1703 = vpop.f32.mrf.mxu0
      %v1704 = vadd.f32 0.0, %v1703
      %v1705 = vpop.f32.mrf.mxu0
      %v1706 = vadd.f32 0.0, %v1705
      %1707 = vmatmul.bf16.gmra.mxu0 %v1619
      %v1708 = vpop.f32.mrf.mxu0
      %v1709 = vadd.f32 0.0, %v1708
      %v1710 = vpop.f32.mrf.mxu0
      %v1711 = vadd.f32 0.0, %v1710
      %1712 = vdwg.mxu0
      %v1713 = vadd.f32 %v1445, %v1634
      %v1714 = vadd.f32 %v1447, %v1636
      %v1715 = vadd.f32 %v1450, %v1639
      %v1716 = vadd.f32 %v1452, %v1641
      %v1717 = vadd.f32 %v1455, %v1644
      %v1718 = vadd.f32 %v1457, %v1646
      %v1719 = vadd.f32 %v1460, %v1649
      %v1720 = vadd.f32 %v1462, %v1651
      %v1721 = vadd.f32 %v1465, %v1654
      %v1722 = vadd.f32 %v1467, %v1656
      %v1723 = vadd.f32 %v1470, %v1659
      %v1724 = vadd.f32 %v1472, %v1661
      %v1725 = vadd.f32 %v1475, %v1664
      %v1726 = vadd.f32 %v1477, %v1666
      %v1727 = vadd.f32 %v1480, %v1669
      %v1728 = vadd.f32 %v1482, %v1671
      %v1729 = vadd.f32 %v1485, %v1674
      %v1730 = vadd.f32 %v1487, %v1676
      %v1731 = vadd.f32 %v1490, %v1679
      %v1732 = vadd.f32 %v1492, %v1681
      %v1733 = vadd.f32 %v1495, %v1684
      %v1734 = vadd.f32 %v1497, %v1686
      %v1735 = vadd.f32 %v1500, %v1689
      %v1736 = vadd.f32 %v1502, %v1691
      %v1737 = vadd.f32 %v1505, %v1694
      %v1738 = vadd.f32 %v1507, %v1696
      %v1739 = vadd.f32 %v1510, %v1699
      %v1740 = vadd.f32 %v1512, %v1701
      %v1741 = vadd.f32 %v1515, %v1704
      %v1742 = vadd.f32 %v1517, %v1706
      %v1743 = vadd.f32 %v1520, %v1709
      %v1744 = vadd.f32 %v1522, %v1711
      %v1745 = vld [vmem:[%s1112 + $0x7] sm:$0xff]
      %v1746 = vld [vmem:[%s1112 + $0xf] sm:$0xff]
      %v1747 = vld [vmem:[%s1112 + $0x27] sm:$0xff]
      %v1748 = vld [vmem:[%s1112 + $0x2f] sm:$0xff]
      %v1749 = vld [vmem:[%s1112 + $0x47] sm:$0xff]
      %v1750 = vld [vmem:[%s1112 + $0x4f] sm:$0xff]
      %v1751 = vld [vmem:[%s1112 + $0x67] sm:$0xff]
      %v1752 = vld [vmem:[%s1112 + $0x6f] sm:$0xff]
      %v1753 = vld [vmem:[%s1112 + $0x87] sm:$0xff]
      %v1754 = vld [vmem:[%s1112 + $0x8f] sm:$0xff]
      %v1755 = vld [vmem:[%s1112 + $0xa7] sm:$0xff]
      %v1756 = vld [vmem:[%s1112 + $0xaf] sm:$0xff]
      %v1757 = vld [vmem:[%s1112 + $0xc7] sm:$0xff]
      %v1758 = vld [vmem:[%s1112 + $0xcf] sm:$0xff]
      %v1759 = vld [vmem:[%s1112 + $0xe7] sm:$0xff]
      %v1760 = vld [vmem:[%s1112 + $0xef] sm:$0xff]
      %v1761 = vld [vmem:[%s1112 + $0x107] sm:$0xff]
      %v1762 = vld [vmem:[%s1112 + $0x10f] sm:$0xff]
      %v1763 = vld [vmem:[%s1112 + $0x127] sm:$0xff]
      %v1764 = vld [vmem:[%s1112 + $0x12f] sm:$0xff]
      %v1765 = vld [vmem:[%s1112 + $0x147] sm:$0xff]
      %v1766 = vld [vmem:[%s1112 + $0x14f] sm:$0xff]
      %v1767 = vld [vmem:[%s1112 + $0x167] sm:$0xff]
      %v1768 = vld [vmem:[%s1112 + $0x16f] sm:$0xff]
      %v1769 = vld [vmem:[%s1112 + $0x187] sm:$0xff]
      %v1770 = vld [vmem:[%s1112 + $0x18f] sm:$0xff]
      %v1771 = vld [vmem:[%s1112 + $0x1a7] sm:$0xff]
      %v1772 = vld [vmem:[%s1112 + $0x1af] sm:$0xff]
      %v1773 = vld [vmem:[%s1112 + $0x1c7] sm:$0xff]
      %v1774 = vld [vmem:[%s1112 + $0x1cf] sm:$0xff]
      %v1775 = vld [vmem:[%s1112 + $0x1e7] sm:$0xff]
      %v1776 = vld [vmem:[%s1112 + $0x1ef] sm:$0xff]
      %v1777 = vpack.c.bf16 %v1746, %v1745
      %v1778 = vpack.c.bf16 %v1748, %v1747
      %v1779 = vpack.c.bf16 %v1750, %v1749
      %v1780 = vpack.c.bf16 %v1752, %v1751
      %v1781 = vpack.c.bf16 %v1754, %v1753
      %v1782 = vpack.c.bf16 %v1756, %v1755
      %v1783 = vpack.c.bf16 %v1758, %v1757
      %v1784 = vpack.c.bf16 %v1760, %v1759
      %v1785 = vpack.c.bf16 %v1762, %v1761
      %v1786 = vpack.c.bf16 %v1764, %v1763
      %v1787 = vpack.c.bf16 %v1766, %v1765
      %v1788 = vpack.c.bf16 %v1768, %v1767
      %v1789 = vpack.c.bf16 %v1770, %v1769
      %v1790 = vpack.c.bf16 %v1772, %v1771
      %v1791 = vpack.c.bf16 %v1774, %v1773
      %v1792 = vpack.c.bf16 %v1776, %v1775
      %v1793 = vld [vmem:[%s3 + $0xc] sm:$0xf]
      %v1795 = vsel %vm1039, %v1777, 0
      %v1798 = vsel %vm1039, %v1778, 0
      %v1801 = vsel %vm1039, %v1779, 0
      %v1804 = vsel %vm1039, %v1780, 0
      %v1807 = vsel %vm1039, %v1781, 0
      %v1810 = vsel %vm1039, %v1782, 0
      %v1813 = vsel %vm1039, %v1783, 0
      %v1816 = vsel %vm1039, %v1784, 0
      %v1819 = vsel %vm1039, %v1785, 0
      %v1822 = vsel %vm1039, %v1786, 0
      %v1825 = vsel %vm1039, %v1787, 0
      %v1828 = vsel %vm1039, %v1788, 0
      %v1831 = vsel %vm1039, %v1789, 0
      %v1834 = vsel %vm1039, %v1790, 0
      %v1837 = vsel %vm1039, %v1791, 0
      %v1840 = vsel %vm1039, %v1792, 0
      %v1843 = vsel %vm1291, %v1793, 0
      %1845 = vmatpush.bf16.msra.mxu0 0
      %1846 = vmatpush.bf16.msra.mxu0 0
      %1847 = vmatpush.bf16.msra.mxu0 0
      %1848 = vmatpush.bf16.msra.mxu0 0
      %1849 = vmatpush.bf16.msra.mxu0 0
      %1850 = vmatpush.bf16.msra.mxu0 0
      %1851 = vmatpush.bf16.msra.mxu0 0
      %1852 = vmatpush.bf16.msra.mxu0 %v1843
      %1853 = vmatmul.bf16.gmra.mxu0 %v1795
      %v1854 = vpop.f32.mrf.mxu0
      %v1855 = vadd.f32 0.0, %v1854
      %v1856 = vpop.f32.mrf.mxu0
      %v1857 = vadd.f32 0.0, %v1856
      %1858 = vmatmul.bf16.gmra.mxu0 %v1798
      %v1859 = vpop.f32.mrf.mxu0
      %v1860 = vadd.f32 0.0, %v1859
      %v1861 = vpop.f32.mrf.mxu0
      %v1862 = vadd.f32 0.0, %v1861
      %1863 = vmatmul.bf16.gmra.mxu0 %v1801
      %v1864 = vpop.f32.mrf.mxu0
      %v1865 = vadd.f32 0.0, %v1864
      %v1866 = vpop.f32.mrf.mxu0
      %v1867 = vadd.f32 0.0, %v1866
      %1868 = vmatmul.bf16.gmra.mxu0 %v1804
      %v1869 = vpop.f32.mrf.mxu0
      %v1870 = vadd.f32 0.0, %v1869
      %v1871 = vpop.f32.mrf.mxu0
      %v1872 = vadd.f32 0.0, %v1871
      %1873 = vmatmul.bf16.gmra.mxu0 %v1807
      %v1874 = vpop.f32.mrf.mxu0
      %v1875 = vadd.f32 0.0, %v1874
      %v1876 = vpop.f32.mrf.mxu0
      %v1877 = vadd.f32 0.0, %v1876
      %1878 = vmatmul.bf16.gmra.mxu0 %v1810
      %v1879 = vpop.f32.mrf.mxu0
      %v1880 = vadd.f32 0.0, %v1879
      %v1881 = vpop.f32.mrf.mxu0
      %v1882 = vadd.f32 0.0, %v1881
      %1883 = vmatmul.bf16.gmra.mxu0 %v1813
      %v1884 = vpop.f32.mrf.mxu0
      %v1885 = vadd.f32 0.0, %v1884
      %v1886 = vpop.f32.mrf.mxu0
      %v1887 = vadd.f32 0.0, %v1886
      %1888 = vmatmul.bf16.gmra.mxu0 %v1816
      %v1889 = vpop.f32.mrf.mxu0
      %v1890 = vadd.f32 0.0, %v1889
      %v1891 = vpop.f32.mrf.mxu0
      %v1892 = vadd.f32 0.0, %v1891
      %1893 = vmatmul.bf16.gmra.mxu0 %v1819
      %v1894 = vpop.f32.mrf.mxu0
      %v1895 = vadd.f32 0.0, %v1894
      %v1896 = vpop.f32.mrf.mxu0
      %v1897 = vadd.f32 0.0, %v1896
      %1898 = vmatmul.bf16.gmra.mxu0 %v1822
      %v1899 = vpop.f32.mrf.mxu0
      %v1900 = vadd.f32 0.0, %v1899
      %v1901 = vpop.f32.mrf.mxu0
      %v1902 = vadd.f32 0.0, %v1901
      %1903 = vmatmul.bf16.gmra.mxu0 %v1825
      %v1904 = vpop.f32.mrf.mxu0
      %v1905 = vadd.f32 0.0, %v1904
      %v1906 = vpop.f32.mrf.mxu0
      %v1907 = vadd.f32 0.0, %v1906
      %1908 = vmatmul.bf16.gmra.mxu0 %v1828
      %v1909 = vpop.f32.mrf.mxu0
      %v1910 = vadd.f32 0.0, %v1909
      %v1911 = vpop.f32.mrf.mxu0
      %v1912 = vadd.f32 0.0, %v1911
      %1913 = vmatmul.bf16.gmra.mxu0 %v1831
      %v1914 = vpop.f32.mrf.mxu0
      %v1915 = vadd.f32 0.0, %v1914
      %v1916 = vpop.f32.mrf.mxu0
      %v1917 = vadd.f32 0.0, %v1916
      %1918 = vmatmul.bf16.gmra.mxu0 %v1834
      %v1919 = vpop.f32.mrf.mxu0
      %v1920 = vadd.f32 0.0, %v1919
      %v1921 = vpop.f32.mrf.mxu0
      %v1922 = vadd.f32 0.0, %v1921
      %1923 = vmatmul.bf16.gmra.mxu0 %v1837
      %v1924 = vpop.f32.mrf.mxu0
      %v1925 = vadd.f32 0.0, %v1924
      %v1926 = vpop.f32.mrf.mxu0
      %v1927 = vadd.f32 0.0, %v1926
      %1928 = vmatmul.bf16.gmra.mxu0 %v1840
      %v1929 = vpop.f32.mrf.mxu0
      %v1930 = vadd.f32 0.0, %v1929
      %v1931 = vpop.f32.mrf.mxu0
      %v1932 = vadd.f32 0.0, %v1931
      %1933 = vdwg.mxu0
      %v1934 = vadd.f32 %v1713, %v1855
      %v1935 = vadd.f32 %v1714, %v1857
      %v1936 = vadd.f32 %v1715, %v1860
      %v1937 = vadd.f32 %v1716, %v1862
      %v1938 = vadd.f32 %v1717, %v1865
      %v1939 = vadd.f32 %v1718, %v1867
      %v1940 = vadd.f32 %v1719, %v1870
      %v1941 = vadd.f32 %v1720, %v1872
      %v1942 = vadd.f32 %v1721, %v1875
      %v1943 = vadd.f32 %v1722, %v1877
      %v1944 = vadd.f32 %v1723, %v1880
      %v1945 = vadd.f32 %v1724, %v1882
      %v1946 = vadd.f32 %v1725, %v1885
      %v1947 = vadd.f32 %v1726, %v1887
      %v1948 = vadd.f32 %v1727, %v1890
      %v1949 = vadd.f32 %v1728, %v1892
      %v1950 = vadd.f32 %v1729, %v1895
      %v1951 = vadd.f32 %v1730, %v1897
      %v1952 = vadd.f32 %v1731, %v1900
      %v1953 = vadd.f32 %v1732, %v1902
      %v1954 = vadd.f32 %v1733, %v1905
      %v1955 = vadd.f32 %v1734, %v1907
      %v1956 = vadd.f32 %v1735, %v1910
      %v1957 = vadd.f32 %v1736, %v1912
      %v1958 = vadd.f32 %v1737, %v1915
      %v1959 = vadd.f32 %v1738, %v1917
      %v1960 = vadd.f32 %v1739, %v1920
      %v1961 = vadd.f32 %v1740, %v1922
      %v1962 = vadd.f32 %v1741, %v1925
      %v1963 = vadd.f32 %v1742, %v1927
      %v1964 = vadd.f32 %v1743, %v1930
      %v1965 = vadd.f32 %v1744, %v1932
      %v1966 = vld [vmem:[%s1112 + $0x8] sm:$0xff]
      %v1967 = vld [vmem:[%s1112 + $0x10] sm:$0xff]
      %v1968 = vld [vmem:[%s1112 + $0x28] sm:$0xff]
      %v1969 = vld [vmem:[%s1112 + $0x30] sm:$0xff]
      %v1970 = vld [vmem:[%s1112 + $0x48] sm:$0xff]
      %v1971 = vld [vmem:[%s1112 + $0x50] sm:$0xff]
      %v1972 = vld [vmem:[%s1112 + $0x68] sm:$0xff]
      %v1973 = vld [vmem:[%s1112 + $0x70] sm:$0xff]
      %v1974 = vld [vmem:[%s1112 + $0x88] sm:$0xff]
      %v1975 = vld [vmem:[%s1112 + $0x90] sm:$0xff]
      %v1976 = vld [vmem:[%s1112 + $0xa8] sm:$0xff]
      %v1977 = vld [vmem:[%s1112 + $0xb0] sm:$0xff]
      %v1978 = vld [vmem:[%s1112 + $0xc8] sm:$0xff]
      %v1979 = vld [vmem:[%s1112 + $0xd0] sm:$0xff]
      %v1980 = vld [vmem:[%s1112 + $0xe8] sm:$0xff]
      %v1981 = vld [vmem:[%s1112 + $0xf0] sm:$0xff]
      %v1982 = vld [vmem:[%s1112 + $0x108] sm:$0xff]
      %v1983 = vld [vmem:[%s1112 + $0x110] sm:$0xff]
      %v1984 = vld [vmem:[%s1112 + $0x128] sm:$0xff]
      %v1985 = vld [vmem:[%s1112 + $0x130] sm:$0xff]
      %v1986 = vld [vmem:[%s1112 + $0x148] sm:$0xff]
      %v1987 = vld [vmem:[%s1112 + $0x150] sm:$0xff]
      %v1988 = vld [vmem:[%s1112 + $0x168] sm:$0xff]
      %v1989 = vld [vmem:[%s1112 + $0x170] sm:$0xff]
      %v1990 = vld [vmem:[%s1112 + $0x188] sm:$0xff]
      %v1991 = vld [vmem:[%s1112 + $0x190] sm:$0xff]
      %v1992 = vld [vmem:[%s1112 + $0x1a8] sm:$0xff]
      %v1993 = vld [vmem:[%s1112 + $0x1b0] sm:$0xff]
      %v1994 = vld [vmem:[%s1112 + $0x1c8] sm:$0xff]
      %v1995 = vld [vmem:[%s1112 + $0x1d0] sm:$0xff]
      %v1996 = vld [vmem:[%s1112 + $0x1e8] sm:$0xff]
      %v1997 = vld [vmem:[%s1112 + $0x1f0] sm:$0xff]
      %v1998 = vpack.c.bf16 %v1967, %v1966
      %v1999 = vpack.c.bf16 %v1969, %v1968
      %v2000 = vpack.c.bf16 %v1971, %v1970
      %v2001 = vpack.c.bf16 %v1973, %v1972
      %v2002 = vpack.c.bf16 %v1975, %v1974
      %v2003 = vpack.c.bf16 %v1977, %v1976
      %v2004 = vpack.c.bf16 %v1979, %v1978
      %v2005 = vpack.c.bf16 %v1981, %v1980
      %v2006 = vpack.c.bf16 %v1983, %v1982
      %v2007 = vpack.c.bf16 %v1985, %v1984
      %v2008 = vpack.c.bf16 %v1987, %v1986
      %v2009 = vpack.c.bf16 %v1989, %v1988
      %v2010 = vpack.c.bf16 %v1991, %v1990
      %v2011 = vpack.c.bf16 %v1993, %v1992
      %v2012 = vpack.c.bf16 %v1995, %v1994
      %v2013 = vpack.c.bf16 %v1997, %v1996
      %v2014 = vld [vmem:[%s3 + $0x10] sm:$0xf]
      %v2016 = vsel %vm1039, %v1998, 0
      %v2019 = vsel %vm1039, %v1999, 0
      %v2022 = vsel %vm1039, %v2000, 0
      %v2025 = vsel %vm1039, %v2001, 0
      %v2028 = vsel %vm1039, %v2002, 0
      %v2031 = vsel %vm1039, %v2003, 0
      %v2034 = vsel %vm1039, %v2004, 0
      %v2037 = vsel %vm1039, %v2005, 0
      %v2040 = vsel %vm1039, %v2006, 0
      %v2043 = vsel %vm1039, %v2007, 0
      %v2046 = vsel %vm1039, %v2008, 0
      %v2049 = vsel %vm1039, %v2009, 0
      %v2052 = vsel %vm1039, %v2010, 0
      %v2055 = vsel %vm1039, %v2011, 0
      %v2058 = vsel %vm1039, %v2012, 0
      %v2061 = vsel %vm1039, %v2013, 0
      %v2064 = vsel %vm1291, %v2014, 0
      %2066 = vmatpush.bf16.msra.mxu0 0
      %2067 = vmatpush.bf16.msra.mxu0 0
      %2068 = vmatpush.bf16.msra.mxu0 0
      %2069 = vmatpush.bf16.msra.mxu0 0
      %2070 = vmatpush.bf16.msra.mxu0 0
      %2071 = vmatpush.bf16.msra.mxu0 0
      %2072 = vmatpush.bf16.msra.mxu0 0
      %2073 = vmatpush.bf16.msra.mxu0 %v2064
      %2074 = vmatmul.bf16.gmra.mxu0 %v2016
      %v2075 = vpop.f32.mrf.mxu0
      %v2076 = vadd.f32 0.0, %v2075
      %v2077 = vpop.f32.mrf.mxu0
      %v2078 = vadd.f32 0.0, %v2077
      %2079 = vmatmul.bf16.gmra.mxu0 %v2019
      %v2080 = vpop.f32.mrf.mxu0
      %v2081 = vadd.f32 0.0, %v2080
      %v2082 = vpop.f32.mrf.mxu0
      %v2083 = vadd.f32 0.0, %v2082
      %2084 = vmatmul.bf16.gmra.mxu0 %v2022
      %v2085 = vpop.f32.mrf.mxu0
      %v2086 = vadd.f32 0.0, %v2085
      %v2087 = vpop.f32.mrf.mxu0
      %v2088 = vadd.f32 0.0, %v2087
      %2089 = vmatmul.bf16.gmra.mxu0 %v2025
      %v2090 = vpop.f32.mrf.mxu0
      %v2091 = vadd.f32 0.0, %v2090
      %v2092 = vpop.f32.mrf.mxu0
      %v2093 = vadd.f32 0.0, %v2092
      %2094 = vmatmul.bf16.gmra.mxu0 %v2028
      %v2095 = vpop.f32.mrf.mxu0
      %v2096 = vadd.f32 0.0, %v2095
      %v2097 = vpop.f32.mrf.mxu0
      %v2098 = vadd.f32 0.0, %v2097
      %2099 = vmatmul.bf16.gmra.mxu0 %v2031
      %v2100 = vpop.f32.mrf.mxu0
      %v2101 = vadd.f32 0.0, %v2100
      %v2102 = vpop.f32.mrf.mxu0
      %v2103 = vadd.f32 0.0, %v2102
      %2104 = vmatmul.bf16.gmra.mxu0 %v2034
      %v2105 = vpop.f32.mrf.mxu0
      %v2106 = vadd.f32 0.0, %v2105
      %v2107 = vpop.f32.mrf.mxu0
      %v2108 = vadd.f32 0.0, %v2107
      %2109 = vmatmul.bf16.gmra.mxu0 %v2037
      %v2110 = vpop.f32.mrf.mxu0
      %v2111 = vadd.f32 0.0, %v2110
      %v2112 = vpop.f32.mrf.mxu0
      %v2113 = vadd.f32 0.0, %v2112
      %2114 = vmatmul.bf16.gmra.mxu0 %v2040
      %v2115 = vpop.f32.mrf.mxu0
      %v2116 = vadd.f32 0.0, %v2115
      %v2117 = vpop.f32.mrf.mxu0
      %v2118 = vadd.f32 0.0, %v2117
      %2119 = vmatmul.bf16.gmra.mxu0 %v2043
      %v2120 = vpop.f32.mrf.mxu0
      %v2121 = vadd.f32 0.0, %v2120
      %v2122 = vpop.f32.mrf.mxu0
      %v2123 = vadd.f32 0.0, %v2122
      %2124 = vmatmul.bf16.gmra.mxu0 %v2046
      %v2125 = vpop.f32.mrf.mxu0
      %v2126 = vadd.f32 0.0, %v2125
      %v2127 = vpop.f32.mrf.mxu0
      %v2128 = vadd.f32 0.0, %v2127
      %2129 = vmatmul.bf16.gmra.mxu0 %v2049
      %v2130 = vpop.f32.mrf.mxu0
      %v2131 = vadd.f32 0.0, %v2130
      %v2132 = vpop.f32.mrf.mxu0
      %v2133 = vadd.f32 0.0, %v2132
      %2134 = vmatmul.bf16.gmra.mxu0 %v2052
      %v2135 = vpop.f32.mrf.mxu0
      %v2136 = vadd.f32 0.0, %v2135
      %v2137 = vpop.f32.mrf.mxu0
      %v2138 = vadd.f32 0.0, %v2137
      %2139 = vmatmul.bf16.gmra.mxu0 %v2055
      %v2140 = vpop.f32.mrf.mxu0
      %v2141 = vadd.f32 0.0, %v2140
      %v2142 = vpop.f32.mrf.mxu0
      %v2143 = vadd.f32 0.0, %v2142
      %2144 = vmatmul.bf16.gmra.mxu0 %v2058
      %v2145 = vpop.f32.mrf.mxu0
      %v2146 = vadd.f32 0.0, %v2145
      %v2147 = vpop.f32.mrf.mxu0
      %v2148 = vadd.f32 0.0, %v2147
      %2149 = vmatmul.bf16.gmra.mxu0 %v2061
      %v2150 = vpop.f32.mrf.mxu0
      %v2151 = vadd.f32 0.0, %v2150
      %v2152 = vpop.f32.mrf.mxu0
      %v2153 = vadd.f32 0.0, %v2152
      %2154 = vdwg.mxu0
      %v2155 = vadd.f32 %v1934, %v2076
      %v2156 = vadd.f32 %v1935, %v2078
      %v2157 = vadd.f32 %v1936, %v2081
      %v2158 = vadd.f32 %v1937, %v2083
      %v2159 = vadd.f32 %v1938, %v2086
      %v2160 = vadd.f32 %v1939, %v2088
      %v2161 = vadd.f32 %v1940, %v2091
      %v2162 = vadd.f32 %v1941, %v2093
      %v2163 = vadd.f32 %v1942, %v2096
      %v2164 = vadd.f32 %v1943, %v2098
      %v2165 = vadd.f32 %v1944, %v2101
      %v2166 = vadd.f32 %v1945, %v2103
      %v2167 = vadd.f32 %v1946, %v2106
      %v2168 = vadd.f32 %v1947, %v2108
      %v2169 = vadd.f32 %v1948, %v2111
      %v2170 = vadd.f32 %v1949, %v2113
      %v2171 = vadd.f32 %v1950, %v2116
      %v2172 = vadd.f32 %v1951, %v2118
      %v2173 = vadd.f32 %v1952, %v2121
      %v2174 = vadd.f32 %v1953, %v2123
      %v2175 = vadd.f32 %v1954, %v2126
      %v2176 = vadd.f32 %v1955, %v2128
      %v2177 = vadd.f32 %v1956, %v2131
      %v2178 = vadd.f32 %v1957, %v2133
      %v2179 = vadd.f32 %v1958, %v2136
      %v2180 = vadd.f32 %v1959, %v2138
      %v2181 = vadd.f32 %v1960, %v2141
      %v2182 = vadd.f32 %v1961, %v2143
      %v2183 = vadd.f32 %v1962, %v2146
      %v2184 = vadd.f32 %v1963, %v2148
      %v2185 = vadd.f32 %v1964, %v2151
      %v2186 = vadd.f32 %v1965, %v2153
      %v2187 = vld [vmem:[%s1112 + $0x9] sm:$0xff]
      %v2188 = vld [vmem:[%s1112 + $0x11] sm:$0xff]
      %v2189 = vld [vmem:[%s1112 + $0x29] sm:$0xff]
      %v2190 = vld [vmem:[%s1112 + $0x31] sm:$0xff]
      %v2191 = vld [vmem:[%s1112 + $0x49] sm:$0xff]
      %v2192 = vld [vmem:[%s1112 + $0x51] sm:$0xff]
      %v2193 = vld [vmem:[%s1112 + $0x69] sm:$0xff]
      %v2194 = vld [vmem:[%s1112 + $0x71] sm:$0xff]
      %v2195 = vld [vmem:[%s1112 + $0x89] sm:$0xff]
      %v2196 = vld [vmem:[%s1112 + $0x91] sm:$0xff]
      %v2197 = vld [vmem:[%s1112 + $0xa9] sm:$0xff]
      %v2198 = vld [vmem:[%s1112 + $0xb1] sm:$0xff]
      %v2199 = vld [vmem:[%s1112 + $0xc9] sm:$0xff]
      %v2200 = vld [vmem:[%s1112 + $0xd1] sm:$0xff]
      %v2201 = vld [vmem:[%s1112 + $0xe9] sm:$0xff]
      %v2202 = vld [vmem:[%s1112 + $0xf1] sm:$0xff]
      %v2203 = vld [vmem:[%s1112 + $0x109] sm:$0xff]
      %v2204 = vld [vmem:[%s1112 + $0x111] sm:$0xff]
      %v2205 = vld [vmem:[%s1112 + $0x129] sm:$0xff]
      %v2206 = vld [vmem:[%s1112 + $0x131] sm:$0xff]
      %v2207 = vld [vmem:[%s1112 + $0x149] sm:$0xff]
      %v2208 = vld [vmem:[%s1112 + $0x151] sm:$0xff]
      %v2209 = vld [vmem:[%s1112 + $0x169] sm:$0xff]
      %v2210 = vld [vmem:[%s1112 + $0x171] sm:$0xff]
      %v2211 = vld [vmem:[%s1112 + $0x189] sm:$0xff]
      %v2212 = vld [vmem:[%s1112 + $0x191] sm:$0xff]
      %v2213 = vld [vmem:[%s1112 + $0x1a9] sm:$0xff]
      %v2214 = vld [vmem:[%s1112 + $0x1b1] sm:$0xff]
      %v2215 = vld [vmem:[%s1112 + $0x1c9] sm:$0xff]
      %v2216 = vld [vmem:[%s1112 + $0x1d1] sm:$0xff]
      %v2217 = vld [vmem:[%s1112 + $0x1e9] sm:$0xff]
      %v2218 = vld [vmem:[%s1112 + $0x1f1] sm:$0xff]
      %v2219 = vpack.c.bf16 %v2188, %v2187
      %v2220 = vpack.c.bf16 %v2190, %v2189
      %v2221 = vpack.c.bf16 %v2192, %v2191
      %v2222 = vpack.c.bf16 %v2194, %v2193
      %v2223 = vpack.c.bf16 %v2196, %v2195
      %v2224 = vpack.c.bf16 %v2198, %v2197
      %v2225 = vpack.c.bf16 %v2200, %v2199
      %v2226 = vpack.c.bf16 %v2202, %v2201
      %v2227 = vpack.c.bf16 %v2204, %v2203
      %v2228 = vpack.c.bf16 %v2206, %v2205
      %v2229 = vpack.c.bf16 %v2208, %v2207
      %v2230 = vpack.c.bf16 %v2210, %v2209
      %v2231 = vpack.c.bf16 %v2212, %v2211
      %v2232 = vpack.c.bf16 %v2214, %v2213
      %v2233 = vpack.c.bf16 %v2216, %v2215
      %v2234 = vpack.c.bf16 %v2218, %v2217
      %v2235 = vld [vmem:[%s3 + $0x14] sm:$0xf]
      %v2237 = vsel %vm1039, %v2219, 0
      %v2240 = vsel %vm1039, %v2220, 0
      %v2243 = vsel %vm1039, %v2221, 0
      %v2246 = vsel %vm1039, %v2222, 0
      %v2249 = vsel %vm1039, %v2223, 0
      %v2252 = vsel %vm1039, %v2224, 0
      %v2255 = vsel %vm1039, %v2225, 0
      %v2258 = vsel %vm1039, %v2226, 0
      %v2261 = vsel %vm1039, %v2227, 0
      %v2264 = vsel %vm1039, %v2228, 0
      %v2267 = vsel %vm1039, %v2229, 0
      %v2270 = vsel %vm1039, %v2230, 0
      %v2273 = vsel %vm1039, %v2231, 0
      %v2276 = vsel %vm1039, %v2232, 0
      %v2279 = vsel %vm1039, %v2233, 0
      %v2282 = vsel %vm1039, %v2234, 0
      %v2285 = vsel %vm1291, %v2235, 0
      %2287 = vmatpush.bf16.msra.mxu0 0
      %2288 = vmatpush.bf16.msra.mxu0 0
      %2289 = vmatpush.bf16.msra.mxu0 0
      %2290 = vmatpush.bf16.msra.mxu0 0
      %2291 = vmatpush.bf16.msra.mxu0 0
      %2292 = vmatpush.bf16.msra.mxu0 0
      %2293 = vmatpush.bf16.msra.mxu0 0
      %2294 = vmatpush.bf16.msra.mxu0 %v2285
      %2295 = vmatmul.bf16.gmra.mxu0 %v2237
      %v2296 = vpop.f32.mrf.mxu0
      %v2297 = vadd.f32 0.0, %v2296
      %v2298 = vpop.f32.mrf.mxu0
      %v2299 = vadd.f32 0.0, %v2298
      %2300 = vmatmul.bf16.gmra.mxu0 %v2240
      %v2301 = vpop.f32.mrf.mxu0
      %v2302 = vadd.f32 0.0, %v2301
      %v2303 = vpop.f32.mrf.mxu0
      %v2304 = vadd.f32 0.0, %v2303
      %2305 = vmatmul.bf16.gmra.mxu0 %v2243
      %v2306 = vpop.f32.mrf.mxu0
      %v2307 = vadd.f32 0.0, %v2306
      %v2308 = vpop.f32.mrf.mxu0
      %v2309 = vadd.f32 0.0, %v2308
      %2310 = vmatmul.bf16.gmra.mxu0 %v2246
      %v2311 = vpop.f32.mrf.mxu0
      %v2312 = vadd.f32 0.0, %v2311
      %v2313 = vpop.f32.mrf.mxu0
      %v2314 = vadd.f32 0.0, %v2313
      %2315 = vmatmul.bf16.gmra.mxu0 %v2249
      %v2316 = vpop.f32.mrf.mxu0
      %v2317 = vadd.f32 0.0, %v2316
      %v2318 = vpop.f32.mrf.mxu0
      %v2319 = vadd.f32 0.0, %v2318
      %2320 = vmatmul.bf16.gmra.mxu0 %v2252
      %v2321 = vpop.f32.mrf.mxu0
      %v2322 = vadd.f32 0.0, %v2321
      %v2323 = vpop.f32.mrf.mxu0
      %v2324 = vadd.f32 0.0, %v2323
      %2325 = vmatmul.bf16.gmra.mxu0 %v2255
      %v2326 = vpop.f32.mrf.mxu0
      %v2327 = vadd.f32 0.0, %v2326
      %v2328 = vpop.f32.mrf.mxu0
      %v2329 = vadd.f32 0.0, %v2328
      %2330 = vmatmul.bf16.gmra.mxu0 %v2258
      %v2331 = vpop.f32.mrf.mxu0
      %v2332 = vadd.f32 0.0, %v2331
      %v2333 = vpop.f32.mrf.mxu0
      %v2334 = vadd.f32 0.0, %v2333
      %2335 = vmatmul.bf16.gmra.mxu0 %v2261
      %v2336 = vpop.f32.mrf.mxu0
      %v2337 = vadd.f32 0.0, %v2336
      %v2338 = vpop.f32.mrf.mxu0
      %v2339 = vadd.f32 0.0, %v2338
      %2340 = vmatmul.bf16.gmra.mxu0 %v2264
      %v2341 = vpop.f32.mrf.mxu0
      %v2342 = vadd.f32 0.0, %v2341
      %v2343 = vpop.f32.mrf.mxu0
      %v2344 = vadd.f32 0.0, %v2343
      %2345 = vmatmul.bf16.gmra.mxu0 %v2267
      %v2346 = vpop.f32.mrf.mxu0
      %v2347 = vadd.f32 0.0, %v2346
      %v2348 = vpop.f32.mrf.mxu0
      %v2349 = vadd.f32 0.0, %v2348
      %2350 = vmatmul.bf16.gmra.mxu0 %v2270
      %v2351 = vpop.f32.mrf.mxu0
      %v2352 = vadd.f32 0.0, %v2351
      %v2353 = vpop.f32.mrf.mxu0
      %v2354 = vadd.f32 0.0, %v2353
      %2355 = vmatmul.bf16.gmra.mxu0 %v2273
      %v2356 = vpop.f32.mrf.mxu0
      %v2357 = vadd.f32 0.0, %v2356
      %v2358 = vpop.f32.mrf.mxu0
      %v2359 = vadd.f32 0.0, %v2358
      %2360 = vmatmul.bf16.gmra.mxu0 %v2276
      %v2361 = vpop.f32.mrf.mxu0
      %v2362 = vadd.f32 0.0, %v2361
      %v2363 = vpop.f32.mrf.mxu0
      %v2364 = vadd.f32 0.0, %v2363
      %2365 = vmatmul.bf16.gmra.mxu0 %v2279
      %v2366 = vpop.f32.mrf.mxu0
      %v2367 = vadd.f32 0.0, %v2366
      %v2368 = vpop.f32.mrf.mxu0
      %v2369 = vadd.f32 0.0, %v2368
      %2370 = vmatmul.bf16.gmra.mxu0 %v2282
      %v2371 = vpop.f32.mrf.mxu0
      %v2372 = vadd.f32 0.0, %v2371
      %v2373 = vpop.f32.mrf.mxu0
      %v2374 = vadd.f32 0.0, %v2373
      %2375 = vdwg.mxu0
      %v2376 = vadd.f32 %v2155, %v2297
      %v2377 = vadd.f32 %v2156, %v2299
      %v2378 = vadd.f32 %v2157, %v2302
      %v2379 = vadd.f32 %v2158, %v2304
      %v2380 = vadd.f32 %v2159, %v2307
      %v2381 = vadd.f32 %v2160, %v2309
      %v2382 = vadd.f32 %v2161, %v2312
      %v2383 = vadd.f32 %v2162, %v2314
      %v2384 = vadd.f32 %v2163, %v2317
      %v2385 = vadd.f32 %v2164, %v2319
      %v2386 = vadd.f32 %v2165, %v2322
      %v2387 = vadd.f32 %v2166, %v2324
      %v2388 = vadd.f32 %v2167, %v2327
      %v2389 = vadd.f32 %v2168, %v2329
      %v2390 = vadd.f32 %v2169, %v2332
      %v2391 = vadd.f32 %v2170, %v2334
      %v2392 = vadd.f32 %v2171, %v2337
      %v2393 = vadd.f32 %v2172, %v2339
      %v2394 = vadd.f32 %v2173, %v2342
      %v2395 = vadd.f32 %v2174, %v2344
      %v2396 = vadd.f32 %v2175, %v2347
      %v2397 = vadd.f32 %v2176, %v2349
      %v2398 = vadd.f32 %v2177, %v2352
      %v2399 = vadd.f32 %v2178, %v2354
      %v2400 = vadd.f32 %v2179, %v2357
      %v2401 = vadd.f32 %v2180, %v2359
      %v2402 = vadd.f32 %v2181, %v2362
      %v2403 = vadd.f32 %v2182, %v2364
      %v2404 = vadd.f32 %v2183, %v2367
      %v2405 = vadd.f32 %v2184, %v2369
      %v2406 = vadd.f32 %v2185, %v2372
      %v2407 = vadd.f32 %v2186, %v2374
      %s2408 = scalar_lea.vmem [#allocation2], 64
      %v2409 = vld [vmem:[%s2408 + $0x7] sm:$0xff]
      %v2410 = vld [vmem:[%s2408 + $0xf] sm:$0xff]
      %v2411 = vld [vmem:[%s2408 + $0x27] sm:$0xff]
      %v2412 = vld [vmem:[%s2408 + $0x2f] sm:$0xff]
      %v2413 = vld [vmem:[%s2408 + $0x47] sm:$0xff]
      %v2414 = vld [vmem:[%s2408 + $0x4f] sm:$0xff]
      %v2415 = vld [vmem:[%s2408 + $0x67] sm:$0xff]
      %v2416 = vld [vmem:[%s2408 + $0x6f] sm:$0xff]
      %v2417 = vld [vmem:[%s2408 + $0x87] sm:$0xff]
      %v2418 = vld [vmem:[%s2408 + $0x8f] sm:$0xff]
      %v2419 = vld [vmem:[%s2408 + $0xa7] sm:$0xff]
      %v2420 = vld [vmem:[%s2408 + $0xaf] sm:$0xff]
      %v2421 = vld [vmem:[%s2408 + $0xc7] sm:$0xff]
      %v2422 = vld [vmem:[%s2408 + $0xcf] sm:$0xff]
      %v2423 = vld [vmem:[%s2408 + $0xe7] sm:$0xff]
      %v2424 = vld [vmem:[%s2408 + $0xef] sm:$0xff]
      %v2425 = vld [vmem:[%s2408 + $0x107] sm:$0xff]
      %v2426 = vld [vmem:[%s2408 + $0x10f] sm:$0xff]
      %v2427 = vld [vmem:[%s2408 + $0x127] sm:$0xff]
      %v2428 = vld [vmem:[%s2408 + $0x12f] sm:$0xff]
      %v2429 = vld [vmem:[%s2408 + $0x147] sm:$0xff]
      %v2430 = vld [vmem:[%s2408 + $0x14f] sm:$0xff]
      %v2431 = vld [vmem:[%s2408 + $0x167] sm:$0xff]
      %v2432 = vld [vmem:[%s2408 + $0x16f] sm:$0xff]
      %v2433 = vld [vmem:[%s2408 + $0x187] sm:$0xff]
      %v2434 = vld [vmem:[%s2408 + $0x18f] sm:$0xff]
      %v2435 = vld [vmem:[%s2408 + $0x1a7] sm:$0xff]
      %v2436 = vld [vmem:[%s2408 + $0x1af] sm:$0xff]
      %v2437 = vld [vmem:[%s2408 + $0x1c7] sm:$0xff]
      %v2438 = vld [vmem:[%s2408 + $0x1cf] sm:$0xff]
      %v2439 = vld [vmem:[%s2408 + $0x1e7] sm:$0xff]
      %v2440 = vld [vmem:[%s2408 + $0x1ef] sm:$0xff]
      %v2441 = vpack.c.bf16 %v2410, %v2409
      %v2442 = vpack.c.bf16 %v2412, %v2411
      %v2443 = vpack.c.bf16 %v2414, %v2413
      %v2444 = vpack.c.bf16 %v2416, %v2415
      %v2445 = vpack.c.bf16 %v2418, %v2417
      %v2446 = vpack.c.bf16 %v2420, %v2419
      %v2447 = vpack.c.bf16 %v2422, %v2421
      %v2448 = vpack.c.bf16 %v2424, %v2423
      %v2449 = vpack.c.bf16 %v2426, %v2425
      %v2450 = vpack.c.bf16 %v2428, %v2427
      %v2451 = vpack.c.bf16 %v2430, %v2429
      %v2452 = vpack.c.bf16 %v2432, %v2431
      %v2453 = vpack.c.bf16 %v2434, %v2433
      %v2454 = vpack.c.bf16 %v2436, %v2435
      %v2455 = vpack.c.bf16 %v2438, %v2437
      %v2456 = vpack.c.bf16 %v2440, %v2439
      %v2457 = vld [vmem:[%s3 + $0x18] sm:$0xf]
      %v2459 = vsel %vm1039, %v2441, 0
      %v2462 = vsel %vm1039, %v2442, 0
      %v2465 = vsel %vm1039, %v2443, 0
      %v2468 = vsel %vm1039, %v2444, 0
      %v2471 = vsel %vm1039, %v2445, 0
      %v2474 = vsel %vm1039, %v2446, 0
      %v2477 = vsel %vm1039, %v2447, 0
      %v2480 = vsel %vm1039, %v2448, 0
      %v2483 = vsel %vm1039, %v2449, 0
      %v2486 = vsel %vm1039, %v2450, 0
      %v2489 = vsel %vm1039, %v2451, 0
      %v2492 = vsel %vm1039, %v2452, 0
      %v2495 = vsel %vm1039, %v2453, 0
      %v2498 = vsel %vm1039, %v2454, 0
      %v2501 = vsel %vm1039, %v2455, 0
      %v2504 = vsel %vm1039, %v2456, 0
      %v2507 = vsel %vm1291, %v2457, 0
      %2509 = vmatpush.bf16.msra.mxu0 0
      %2510 = vmatpush.bf16.msra.mxu0 0
      %2511 = vmatpush.bf16.msra.mxu0 0
      %2512 = vmatpush.bf16.msra.mxu0 0
      %2513 = vmatpush.bf16.msra.mxu0 0
      %2514 = vmatpush.bf16.msra.mxu0 0
      %2515 = vmatpush.bf16.msra.mxu0 0
      %2516 = vmatpush.bf16.msra.mxu0 %v2507
      %2517 = vmatmul.bf16.gmra.mxu0 %v2459
      %v2518 = vpop.f32.mrf.mxu0
      %v2519 = vadd.f32 0.0, %v2518
      %v2520 = vpop.f32.mrf.mxu0
      %v2521 = vadd.f32 0.0, %v2520
      %2522 = vmatmul.bf16.gmra.mxu0 %v2462
      %v2523 = vpop.f32.mrf.mxu0
      %v2524 = vadd.f32 0.0, %v2523
      %v2525 = vpop.f32.mrf.mxu0
      %v2526 = vadd.f32 0.0, %v2525
      %2527 = vmatmul.bf16.gmra.mxu0 %v2465
      %v2528 = vpop.f32.mrf.mxu0
      %v2529 = vadd.f32 0.0, %v2528
      %v2530 = vpop.f32.mrf.mxu0
      %v2531 = vadd.f32 0.0, %v2530
      %2532 = vmatmul.bf16.gmra.mxu0 %v2468
      %v2533 = vpop.f32.mrf.mxu0
      %v2534 = vadd.f32 0.0, %v2533
      %v2535 = vpop.f32.mrf.mxu0
      %v2536 = vadd.f32 0.0, %v2535
      %2537 = vmatmul.bf16.gmra.mxu0 %v2471
      %v2538 = vpop.f32.mrf.mxu0
      %v2539 = vadd.f32 0.0, %v2538
      %v2540 = vpop.f32.mrf.mxu0
      %v2541 = vadd.f32 0.0, %v2540
      %2542 = vmatmul.bf16.gmra.mxu0 %v2474
      %v2543 = vpop.f32.mrf.mxu0
      %v2544 = vadd.f32 0.0, %v2543
      %v2545 = vpop.f32.mrf.mxu0
      %v2546 = vadd.f32 0.0, %v2545
      %2547 = vmatmul.bf16.gmra.mxu0 %v2477
      %v2548 = vpop.f32.mrf.mxu0
      %v2549 = vadd.f32 0.0, %v2548
      %v2550 = vpop.f32.mrf.mxu0
      %v2551 = vadd.f32 0.0, %v2550
      %2552 = vmatmul.bf16.gmra.mxu0 %v2480
      %v2553 = vpop.f32.mrf.mxu0
      %v2554 = vadd.f32 0.0, %v2553
      %v2555 = vpop.f32.mrf.mxu0
      %v2556 = vadd.f32 0.0, %v2555
      %2557 = vmatmul.bf16.gmra.mxu0 %v2483
      %v2558 = vpop.f32.mrf.mxu0
      %v2559 = vadd.f32 0.0, %v2558
      %v2560 = vpop.f32.mrf.mxu0
      %v2561 = vadd.f32 0.0, %v2560
      %2562 = vmatmul.bf16.gmra.mxu0 %v2486
      %v2563 = vpop.f32.mrf.mxu0
      %v2564 = vadd.f32 0.0, %v2563
      %v2565 = vpop.f32.mrf.mxu0
      %v2566 = vadd.f32 0.0, %v2565
      %2567 = vmatmul.bf16.gmra.mxu0 %v2489
      %v2568 = vpop.f32.mrf.mxu0
      %v2569 = vadd.f32 0.0, %v2568
      %v2570 = vpop.f32.mrf.mxu0
      %v2571 = vadd.f32 0.0, %v2570
      %2572 = vmatmul.bf16.gmra.mxu0 %v2492
      %v2573 = vpop.f32.mrf.mxu0
      %v2574 = vadd.f32 0.0, %v2573
      %v2575 = vpop.f32.mrf.mxu0
      %v2576 = vadd.f32 0.0, %v2575
      %2577 = vmatmul.bf16.gmra.mxu0 %v2495
      %v2578 = vpop.f32.mrf.mxu0
      %v2579 = vadd.f32 0.0, %v2578
      %v2580 = vpop.f32.mrf.mxu0
      %v2581 = vadd.f32 0.0, %v2580
      %2582 = vmatmul.bf16.gmra.mxu0 %v2498
      %v2583 = vpop.f32.mrf.mxu0
      %v2584 = vadd.f32 0.0, %v2583
      %v2585 = vpop.f32.mrf.mxu0
      %v2586 = vadd.f32 0.0, %v2585
      %2587 = vmatmul.bf16.gmra.mxu0 %v2501
      %v2588 = vpop.f32.mrf.mxu0
      %v2589 = vadd.f32 0.0, %v2588
      %v2590 = vpop.f32.mrf.mxu0
      %v2591 = vadd.f32 0.0, %v2590
      %2592 = vmatmul.bf16.gmra.mxu0 %v2504
      %v2593 = vpop.f32.mrf.mxu0
      %v2594 = vadd.f32 0.0, %v2593
      %v2595 = vpop.f32.mrf.mxu0
      %v2596 = vadd.f32 0.0, %v2595
      %2597 = vdwg.mxu0
      %v2598 = vadd.f32 %v2376, %v2519
      %v2599 = vadd.f32 %v2377, %v2521
      %v2600 = vadd.f32 %v2378, %v2524
      %v2601 = vadd.f32 %v2379, %v2526
      %v2602 = vadd.f32 %v2380, %v2529
      %v2603 = vadd.f32 %v2381, %v2531
      %v2604 = vadd.f32 %v2382, %v2534
      %v2605 = vadd.f32 %v2383, %v2536
      %v2606 = vadd.f32 %v2384, %v2539
      %v2607 = vadd.f32 %v2385, %v2541
      %v2608 = vadd.f32 %v2386, %v2544
      %v2609 = vadd.f32 %v2387, %v2546
      %v2610 = vadd.f32 %v2388, %v2549
      %v2611 = vadd.f32 %v2389, %v2551
      %v2612 = vadd.f32 %v2390, %v2554
      %v2613 = vadd.f32 %v2391, %v2556
      %v2614 = vadd.f32 %v2392, %v2559
      %v2615 = vadd.f32 %v2393, %v2561
      %v2616 = vadd.f32 %v2394, %v2564
      %v2617 = vadd.f32 %v2395, %v2566
      %v2618 = vadd.f32 %v2396, %v2569
      %v2619 = vadd.f32 %v2397, %v2571
      %v2620 = vadd.f32 %v2398, %v2574
      %v2621 = vadd.f32 %v2399, %v2576
      %v2622 = vadd.f32 %v2400, %v2579
      %v2623 = vadd.f32 %v2401, %v2581
      %v2624 = vadd.f32 %v2402, %v2584
      %v2625 = vadd.f32 %v2403, %v2586
      %v2626 = vadd.f32 %v2404, %v2589
      %v2627 = vadd.f32 %v2405, %v2591
      %v2628 = vadd.f32 %v2406, %v2594
      %v2629 = vadd.f32 %v2407, %v2596
      %v2630 = vld [vmem:[%s2408 + $0x8] sm:$0xff]
      %v2631 = vld [vmem:[%s2408 + $0x10] sm:$0xff]
      %v2632 = vld [vmem:[%s2408 + $0x28] sm:$0xff]
      %v2633 = vld [vmem:[%s2408 + $0x30] sm:$0xff]
      %v2634 = vld [vmem:[%s2408 + $0x48] sm:$0xff]
      %v2635 = vld [vmem:[%s2408 + $0x50] sm:$0xff]
      %v2636 = vld [vmem:[%s2408 + $0x68] sm:$0xff]
      %v2637 = vld [vmem:[%s2408 + $0x70] sm:$0xff]
      %v2638 = vld [vmem:[%s2408 + $0x88] sm:$0xff]
      %v2639 = vld [vmem:[%s2408 + $0x90] sm:$0xff]
      %v2640 = vld [vmem:[%s2408 + $0xa8] sm:$0xff]
      %v2641 = vld [vmem:[%s2408 + $0xb0] sm:$0xff]
      %v2642 = vld [vmem:[%s2408 + $0xc8] sm:$0xff]
      %v2643 = vld [vmem:[%s2408 + $0xd0] sm:$0xff]
      %v2644 = vld [vmem:[%s2408 + $0xe8] sm:$0xff]
      %v2645 = vld [vmem:[%s2408 + $0xf0] sm:$0xff]
      %v2646 = vld [vmem:[%s2408 + $0x108] sm:$0xff]
      %v2647 = vld [vmem:[%s2408 + $0x110] sm:$0xff]
      %v2648 = vld [vmem:[%s2408 + $0x128] sm:$0xff]
      %v2649 = vld [vmem:[%s2408 + $0x130] sm:$0xff]
      %v2650 = vld [vmem:[%s2408 + $0x148] sm:$0xff]
      %v2651 = vld [vmem:[%s2408 + $0x150] sm:$0xff]
      %v2652 = vld [vmem:[%s2408 + $0x168] sm:$0xff]
      %v2653 = vld [vmem:[%s2408 + $0x170] sm:$0xff]
      %v2654 = vld [vmem:[%s2408 + $0x188] sm:$0xff]
      %v2655 = vld [vmem:[%s2408 + $0x190] sm:$0xff]
      %v2656 = vld [vmem:[%s2408 + $0x1a8] sm:$0xff]
      %v2657 = vld [vmem:[%s2408 + $0x1b0] sm:$0xff]
      %v2658 = vld [vmem:[%s2408 + $0x1c8] sm:$0xff]
      %v2659 = vld [vmem:[%s2408 + $0x1d0] sm:$0xff]
      %v2660 = vld [vmem:[%s2408 + $0x1e8] sm:$0xff]
      %v2661 = vld [vmem:[%s2408 + $0x1f0] sm:$0xff]
      %v2662 = vpack.c.bf16 %v2631, %v2630
      %v2663 = vpack.c.bf16 %v2633, %v2632
      %v2664 = vpack.c.bf16 %v2635, %v2634
      %v2665 = vpack.c.bf16 %v2637, %v2636
      %v2666 = vpack.c.bf16 %v2639, %v2638
      %v2667 = vpack.c.bf16 %v2641, %v2640
      %v2668 = vpack.c.bf16 %v2643, %v2642
      %v2669 = vpack.c.bf16 %v2645, %v2644
      %v2670 = vpack.c.bf16 %v2647, %v2646
      %v2671 = vpack.c.bf16 %v2649, %v2648
      %v2672 = vpack.c.bf16 %v2651, %v2650
      %v2673 = vpack.c.bf16 %v2653, %v2652
      %v2674 = vpack.c.bf16 %v2655, %v2654
      %v2675 = vpack.c.bf16 %v2657, %v2656
      %v2676 = vpack.c.bf16 %v2659, %v2658
      %v2677 = vpack.c.bf16 %v2661, %v2660
      %v2678 = vld [vmem:[%s3 + $0x1c] sm:$0xf]
      %v2680 = vsel %vm1039, %v2662, 0
      %v2683 = vsel %vm1039, %v2663, 0
      %v2686 = vsel %vm1039, %v2664, 0
      %v2689 = vsel %vm1039, %v2665, 0
      %v2692 = vsel %vm1039, %v2666, 0
      %v2695 = vsel %vm1039, %v2667, 0
      %v2698 = vsel %vm1039, %v2668, 0
      %v2701 = vsel %vm1039, %v2669, 0
      %v2704 = vsel %vm1039, %v2670, 0
      %v2707 = vsel %vm1039, %v2671, 0
      %v2710 = vsel %vm1039, %v2672, 0
      %v2713 = vsel %vm1039, %v2673, 0
      %v2716 = vsel %vm1039, %v2674, 0
      %v2719 = vsel %vm1039, %v2675, 0
      %v2722 = vsel %vm1039, %v2676, 0
      %v2725 = vsel %vm1039, %v2677, 0
      %v2728 = vsel %vm1291, %v2678, 0
      %2730 = vmatpush.bf16.msra.mxu0 0
      %2731 = vmatpush.bf16.msra.mxu0 0
      %2732 = vmatpush.bf16.msra.mxu0 0
      %2733 = vmatpush.bf16.msra.mxu0 0
      %2734 = vmatpush.bf16.msra.mxu0 0
      %2735 = vmatpush.bf16.msra.mxu0 0
      %2736 = vmatpush.bf16.msra.mxu0 0
      %2737 = vmatpush.bf16.msra.mxu0 %v2728
      %2738 = vmatmul.bf16.gmra.mxu0 %v2680
      %v2739 = vpop.f32.mrf.mxu0
      %v2740 = vadd.f32 0.0, %v2739
      %v2741 = vpop.f32.mrf.mxu0
      %v2742 = vadd.f32 0.0, %v2741
      %2743 = vmatmul.bf16.gmra.mxu0 %v2683
      %v2744 = vpop.f32.mrf.mxu0
      %v2745 = vadd.f32 0.0, %v2744
      %v2746 = vpop.f32.mrf.mxu0
      %v2747 = vadd.f32 0.0, %v2746
      %2748 = vmatmul.bf16.gmra.mxu0 %v2686
      %v2749 = vpop.f32.mrf.mxu0
      %v2750 = vadd.f32 0.0, %v2749
      %v2751 = vpop.f32.mrf.mxu0
      %v2752 = vadd.f32 0.0, %v2751
      %2753 = vmatmul.bf16.gmra.mxu0 %v2689
      %v2754 = vpop.f32.mrf.mxu0
      %v2755 = vadd.f32 0.0, %v2754
      %v2756 = vpop.f32.mrf.mxu0
      %v2757 = vadd.f32 0.0, %v2756
      %2758 = vmatmul.bf16.gmra.mxu0 %v2692
      %v2759 = vpop.f32.mrf.mxu0
      %v2760 = vadd.f32 0.0, %v2759
      %v2761 = vpop.f32.mrf.mxu0
      %v2762 = vadd.f32 0.0, %v2761
      %2763 = vmatmul.bf16.gmra.mxu0 %v2695
      %v2764 = vpop.f32.mrf.mxu0
      %v2765 = vadd.f32 0.0, %v2764
      %v2766 = vpop.f32.mrf.mxu0
      %v2767 = vadd.f32 0.0, %v2766
      %2768 = vmatmul.bf16.gmra.mxu0 %v2698
      %v2769 = vpop.f32.mrf.mxu0
      %v2770 = vadd.f32 0.0, %v2769
      %v2771 = vpop.f32.mrf.mxu0
      %v2772 = vadd.f32 0.0, %v2771
      %2773 = vmatmul.bf16.gmra.mxu0 %v2701
      %v2774 = vpop.f32.mrf.mxu0
      %v2775 = vadd.f32 0.0, %v2774
      %v2776 = vpop.f32.mrf.mxu0
      %v2777 = vadd.f32 0.0, %v2776
      %2778 = vmatmul.bf16.gmra.mxu0 %v2704
      %v2779 = vpop.f32.mrf.mxu0
      %v2780 = vadd.f32 0.0, %v2779
      %v2781 = vpop.f32.mrf.mxu0
      %v2782 = vadd.f32 0.0, %v2781
      %2783 = vmatmul.bf16.gmra.mxu0 %v2707
      %v2784 = vpop.f32.mrf.mxu0
      %v2785 = vadd.f32 0.0, %v2784
      %v2786 = vpop.f32.mrf.mxu0
      %v2787 = vadd.f32 0.0, %v2786
      %2788 = vmatmul.bf16.gmra.mxu0 %v2710
      %v2789 = vpop.f32.mrf.mxu0
      %v2790 = vadd.f32 0.0, %v2789
      %v2791 = vpop.f32.mrf.mxu0
      %v2792 = vadd.f32 0.0, %v2791
      %2793 = vmatmul.bf16.gmra.mxu0 %v2713
      %v2794 = vpop.f32.mrf.mxu0
      %v2795 = vadd.f32 0.0, %v2794
      %v2796 = vpop.f32.mrf.mxu0
      %v2797 = vadd.f32 0.0, %v2796
      %2798 = vmatmul.bf16.gmra.mxu0 %v2716
      %v2799 = vpop.f32.mrf.mxu0
      %v2800 = vadd.f32 0.0, %v2799
      %v2801 = vpop.f32.mrf.mxu0
      %v2802 = vadd.f32 0.0, %v2801
      %2803 = vmatmul.bf16.gmra.mxu0 %v2719
      %v2804 = vpop.f32.mrf.mxu0
      %v2805 = vadd.f32 0.0, %v2804
      %v2806 = vpop.f32.mrf.mxu0
      %v2807 = vadd.f32 0.0, %v2806
      %2808 = vmatmul.bf16.gmra.mxu0 %v2722
      %v2809 = vpop.f32.mrf.mxu0
      %v2810 = vadd.f32 0.0, %v2809
      %v2811 = vpop.f32.mrf.mxu0
      %v2812 = vadd.f32 0.0, %v2811
      %2813 = vmatmul.bf16.gmra.mxu0 %v2725
      %v2814 = vpop.f32.mrf.mxu0
      %v2815 = vadd.f32 0.0, %v2814
      %v2816 = vpop.f32.mrf.mxu0
      %v2817 = vadd.f32 0.0, %v2816
      %2818 = vdwg.mxu0
      %v2819 = vadd.f32 %v2598, %v2740
      %v2820 = vadd.f32 %v2599, %v2742
      %v2821 = vadd.f32 %v2600, %v2745
      %v2822 = vadd.f32 %v2601, %v2747
      %v2823 = vadd.f32 %v2602, %v2750
      %v2824 = vadd.f32 %v2603, %v2752
      %v2825 = vadd.f32 %v2604, %v2755
      %v2826 = vadd.f32 %v2605, %v2757
      %v2827 = vadd.f32 %v2606, %v2760
      %v2828 = vadd.f32 %v2607, %v2762
      %v2829 = vadd.f32 %v2608, %v2765
      %v2830 = vadd.f32 %v2609, %v2767
      %v2831 = vadd.f32 %v2610, %v2770
      %v2832 = vadd.f32 %v2611, %v2772
      %v2833 = vadd.f32 %v2612, %v2775
      %v2834 = vadd.f32 %v2613, %v2777
      %v2835 = vadd.f32 %v2614, %v2780
      %v2836 = vadd.f32 %v2615, %v2782
      %v2837 = vadd.f32 %v2616, %v2785
      %v2838 = vadd.f32 %v2617, %v2787
      %v2839 = vadd.f32 %v2618, %v2790
      %v2840 = vadd.f32 %v2619, %v2792
      %v2841 = vadd.f32 %v2620, %v2795
      %v2842 = vadd.f32 %v2621, %v2797
      %v2843 = vadd.f32 %v2622, %v2800
      %v2844 = vadd.f32 %v2623, %v2802
      %v2845 = vadd.f32 %v2624, %v2805
      %v2846 = vadd.f32 %v2625, %v2807
      %v2847 = vadd.f32 %v2626, %v2810
      %v2848 = vadd.f32 %v2627, %v2812
      %v2849 = vadd.f32 %v2628, %v2815
      %v2850 = vadd.f32 %v2629, %v2817
      %v2851 = vld [vmem:[%s2408 + $0x9] sm:$0xff]
      %v2852 = vld [vmem:[%s2408 + $0x11] sm:$0xff]
      %v2853 = vld [vmem:[%s2408 + $0x29] sm:$0xff]
      %v2854 = vld [vmem:[%s2408 + $0x31] sm:$0xff]
      %v2855 = vld [vmem:[%s2408 + $0x49] sm:$0xff]
      %v2856 = vld [vmem:[%s2408 + $0x51] sm:$0xff]
      %v2857 = vld [vmem:[%s2408 + $0x69] sm:$0xff]
      %v2858 = vld [vmem:[%s2408 + $0x71] sm:$0xff]
      %v2859 = vld [vmem:[%s2408 + $0x89] sm:$0xff]
      %v2860 = vld [vmem:[%s2408 + $0x91] sm:$0xff]
      %v2861 = vld [vmem:[%s2408 + $0xa9] sm:$0xff]
      %v2862 = vld [vmem:[%s2408 + $0xb1] sm:$0xff]
      %v2863 = vld [vmem:[%s2408 + $0xc9] sm:$0xff]
      %v2864 = vld [vmem:[%s2408 + $0xd1] sm:$0xff]
      %v2865 = vld [vmem:[%s2408 + $0xe9] sm:$0xff]
      %v2866 = vld [vmem:[%s2408 + $0xf1] sm:$0xff]
      %v2867 = vld [vmem:[%s2408 + $0x109] sm:$0xff]
      %v2868 = vld [vmem:[%s2408 + $0x111] sm:$0xff]
      %v2869 = vld [vmem:[%s2408 + $0x129] sm:$0xff]
      %v2870 = vld [vmem:[%s2408 + $0x131] sm:$0xff]
      %v2871 = vld [vmem:[%s2408 + $0x149] sm:$0xff]
      %v2872 = vld [vmem:[%s2408 + $0x151] sm:$0xff]
      %v2873 = vld [vmem:[%s2408 + $0x169] sm:$0xff]
      %v2874 = vld [vmem:[%s2408 + $0x171] sm:$0xff]
      %v2875 = vld [vmem:[%s2408 + $0x189] sm:$0xff]
      %v2876 = vld [vmem:[%s2408 + $0x191] sm:$0xff]
      %v2877 = vld [vmem:[%s2408 + $0x1a9] sm:$0xff]
      %v2878 = vld [vmem:[%s2408 + $0x1b1] sm:$0xff]
      %v2879 = vld [vmem:[%s2408 + $0x1c9] sm:$0xff]
      %v2880 = vld [vmem:[%s2408 + $0x1d1] sm:$0xff]
      %v2881 = vld [vmem:[%s2408 + $0x1e9] sm:$0xff]
      %v2882 = vld [vmem:[%s2408 + $0x1f1] sm:$0xff]
      %v2883 = vpack.c.bf16 %v2852, %v2851
      %v2884 = vpack.c.bf16 %v2854, %v2853
      %v2885 = vpack.c.bf16 %v2856, %v2855
      %v2886 = vpack.c.bf16 %v2858, %v2857
      %v2887 = vpack.c.bf16 %v2860, %v2859
      %v2888 = vpack.c.bf16 %v2862, %v2861
      %v2889 = vpack.c.bf16 %v2864, %v2863
      %v2890 = vpack.c.bf16 %v2866, %v2865
      %v2891 = vpack.c.bf16 %v2868, %v2867
      %v2892 = vpack.c.bf16 %v2870, %v2869
      %v2893 = vpack.c.bf16 %v2872, %v2871
      %v2894 = vpack.c.bf16 %v2874, %v2873
      %v2895 = vpack.c.bf16 %v2876, %v2875
      %v2896 = vpack.c.bf16 %v2878, %v2877
      %v2897 = vpack.c.bf16 %v2880, %v2879
      %v2898 = vpack.c.bf16 %v2882, %v2881
      %v2899 = vld [vmem:[%s3 + $0x20] sm:$0xf]
      %v2901 = vsel %vm1039, %v2883, 0
      %v2904 = vsel %vm1039, %v2884, 0
      %v2907 = vsel %vm1039, %v2885, 0
      %v2910 = vsel %vm1039, %v2886, 0
      %v2913 = vsel %vm1039, %v2887, 0
      %v2916 = vsel %vm1039, %v2888, 0
      %v2919 = vsel %vm1039, %v2889, 0
      %v2922 = vsel %vm1039, %v2890, 0
      %v2925 = vsel %vm1039, %v2891, 0
      %v2928 = vsel %vm1039, %v2892, 0
      %v2931 = vsel %vm1039, %v2893, 0
      %v2934 = vsel %vm1039, %v2894, 0
      %v2937 = vsel %vm1039, %v2895, 0
      %v2940 = vsel %vm1039, %v2896, 0
      %v2943 = vsel %vm1039, %v2897, 0
      %v2946 = vsel %vm1039, %v2898, 0
      %v2949 = vsel %vm1291, %v2899, 0
      %2951 = vmatpush.bf16.msra.mxu0 0
      %2952 = vmatpush.bf16.msra.mxu0 0
      %2953 = vmatpush.bf16.msra.mxu0 0
      %2954 = vmatpush.bf16.msra.mxu0 0
      %2955 = vmatpush.bf16.msra.mxu0 0
      %2956 = vmatpush.bf16.msra.mxu0 0
      %2957 = vmatpush.bf16.msra.mxu0 0
      %2958 = vmatpush.bf16.msra.mxu0 %v2949
      %2959 = vmatmul.bf16.gmra.mxu0 %v2901
      %v2960 = vpop.f32.mrf.mxu0
      %v2961 = vadd.f32 0.0, %v2960
      %v2962 = vpop.f32.mrf.mxu0
      %v2963 = vadd.f32 0.0, %v2962
      %2964 = vmatmul.bf16.gmra.mxu0 %v2904
      %v2965 = vpop.f32.mrf.mxu0
      %v2966 = vadd.f32 0.0, %v2965
      %v2967 = vpop.f32.mrf.mxu0
      %v2968 = vadd.f32 0.0, %v2967
      %2969 = vmatmul.bf16.gmra.mxu0 %v2907
      %v2970 = vpop.f32.mrf.mxu0
      %v2971 = vadd.f32 0.0, %v2970
      %v2972 = vpop.f32.mrf.mxu0
      %v2973 = vadd.f32 0.0, %v2972
      %2974 = vmatmul.bf16.gmra.mxu0 %v2910
      %v2975 = vpop.f32.mrf.mxu0
      %v2976 = vadd.f32 0.0, %v2975
      %v2977 = vpop.f32.mrf.mxu0
      %v2978 = vadd.f32 0.0, %v2977
      %2979 = vmatmul.bf16.gmra.mxu0 %v2913
      %v2980 = vpop.f32.mrf.mxu0
      %v2981 = vadd.f32 0.0, %v2980
      %v2982 = vpop.f32.mrf.mxu0
      %v2983 = vadd.f32 0.0, %v2982
      %2984 = vmatmul.bf16.gmra.mxu0 %v2916
      %v2985 = vpop.f32.mrf.mxu0
      %v2986 = vadd.f32 0.0, %v2985
      %v2987 = vpop.f32.mrf.mxu0
      %v2988 = vadd.f32 0.0, %v2987
      %2989 = vmatmul.bf16.gmra.mxu0 %v2919
      %v2990 = vpop.f32.mrf.mxu0
      %v2991 = vadd.f32 0.0, %v2990
      %v2992 = vpop.f32.mrf.mxu0
      %v2993 = vadd.f32 0.0, %v2992
      %2994 = vmatmul.bf16.gmra.mxu0 %v2922
      %v2995 = vpop.f32.mrf.mxu0
      %v2996 = vadd.f32 0.0, %v2995
      %v2997 = vpop.f32.mrf.mxu0
      %v2998 = vadd.f32 0.0, %v2997
      %2999 = vmatmul.bf16.gmra.mxu0 %v2925
      %v3000 = vpop.f32.mrf.mxu0
      %v3001 = vadd.f32 0.0, %v3000
      %v3002 = vpop.f32.mrf.mxu0
      %v3003 = vadd.f32 0.0, %v3002
      %3004 = vmatmul.bf16.gmra.mxu0 %v2928
      %v3005 = vpop.f32.mrf.mxu0
      %v3006 = vadd.f32 0.0, %v3005
      %v3007 = vpop.f32.mrf.mxu0
      %v3008 = vadd.f32 0.0, %v3007
      %3009 = vmatmul.bf16.gmra.mxu0 %v2931
      %v3010 = vpop.f32.mrf.mxu0
      %v3011 = vadd.f32 0.0, %v3010
      %v3012 = vpop.f32.mrf.mxu0
      %v3013 = vadd.f32 0.0, %v3012
      %3014 = vmatmul.bf16.gmra.mxu0 %v2934
      %v3015 = vpop.f32.mrf.mxu0
      %v3016 = vadd.f32 0.0, %v3015
      %v3017 = vpop.f32.mrf.mxu0
      %v3018 = vadd.f32 0.0, %v3017
      %3019 = vmatmul.bf16.gmra.mxu0 %v2937
      %v3020 = vpop.f32.mrf.mxu0
      %v3021 = vadd.f32 0.0, %v3020
      %v3022 = vpop.f32.mrf.mxu0
      %v3023 = vadd.f32 0.0, %v3022
      %3024 = vmatmul.bf16.gmra.mxu0 %v2940
      %v3025 = vpop.f32.mrf.mxu0
      %v3026 = vadd.f32 0.0, %v3025
      %v3027 = vpop.f32.mrf.mxu0
      %v3028 = vadd.f32 0.0, %v3027
      %3029 = vmatmul.bf16.gmra.mxu0 %v2943
      %v3030 = vpop.f32.mrf.mxu0
      %v3031 = vadd.f32 0.0, %v3030
      %v3032 = vpop.f32.mrf.mxu0
      %v3033 = vadd.f32 0.0, %v3032
      %3034 = vmatmul.bf16.gmra.mxu0 %v2946
      %v3035 = vpop.f32.mrf.mxu0
      %v3036 = vadd.f32 0.0, %v3035
      %v3037 = vpop.f32.mrf.mxu0
      %v3038 = vadd.f32 0.0, %v3037
      %3039 = vdwg.mxu0
      %v3040 = vadd.f32 %v2819, %v2961
      %v3041 = vadd.f32 %v2820, %v2963
      %v3042 = vadd.f32 %v2821, %v2966
      %v3043 = vadd.f32 %v2822, %v2968
      %v3044 = vadd.f32 %v2823, %v2971
      %v3045 = vadd.f32 %v2824, %v2973
      %v3046 = vadd.f32 %v2825, %v2976
      %v3047 = vadd.f32 %v2826, %v2978
      %v3048 = vadd.f32 %v2827, %v2981
      %v3049 = vadd.f32 %v2828, %v2983
      %v3050 = vadd.f32 %v2829, %v2986
      %v3051 = vadd.f32 %v2830, %v2988
      %v3052 = vadd.f32 %v2831, %v2991
      %v3053 = vadd.f32 %v2832, %v2993
      %v3054 = vadd.f32 %v2833, %v2996
      %v3055 = vadd.f32 %v2834, %v2998
      %v3056 = vadd.f32 %v2835, %v3001
      %v3057 = vadd.f32 %v2836, %v3003
      %v3058 = vadd.f32 %v2837, %v3006
      %v3059 = vadd.f32 %v2838, %v3008
      %v3060 = vadd.f32 %v2839, %v3011
      %v3061 = vadd.f32 %v2840, %v3013
      %v3062 = vadd.f32 %v2841, %v3016
      %v3063 = vadd.f32 %v2842, %v3018
      %v3064 = vadd.f32 %v2843, %v3021
      %v3065 = vadd.f32 %v2844, %v3023
      %v3066 = vadd.f32 %v2845, %v3026
      %v3067 = vadd.f32 %v2846, %v3028
      %v3068 = vadd.f32 %v2847, %v3031
      %v3069 = vadd.f32 %v2848, %v3033
      %v3070 = vadd.f32 %v2849, %v3036
      %v3071 = vadd.f32 %v2850, %v3038
      %v3072 = vld [vmem:[%s4] sm:$0x1]
      %v3074 = vperm.slane %v3072, 0
      %v3076 = vadd.f32 %v3040, %v3074
      %v3077 = vadd.f32 %v3041, %v3074
      %v3078 = vadd.f32 %v3042, %v3074
      %v3079 = vadd.f32 %v3043, %v3074
      %v3080 = vadd.f32 %v3044, %v3074
      %v3081 = vadd.f32 %v3045, %v3074
      %v3082 = vadd.f32 %v3046, %v3074
      %v3083 = vadd.f32 %v3047, %v3074
      %v3084 = vadd.f32 %v3048, %v3074
      %v3085 = vadd.f32 %v3049, %v3074
      %v3086 = vadd.f32 %v3050, %v3074
      %v3087 = vadd.f32 %v3051, %v3074
      %v3088 = vadd.f32 %v3052, %v3074
      %v3089 = vadd.f32 %v3053, %v3074
      %v3090 = vadd.f32 %v3054, %v3074
      %v3091 = vadd.f32 %v3055, %v3074
      %v3092 = vadd.f32 %v3056, %v3074
      %v3093 = vadd.f32 %v3057, %v3074
      %v3094 = vadd.f32 %v3058, %v3074
      %v3095 = vadd.f32 %v3059, %v3074
      %v3096 = vadd.f32 %v3060, %v3074
      %v3097 = vadd.f32 %v3061, %v3074
      %v3098 = vadd.f32 %v3062, %v3074
      %v3099 = vadd.f32 %v3063, %v3074
      %v3100 = vadd.f32 %v3064, %v3074
      %v3101 = vadd.f32 %v3065, %v3074
      %v3102 = vadd.f32 %v3066, %v3074
      %v3103 = vadd.f32 %v3067, %v3074
      %v3104 = vadd.f32 %v3068, %v3074
      %v3105 = vadd.f32 %v3069, %v3074
      %v3106 = vadd.f32 %v3070, %v3074
      %v3107 = vadd.f32 %v3071, %v3074
      %v3108 = vmax.f32 %v3076, 0.0
      %v3109 = vmax.f32 %v3077, 0.0
      %v3110 = vmax.f32 %v3078, 0.0
      %v3111 = vmax.f32 %v3079, 0.0
      %v3112 = vmax.f32 %v3080, 0.0
      %v3113 = vmax.f32 %v3081, 0.0
      %v3114 = vmax.f32 %v3082, 0.0
      %v3115 = vmax.f32 %v3083, 0.0
      %v3116 = vmax.f32 %v3084, 0.0
      %v3117 = vmax.f32 %v3085, 0.0
      %v3118 = vmax.f32 %v3086, 0.0
      %v3119 = vmax.f32 %v3087, 0.0
      %v3120 = vmax.f32 %v3088, 0.0
      %v3121 = vmax.f32 %v3089, 0.0
      %v3122 = vmax.f32 %v3090, 0.0
      %v3123 = vmax.f32 %v3091, 0.0
      %v3124 = vmax.f32 %v3092, 0.0
      %v3125 = vmax.f32 %v3093, 0.0
      %v3126 = vmax.f32 %v3094, 0.0
      %v3127 = vmax.f32 %v3095, 0.0
      %v3128 = vmax.f32 %v3096, 0.0
      %v3129 = vmax.f32 %v3097, 0.0
      %v3130 = vmax.f32 %v3098, 0.0
      %v3131 = vmax.f32 %v3099, 0.0
      %v3132 = vmax.f32 %v3100, 0.0
      %v3133 = vmax.f32 %v3101, 0.0
      %v3134 = vmax.f32 %v3102, 0.0
      %v3135 = vmax.f32 %v3103, 0.0
      %v3136 = vmax.f32 %v3104, 0.0
      %v3137 = vmax.f32 %v3105, 0.0
      %v3138 = vmax.f32 %v3106, 0.0
      %v3139 = vmax.f32 %v3107, 0.0
      %v3140 = vlaneseq
      %v3141 = vshrl.u32 %v3140, 7
      %v3142 = vadd.s32 %v3141, 8
      %v3143 = vadd.s32 %v3141, 16
      %v3144 = vadd.s32 %v3141, 24
      %v3145 = vadd.s32 %v3141, 32
      %v3146 = vadd.s32 %v3141, 40
      %v3147 = vadd.s32 %v3141, 48
      %v3148 = vadd.s32 %v3141, 56
      %v3149 = vadd.s32 %v3141, 64
      %v3150 = vadd.s32 %v3141, 72
      %v3151 = vadd.s32 %v3141, 80
      %v3152 = vadd.s32 %v3141, 88
      %v3153 = vadd.s32 %v3141, 96
      %v3154 = vadd.s32 %v3141, 104
      %v3155 = vadd.s32 %v3141, 112
      %v3156 = vadd.s32 %v3141, 120
      %v3157 = vlaneseq
      %v3158 = vand.u32 %v3157, 127
      %v3159 = vadd.s32 %v3158, 128
      %v3160 = vmul.u32 %v3141, 2
      %v3161 = vmul.u32 %v3142, 2
      %v3162 = vmul.u32 %v3143, 2
      %v3163 = vmul.u32 %v3144, 2
      %v3164 = vmul.u32 %v3145, 2
      %v3165 = vmul.u32 %v3146, 2
      %v3166 = vmul.u32 %v3147, 2
      %v3167 = vmul.u32 %v3148, 2
      %v3168 = vmul.u32 %v3149, 2
      %v3169 = vmul.u32 %v3150, 2
      %v3170 = vmul.u32 %v3151, 2
      %v3171 = vmul.u32 %v3152, 2
      %v3172 = vmul.u32 %v3153, 2
      %v3173 = vmul.u32 %v3154, 2
      %v3174 = vmul.u32 %v3155, 2
      %v3175 = vmul.u32 %v3156, 2
      %vm3176 = vcmp.eq.s32.totalorder %v3158, %v3160
      %vm3177 = vcmp.eq.s32.totalorder %v3159, %v3160
      %vm3178 = vcmp.eq.s32.totalorder %v3158, %v3161
      %vm3179 = vcmp.eq.s32.totalorder %v3159, %v3161
      %vm3180 = vcmp.eq.s32.totalorder %v3158, %v3162
      %vm3181 = vcmp.eq.s32.totalorder %v3159, %v3162
      %vm3182 = vcmp.eq.s32.totalorder %v3158, %v3163
      %vm3183 = vcmp.eq.s32.totalorder %v3159, %v3163
      %vm3184 = vcmp.eq.s32.totalorder %v3158, %v3164
      %vm3185 = vcmp.eq.s32.totalorder %v3159, %v3164
      %vm3186 = vcmp.eq.s32.totalorder %v3158, %v3165
      %vm3187 = vcmp.eq.s32.totalorder %v3159, %v3165
      %vm3188 = vcmp.eq.s32.totalorder %v3158, %v3166
      %vm3189 = vcmp.eq.s32.totalorder %v3159, %v3166
      %vm3190 = vcmp.eq.s32.totalorder %v3158, %v3167
      %vm3191 = vcmp.eq.s32.totalorder %v3159, %v3167
      %vm3192 = vcmp.eq.s32.totalorder %v3158, %v3168
      %vm3193 = vcmp.eq.s32.totalorder %v3159, %v3168
      %vm3194 = vcmp.eq.s32.totalorder %v3158, %v3169
      %vm3195 = vcmp.eq.s32.totalorder %v3159, %v3169
      %vm3196 = vcmp.eq.s32.totalorder %v3158, %v3170
      %vm3197 = vcmp.eq.s32.totalorder %v3159, %v3170
      %vm3198 = vcmp.eq.s32.totalorder %v3158, %v3171
      %vm3199 = vcmp.eq.s32.totalorder %v3159, %v3171
      %vm3200 = vcmp.eq.s32.totalorder %v3158, %v3172
      %vm3201 = vcmp.eq.s32.totalorder %v3159, %v3172
      %vm3202 = vcmp.eq.s32.totalorder %v3158, %v3173
      %vm3203 = vcmp.eq.s32.totalorder %v3159, %v3173
      %vm3204 = vcmp.eq.s32.totalorder %v3158, %v3174
      %vm3205 = vcmp.eq.s32.totalorder %v3159, %v3174
      %vm3206 = vcmp.eq.s32.totalorder %v3158, %v3175
      %vm3207 = vcmp.eq.s32.totalorder %v3159, %v3175
      %v3208 = vsel %vm3176, 1, 0
      %v3209 = vsel %vm3177, 1, 0
      %v3210 = vsel %vm3178, 1, 0
      %v3211 = vsel %vm3179, 1, 0
      %v3212 = vsel %vm3180, 1, 0
      %v3213 = vsel %vm3181, 1, 0
      %v3214 = vsel %vm3182, 1, 0
      %v3215 = vsel %vm3183, 1, 0
      %v3216 = vsel %vm3184, 1, 0
      %v3217 = vsel %vm3185, 1, 0
      %v3218 = vsel %vm3186, 1, 0
      %v3219 = vsel %vm3187, 1, 0
      %v3220 = vsel %vm3188, 1, 0
      %v3221 = vsel %vm3189, 1, 0
      %v3222 = vsel %vm3190, 1, 0
      %v3223 = vsel %vm3191, 1, 0
      %v3224 = vsel %vm3192, 1, 0
      %v3225 = vsel %vm3193, 1, 0
      %v3226 = vsel %vm3194, 1, 0
      %v3227 = vsel %vm3195, 1, 0
      %v3228 = vsel %vm3196, 1, 0
      %v3229 = vsel %vm3197, 1, 0
      %v3230 = vsel %vm3198, 1, 0
      %v3231 = vsel %vm3199, 1, 0
      %v3232 = vsel %vm3200, 1, 0
      %v3233 = vsel %vm3201, 1, 0
      %v3234 = vsel %vm3202, 1, 0
      %v3235 = vsel %vm3203, 1, 0
      %v3236 = vsel %vm3204, 1, 0
      %v3237 = vsel %vm3205, 1, 0
      %v3238 = vsel %vm3206, 1, 0
      %v3239 = vsel %vm3207, 1, 0
      %v3240 = vcvt.s32.f32 %v3208
      %v3241 = vcvt.s32.f32 %v3209
      %v3242 = vcvt.s32.f32 %v3210
      %v3243 = vcvt.s32.f32 %v3211
      %v3244 = vcvt.s32.f32 %v3212
      %v3245 = vcvt.s32.f32 %v3213
      %v3246 = vcvt.s32.f32 %v3214
      %v3247 = vcvt.s32.f32 %v3215
      %v3248 = vcvt.s32.f32 %v3216
      %v3249 = vcvt.s32.f32 %v3217
      %v3250 = vcvt.s32.f32 %v3218
      %v3251 = vcvt.s32.f32 %v3219
      %v3252 = vcvt.s32.f32 %v3220
      %v3253 = vcvt.s32.f32 %v3221
      %v3254 = vcvt.s32.f32 %v3222
      %v3255 = vcvt.s32.f32 %v3223
      %v3256 = vcvt.s32.f32 %v3224
      %v3257 = vcvt.s32.f32 %v3225
      %v3258 = vcvt.s32.f32 %v3226
      %v3259 = vcvt.s32.f32 %v3227
      %v3260 = vcvt.s32.f32 %v3228
      %v3261 = vcvt.s32.f32 %v3229
      %v3262 = vcvt.s32.f32 %v3230
      %v3263 = vcvt.s32.f32 %v3231
      %v3264 = vcvt.s32.f32 %v3232
      %v3265 = vcvt.s32.f32 %v3233
      %v3266 = vcvt.s32.f32 %v3234
      %v3267 = vcvt.s32.f32 %v3235
      %v3268 = vcvt.s32.f32 %v3236
      %v3269 = vcvt.s32.f32 %v3237
      %v3270 = vcvt.s32.f32 %v3238
      %v3271 = vcvt.s32.f32 %v3239
      %v3272 = vadd.s32 %v3160, 1
      %v3273 = vadd.s32 %v3161, 1
      %v3274 = vadd.s32 %v3162, 1
      %v3275 = vadd.s32 %v3163, 1
      %v3276 = vadd.s32 %v3164, 1
      %v3277 = vadd.s32 %v3165, 1
      %v3278 = vadd.s32 %v3166, 1
      %v3279 = vadd.s32 %v3167, 1
      %v3280 = vadd.s32 %v3168, 1
      %v3281 = vadd.s32 %v3169, 1
      %v3282 = vadd.s32 %v3170, 1
      %v3283 = vadd.s32 %v3171, 1
      %v3284 = vadd.s32 %v3172, 1
      %v3285 = vadd.s32 %v3173, 1
      %v3286 = vadd.s32 %v3174, 1
      %v3287 = vadd.s32 %v3175, 1
      %vm3288 = vcmp.eq.s32.totalorder %v3158, %v3272
      %vm3289 = vcmp.eq.s32.totalorder %v3159, %v3272
      %vm3290 = vcmp.eq.s32.totalorder %v3158, %v3273
      %vm3291 = vcmp.eq.s32.totalorder %v3159, %v3273
      %vm3292 = vcmp.eq.s32.totalorder %v3158, %v3274
      %vm3293 = vcmp.eq.s32.totalorder %v3159, %v3274
      %vm3294 = vcmp.eq.s32.totalorder %v3158, %v3275
      %vm3295 = vcmp.eq.s32.totalorder %v3159, %v3275
      %vm3296 = vcmp.eq.s32.totalorder %v3158, %v3276
      %vm3297 = vcmp.eq.s32.totalorder %v3159, %v3276
      %vm3298 = vcmp.eq.s32.totalorder %v3158, %v3277
      %vm3299 = vcmp.eq.s32.totalorder %v3159, %v3277
      %vm3300 = vcmp.eq.s32.totalorder %v3158, %v3278
      %vm3301 = vcmp.eq.s32.totalorder %v3159, %v3278
      %vm3302 = vcmp.eq.s32.totalorder %v3158, %v3279
      %vm3303 = vcmp.eq.s32.totalorder %v3159, %v3279
      %vm3304 = vcmp.eq.s32.totalorder %v3158, %v3280
      %vm3305 = vcmp.eq.s32.totalorder %v3159, %v3280
      %vm3306 = vcmp.eq.s32.totalorder %v3158, %v3281
      %vm3307 = vcmp.eq.s32.totalorder %v3159, %v3281
      %vm3308 = vcmp.eq.s32.totalorder %v3158, %v3282
      %vm3309 = vcmp.eq.s32.totalorder %v3159, %v3282
      %vm3310 = vcmp.eq.s32.totalorder %v3158, %v3283
      %vm3311 = vcmp.eq.s32.totalorder %v3159, %v3283
      %vm3312 = vcmp.eq.s32.totalorder %v3158, %v3284
      %vm3313 = vcmp.eq.s32.totalorder %v3159, %v3284
      %vm3314 = vcmp.eq.s32.totalorder %v3158, %v3285
      %vm3315 = vcmp.eq.s32.totalorder %v3159, %v3285
      %vm3316 = vcmp.eq.s32.totalorder %v3158, %v3286
      %vm3317 = vcmp.eq.s32.totalorder %v3159, %v3286
      %vm3318 = vcmp.eq.s32.totalorder %v3158, %v3287
      %vm3319 = vcmp.eq.s32.totalorder %v3159, %v3287
      %v3320 = vsel %vm3288, 1, 0
      %v3321 = vsel %vm3289, 1, 0
      %v3322 = vsel %vm3290, 1, 0
      %v3323 = vsel %vm3291, 1, 0
      %v3324 = vsel %vm3292, 1, 0
      %v3325 = vsel %vm3293, 1, 0
      %v3326 = vsel %vm3294, 1, 0
      %v3327 = vsel %vm3295, 1, 0
      %v3328 = vsel %vm3296, 1, 0
      %v3329 = vsel %vm3297, 1, 0
      %v3330 = vsel %vm3298, 1, 0
      %v3331 = vsel %vm3299, 1, 0
      %v3332 = vsel %vm3300, 1, 0
      %v3333 = vsel %vm3301, 1, 0
      %v3334 = vsel %vm3302, 1, 0
      %v3335 = vsel %vm3303, 1, 0
      %v3336 = vsel %vm3304, 1, 0
      %v3337 = vsel %vm3305, 1, 0
      %v3338 = vsel %vm3306, 1, 0
      %v3339 = vsel %vm3307, 1, 0
      %v3340 = vsel %vm3308, 1, 0
      %v3341 = vsel %vm3309, 1, 0
      %v3342 = vsel %vm3310, 1, 0
      %v3343 = vsel %vm3311, 1, 0
      %v3344 = vsel %vm3312, 1, 0
      %v3345 = vsel %vm3313, 1, 0
      %v3346 = vsel %vm3314, 1, 0
      %v3347 = vsel %vm3315, 1, 0
      %v3348 = vsel %vm3316, 1, 0
      %v3349 = vsel %vm3317, 1, 0
      %v3350 = vsel %vm3318, 1, 0
      %v3351 = vsel %vm3319, 1, 0
      %v3352 = vcvt.s32.f32 %v3320
      %v3353 = vcvt.s32.f32 %v3321
      %v3354 = vcvt.s32.f32 %v3322
      %v3355 = vcvt.s32.f32 %v3323
      %v3356 = vcvt.s32.f32 %v3324
      %v3357 = vcvt.s32.f32 %v3325
      %v3358 = vcvt.s32.f32 %v3326
      %v3359 = vcvt.s32.f32 %v3327
      %v3360 = vcvt.s32.f32 %v3328
      %v3361 = vcvt.s32.f32 %v3329
      %v3362 = vcvt.s32.f32 %v3330
      %v3363 = vcvt.s32.f32 %v3331
      %v3364 = vcvt.s32.f32 %v3332
      %v3365 = vcvt.s32.f32 %v3333
      %v3366 = vcvt.s32.f32 %v3334
      %v3367 = vcvt.s32.f32 %v3335
      %v3368 = vcvt.s32.f32 %v3336
      %v3369 = vcvt.s32.f32 %v3337
      %v3370 = vcvt.s32.f32 %v3338
      %v3371 = vcvt.s32.f32 %v3339
      %v3372 = vcvt.s32.f32 %v3340
      %v3373 = vcvt.s32.f32 %v3341
      %v3374 = vcvt.s32.f32 %v3342
      %v3375 = vcvt.s32.f32 %v3343
      %v3376 = vcvt.s32.f32 %v3344
      %v3377 = vcvt.s32.f32 %v3345
      %v3378 = vcvt.s32.f32 %v3346
      %v3379 = vcvt.s32.f32 %v3347
      %v3380 = vcvt.s32.f32 %v3348
      %v3381 = vcvt.s32.f32 %v3349
      %v3382 = vcvt.s32.f32 %v3350
      %v3383 = vcvt.s32.f32 %v3351
      %3384 = vmatpush.msra.mxu0 %v3123
      %3385 = vmatpush.msra.mxu0 %v3122
      %3386 = vmatpush.msra.mxu0 %v3121
      %3387 = vmatpush.msra.mxu0 %v3120
      %3388 = vmatpush.msra.mxu0 %v3119
      %3389 = vmatpush.msra.mxu0 %v3118
      %3390 = vmatpush.msra.mxu0 %v3117
      %3391 = vmatpush.msra.mxu0 %v3116
      %3392 = vmatpush.msra.mxu0 %v3115
      %3393 = vmatpush.msra.mxu0 %v3114
      %3394 = vmatpush.msra.mxu0 %v3113
      %3395 = vmatpush.msra.mxu0 %v3112
      %3396 = vmatpush.msra.mxu0 %v3111
      %3397 = vmatpush.msra.mxu0 %v3110
      %3398 = vmatpush.msra.mxu0 %v3109
      %3399 = vmatpush.msra.mxu0 %v3108
      %3400 = vmatmul.f32.gmra.mxu0 %v3240
      %v3401 = vpop.f32.mrf.mxu0
      %v3402 = vadd.f32 0.0, %v3401
      %3403 = vmatmul.f32.gmra.mxu0 %v3242
      %v3404 = vpop.f32.mrf.mxu0
      %v3405 = vadd.f32 0.0, %v3404
      %3406 = vmatmul.f32.gmra.mxu0 %v3244
      %v3407 = vpop.f32.mrf.mxu0
      %v3408 = vadd.f32 0.0, %v3407
      %3409 = vmatmul.f32.gmra.mxu0 %v3246
      %v3410 = vpop.f32.mrf.mxu0
      %v3411 = vadd.f32 0.0, %v3410
      %3412 = vmatmul.f32.gmra.mxu0 %v3248
      %v3413 = vpop.f32.mrf.mxu0
      %v3414 = vadd.f32 0.0, %v3413
      %3415 = vmatmul.f32.gmra.mxu0 %v3250
      %v3416 = vpop.f32.mrf.mxu0
      %v3417 = vadd.f32 0.0, %v3416
      %3418 = vmatmul.f32.gmra.mxu0 %v3252
      %v3419 = vpop.f32.mrf.mxu0
      %v3420 = vadd.f32 0.0, %v3419
      %3421 = vmatmul.f32.gmra.mxu0 %v3254
      %v3422 = vpop.f32.mrf.mxu0
      %v3423 = vadd.f32 0.0, %v3422
      %3424 = vmatmul.f32.gmra.mxu0 %v3256
      %v3425 = vpop.f32.mrf.mxu0
      %v3426 = vadd.f32 0.0, %v3425
      %3427 = vmatmul.f32.gmra.mxu0 %v3258
      %v3428 = vpop.f32.mrf.mxu0
      %v3429 = vadd.f32 0.0, %v3428
      %3430 = vmatmul.f32.gmra.mxu0 %v3260
      %v3431 = vpop.f32.mrf.mxu0
      %v3432 = vadd.f32 0.0, %v3431
      %3433 = vmatmul.f32.gmra.mxu0 %v3262
      %v3434 = vpop.f32.mrf.mxu0
      %v3435 = vadd.f32 0.0, %v3434
      %3436 = vmatmul.f32.gmra.mxu0 %v3264
      %v3437 = vpop.f32.mrf.mxu0
      %v3438 = vadd.f32 0.0, %v3437
      %3439 = vmatmul.f32.gmra.mxu0 %v3266
      %v3440 = vpop.f32.mrf.mxu0
      %v3441 = vadd.f32 0.0, %v3440
      %3442 = vmatmul.f32.gmra.mxu0 %v3268
      %v3443 = vpop.f32.mrf.mxu0
      %v3444 = vadd.f32 0.0, %v3443
      %3445 = vmatmul.f32.gmra.mxu0 %v3270
      %v3446 = vpop.f32.mrf.mxu0
      %v3447 = vadd.f32 0.0, %v3446
      %3448 = vdwg.mxu0
      %3449 = vmatpush.msra.mxu0 %v3139
      %3450 = vmatpush.msra.mxu0 %v3138
      %3451 = vmatpush.msra.mxu0 %v3137
      %3452 = vmatpush.msra.mxu0 %v3136
      %3453 = vmatpush.msra.mxu0 %v3135
      %3454 = vmatpush.msra.mxu0 %v3134
      %3455 = vmatpush.msra.mxu0 %v3133
      %3456 = vmatpush.msra.mxu0 %v3132
      %3457 = vmatpush.msra.mxu0 %v3131
      %3458 = vmatpush.msra.mxu0 %v3130
      %3459 = vmatpush.msra.mxu0 %v3129
      %3460 = vmatpush.msra.mxu0 %v3128
      %3461 = vmatpush.msra.mxu0 %v3127
      %3462 = vmatpush.msra.mxu0 %v3126
      %3463 = vmatpush.msra.mxu0 %v3125
      %3464 = vmatpush.msra.mxu0 %v3124
      %3465 = vmatmul.f32.gmra.mxu0 %v3241
      %v3466 = vpop.f32.mrf.mxu0
      %v3467 = vadd.f32 %v3402, %v3466
      %3468 = vmatmul.f32.gmra.mxu0 %v3243
      %v3469 = vpop.f32.mrf.mxu0
      %v3470 = vadd.f32 %v3405, %v3469
      %3471 = vmatmul.f32.gmra.mxu0 %v3245
      %v3472 = vpop.f32.mrf.mxu0
      %v3473 = vadd.f32 %v3408, %v3472
      %3474 = vmatmul.f32.gmra.mxu0 %v3247
      %v3475 = vpop.f32.mrf.mxu0
      %v3476 = vadd.f32 %v3411, %v3475
      %3477 = vmatmul.f32.gmra.mxu0 %v3249
      %v3478 = vpop.f32.mrf.mxu0
      %v3479 = vadd.f32 %v3414, %v3478
      %3480 = vmatmul.f32.gmra.mxu0 %v3251
      %v3481 = vpop.f32.mrf.mxu0
      %v3482 = vadd.f32 %v3417, %v3481
      %3483 = vmatmul.f32.gmra.mxu0 %v3253
      %v3484 = vpop.f32.mrf.mxu0
      %v3485 = vadd.f32 %v3420, %v3484
      %3486 = vmatmul.f32.gmra.mxu0 %v3255
      %v3487 = vpop.f32.mrf.mxu0
      %v3488 = vadd.f32 %v3423, %v3487
      %3489 = vmatmul.f32.gmra.mxu0 %v3257
      %v3490 = vpop.f32.mrf.mxu0
      %v3491 = vadd.f32 %v3426, %v3490
      %3492 = vmatmul.f32.gmra.mxu0 %v3259
      %v3493 = vpop.f32.mrf.mxu0
      %v3494 = vadd.f32 %v3429, %v3493
      %3495 = vmatmul.f32.gmra.mxu0 %v3261
      %v3496 = vpop.f32.mrf.mxu0
      %v3497 = vadd.f32 %v3432, %v3496
      %3498 = vmatmul.f32.gmra.mxu0 %v3263
      %v3499 = vpop.f32.mrf.mxu0
      %v3500 = vadd.f32 %v3435, %v3499
      %3501 = vmatmul.f32.gmra.mxu0 %v3265
      %v3502 = vpop.f32.mrf.mxu0
      %v3503 = vadd.f32 %v3438, %v3502
      %3504 = vmatmul.f32.gmra.mxu0 %v3267
      %v3505 = vpop.f32.mrf.mxu0
      %v3506 = vadd.f32 %v3441, %v3505
      %3507 = vmatmul.f32.gmra.mxu0 %v3269
      %v3508 = vpop.f32.mrf.mxu0
      %v3509 = vadd.f32 %v3444, %v3508
      %3510 = vmatmul.f32.gmra.mxu0 %v3271
      %v3511 = vpop.f32.mrf.mxu0
      %v3512 = vadd.f32 %v3447, %v3511
      %3513 = vdwg.mxu0
      %3514 = vmatpush.msra.mxu0 %v3123
      %3515 = vmatpush.msra.mxu0 %v3122
      %3516 = vmatpush.msra.mxu0 %v3121
      %3517 = vmatpush.msra.mxu0 %v3120
      %3518 = vmatpush.msra.mxu0 %v3119
      %3519 = vmatpush.msra.mxu0 %v3118
      %3520 = vmatpush.msra.mxu0 %v3117
      %3521 = vmatpush.msra.mxu0 %v3116
      %3522 = vmatpush.msra.mxu0 %v3115
      %3523 = vmatpush.msra.mxu0 %v3114
      %3524 = vmatpush.msra.mxu0 %v3113
      %3525 = vmatpush.msra.mxu0 %v3112
      %3526 = vmatpush.msra.mxu0 %v3111
      %3527 = vmatpush.msra.mxu0 %v3110
      %3528 = vmatpush.msra.mxu0 %v3109
      %3529 = vmatpush.msra.mxu0 %v3108
      %3530 = vmatmul.f32.gmra.mxu0 %v3352
      %v3531 = vpop.f32.mrf.mxu0
      %v3532 = vadd.f32 0.0, %v3531
      %3533 = vmatmul.f32.gmra.mxu0 %v3354
      %v3534 = vpop.f32.mrf.mxu0
      %v3535 = vadd.f32 0.0, %v3534
      %3536 = vmatmul.f32.gmra.mxu0 %v3356
      %v3537 = vpop.f32.mrf.mxu0
      %v3538 = vadd.f32 0.0, %v3537
      %3539 = vmatmul.f32.gmra.mxu0 %v3358
      %v3540 = vpop.f32.mrf.mxu0
      %v3541 = vadd.f32 0.0, %v3540
      %3542 = vmatmul.f32.gmra.mxu0 %v3360
      %v3543 = vpop.f32.mrf.mxu0
      %v3544 = vadd.f32 0.0, %v3543
      %3545 = vmatmul.f32.gmra.mxu0 %v3362
      %v3546 = vpop.f32.mrf.mxu0
      %v3547 = vadd.f32 0.0, %v3546
      %3548 = vmatmul.f32.gmra.mxu0 %v3364
      %v3549 = vpop.f32.mrf.mxu0
      %v3550 = vadd.f32 0.0, %v3549
      %3551 = vmatmul.f32.gmra.mxu0 %v3366
      %v3552 = vpop.f32.mrf.mxu0
      %v3553 = vadd.f32 0.0, %v3552
      %3554 = vmatmul.f32.gmra.mxu0 %v3368
      %v3555 = vpop.f32.mrf.mxu0
      %v3556 = vadd.f32 0.0, %v3555
      %3557 = vmatmul.f32.gmra.mxu0 %v3370
      %v3558 = vpop.f32.mrf.mxu0
      %v3559 = vadd.f32 0.0, %v3558
      %3560 = vmatmul.f32.gmra.mxu0 %v3372
      %v3561 = vpop.f32.mrf.mxu0
      %v3562 = vadd.f32 0.0, %v3561
      %3563 = vmatmul.f32.gmra.mxu0 %v3374
      %v3564 = vpop.f32.mrf.mxu0
      %v3565 = vadd.f32 0.0, %v3564
      %3566 = vmatmul.f32.gmra.mxu0 %v3376
      %v3567 = vpop.f32.mrf.mxu0
      %v3568 = vadd.f32 0.0, %v3567
      %3569 = vmatmul.f32.gmra.mxu0 %v3378
      %v3570 = vpop.f32.mrf.mxu0
      %v3571 = vadd.f32 0.0, %v3570
      %3572 = vmatmul.f32.gmra.mxu0 %v3380
      %v3573 = vpop.f32.mrf.mxu0
      %v3574 = vadd.f32 0.0, %v3573
      %3575 = vmatmul.f32.gmra.mxu0 %v3382
      %v3576 = vpop.f32.mrf.mxu0
      %v3577 = vadd.f32 0.0, %v3576
      %3578 = vdwg.mxu0
      %3579 = vmatpush.msra.mxu0 %v3139
      %3580 = vmatpush.msra.mxu0 %v3138
      %3581 = vmatpush.msra.mxu0 %v3137
      %3582 = vmatpush.msra.mxu0 %v3136
      %3583 = vmatpush.msra.mxu0 %v3135
      %3584 = vmatpush.msra.mxu0 %v3134
      %3585 = vmatpush.msra.mxu0 %v3133
      %3586 = vmatpush.msra.mxu0 %v3132
      %3587 = vmatpush.msra.mxu0 %v3131
      %3588 = vmatpush.msra.mxu0 %v3130
      %3589 = vmatpush.msra.mxu0 %v3129
      %3590 = vmatpush.msra.mxu0 %v3128
      %3591 = vmatpush.msra.mxu0 %v3127
      %3592 = vmatpush.msra.mxu0 %v3126
      %3593 = vmatpush.msra.mxu0 %v3125
      %3594 = vmatpush.msra.mxu0 %v3124
      %3595 = vmatmul.f32.gmra.mxu0 %v3353
      %v3596 = vpop.f32.mrf.mxu0
      %v3597 = vadd.f32 %v3532, %v3596
      %3598 = vmatmul.f32.gmra.mxu0 %v3355
      %v3599 = vpop.f32.mrf.mxu0
      %v3600 = vadd.f32 %v3535, %v3599
      %3601 = vmatmul.f32.gmra.mxu0 %v3357
      %v3602 = vpop.f32.mrf.mxu0
      %v3603 = vadd.f32 %v3538, %v3602
      %3604 = vmatmul.f32.gmra.mxu0 %v3359
      %v3605 = vpop.f32.mrf.mxu0
      %v3606 = vadd.f32 %v3541, %v3605
      %3607 = vmatmul.f32.gmra.mxu0 %v3361
      %v3608 = vpop.f32.mrf.mxu0
      %v3609 = vadd.f32 %v3544, %v3608
      %3610 = vmatmul.f32.gmra.mxu0 %v3363
      %v3611 = vpop.f32.mrf.mxu0
      %v3612 = vadd.f32 %v3547, %v3611
      %3613 = vmatmul.f32.gmra.mxu0 %v3365
      %v3614 = vpop.f32.mrf.mxu0
      %v3615 = vadd.f32 %v3550, %v3614
      %3616 = vmatmul.f32.gmra.mxu0 %v3367
      %v3617 = vpop.f32.mrf.mxu0
      %v3618 = vadd.f32 %v3553, %v3617
      %3619 = vmatmul.f32.gmra.mxu0 %v3369
      %v3620 = vpop.f32.mrf.mxu0
      %v3621 = vadd.f32 %v3556, %v3620
      %3622 = vmatmul.f32.gmra.mxu0 %v3371
      %v3623 = vpop.f32.mrf.mxu0
      %v3624 = vadd.f32 %v3559, %v3623
      %3625 = vmatmul.f32.gmra.mxu0 %v3373
      %v3626 = vpop.f32.mrf.mxu0
      %v3627 = vadd.f32 %v3562, %v3626
      %3628 = vmatmul.f32.gmra.mxu0 %v3375
      %v3629 = vpop.f32.mrf.mxu0
      %v3630 = vadd.f32 %v3565, %v3629
      %3631 = vmatmul.f32.gmra.mxu0 %v3377
      %v3632 = vpop.f32.mrf.mxu0
      %v3633 = vadd.f32 %v3568, %v3632
      %3634 = vmatmul.f32.gmra.mxu0 %v3379
      %v3635 = vpop.f32.mrf.mxu0
      %v3636 = vadd.f32 %v3571, %v3635
      %3637 = vmatmul.f32.gmra.mxu0 %v3381
      %v3638 = vpop.f32.mrf.mxu0
      %v3639 = vadd.f32 %v3574, %v3638
      %3640 = vmatmul.f32.gmra.mxu0 %v3383
      %v3641 = vpop.f32.mrf.mxu0
      %v3642 = vadd.f32 %v3577, %v3641
      %3643 = vdwg.mxu0
      %v3644 = vmax.f32 %v3467, %v3597
      %v3645 = vmax.f32 %v3470, %v3600
      %v3646 = vmax.f32 %v3473, %v3603
      %v3647 = vmax.f32 %v3476, %v3606
      %v3648 = vmax.f32 %v3479, %v3609
      %v3649 = vmax.f32 %v3482, %v3612
      %v3650 = vmax.f32 %v3485, %v3615
      %v3651 = vmax.f32 %v3488, %v3618
      %v3652 = vmax.f32 %v3491, %v3621
      %v3653 = vmax.f32 %v3494, %v3624
      %v3654 = vmax.f32 %v3497, %v3627
      %v3655 = vmax.f32 %v3500, %v3630
      %v3656 = vmax.f32 %v3503, %v3633
      %v3657 = vmax.f32 %v3506, %v3636
      %v3658 = vmax.f32 %v3509, %v3639
      %v3659 = vmax.f32 %v3512, %v3642
      %v3660 = vmax.f32 %v3644, %v3645
      %v3661 = vmax.f32 %v3646, %v3647
      %v3662 = vmax.f32 %v3648, %v3649
      %v3663 = vmax.f32 %v3650, %v3651
      %v3664 = vmax.f32 %v3652, %v3653
      %v3665 = vmax.f32 %v3654, %v3655
      %v3666 = vmax.f32 %v3656, %v3657
      %v3667 = vmax.f32 %v3658, %v3659
      %vm3668 = vcmask 130048
      %3669 = vst.msk [vmem:[%s367] sm:$0xff] %vm3668, %v3660
      %3670 = vst.msk [vmem:[%s367 + $0x8] sm:$0xff] %vm3668, %v3661
      %3671 = vst.msk [vmem:[%s367 + $0x10] sm:$0xff] %vm3668, %v3662
      %3672 = vst.msk [vmem:[%s367 + $0x18] sm:$0xff] %vm3668, %v3663
      %3673 = vst.msk [vmem:[%s367 + $0x20] sm:$0xff] %vm3668, %v3664
      %3674 = vst.msk [vmem:[%s367 + $0x28] sm:$0xff] %vm3668, %v3665
      %3675 = vst.msk [vmem:[%s367 + $0x30] sm:$0xff] %vm3668, %v3666
      %3676 = vst.msk [vmem:[%s367 + $0x38] sm:$0xff] %vm3668, %v3667
      %3677 = vst.msk [vmem:[#allocation3] sm:$0xff] %vm3668, 0.0
      %3678 = vst.msk [vmem:[#allocation3 + $0x8] sm:$0xff] %vm3668, 0.0
      %3679 = vst.msk [vmem:[#allocation3 + $0x10] sm:$0xff] %vm3668, 0.0
      %3680 = vst.msk [vmem:[#allocation3 + $0x18] sm:$0xff] %vm3668, 0.0
      %3681 = vst.msk [vmem:[#allocation3 + $0x20] sm:$0xff] %vm3668, 0.0
      %3682 = vst.msk [vmem:[#allocation3 + $0x28] sm:$0xff] %vm3668, 0.0
      %3683 = vst.msk [vmem:[#allocation3 + $0x30] sm:$0xff] %vm3668, 0.0
      %3684 = vst.msk [vmem:[#allocation3 + $0x38] sm:$0xff] %vm3668, 0.0
      %3685 = vst.msk [vmem:[#allocation3 + $0x40] sm:$0xff] %vm3668, 0.0
      %3686 = vst.msk [vmem:[#allocation3 + $0x48] sm:$0xff] %vm3668, 0.0
      %3687 = vst.msk [vmem:[#allocation3 + $0x50] sm:$0xff] %vm3668, 0.0
      %3688 = vst.msk [vmem:[#allocation3 + $0x58] sm:$0xff] %vm3668, 0.0
      %3689 = vst.msk [vmem:[#allocation3 + $0x60] sm:$0xff] %vm3668, 0.0
      %3690 = vst.msk [vmem:[#allocation3 + $0x68] sm:$0xff] %vm3668, 0.0
      %3691 = vst.msk [vmem:[#allocation3 + $0x70] sm:$0xff] %vm3668, 0.0
      %3692 = vst.msk [vmem:[#allocation3 + $0x78] sm:$0xff] %vm3668, 0.0
      %3693 = vst.msk [vmem:[#allocation3 + $0x80] sm:$0xff] %vm3668, 0.0
      %3694 = vst.msk [vmem:[#allocation3 + $0x88] sm:$0xff] %vm3668, 0.0
      %3695 = vst.msk [vmem:[#allocation3 + $0x90] sm:$0xff] %vm3668, 0.0
      %3696 = vst.msk [vmem:[#allocation3 + $0x98] sm:$0xff] %vm3668, 0.0
      %3697 = vst.msk [vmem:[#allocation3 + $0xa0] sm:$0xff] %vm3668, 0.0
      %3698 = vst.msk [vmem:[#allocation3 + $0xa8] sm:$0xff] %vm3668, 0.0
      %3699 = vst.msk [vmem:[#allocation3 + $0xb0] sm:$0xff] %vm3668, 0.0
      %3700 = vst.msk [vmem:[#allocation3 + $0xb8] sm:$0xff] %vm3668, 0.0
      %3701 = vst.msk [vmem:[#allocation3 + $0xc0] sm:$0xff] %vm3668, 0.0
      %3702 = vst.msk [vmem:[#allocation3 + $0xc8] sm:$0xff] %vm3668, 0.0
      %3703 = vst.msk [vmem:[#allocation3 + $0xd0] sm:$0xff] %vm3668, 0.0
      %3704 = vst.msk [vmem:[#allocation3 + $0xd8] sm:$0xff] %vm3668, 0.0
      %3705 = vst.msk [vmem:[#allocation3 + $0xe0] sm:$0xff] %vm3668, 0.0
      %3706 = vst.msk [vmem:[#allocation3 + $0xe8] sm:$0xff] %vm3668, 0.0
      %s3707 = scalar_lea.vmem [#allocation3], 24
      %3708 = vst.msk [vmem:[%s3707 + $0x8] sm:$0xff] %vm3668, %v3660
      %3709 = vst.msk [vmem:[%s3707 + $0x20] sm:$0xff] %vm3668, %v3661
      %3710 = vst.msk [vmem:[%s3707 + $0x38] sm:$0xff] %vm3668, %v3662
      %3711 = vst.msk [vmem:[%s3707 + $0x50] sm:$0xff] %vm3668, %v3663
      %3712 = vst.msk [vmem:[%s3707 + $0x68] sm:$0xff] %vm3668, %v3664
      %3713 = vst.msk [vmem:[%s3707 + $0x80] sm:$0xff] %vm3668, %v3665
      %3714 = vst.msk [vmem:[%s3707 + $0x98] sm:$0xff] %vm3668, %v3666
      %3715 = vst.msk [vmem:[%s3707 + $0xb0] sm:$0xff] %vm3668, %v3667
      %v3716 = vld [vmem:[#allocation3 + $0x7] sm:$0xff]
      %v3717 = vld [vmem:[#allocation3 + $0x1f] sm:$0xff]
      %v3718 = vld [vmem:[#allocation3 + $0x37] sm:$0xff]
      %v3719 = vld [vmem:[#allocation3 + $0x4f] sm:$0xff]
      %v3720 = vld [vmem:[#allocation3 + $0x67] sm:$0xff]
      %v3721 = vld [vmem:[#allocation3 + $0x7f] sm:$0xff]
      %v3722 = vld [vmem:[#allocation3 + $0x97] sm:$0xff]
      %v3723 = vld [vmem:[#allocation3 + $0xaf] sm:$0xff]
      %v3724 = vpack.c.bf16 %v3717, %v3716
      %v3725 = vpack.c.bf16 %v3719, %v3718
      %v3726 = vpack.c.bf16 %v3721, %v3720
      %v3727 = vpack.c.bf16 %v3723, %v3722
      %v3728 = vld [vmem:[%s5] sm:$0xf]
      %v3729 = vld [vmem:[%s5 + $0x4] sm:$0xf]
      %v3730 = vld [vmem:[#allocation3 + $0x8] sm:$0xff]
      %v3731 = vld [vmem:[#allocation3 + $0x20] sm:$0xff]
      %v3732 = vld [vmem:[#allocation3 + $0x38] sm:$0xff]
      %v3733 = vld [vmem:[#allocation3 + $0x50] sm:$0xff]
      %v3734 = vld [vmem:[#allocation3 + $0x68] sm:$0xff]
      %v3735 = vld [vmem:[#allocation3 + $0x80] sm:$0xff]
      %v3736 = vld [vmem:[#allocation3 + $0x98] sm:$0xff]
      %v3737 = vld [vmem:[#allocation3 + $0xb0] sm:$0xff]
      %v3738 = vpack.c.bf16 %v3731, %v3730
      %v3739 = vpack.c.bf16 %v3733, %v3732
      %v3740 = vpack.c.bf16 %v3735, %v3734
      %v3741 = vpack.c.bf16 %v3737, %v3736
      %v3742 = vld [vmem:[%s5 + $0x8] sm:$0xf]
      %v3743 = vld [vmem:[%s5 + $0xc] sm:$0xf]
      %v3746 = vunpack.c.l.b16 %v3742
      %v3747 = vunpack.c.l.b16 %v3743
      %v3748 = vpack.c.b16 %v3747, %v3746
      %v3751 = vsel %vm3668, %v3738, 0
      %v3754 = vsel %vm3668, %v3739, 0
      %v3757 = vsel %vm3668, %v3740, 0
      %v3760 = vsel %vm3668, %v3741, 0
      %3762 = vmatpush.bf16.msra.mxu0 0
      %3763 = vmatpush.bf16.msra.mxu0 0
      %3764 = vmatpush.bf16.msra.mxu0 0
      %3765 = vmatpush.bf16.msra.mxu0 0
      %3766 = vmatpush.bf16.msra.mxu0 0
      %3767 = vmatpush.bf16.msra.mxu0 0
      %3768 = vmatpush.bf16.msra.mxu0 0
      %3769 = vmatpush.bf16.msra.mxu0 %v3748
      %3770 = vmatmul.bf16.gmra.mxu0 %v3751
      %v3771 = vpop.f32.mrf.mxu0
      %v3772 = vadd.f32 0.0, %v3771
      %v3773 = vpop.f32.mrf.mxu0
      %v3774 = vadd.f32 0.0, %v3773
      %3775 = vmatmul.bf16.gmra.mxu0 %v3754
      %v3776 = vpop.f32.mrf.mxu0
      %v3777 = vadd.f32 0.0, %v3776
      %v3778 = vpop.f32.mrf.mxu0
      %v3779 = vadd.f32 0.0, %v3778
      %3780 = vmatmul.bf16.gmra.mxu0 %v3757
      %v3781 = vpop.f32.mrf.mxu0
      %v3782 = vadd.f32 0.0, %v3781
      %v3783 = vpop.f32.mrf.mxu0
      %v3784 = vadd.f32 0.0, %v3783
      %3785 = vmatmul.bf16.gmra.mxu0 %v3760
      %v3786 = vpop.f32.mrf.mxu0
      %v3787 = vadd.f32 0.0, %v3786
      %v3788 = vpop.f32.mrf.mxu0
      %v3789 = vadd.f32 0.0, %v3788
      %3790 = vdwg.mxu0
      %v3793 = vunpack.c.l.b16 %v3728
      %v3794 = vunpack.c.l.b16 %v3729
      %v3795 = vpack.c.b16 %v3794, %v3793
      %v3798 = vsel %vm3668, %v3724, 0
      %v3801 = vsel %vm3668, %v3725, 0
      %v3804 = vsel %vm3668, %v3726, 0
      %v3807 = vsel %vm3668, %v3727, 0
      %3809 = vmatpush.bf16.msra.mxu0 0
      %3810 = vmatpush.bf16.msra.mxu0 0
      %3811 = vmatpush.bf16.msra.mxu0 0
      %3812 = vmatpush.bf16.msra.mxu0 0
      %3813 = vmatpush.bf16.msra.mxu0 0
      %3814 = vmatpush.bf16.msra.mxu0 0
      %3815 = vmatpush.bf16.msra.mxu0 0
      %3816 = vmatpush.bf16.msra.mxu0 %v3795
      %3817 = vmatmul.bf16.gmra.mxu0 %v3798
      %v3818 = vpop.f32.mrf.mxu0
      %v3819 = vadd.f32 %v3772, %v3818
      %v3820 = vpop.f32.mrf.mxu0
      %v3821 = vadd.f32 %v3774, %v3820
      %3822 = vmatmul.bf16.gmra.mxu0 %v3801
      %v3823 = vpop.f32.mrf.mxu0
      %v3824 = vadd.f32 %v3777, %v3823
      %v3825 = vpop.f32.mrf.mxu0
      %v3826 = vadd.f32 %v3779, %v3825
      %3827 = vmatmul.bf16.gmra.mxu0 %v3804
      %v3828 = vpop.f32.mrf.mxu0
      %v3829 = vadd.f32 %v3782, %v3828
      %v3830 = vpop.f32.mrf.mxu0
      %v3831 = vadd.f32 %v3784, %v3830
      %3832 = vmatmul.bf16.gmra.mxu0 %v3807
      %v3833 = vpop.f32.mrf.mxu0
      %v3834 = vadd.f32 %v3787, %v3833
      %v3835 = vpop.f32.mrf.mxu0
      %v3836 = vadd.f32 %v3789, %v3835
      %3837 = vdwg.mxu0
      %v3838 = vld [vmem:[#allocation3 + $0x9] sm:$0xff]
      %v3839 = vld [vmem:[#allocation3 + $0x21] sm:$0xff]
      %v3840 = vld [vmem:[#allocation3 + $0x39] sm:$0xff]
      %v3841 = vld [vmem:[#allocation3 + $0x51] sm:$0xff]
      %v3842 = vld [vmem:[#allocation3 + $0x69] sm:$0xff]
      %v3843 = vld [vmem:[#allocation3 + $0x81] sm:$0xff]
      %v3844 = vld [vmem:[#allocation3 + $0x99] sm:$0xff]
      %v3845 = vld [vmem:[#allocation3 + $0xb1] sm:$0xff]
      %v3846 = vpack.c.bf16 %v3839, %v3838
      %v3847 = vpack.c.bf16 %v3841, %v3840
      %v3848 = vpack.c.bf16 %v3843, %v3842
      %v3849 = vpack.c.bf16 %v3845, %v3844
      %v3850 = vld [vmem:[%s5 + $0x10] sm:$0xf]
      %v3851 = vld [vmem:[%s5 + $0x14] sm:$0xf]
      %v3854 = vunpack.c.l.b16 %v3850
      %v3855 = vunpack.c.l.b16 %v3851
      %v3856 = vpack.c.b16 %v3855, %v3854
      %v3859 = vsel %vm3668, %v3846, 0
      %v3862 = vsel %vm3668, %v3847, 0
      %v3865 = vsel %vm3668, %v3848, 0
      %v3868 = vsel %vm3668, %v3849, 0
      %3870 = vmatpush.bf16.msra.mxu0 0
      %3871 = vmatpush.bf16.msra.mxu0 0
      %3872 = vmatpush.bf16.msra.mxu0 0
      %3873 = vmatpush.bf16.msra.mxu0 0
      %3874 = vmatpush.bf16.msra.mxu0 0
      %3875 = vmatpush.bf16.msra.mxu0 0
      %3876 = vmatpush.bf16.msra.mxu0 0
      %3877 = vmatpush.bf16.msra.mxu0 %v3856
      %3878 = vmatmul.bf16.gmra.mxu0 %v3859
      %v3879 = vpop.f32.mrf.mxu0
      %v3880 = vadd.f32 0.0, %v3879
      %v3881 = vpop.f32.mrf.mxu0
      %v3882 = vadd.f32 0.0, %v3881
      %3883 = vmatmul.bf16.gmra.mxu0 %v3862
      %v3884 = vpop.f32.mrf.mxu0
      %v3885 = vadd.f32 0.0, %v3884
      %v3886 = vpop.f32.mrf.mxu0
      %v3887 = vadd.f32 0.0, %v3886
      %3888 = vmatmul.bf16.gmra.mxu0 %v3865
      %v3889 = vpop.f32.mrf.mxu0
      %v3890 = vadd.f32 0.0, %v3889
      %v3891 = vpop.f32.mrf.mxu0
      %v3892 = vadd.f32 0.0, %v3891
      %3893 = vmatmul.bf16.gmra.mxu0 %v3868
      %v3894 = vpop.f32.mrf.mxu0
      %v3895 = vadd.f32 0.0, %v3894
      %v3896 = vpop.f32.mrf.mxu0
      %v3897 = vadd.f32 0.0, %v3896
      %3898 = vdwg.mxu0
      %v3899 = vadd.f32 %v3819, %v3880
      %v3900 = vadd.f32 %v3821, %v3882
      %v3901 = vadd.f32 %v3824, %v3885
      %v3902 = vadd.f32 %v3826, %v3887
      %v3903 = vadd.f32 %v3829, %v3890
      %v3904 = vadd.f32 %v3831, %v3892
      %v3905 = vadd.f32 %v3834, %v3895
      %v3906 = vadd.f32 %v3836, %v3897
      %v3907 = vld [vmem:[%s3707 + $0x7] sm:$0xff]
      %v3908 = vld [vmem:[%s3707 + $0x1f] sm:$0xff]
      %v3909 = vld [vmem:[%s3707 + $0x37] sm:$0xff]
      %v3910 = vld [vmem:[%s3707 + $0x4f] sm:$0xff]
      %v3911 = vld [vmem:[%s3707 + $0x67] sm:$0xff]
      %v3912 = vld [vmem:[%s3707 + $0x7f] sm:$0xff]
      %v3913 = vld [vmem:[%s3707 + $0x97] sm:$0xff]
      %v3914 = vld [vmem:[%s3707 + $0xaf] sm:$0xff]
      %v3915 = vpack.c.bf16 %v3908, %v3907
      %v3916 = vpack.c.bf16 %v3910, %v3909
      %v3917 = vpack.c.bf16 %v3912, %v3911
      %v3918 = vpack.c.bf16 %v3914, %v3913
      %v3919 = vld [vmem:[%s5 + $0x18] sm:$0xf]
      %v3920 = vld [vmem:[%s5 + $0x1c] sm:$0xf]
      %v3923 = vunpack.c.l.b16 %v3919
      %v3924 = vunpack.c.l.b16 %v3920
      %v3925 = vpack.c.b16 %v3924, %v3923
      %v3928 = vsel %vm3668, %v3915, 0
      %v3931 = vsel %vm3668, %v3916, 0
      %v3934 = vsel %vm3668, %v3917, 0
      %v3937 = vsel %vm3668, %v3918, 0
      %3939 = vmatpush.bf16.msra.mxu0 0
      %3940 = vmatpush.bf16.msra.mxu0 0
      %3941 = vmatpush.bf16.msra.mxu0 0
      %3942 = vmatpush.bf16.msra.mxu0 0
      %3943 = vmatpush.bf16.msra.mxu0 0
      %3944 = vmatpush.bf16.msra.mxu0 0
      %3945 = vmatpush.bf16.msra.mxu0 0
      %3946 = vmatpush.bf16.msra.mxu0 %v3925
      %3947 = vmatmul.bf16.gmra.mxu0 %v3928
      %v3948 = vpop.f32.mrf.mxu0
      %v3949 = vadd.f32 0.0, %v3948
      %v3950 = vpop.f32.mrf.mxu0
      %v3951 = vadd.f32 0.0, %v3950
      %3952 = vmatmul.bf16.gmra.mxu0 %v3931
      %v3953 = vpop.f32.mrf.mxu0
      %v3954 = vadd.f32 0.0, %v3953
      %v3955 = vpop.f32.mrf.mxu0
      %v3956 = vadd.f32 0.0, %v3955
      %3957 = vmatmul.bf16.gmra.mxu0 %v3934
      %v3958 = vpop.f32.mrf.mxu0
      %v3959 = vadd.f32 0.0, %v3958
      %v3960 = vpop.f32.mrf.mxu0
      %v3961 = vadd.f32 0.0, %v3960
      %3962 = vmatmul.bf16.gmra.mxu0 %v3937
      %v3963 = vpop.f32.mrf.mxu0
      %v3964 = vadd.f32 0.0, %v3963
      %v3965 = vpop.f32.mrf.mxu0
      %v3966 = vadd.f32 0.0, %v3965
      %3967 = vdwg.mxu0
      %v3968 = vadd.f32 %v3899, %v3949
      %v3969 = vadd.f32 %v3900, %v3951
      %v3970 = vadd.f32 %v3901, %v3954
      %v3971 = vadd.f32 %v3902, %v3956
      %v3972 = vadd.f32 %v3903, %v3959
      %v3973 = vadd.f32 %v3904, %v3961
      %v3974 = vadd.f32 %v3905, %v3964
      %v3975 = vadd.f32 %v3906, %v3966
      %v3976 = vld [vmem:[%s3707 + $0x8] sm:$0xff]
      %v3977 = vld [vmem:[%s3707 + $0x20] sm:$0xff]
      %v3978 = vld [vmem:[%s3707 + $0x38] sm:$0xff]
      %v3979 = vld [vmem:[%s3707 + $0x50] sm:$0xff]
      %v3980 = vld [vmem:[%s3707 + $0x68] sm:$0xff]
      %v3981 = vld [vmem:[%s3707 + $0x80] sm:$0xff]
      %v3982 = vld [vmem:[%s3707 + $0x98] sm:$0xff]
      %v3983 = vld [vmem:[%s3707 + $0xb0] sm:$0xff]
      %v3984 = vpack.c.bf16 %v3977, %v3976
      %v3985 = vpack.c.bf16 %v3979, %v3978
      %v3986 = vpack.c.bf16 %v3981, %v3980
      %v3987 = vpack.c.bf16 %v3983, %v3982
      %v3988 = vld [vmem:[%s5 + $0x20] sm:$0xf]
      %v3989 = vld [vmem:[%s5 + $0x24] sm:$0xf]
      %v3992 = vunpack.c.l.b16 %v3988
      %v3993 = vunpack.c.l.b16 %v3989
      %v3994 = vpack.c.b16 %v3993, %v3992
      %v3997 = vsel %vm3668, %v3984, 0
      %v4000 = vsel %vm3668, %v3985, 0
      %v4003 = vsel %vm3668, %v3986, 0
      %v4006 = vsel %vm3668, %v3987, 0
      %4008 = vmatpush.bf16.msra.mxu0 0
      %4009 = vmatpush.bf16.msra.mxu0 0
      %4010 = vmatpush.bf16.msra.mxu0 0
      %4011 = vmatpush.bf16.msra.mxu0 0
      %4012 = vmatpush.bf16.msra.mxu0 0
      %4013 = vmatpush.bf16.msra.mxu0 0
      %4014 = vmatpush.bf16.msra.mxu0 0
      %4015 = vmatpush.bf16.msra.mxu0 %v3994
      %4016 = vmatmul.bf16.gmra.mxu0 %v3997
      %v4017 = vpop.f32.mrf.mxu0
      %v4018 = vadd.f32 0.0, %v4017
      %v4019 = vpop.f32.mrf.mxu0
      %v4020 = vadd.f32 0.0, %v4019
      %4021 = vmatmul.bf16.gmra.mxu0 %v4000
      %v4022 = vpop.f32.mrf.mxu0
      %v4023 = vadd.f32 0.0, %v4022
      %v4024 = vpop.f32.mrf.mxu0
      %v4025 = vadd.f32 0.0, %v4024
      %4026 = vmatmul.bf16.gmra.mxu0 %v4003
      %v4027 = vpop.f32.mrf.mxu0
      %v4028 = vadd.f32 0.0, %v4027
      %v4029 = vpop.f32.mrf.mxu0
      %v4030 = vadd.f32 0.0, %v4029
      %4031 = vmatmul.bf16.gmra.mxu0 %v4006
      %v4032 = vpop.f32.mrf.mxu0
      %v4033 = vadd.f32 0.0, %v4032
      %v4034 = vpop.f32.mrf.mxu0
      %v4035 = vadd.f32 0.0, %v4034
      %4036 = vdwg.mxu0
      %v4037 = vadd.f32 %v3968, %v4018
      %v4038 = vadd.f32 %v3969, %v4020
      %v4039 = vadd.f32 %v3970, %v4023
      %v4040 = vadd.f32 %v3971, %v4025
      %v4041 = vadd.f32 %v3972, %v4028
      %v4042 = vadd.f32 %v3973, %v4030
      %v4043 = vadd.f32 %v3974, %v4033
      %v4044 = vadd.f32 %v3975, %v4035
      %v4045 = vld [vmem:[%s3707 + $0x9] sm:$0xff]
      %v4046 = vld [vmem:[%s3707 + $0x21] sm:$0xff]
      %v4047 = vld [vmem:[%s3707 + $0x39] sm:$0xff]
      %v4048 = vld [vmem:[%s3707 + $0x51] sm:$0xff]
      %v4049 = vld [vmem:[%s3707 + $0x69] sm:$0xff]
      %v4050 = vld [vmem:[%s3707 + $0x81] sm:$0xff]
      %v4051 = vld [vmem:[%s3707 + $0x99] sm:$0xff]
      %v4052 = vld [vmem:[%s3707 + $0xb1] sm:$0xff]
      %v4053 = vpack.c.bf16 %v4046, %v4045
      %v4054 = vpack.c.bf16 %v4048, %v4047
      %v4055 = vpack.c.bf16 %v4050, %v4049
      %v4056 = vpack.c.bf16 %v4052, %v4051
      %v4057 = vld [vmem:[%s5 + $0x28] sm:$0xf]
      %v4058 = vld [vmem:[%s5 + $0x2c] sm:$0xf]
      %v4061 = vunpack.c.l.b16 %v4057
      %v4062 = vunpack.c.l.b16 %v4058
      %v4063 = vpack.c.b16 %v4062, %v4061
      %v4066 = vsel %vm3668, %v4053, 0
      %v4069 = vsel %vm3668, %v4054, 0
      %v4072 = vsel %vm3668, %v4055, 0
      %v4075 = vsel %vm3668, %v4056, 0
      %4077 = vmatpush.bf16.msra.mxu0 0
      %4078 = vmatpush.bf16.msra.mxu0 0
      %4079 = vmatpush.bf16.msra.mxu0 0
      %4080 = vmatpush.bf16.msra.mxu0 0
      %4081 = vmatpush.bf16.msra.mxu0 0
      %4082 = vmatpush.bf16.msra.mxu0 0
      %4083 = vmatpush.bf16.msra.mxu0 0
      %4084 = vmatpush.bf16.msra.mxu0 %v4063
      %4085 = vmatmul.bf16.gmra.mxu0 %v4066
      %v4086 = vpop.f32.mrf.mxu0
      %v4087 = vadd.f32 0.0, %v4086
      %v4088 = vpop.f32.mrf.mxu0
      %v4089 = vadd.f32 0.0, %v4088
      %4090 = vmatmul.bf16.gmra.mxu0 %v4069
      %v4091 = vpop.f32.mrf.mxu0
      %v4092 = vadd.f32 0.0, %v4091
      %v4093 = vpop.f32.mrf.mxu0
      %v4094 = vadd.f32 0.0, %v4093
      %4095 = vmatmul.bf16.gmra.mxu0 %v4072
      %v4096 = vpop.f32.mrf.mxu0
      %v4097 = vadd.f32 0.0, %v4096
      %v4098 = vpop.f32.mrf.mxu0
      %v4099 = vadd.f32 0.0, %v4098
      %4100 = vmatmul.bf16.gmra.mxu0 %v4075
      %v4101 = vpop.f32.mrf.mxu0
      %v4102 = vadd.f32 0.0, %v4101
      %v4103 = vpop.f32.mrf.mxu0
      %v4104 = vadd.f32 0.0, %v4103
      %4105 = vdwg.mxu0
      %v4106 = vadd.f32 %v4037, %v4087
      %v4107 = vadd.f32 %v4038, %v4089
      %v4108 = vadd.f32 %v4039, %v4092
      %v4109 = vadd.f32 %v4040, %v4094
      %v4110 = vadd.f32 %v4041, %v4097
      %v4111 = vadd.f32 %v4042, %v4099
      %v4112 = vadd.f32 %v4043, %v4102
      %v4113 = vadd.f32 %v4044, %v4104
      %s4114 = scalar_lea.vmem [#allocation3], 48
      %v4115 = vld [vmem:[%s4114 + $0x7] sm:$0xff]
      %v4116 = vld [vmem:[%s4114 + $0x1f] sm:$0xff]
      %v4117 = vld [vmem:[%s4114 + $0x37] sm:$0xff]
      %v4118 = vld [vmem:[%s4114 + $0x4f] sm:$0xff]
      %v4119 = vld [vmem:[%s4114 + $0x67] sm:$0xff]
      %v4120 = vld [vmem:[%s4114 + $0x7f] sm:$0xff]
      %v4121 = vld [vmem:[%s4114 + $0x97] sm:$0xff]
      %v4122 = vld [vmem:[%s4114 + $0xaf] sm:$0xff]
      %v4123 = vpack.c.bf16 %v4116, %v4115
      %v4124 = vpack.c.bf16 %v4118, %v4117
      %v4125 = vpack.c.bf16 %v4120, %v4119
      %v4126 = vpack.c.bf16 %v4122, %v4121
      %v4127 = vld [vmem:[%s5 + $0x30] sm:$0xf]
      %v4128 = vld [vmem:[%s5 + $0x34] sm:$0xf]
      %v4131 = vunpack.c.l.b16 %v4127
      %v4132 = vunpack.c.l.b16 %v4128
      %v4133 = vpack.c.b16 %v4132, %v4131
      %v4136 = vsel %vm3668, %v4123, 0
      %v4139 = vsel %vm3668, %v4124, 0
      %v4142 = vsel %vm3668, %v4125, 0
      %v4145 = vsel %vm3668, %v4126, 0
      %4147 = vmatpush.bf16.msra.mxu0 0
      %4148 = vmatpush.bf16.msra.mxu0 0
      %4149 = vmatpush.bf16.msra.mxu0 0
      %4150 = vmatpush.bf16.msra.mxu0 0
      %4151 = vmatpush.bf16.msra.mxu0 0
      %4152 = vmatpush.bf16.msra.mxu0 0
      %4153 = vmatpush.bf16.msra.mxu0 0
      %4154 = vmatpush.bf16.msra.mxu0 %v4133
      %4155 = vmatmul.bf16.gmra.mxu0 %v4136
      %v4156 = vpop.f32.mrf.mxu0
      %v4157 = vadd.f32 0.0, %v4156
      %v4158 = vpop.f32.mrf.mxu0
      %v4159 = vadd.f32 0.0, %v4158
      %4160 = vmatmul.bf16.gmra.mxu0 %v4139
      %v4161 = vpop.f32.mrf.mxu0
      %v4162 = vadd.f32 0.0, %v4161
      %v4163 = vpop.f32.mrf.mxu0
      %v4164 = vadd.f32 0.0, %v4163
      %4165 = vmatmul.bf16.gmra.mxu0 %v4142
      %v4166 = vpop.f32.mrf.mxu0
      %v4167 = vadd.f32 0.0, %v4166
      %v4168 = vpop.f32.mrf.mxu0
      %v4169 = vadd.f32 0.0, %v4168
      %4170 = vmatmul.bf16.gmra.mxu0 %v4145
      %v4171 = vpop.f32.mrf.mxu0
      %v4172 = vadd.f32 0.0, %v4171
      %v4173 = vpop.f32.mrf.mxu0
      %v4174 = vadd.f32 0.0, %v4173
      %4175 = vdwg.mxu0
      %v4176 = vadd.f32 %v4106, %v4157
      %v4177 = vadd.f32 %v4107, %v4159
      %v4178 = vadd.f32 %v4108, %v4162
      %v4179 = vadd.f32 %v4109, %v4164
      %v4180 = vadd.f32 %v4110, %v4167
      %v4181 = vadd.f32 %v4111, %v4169
      %v4182 = vadd.f32 %v4112, %v4172
      %v4183 = vadd.f32 %v4113, %v4174
      %v4184 = vld [vmem:[%s4114 + $0x8] sm:$0xff]
      %v4185 = vld [vmem:[%s4114 + $0x20] sm:$0xff]
      %v4186 = vld [vmem:[%s4114 + $0x38] sm:$0xff]
      %v4187 = vld [vmem:[%s4114 + $0x50] sm:$0xff]
      %v4188 = vld [vmem:[%s4114 + $0x68] sm:$0xff]
      %v4189 = vld [vmem:[%s4114 + $0x80] sm:$0xff]
      %v4190 = vld [vmem:[%s4114 + $0x98] sm:$0xff]
      %v4191 = vld [vmem:[%s4114 + $0xb0] sm:$0xff]
      %v4192 = vpack.c.bf16 %v4185, %v4184
      %v4193 = vpack.c.bf16 %v4187, %v4186
      %v4194 = vpack.c.bf16 %v4189, %v4188
      %v4195 = vpack.c.bf16 %v4191, %v4190
      %v4196 = vld [vmem:[%s5 + $0x38] sm:$0xf]
      %v4197 = vld [vmem:[%s5 + $0x3c] sm:$0xf]
      %v4200 = vunpack.c.l.b16 %v4196
      %v4201 = vunpack.c.l.b16 %v4197
      %v4202 = vpack.c.b16 %v4201, %v4200
      %v4205 = vsel %vm3668, %v4192, 0
      %v4208 = vsel %vm3668, %v4193, 0
      %v4211 = vsel %vm3668, %v4194, 0
      %v4214 = vsel %vm3668, %v4195, 0
      %4216 = vmatpush.bf16.msra.mxu0 0
      %4217 = vmatpush.bf16.msra.mxu0 0
      %4218 = vmatpush.bf16.msra.mxu0 0
      %4219 = vmatpush.bf16.msra.mxu0 0
      %4220 = vmatpush.bf16.msra.mxu0 0
      %4221 = vmatpush.bf16.msra.mxu0 0
      %4222 = vmatpush.bf16.msra.mxu0 0
      %4223 = vmatpush.bf16.msra.mxu0 %v4202
      %4224 = vmatmul.bf16.gmra.mxu0 %v4205
      %v4225 = vpop.f32.mrf.mxu0
      %v4226 = vadd.f32 0.0, %v4225
      %v4227 = vpop.f32.mrf.mxu0
      %v4228 = vadd.f32 0.0, %v4227
      %4229 = vmatmul.bf16.gmra.mxu0 %v4208
      %v4230 = vpop.f32.mrf.mxu0
      %v4231 = vadd.f32 0.0, %v4230
      %v4232 = vpop.f32.mrf.mxu0
      %v4233 = vadd.f32 0.0, %v4232
      %4234 = vmatmul.bf16.gmra.mxu0 %v4211
      %v4235 = vpop.f32.mrf.mxu0
      %v4236 = vadd.f32 0.0, %v4235
      %v4237 = vpop.f32.mrf.mxu0
      %v4238 = vadd.f32 0.0, %v4237
      %4239 = vmatmul.bf16.gmra.mxu0 %v4214
      %v4240 = vpop.f32.mrf.mxu0
      %v4241 = vadd.f32 0.0, %v4240
      %v4242 = vpop.f32.mrf.mxu0
      %v4243 = vadd.f32 0.0, %v4242
      %4244 = vdwg.mxu0
      %v4245 = vadd.f32 %v4176, %v4226
      %v4246 = vadd.f32 %v4177, %v4228
      %v4247 = vadd.f32 %v4178, %v4231
      %v4248 = vadd.f32 %v4179, %v4233
      %v4249 = vadd.f32 %v4180, %v4236
      %v4250 = vadd.f32 %v4181, %v4238
      %v4251 = vadd.f32 %v4182, %v4241
      %v4252 = vadd.f32 %v4183, %v4243
      %v4253 = vld [vmem:[%s4114 + $0x9] sm:$0xff]
      %v4254 = vld [vmem:[%s4114 + $0x21] sm:$0xff]
      %v4255 = vld [vmem:[%s4114 + $0x39] sm:$0xff]
      %v4256 = vld [vmem:[%s4114 + $0x51] sm:$0xff]
      %v4257 = vld [vmem:[%s4114 + $0x69] sm:$0xff]
      %v4258 = vld [vmem:[%s4114 + $0x81] sm:$0xff]
      %v4259 = vld [vmem:[%s4114 + $0x99] sm:$0xff]
      %v4260 = vld [vmem:[%s4114 + $0xb1] sm:$0xff]
      %v4261 = vpack.c.bf16 %v4254, %v4253
      %v4262 = vpack.c.bf16 %v4256, %v4255
      %v4263 = vpack.c.bf16 %v4258, %v4257
      %v4264 = vpack.c.bf16 %v4260, %v4259
      %v4265 = vld [vmem:[%s5 + $0x40] sm:$0xf]
      %v4266 = vld [vmem:[%s5 + $0x44] sm:$0xf]
      %v4269 = vunpack.c.l.b16 %v4265
      %v4270 = vunpack.c.l.b16 %v4266
      %v4271 = vpack.c.b16 %v4270, %v4269
      %v4274 = vsel %vm3668, %v4261, 0
      %v4277 = vsel %vm3668, %v4262, 0
      %v4280 = vsel %vm3668, %v4263, 0
      %v4283 = vsel %vm3668, %v4264, 0
      %4285 = vmatpush.bf16.msra.mxu0 0
      %4286 = vmatpush.bf16.msra.mxu0 0
      %4287 = vmatpush.bf16.msra.mxu0 0
      %4288 = vmatpush.bf16.msra.mxu0 0
      %4289 = vmatpush.bf16.msra.mxu0 0
      %4290 = vmatpush.bf16.msra.mxu0 0
      %4291 = vmatpush.bf16.msra.mxu0 0
      %4292 = vmatpush.bf16.msra.mxu0 %v4271
      %4293 = vmatmul.bf16.gmra.mxu0 %v4274
      %v4294 = vpop.f32.mrf.mxu0
      %v4295 = vadd.f32 0.0, %v4294
      %v4296 = vpop.f32.mrf.mxu0
      %v4297 = vadd.f32 0.0, %v4296
      %4298 = vmatmul.bf16.gmra.mxu0 %v4277
      %v4299 = vpop.f32.mrf.mxu0
      %v4300 = vadd.f32 0.0, %v4299
      %v4301 = vpop.f32.mrf.mxu0
      %v4302 = vadd.f32 0.0, %v4301
      %4303 = vmatmul.bf16.gmra.mxu0 %v4280
      %v4304 = vpop.f32.mrf.mxu0
      %v4305 = vadd.f32 0.0, %v4304
      %v4306 = vpop.f32.mrf.mxu0
      %v4307 = vadd.f32 0.0, %v4306
      %4308 = vmatmul.bf16.gmra.mxu0 %v4283
      %v4309 = vpop.f32.mrf.mxu0
      %v4310 = vadd.f32 0.0, %v4309
      %v4311 = vpop.f32.mrf.mxu0
      %v4312 = vadd.f32 0.0, %v4311
      %4313 = vdwg.mxu0
      %v4314 = vadd.f32 %v4245, %v4295
      %v4315 = vadd.f32 %v4246, %v4297
      %v4316 = vadd.f32 %v4247, %v4300
      %v4317 = vadd.f32 %v4248, %v4302
      %v4318 = vadd.f32 %v4249, %v4305
      %v4319 = vadd.f32 %v4250, %v4307
      %v4320 = vadd.f32 %v4251, %v4310
      %v4321 = vadd.f32 %v4252, %v4312
      %v4322 = vld [vmem:[%s6] sm:$0x1]
      %v4324 = vperm.slane %v4322, 0
      %v4326 = vadd.f32 %v4314, %v4324
      %v4327 = vadd.f32 %v4315, %v4324
      %v4328 = vadd.f32 %v4316, %v4324
      %v4329 = vadd.f32 %v4317, %v4324
      %v4330 = vadd.f32 %v4318, %v4324
      %v4331 = vadd.f32 %v4319, %v4324
      %v4332 = vadd.f32 %v4320, %v4324
      %v4333 = vadd.f32 %v4321, %v4324
      %v4334 = vmax.f32 %v4326, 0.0
      %v4335 = vmax.f32 %v4327, 0.0
      %v4336 = vmax.f32 %v4328, 0.0
      %v4337 = vmax.f32 %v4329, 0.0
      %v4338 = vmax.f32 %v4330, 0.0
      %v4339 = vmax.f32 %v4331, 0.0
      %v4340 = vmax.f32 %v4332, 0.0
      %v4341 = vmax.f32 %v4333, 0.0
      %v4342 = vpack.c.bf16 %v4335, %v4334
      %v4343 = vpack.c.bf16 %v4337, %v4336
      %v4344 = vpack.c.bf16 %v4339, %v4338
      %v4345 = vpack.c.bf16 %v4341, %v4340
      %v4346 = vld [vmem:[%s7] sm:$0xf]
      %v4347 = vld [vmem:[%s7 + $0x4] sm:$0xf]
      %v4348 = vld [vmem:[%s8] sm:$0x1]
      %v4350 = vperm.slane %v4348, 0
      %v4354 = vunpack.c.l.b16 %v4346
      %v4355 = vunpack.c.l.b16 %v4347
      %v4356 = vpack.c.b16 %v4355, %v4354
      %v4359 = vsel %vm3668, %v4342, 0
      %v4362 = vsel %vm3668, %v4343, 0
      %v4365 = vsel %vm3668, %v4344, 0
      %v4368 = vsel %vm3668, %v4345, 0
      %4370 = vmatpush.bf16.msra.mxu0 0
      %4371 = vmatpush.bf16.msra.mxu0 0
      %4372 = vmatpush.bf16.msra.mxu0 0
      %4373 = vmatpush.bf16.msra.mxu0 0
      %4374 = vmatpush.bf16.msra.mxu0 0
      %4375 = vmatpush.bf16.msra.mxu0 0
      %4376 = vmatpush.bf16.msra.mxu0 0
      %4377 = vmatpush.bf16.msra.mxu0 %v4356
      %4378 = vmatmul.bf16.gmra.mxu0 %v4359
      %v4379 = vpop.f32.mrf.mxu0
      %v4380 = vadd.f32 %v4350, %v4379
      %v4381 = vpop.f32.mrf.mxu0
      %v4382 = vadd.f32 %v4350, %v4381
      %4383 = vmatmul.bf16.gmra.mxu0 %v4362
      %v4384 = vpop.f32.mrf.mxu0
      %v4385 = vadd.f32 %v4350, %v4384
      %v4386 = vpop.f32.mrf.mxu0
      %v4387 = vadd.f32 %v4350, %v4386
      %4388 = vmatmul.bf16.gmra.mxu0 %v4365
      %v4389 = vpop.f32.mrf.mxu0
      %v4390 = vadd.f32 %v4350, %v4389
      %v4391 = vpop.f32.mrf.mxu0
      %v4392 = vadd.f32 %v4350, %v4391
      %4393 = vmatmul.bf16.gmra.mxu0 %v4368
      %v4394 = vpop.f32.mrf.mxu0
      %v4395 = vadd.f32 %v4350, %v4394
      %v4396 = vpop.f32.mrf.mxu0
      %v4397 = vadd.f32 %v4350, %v4396
      %4398 = vdwg.mxu0
      %4399 = vst [vmem:[%s372] sm:$0xff] %v4380
      %4400 = vst [vmem:[%s372 + $0x8] sm:$0xff] %v4382
      %4401 = vst [vmem:[%s372 + $0x10] sm:$0xff] %v4385
      %4402 = vst [vmem:[%s372 + $0x18] sm:$0xff] %v4387
      %4403 = vst [vmem:[%s372 + $0x20] sm:$0xff] %v4390
      %4404 = vst [vmem:[%s372 + $0x28] sm:$0xff] %v4392
      %4405 = vst [vmem:[%s372 + $0x30] sm:$0xff] %v4395
      %4406 = vst [vmem:[%s372 + $0x38] sm:$0xff] %v4397
      %p4407 = scmp.lt.s32.totalorder %s22, 1
      %s4408 = scalar_select %p4407, %s22, 1
      %s4409 = smul.addr %s4408, 8
      %s4410 = smul.addr %s4409, 8
      %s4411 = scalar_lea.vmem %s9, %s4410
      %p4412 = scmp.lt.s32.totalorder %s22, 1
      %s4413 = scalar_select %p4412, %s22, 1
      %s4414 = smul.addr %s4413, 8
      %s4415 = smul.addr %s4414, 8
      %s4416 = scalar_lea.vmem %s10, %s4415
      // Predicated region
      $region57: #{_forward_device.5} parent=55 // pred_check
        %p4417 = pneg %p234
      $region58: #{_forward_device.5} parent=55 // pred_check_branch
        %4419 = sbr.rel (%p4417) target = $region60
      $region59: #{_forward_device.5} parent=55 // pred_region
        _
      $region60: #{_forward_device.5} parent=55 // pred_fallthru
        _
      // Predicated region
      $region61: #{_forward_device.5} parent=55 // pred_check
        %p4420 = pneg %p260
      $region62: #{_forward_device.5} parent=55 // pred_check_branch
        %4422 = sbr.rel (%p4420) target = $region64
      $region63: #{_forward_device.5} parent=55 // pred_region
        _
      $region64: #{_forward_device.5} parent=55 // pred_fallthru
        _
    $region56: #{_forward_device.5} parent=5 // pred_fallthru
      _
    %p4423 = scmp.le.s32.totalorder 2, %s17
    // Predicated region
    $region65: #{_forward_device.5} parent=5 // pred_check
      %p4424 = pneg %p4423
    $region66: #{_forward_device.5} parent=5 // pred_check_branch
      %4426 = sbr.rel (%p4424) target = $region68
    $region67: #{_forward_device.5} parent=5 // pred_region
      %s4427 = ssub.s32 %s17, 2
      // Predicated region
      $region69: #{_forward_device.5} parent=67 // pred_check
        %p4428 = pneg %p240
      $region70: #{_forward_device.5} parent=67 // pred_check_branch
        %4430 = sbr.rel (%p4428) target = $region72
      $region71: #{_forward_device.5} parent=67 // pred_region
        %p4431 = scmp.lt.s32.totalorder %s23, 1
        %s4432 = scalar_select %p4431, %s23, 1
        %s4433 = smul.addr %s4432, 8
        %s4434 = smul.addr %s4433, 8
        %s4435 = scalar_lea.vmem %s9, %s4434
      $region72: #{_forward_device.5} parent=67 // pred_fallthru
        _
      // Predicated region
      $region73: #{_forward_device.5} parent=67 // pred_check
        %p4436 = pneg %p266
      $region74: #{_forward_device.5} parent=67 // pred_check_branch
        %4438 = sbr.rel (%p4436) target = $region76
      $region75: #{_forward_device.5} parent=67 // pred_region
        %p4439 = scmp.lt.s32.totalorder %s23, 1
        %s4440 = scalar_select %p4439, %s23, 1
        %s4441 = smul.addr %s4440, 8
        %s4442 = smul.addr %s4441, 8
        %s4443 = scalar_lea.vmem %s10, %s4442
      $region76: #{_forward_device.5} parent=67 // pred_fallthru
        _
    $region68: #{_forward_device.5} parent=5 // pred_fallthru
      _
  $region6: #{_forward_device.5} parent=0 // loop_footer
    %s21 = sadd.s32 1, %s17
  $region7: #{_forward_device.5} parent=0 // loop_footer_branch
    %16 = sbr.rel target = $region3
  $region8: #{_forward_device.5} parent=0 // loop_exit
    _

// kernel: _forward_device.7
$region0: #{_forward_device.7}
  #allocation0 [shape = 'u32[]', space=smem, size = 0x4, offset = 0x4, fixed_abs, tag = 'smem constant byte address 0x4 - core index']
  #allocation1 [shape = 'u32[72,128]{1,0:T(1,128)}', space=vmem, size = 0x9000, scoped, tag = 'internal scratch']
  #allocation2 [shape = 'f32[128,128]{1,0:T(8,128)}', space=vmem, size = 0x10000, scoped, tag = 'scratch operand']
  %s0 = inlined_call_operand.vmem [shape: f32[2,128,4], index: 0, kind: input, shape index: {}]
  %s1 = inlined_call_operand.vmem [shape: f32[2,4,128], index: 1, kind: input, shape index: {}]
  %s2 = inlined_call_operand.vmem [shape: f32[2,1,128], index: 2, kind: input, shape index: {}]
  %s3 = inlined_call_operand.vmem [shape: f32[2,1,128], index: 3, kind: output, shape index: {}]
  %s4 = sld [smem:[#allocation0]]
  $region52: #{_forward_device.7} parent=0
    _
  %s6 = ssub.s32 1, %s4
  %s7 = scalar_select 0, %s6, %s4
  loop: start=0, step=1, limit=4
  $region2: #{_forward_device.7} parent=0 // loop_pre_header
    _
  $region3: #{_forward_device.7} parent=0 // loop_header
    %s9 = sphi 0, %s13
    %p10 = scmp.ge.s32.totalorder %s9, 4
    %s19 = sphi 0, %s21
    %s22 = sphi 0, %s19
    %s23 = sphi 0, %s22
    %s39 = sphi 0, %s23
    %s45 = sphi 0, %s47
    %s48 = sphi 0, %s45
    %s49 = sphi 0, %s48
    %s65 = sphi 0, %s49
    %s71 = sphi 0, %s73
    %s74 = sphi 0, %s71
    %s75 = sphi 0, %s74
    %s91 = sphi 0, %s75
    %s97 = sphi 0, %s99
    %s100 = sphi 0, %s97
    %s101 = sphi 0, %s100
    %s117 = sphi 0, %s101
  $region4: #{_forward_device.7} parent=0 // loop_header_branch
    %12 = sbr.rel (%p10) target = $region8
  $region5: #{_forward_device.7} parent=0 // loop_body
    %s14 = ssub.s32 %s9, 1
    %s15 = ssub.s32 %s9, 2
    %s16 = sadd.s32 %s9, 1
    %s17 = ssub.s32 %s9, %s16
    %p18 = scmp.eq.s32.totalorder %s17, 0
    %s20 = sadd.s32 %s19, 1
    %s21 = scalar_select %p18, %s19, %s20
    %p24 = pneg %p18
    %p25 = scmp.eq.s32.totalorder %s9, 1
    %p26 = por %p24, %p25
    %p27 = scmp.ne.s32.totalorder %s19, %s22
    %p28 = scmp.eq.s32.totalorder %s9, 0
    %p29 = por %p27, %p28
    %p30 = scmp.ne.s32.totalorder %s19, %s22
    %p31 = scmp.eq.s32.totalorder %s14, 1
    %p32 = por %p30, %p31
    %p33 = scmp.ne.s32.totalorder %s22, %s23
    %p34 = scmp.eq.s32.totalorder %s14, 0
    %p35 = por %p33, %p34
    %p36 = scmp.ne.s32.totalorder %s22, %s23
    %p37 = scmp.eq.s32.totalorder %s15, 1
    %p38 = por %p36, %p37
    %p40 = scmp.ne.s32.totalorder %s23, %s39
    %p41 = scmp.eq.s32.totalorder %s15, 0
    %p42 = por %p40, %p41
    %s43 = ssub.s32 %s9, %s16
    %p44 = scmp.eq.s32.totalorder %s43, 0
    %s46 = sadd.s32 %s45, 1
    %s47 = scalar_select %p44, %s45, %s46
    %p50 = pneg %p44
    %p51 = scmp.eq.s32.totalorder %s9, 1
    %p52 = por %p50, %p51
    %p53 = scmp.ne.s32.totalorder %s45, %s48
    %p54 = scmp.eq.s32.totalorder %s9, 0
    %p55 = por %p53, %p54
    %p56 = scmp.ne.s32.totalorder %s45, %s48
    %p57 = scmp.eq.s32.totalorder %s14, 1
    %p58 = por %p56, %p57
    %p59 = scmp.ne.s32.totalorder %s48, %s49
    %p60 = scmp.eq.s32.totalorder %s14, 0
    %p61 = por %p59, %p60
    %p62 = scmp.ne.s32.totalorder %s48, %s49
    %p63 = scmp.eq.s32.totalorder %s15, 1
    %p64 = por %p62, %p63
    %p66 = scmp.ne.s32.totalorder %s49, %s65
    %p67 = scmp.eq.s32.totalorder %s15, 0
    %p68 = por %p66, %p67
    %s69 = ssub.s32 %s9, %s16
    %p70 = scmp.eq.s32.totalorder %s69, 0
    %s72 = sadd.s32 %s71, 1
    %s73 = scalar_select %p70, %s71, %s72
    %p76 = pneg %p70
    %p77 = scmp.eq.s32.totalorder %s9, 1
    %p78 = por %p76, %p77
    %p79 = scmp.ne.s32.totalorder %s71, %s74
    %p80 = scmp.eq.s32.totalorder %s9, 0
    %p81 = por %p79, %p80
    %p82 = scmp.ne.s32.totalorder %s71, %s74
    %p83 = scmp.eq.s32.totalorder %s14, 1
    %p84 = por %p82, %p83
    %p85 = scmp.ne.s32.totalorder %s74, %s75
    %p86 = scmp.eq.s32.totalorder %s14, 0
    %p87 = por %p85, %p86
    %p88 = scmp.ne.s32.totalorder %s74, %s75
    %p89 = scmp.eq.s32.totalorder %s15, 1
    %p90 = por %p88, %p89
    %p92 = scmp.ne.s32.totalorder %s75, %s91
    %p93 = scmp.eq.s32.totalorder %s15, 0
    %p94 = por %p92, %p93
    %s95 = ssub.s32 %s9, %s16
    %p96 = scmp.eq.s32.totalorder %s95, 0
    %s98 = sadd.s32 %s97, 1
    %s99 = scalar_select %p96, %s97, %s98
    %p102 = pneg %p96
    %p103 = scmp.eq.s32.totalorder %s9, 1
    %p104 = por %p102, %p103
    %p105 = scmp.ne.s32.totalorder %s97, %s100
    %p106 = scmp.eq.s32.totalorder %s9, 0
    %p107 = por %p105, %p106
    %p108 = scmp.ne.s32.totalorder %s97, %s100
    %p109 = scmp.eq.s32.totalorder %s14, 1
    %p110 = por %p108, %p109
    %p111 = scmp.ne.s32.totalorder %s100, %s101
    %p112 = scmp.eq.s32.totalorder %s14, 0
    %p113 = por %p111, %p112
    %p114 = scmp.ne.s32.totalorder %s100, %s101
    %p115 = scmp.eq.s32.totalorder %s15, 1
    %p116 = por %p114, %p115
    %p118 = scmp.ne.s32.totalorder %s101, %s117
    %p119 = scmp.eq.s32.totalorder %s15, 0
    %p120 = por %p118, %p119
    %p121 = scmp.le.s32.totalorder 1, %s9
    %p122 = scmp.lt.s32.totalorder %s9, 3
    %p123 = pnand %p121, %p122
    %p124 = pneg %p123
    // Predicated region
    $region9: #{_forward_device.7} parent=5 // pred_check
      _
    $region10: #{_forward_device.7} parent=5 // pred_check_branch
      %126 = sbr.rel (%p123) target = $region12
    $region11: #{_forward_device.7} parent=5 // pred_region
      %s127 = ssub.s32 %s9, 1
    $region12: #{_forward_device.7} parent=5 // pred_fallthru
      _
    %p128 = scmp.lt.s32.totalorder %s9, 2
    // Predicated region
    $region13: #{_forward_device.7} parent=5 // pred_check
      %p129 = pneg %p128
    $region14: #{_forward_device.7} parent=5 // pred_check_branch
      %131 = sbr.rel (%p129) target = $region16
    $region15: #{_forward_device.7} parent=5 // pred_region
      // Predicated region
      $region17: #{_forward_device.7} parent=15 // pred_check
        %p132 = pneg %p29
      $region18: #{_forward_device.7} parent=15 // pred_check_branch
        %134 = sbr.rel (%p132) target = $region20
      $region19: #{_forward_device.7} parent=15 // pred_region
        %p135 = scmp.lt.s32.totalorder %s9, 1
        %s136 = scalar_select %p135, %s9, 1
        %s137 = smul.addr %s136, 16
        %s138 = smul.addr %s137, 8
        %s139 = scalar_lea.vmem %s0, %s138
      $region20: #{_forward_device.7} parent=15 // pred_fallthru
        _
      // Predicated region
      $region21: #{_forward_device.7} parent=15 // pred_check
        %p140 = pneg %p55
      $region22: #{_forward_device.7} parent=15 // pred_check_branch
        %142 = sbr.rel (%p140) target = $region24
      $region23: #{_forward_device.7} parent=15 // pred_region
        %p143 = scmp.lt.s32.totalorder %s9, 1
        %s144 = scalar_select %p143, %s9, 1
        %s145 = smul.addr %s144, 4
        %s146 = scalar_lea.vmem %s1, %s145
      $region24: #{_forward_device.7} parent=15 // pred_fallthru
        _
      // Predicated region
      $region25: #{_forward_device.7} parent=15 // pred_check
        %p147 = pneg %p81
      $region26: #{_forward_device.7} parent=15 // pred_check_branch
        %149 = sbr.rel (%p147) target = $region28
      $region27: #{_forward_device.7} parent=15 // pred_region
        %p150 = scmp.lt.s32.totalorder %s9, 1
        %s151 = scalar_select %p150, %s9, 1
        %s152 = scalar_lea.vmem %s2, %s151
      $region28: #{_forward_device.7} parent=15 // pred_fallthru
        _
    $region16: #{_forward_device.7} parent=5 // pred_fallthru
      _
    %p153 = scmp.le.s32.totalorder 1, %s9
    %p154 = scmp.lt.s32.totalorder %s9, 3
    %p155 = pnand %p153, %p154
    %p156 = pneg %p155
    // Predicated region
    $region29: #{_forward_device.7} parent=5 // pred_check
      _
    $region30: #{_forward_device.7} parent=5 // pred_check_branch
      %158 = sbr.rel (%p155) target = $region32
    $region31: #{_forward_device.7} parent=5 // pred_region
      %s159 = ssub.s32 %s9, 1
      %p160 = scmp.lt.s32.totalorder %s14, 1
      %s161 = scalar_select %p160, %s14, 1
      %s162 = smul.addr %s161, 16
      %s163 = smul.addr %s162, 8
      %s164 = scalar_lea.vmem %s0, %s163
      %p165 = pneg %p35
      %p166 = pneg %p32
      %p167 = scmp.lt.s32.totalorder %s14, 1
      %s168 = scalar_select %p167, %s14, 1
      %s169 = smul.addr %s168, 4
      %s170 = scalar_lea.vmem %s1, %s169
      %p171 = pneg %p61
      %p172 = pneg %p58
      %p173 = scmp.lt.s32.totalorder %s14, 1
      %s174 = scalar_select %p173, %s14, 1
      %s175 = scalar_lea.vmem %s2, %s174
      %p176 = pneg %p87
      %p177 = pneg %p84
      %p178 = pneg %p113
      %p179 = pneg %p110
      %p180 = scmp.lt.s32.totalorder %s14, 1
      %s181 = scalar_select %p180, %s14, 1
      %s182 = scalar_lea.vmem %s3, %s181
      %p183 = scmp.lt.s32.totalorder %s14, 1
      %s184 = scalar_select %p183, %s14, 1
      %s185 = smul.addr %s184, 16
      %s186 = smul.addr %s185, 8
      %s187 = scalar_lea.vmem %s0, %s186
      %p188 = scmp.lt.s32.totalorder %s14, 1
      %s189 = scalar_select %p188, %s14, 1
      %s190 = smul.addr %s189, 4
      %s191 = scalar_lea.vmem %s1, %s190
      %p192 = scmp.lt.s32.totalorder %s14, 1
      %s193 = scalar_select %p192, %s14, 1
      %s194 = scalar_lea.vmem %s2, %s193
      %p195 = scmp.lt.s32.totalorder %s14, 1
      %s196 = scalar_select %p195, %s14, 1
      %s197 = scalar_lea.vmem %s3, %s196
      %v198 = vld [vmem:[%s187] sm:$0xff]
      %v199 = vld [vmem:[%s187 + $0x8] sm:$0xff]
      %v200 = vld [vmem:[%s187 + $0x10] sm:$0xff]
      %v201 = vld [vmem:[%s187 + $0x18] sm:$0xff]
      %v202 = vld [vmem:[%s187 + $0x20] sm:$0xff]
      %v203 = vld [vmem:[%s187 + $0x28] sm:$0xff]
      %v204 = vld [vmem:[%s187 + $0x30] sm:$0xff]
      %v205 = vld [vmem:[%s187 + $0x38] sm:$0xff]
      %v206 = vld [vmem:[%s187 + $0x40] sm:$0xff]
      %v207 = vld [vmem:[%s187 + $0x48] sm:$0xff]
      %v208 = vld [vmem:[%s187 + $0x50] sm:$0xff]
      %v209 = vld [vmem:[%s187 + $0x58] sm:$0xff]
      %v210 = vld [vmem:[%s187 + $0x60] sm:$0xff]
      %v211 = vld [vmem:[%s187 + $0x68] sm:$0xff]
      %v212 = vld [vmem:[%s187 + $0x70] sm:$0xff]
      %v213 = vld [vmem:[%s187 + $0x78] sm:$0xff]
      %v214 = vld [vmem:[%s191] sm:$0xf]
      %231 = vrot.lane.b32.xlu0 %v198, 2
      %v232 = vpop.permute.xlu0 %231
      %233 = vrot.lane.b32.xlu0 %v199, 2
      %v234 = vpop.permute.xlu0 %233
      %235 = vrot.lane.b32.xlu0 %v200, 2
      %v236 = vpop.permute.xlu0 %235
      %237 = vrot.lane.b32.xlu0 %v201, 2
      %v238 = vpop.permute.xlu0 %237
      %239 = vrot.lane.b32.xlu0 %v202, 2
      %v240 = vpop.permute.xlu0 %239
      %241 = vrot.lane.b32.xlu0 %v203, 2
      %v242 = vpop.permute.xlu0 %241
      %243 = vrot.lane.b32.xlu0 %v204, 2
      %v244 = vpop.permute.xlu0 %243
      %245 = vrot.lane.b32.xlu0 %v205, 2
      %v246 = vpop.permute.xlu0 %245
      %247 = vrot.lane.b32.xlu0 %v206, 2
      %v248 = vpop.permute.xlu0 %247
      %249 = vrot.lane.b32.xlu0 %v207, 2
      %v250 = vpop.permute.xlu0 %249
      %251 = vrot.lane.b32.xlu0 %v208, 2
      %v252 = vpop.permute.xlu0 %251
      %253 = vrot.lane.b32.xlu0 %v209, 2
      %v254 = vpop.permute.xlu0 %253
      %255 = vrot.lane.b32.xlu0 %v210, 2
      %v256 = vpop.permute.xlu0 %255
      %257 = vrot.lane.b32.xlu0 %v211, 2
      %v258 = vpop.permute.xlu0 %257
      %259 = vrot.lane.b32.xlu0 %v212, 2
      %v260 = vpop.permute.xlu0 %259
      %261 = vrot.lane.b32.xlu0 %v213, 2
      %v262 = vpop.permute.xlu0 %261
      %v279 = vsub.f32 %v198, %v232
      %v280 = vsub.f32 %v199, %v234
      %v281 = vsub.f32 %v200, %v236
      %v282 = vsub.f32 %v201, %v238
      %v283 = vsub.f32 %v202, %v240
      %v284 = vsub.f32 %v203, %v242
      %v285 = vsub.f32 %v204, %v244
      %v286 = vsub.f32 %v205, %v246
      %v287 = vsub.f32 %v206, %v248
      %v288 = vsub.f32 %v207, %v250
      %v289 = vsub.f32 %v208, %v252
      %v290 = vsub.f32 %v209, %v254
      %v291 = vsub.f32 %v210, %v256
      %v292 = vsub.f32 %v211, %v258
      %v293 = vsub.f32 %v212, %v260
      %v294 = vsub.f32 %v213, %v262
      %311 = vrot.lane.b32.xlu0 %v279, 127
      %v312 = vpop.permute.xlu0 %311
      %313 = vrot.lane.b32.xlu0 %v280, 127
      %v314 = vpop.permute.xlu0 %313
      %315 = vrot.lane.b32.xlu0 %v281, 127
      %v316 = vpop.permute.xlu0 %315
      %317 = vrot.lane.b32.xlu0 %v282, 127
      %v318 = vpop.permute.xlu0 %317
      %319 = vrot.lane.b32.xlu0 %v283, 127
      %v320 = vpop.permute.xlu0 %319
      %321 = vrot.lane.b32.xlu0 %v284, 127
      %v322 = vpop.permute.xlu0 %321
      %323 = vrot.lane.b32.xlu0 %v285, 127
      %v324 = vpop.permute.xlu0 %323
      %325 = vrot.lane.b32.xlu0 %v286, 127
      %v326 = vpop.permute.xlu0 %325
      %327 = vrot.lane.b32.xlu0 %v287, 127
      %v328 = vpop.permute.xlu0 %327
      %329 = vrot.lane.b32.xlu0 %v288, 127
      %v330 = vpop.permute.xlu0 %329
      %331 = vrot.lane.b32.xlu0 %v289, 127
      %v332 = vpop.permute.xlu0 %331
      %333 = vrot.lane.b32.xlu0 %v290, 127
      %v334 = vpop.permute.xlu0 %333
      %335 = vrot.lane.b32.xlu0 %v291, 127
      %v336 = vpop.permute.xlu0 %335
      %337 = vrot.lane.b32.xlu0 %v292, 127
      %v338 = vpop.permute.xlu0 %337
      %339 = vrot.lane.b32.xlu0 %v293, 127
      %v340 = vpop.permute.xlu0 %339
      %341 = vrot.lane.b32.xlu0 %v294, 127
      %v342 = vpop.permute.xlu0 %341
      %v359 = vmul.f32 %v279, %v312
      %v360 = vmul.f32 %v280, %v314
      %v361 = vmul.f32 %v281, %v316
      %v362 = vmul.f32 %v282, %v318
      %v363 = vmul.f32 %v283, %v320
      %v364 = vmul.f32 %v284, %v322
      %v365 = vmul.f32 %v285, %v324
      %v366 = vmul.f32 %v286, %v326
      %v367 = vmul.f32 %v287, %v328
      %v368 = vmul.f32 %v288, %v330
      %v369 = vmul.f32 %v289, %v332
      %v370 = vmul.f32 %v290, %v334
      %v371 = vmul.f32 %v291, %v336
      %v372 = vmul.f32 %v292, %v338
      %v373 = vmul.f32 %v293, %v340
      %v374 = vmul.f32 %v294, %v342
      %v376 = vrot.slane %v214, 6
      %v378 = vsub.f32 %v214, %v376
      %v380 = vrot.slane %v378, 1
      %v382 = vmul.f32 %v378, %v380
      %383 = vset.pattern.permute.xlu0 2
      %384 = vperm.xlu0 %383, %v198
      %v385 = vpop.permute.xlu0 %384
      %387 = vset.pattern.permute.xlu0 2
      %388 = vperm.xlu0 %387, %v199
      %v389 = vpop.permute.xlu0 %388
      %391 = vset.pattern.permute.xlu0 2
      %392 = vperm.xlu0 %391, %v200
      %v393 = vpop.permute.xlu0 %392
      %395 = vset.pattern.permute.xlu0 2
      %396 = vperm.xlu0 %395, %v201
      %v397 = vpop.permute.xlu0 %396
      %399 = vset.pattern.permute.xlu0 2
      %400 = vperm.xlu0 %399, %v202
      %v401 = vpop.permute.xlu0 %400
      %403 = vset.pattern.permute.xlu0 2
      %404 = vperm.xlu0 %403, %v203
      %v405 = vpop.permute.xlu0 %404
      %407 = vset.pattern.permute.xlu0 2
      %408 = vperm.xlu0 %407, %v204
      %v409 = vpop.permute.xlu0 %408
      %411 = vset.pattern.permute.xlu0 2
      %412 = vperm.xlu0 %411, %v205
      %v413 = vpop.permute.xlu0 %412
      %415 = vset.pattern.permute.xlu0 2
      %416 = vperm.xlu0 %415, %v206
      %v417 = vpop.permute.xlu0 %416
      %419 = vset.pattern.permute.xlu0 2
      %420 = vperm.xlu0 %419, %v207
      %v421 = vpop.permute.xlu0 %420
      %423 = vset.pattern.permute.xlu0 2
      %424 = vperm.xlu0 %423, %v208
      %v425 = vpop.permute.xlu0 %424
      %427 = vset.pattern.permute.xlu0 2
      %428 = vperm.xlu0 %427, %v209
      %v429 = vpop.permute.xlu0 %428
      %431 = vset.pattern.permute.xlu0 2
      %432 = vperm.xlu0 %431, %v210
      %v433 = vpop.permute.xlu0 %432
      %435 = vset.pattern.permute.xlu0 2
      %436 = vperm.xlu0 %435, %v211
      %v437 = vpop.permute.xlu0 %436
      %439 = vset.pattern.permute.xlu0 2
      %440 = vperm.xlu0 %439, %v212
      %v441 = vpop.permute.xlu0 %440
      %443 = vset.pattern.permute.xlu0 2
      %444 = vperm.xlu0 %443, %v213
      %v445 = vpop.permute.xlu0 %444
      %v447 = vperm.slane %v214, 2
      %v448 = vmin.f32 %v385, %v447
      %v449 = vmin.f32 %v389, %v447
      %v450 = vmin.f32 %v393, %v447
      %v451 = vmin.f32 %v397, %v447
      %v452 = vmin.f32 %v401, %v447
      %v453 = vmin.f32 %v405, %v447
      %v454 = vmin.f32 %v409, %v447
      %v455 = vmin.f32 %v413, %v447
      %v456 = vmin.f32 %v417, %v447
      %v457 = vmin.f32 %v421, %v447
      %v458 = vmin.f32 %v425, %v447
      %v459 = vmin.f32 %v429, %v447
      %v460 = vmin.f32 %v433, %v447
      %v461 = vmin.f32 %v437, %v447
      %v462 = vmin.f32 %v441, %v447
      %v463 = vmin.f32 %v445, %v447
      %464 = vset.pattern.permute.xlu0 0
      %465 = vperm.xlu0 %464, %v198
      %v466 = vpop.permute.xlu0 %465
      %468 = vset.pattern.permute.xlu0 0
      %469 = vperm.xlu0 %468, %v199
      %v470 = vpop.permute.xlu0 %469
      %472 = vset.pattern.permute.xlu0 0
      %473 = vperm.xlu0 %472, %v200
      %v474 = vpop.permute.xlu0 %473
      %476 = vset.pattern.permute.xlu0 0
      %477 = vperm.xlu0 %476, %v201
      %v478 = vpop.permute.xlu0 %477
      %480 = vset.pattern.permute.xlu0 0
      %481 = vperm.xlu0 %480, %v202
      %v482 = vpop.permute.xlu0 %481
      %484 = vset.pattern.permute.xlu0 0
      %485 = vperm.xlu0 %484, %v203
      %v486 = vpop.permute.xlu0 %485
      %488 = vset.pattern.permute.xlu0 0
      %489 = vperm.xlu0 %488, %v204
      %v490 = vpop.permute.xlu0 %489
      %492 = vset.pattern.permute.xlu0 0
      %493 = vperm.xlu0 %492, %v205
      %v494 = vpop.permute.xlu0 %493
      %496 = vset.pattern.permute.xlu0 0
      %497 = vperm.xlu0 %496, %v206
      %v498 = vpop.permute.xlu0 %497
      %500 = vset.pattern.permute.xlu0 0
      %501 = vperm.xlu0 %500, %v207
      %v502 = vpop.permute.xlu0 %501
      %504 = vset.pattern.permute.xlu0 0
      %505 = vperm.xlu0 %504, %v208
      %v506 = vpop.permute.xlu0 %505
      %508 = vset.pattern.permute.xlu0 0
      %509 = vperm.xlu0 %508, %v209
      %v510 = vpop.permute.xlu0 %509
      %512 = vset.pattern.permute.xlu0 0
      %513 = vperm.xlu0 %512, %v210
      %v514 = vpop.permute.xlu0 %513
      %516 = vset.pattern.permute.xlu0 0
      %517 = vperm.xlu0 %516, %v211
      %v518 = vpop.permute.xlu0 %517
      %520 = vset.pattern.permute.xlu0 0
      %521 = vperm.xlu0 %520, %v212
      %v522 = vpop.permute.xlu0 %521
      %524 = vset.pattern.permute.xlu0 0
      %525 = vperm.xlu0 %524, %v213
      %v526 = vpop.permute.xlu0 %525
      %v528 = vperm.slane %v214, 0
      %v529 = vmax.f32 %v466, %v528
      %v530 = vmax.f32 %v470, %v528
      %v531 = vmax.f32 %v474, %v528
      %v532 = vmax.f32 %v478, %v528
      %v533 = vmax.f32 %v482, %v528
      %v534 = vmax.f32 %v486, %v528
      %v535 = vmax.f32 %v490, %v528
      %v536 = vmax.f32 %v494, %v528
      %v537 = vmax.f32 %v498, %v528
      %v538 = vmax.f32 %v502, %v528
      %v539 = vmax.f32 %v506, %v528
      %v540 = vmax.f32 %v510, %v528
      %v541 = vmax.f32 %v514, %v528
      %v542 = vmax.f32 %v518, %v528
      %v543 = vmax.f32 %v522, %v528
      %v544 = vmax.f32 %v526, %v528
      %v545 = vsub.f32 %v448, %v529
      %v546 = vsub.f32 %v449, %v530
      %v547 = vsub.f32 %v450, %v531
      %v548 = vsub.f32 %v451, %v532
      %v549 = vsub.f32 %v452, %v533
      %v550 = vsub.f32 %v453, %v534
      %v551 = vsub.f32 %v454, %v535
      %v552 = vsub.f32 %v455, %v536
      %v553 = vsub.f32 %v456, %v537
      %v554 = vsub.f32 %v457, %v538
      %v555 = vsub.f32 %v458, %v539
      %v556 = vsub.f32 %v459, %v540
      %v557 = vsub.f32 %v460, %v541
      %v558 = vsub.f32 %v461, %v542
      %v559 = vsub.f32 %v462, %v543
      %v560 = vsub.f32 %v463, %v544
      %v561 = vmax.f32 %v545, 0.0
      %v562 = vmax.f32 %v546, 0.0
      %v563 = vmax.f32 %v547, 0.0
      %v564 = vmax.f32 %v548, 0.0
      %v565 = vmax.f32 %v549, 0.0
      %v566 = vmax.f32 %v550, 0.0
      %v567 = vmax.f32 %v551, 0.0
      %v568 = vmax.f32 %v552, 0.0
      %v569 = vmax.f32 %v553, 0.0
      %v570 = vmax.f32 %v554, 0.0
      %v571 = vmax.f32 %v555, 0.0
      %v572 = vmax.f32 %v556, 0.0
      %v573 = vmax.f32 %v557, 0.0
      %v574 = vmax.f32 %v558, 0.0
      %v575 = vmax.f32 %v559, 0.0
      %v576 = vmax.f32 %v560, 0.0
      %577 = vset.pattern.permute.xlu0 3
      %578 = vperm.xlu0 %577, %v198
      %v579 = vpop.permute.xlu0 %578
      %581 = vset.pattern.permute.xlu0 3
      %582 = vperm.xlu0 %581, %v199
      %v583 = vpop.permute.xlu0 %582
      %585 = vset.pattern.permute.xlu0 3
      %586 = vperm.xlu0 %585, %v200
      %v587 = vpop.permute.xlu0 %586
      %589 = vset.pattern.permute.xlu0 3
      %590 = vperm.xlu0 %589, %v201
      %v591 = vpop.permute.xlu0 %590
      %593 = vset.pattern.permute.xlu0 3
      %594 = vperm.xlu0 %593, %v202
      %v595 = vpop.permute.xlu0 %594
      %597 = vset.pattern.permute.xlu0 3
      %598 = vperm.xlu0 %597, %v203
      %v599 = vpop.permute.xlu0 %598
      %601 = vset.pattern.permute.xlu0 3
      %602 = vperm.xlu0 %601, %v204
      %v603 = vpop.permute.xlu0 %602
      %605 = vset.pattern.permute.xlu0 3
      %606 = vperm.xlu0 %605, %v205
      %v607 = vpop.permute.xlu0 %606
      %609 = vset.pattern.permute.xlu0 3
      %610 = vperm.xlu0 %609, %v206
      %v611 = vpop.permute.xlu0 %610
      %613 = vset.pattern.permute.xlu0 3
      %614 = vperm.xlu0 %613, %v207
      %v615 = vpop.permute.xlu0 %614
      %617 = vset.pattern.permute.xlu0 3
      %618 = vperm.xlu0 %617, %v208
      %v619 = vpop.permute.xlu0 %618
      %621 = vset.pattern.permute.xlu0 3
      %622 = vperm.xlu0 %621, %v209
      %v623 = vpop.permute.xlu0 %622
      %625 = vset.pattern.permute.xlu0 3
      %626 = vperm.xlu0 %625, %v210
      %v627 = vpop.permute.xlu0 %626
      %629 = vset.pattern.permute.xlu0 3
      %630 = vperm.xlu0 %629, %v211
      %v631 = vpop.permute.xlu0 %630
      %633 = vset.pattern.permute.xlu0 3
      %634 = vperm.xlu0 %633, %v212
      %v635 = vpop.permute.xlu0 %634
      %637 = vset.pattern.permute.xlu0 3
      %638 = vperm.xlu0 %637, %v213
      %v639 = vpop.permute.xlu0 %638
      %v641 = vperm.slane %v214, 3
      %v642 = vmin.f32 %v579, %v641
      %v643 = vmin.f32 %v583, %v641
      %v644 = vmin.f32 %v587, %v641
      %v645 = vmin.f32 %v591, %v641
      %v646 = vmin.f32 %v595, %v641
      %v647 = vmin.f32 %v599, %v641
      %v648 = vmin.f32 %v603, %v641
      %v649 = vmin.f32 %v607, %v641
      %v650 = vmin.f32 %v611, %v641
      %v651 = vmin.f32 %v615, %v641
      %v652 = vmin.f32 %v619, %v641
      %v653 = vmin.f32 %v623, %v641
      %v654 = vmin.f32 %v627, %v641
      %v655 = vmin.f32 %v631, %v641
      %v656 = vmin.f32 %v635, %v641
      %v657 = vmin.f32 %v639, %v641
      %658 = vset.pattern.permute.xlu0 1
      %659 = vperm.xlu0 %658, %v198
      %v660 = vpop.permute.xlu0 %659
      %662 = vset.pattern.permute.xlu0 1
      %663 = vperm.xlu0 %662, %v199
      %v664 = vpop.permute.xlu0 %663
      %666 = vset.pattern.permute.xlu0 1
      %667 = vperm.xlu0 %666, %v200
      %v668 = vpop.permute.xlu0 %667
      %670 = vset.pattern.permute.xlu0 1
      %671 = vperm.xlu0 %670, %v201
      %v672 = vpop.permute.xlu0 %671
      %674 = vset.pattern.permute.xlu0 1
      %675 = vperm.xlu0 %674, %v202
      %v676 = vpop.permute.xlu0 %675
      %678 = vset.pattern.permute.xlu0 1
      %679 = vperm.xlu0 %678, %v203
      %v680 = vpop.permute.xlu0 %679
      %682 = vset.pattern.permute.xlu0 1
      %683 = vperm.xlu0 %682, %v204
      %v684 = vpop.permute.xlu0 %683
      %686 = vset.pattern.permute.xlu0 1
      %687 = vperm.xlu0 %686, %v205
      %v688 = vpop.permute.xlu0 %687
      %690 = vset.pattern.permute.xlu0 1
      %691 = vperm.xlu0 %690, %v206
      %v692 = vpop.permute.xlu0 %691
      %694 = vset.pattern.permute.xlu0 1
      %695 = vperm.xlu0 %694, %v207
      %v696 = vpop.permute.xlu0 %695
      %698 = vset.pattern.permute.xlu0 1
      %699 = vperm.xlu0 %698, %v208
      %v700 = vpop.permute.xlu0 %699
      %702 = vset.pattern.permute.xlu0 1
      %703 = vperm.xlu0 %702, %v209
      %v704 = vpop.permute.xlu0 %703
      %706 = vset.pattern.permute.xlu0 1
      %707 = vperm.xlu0 %706, %v210
      %v708 = vpop.permute.xlu0 %707
      %710 = vset.pattern.permute.xlu0 1
      %711 = vperm.xlu0 %710, %v211
      %v712 = vpop.permute.xlu0 %711
      %714 = vset.pattern.permute.xlu0 1
      %715 = vperm.xlu0 %714, %v212
      %v716 = vpop.permute.xlu0 %715
      %718 = vset.pattern.permute.xlu0 1
      %719 = vperm.xlu0 %718, %v213
      %v720 = vpop.permute.xlu0 %719
      %v722 = vperm.slane %v214, 1
      %v723 = vmax.f32 %v660, %v722
      %v724 = vmax.f32 %v664, %v722
      %v725 = vmax.f32 %v668, %v722
      %v726 = vmax.f32 %v672, %v722
      %v727 = vmax.f32 %v676, %v722
      %v728 = vmax.f32 %v680, %v722
      %v729 = vmax.f32 %v684, %v722
      %v730 = vmax.f32 %v688, %v722
      %v731 = vmax.f32 %v692, %v722
      %v732 = vmax.f32 %v696, %v722
      %v733 = vmax.f32 %v700, %v722
      %v734 = vmax.f32 %v704, %v722
      %v735 = vmax.f32 %v708, %v722
      %v736 = vmax.f32 %v712, %v722
      %v737 = vmax.f32 %v716, %v722
      %v738 = vmax.f32 %v720, %v722
      %v739 = vsub.f32 %v642, %v723
      %v740 = vsub.f32 %v643, %v724
      %v741 = vsub.f32 %v644, %v725
      %v742 = vsub.f32 %v645, %v726
      %v743 = vsub.f32 %v646, %v727
      %v744 = vsub.f32 %v647, %v728
      %v745 = vsub.f32 %v648, %v729
      %v746 = vsub.f32 %v649, %v730
      %v747 = vsub.f32 %v650, %v731
      %v748 = vsub.f32 %v651, %v732
      %v749 = vsub.f32 %v652, %v733
      %v750 = vsub.f32 %v653, %v734
      %v751 = vsub.f32 %v654, %v735
      %v752 = vsub.f32 %v655, %v736
      %v753 = vsub.f32 %v656, %v737
      %v754 = vsub.f32 %v657, %v738
      %v755 = vmax.f32 %v739, 0.0
      %v756 = vmax.f32 %v740, 0.0
      %v757 = vmax.f32 %v741, 0.0
      %v758 = vmax.f32 %v742, 0.0
      %v759 = vmax.f32 %v743, 0.0
      %v760 = vmax.f32 %v744, 0.0
      %v761 = vmax.f32 %v745, 0.0
      %v762 = vmax.f32 %v746, 0.0
      %v763 = vmax.f32 %v747, 0.0
      %v764 = vmax.f32 %v748, 0.0
      %v765 = vmax.f32 %v749, 0.0
      %v766 = vmax.f32 %v750, 0.0
      %v767 = vmax.f32 %v751, 0.0
      %v768 = vmax.f32 %v752, 0.0
      %v769 = vmax.f32 %v753, 0.0
      %v770 = vmax.f32 %v754, 0.0
      %v771 = vmul.f32 %v561, %v755
      %v772 = vmul.f32 %v562, %v756
      %v773 = vmul.f32 %v563, %v757
      %v774 = vmul.f32 %v564, %v758
      %v775 = vmul.f32 %v565, %v759
      %v776 = vmul.f32 %v566, %v760
      %v777 = vmul.f32 %v567, %v761
      %v778 = vmul.f32 %v568, %v762
      %v779 = vmul.f32 %v569, %v763
      %v780 = vmul.f32 %v570, %v764
      %v781 = vmul.f32 %v571, %v765
      %v782 = vmul.f32 %v572, %v766
      %v783 = vmul.f32 %v573, %v767
      %v784 = vmul.f32 %v574, %v768
      %v785 = vmul.f32 %v575, %v769
      %v786 = vmul.f32 %v576, %v770
      %788 = vset.pattern.permute.xlu0 2
      %789 = vperm.xlu0 %788, %v359
      %v790 = vpop.permute.xlu0 %789
      %793 = vset.pattern.permute.xlu0 2
      %794 = vperm.xlu0 %793, %v360
      %v795 = vpop.permute.xlu0 %794
      %798 = vset.pattern.permute.xlu0 2
      %799 = vperm.xlu0 %798, %v361
      %v800 = vpop.permute.xlu0 %799
      %803 = vset.pattern.permute.xlu0 2
      %804 = vperm.xlu0 %803, %v362
      %v805 = vpop.permute.xlu0 %804
      %808 = vset.pattern.permute.xlu0 2
      %809 = vperm.xlu0 %808, %v363
      %v810 = vpop.permute.xlu0 %809
      %813 = vset.pattern.permute.xlu0 2
      %814 = vperm.xlu0 %813, %v364
      %v815 = vpop.permute.xlu0 %814
      %818 = vset.pattern.permute.xlu0 2
      %819 = vperm.xlu0 %818, %v365
      %v820 = vpop.permute.xlu0 %819
      %823 = vset.pattern.permute.xlu0 2
      %824 = vperm.xlu0 %823, %v366
      %v825 = vpop.permute.xlu0 %824
      %828 = vset.pattern.permute.xlu0 2
      %829 = vperm.xlu0 %828, %v367
      %v830 = vpop.permute.xlu0 %829
      %833 = vset.pattern.permute.xlu0 2
      %834 = vperm.xlu0 %833, %v368
      %v835 = vpop.permute.xlu0 %834
      %838 = vset.pattern.permute.xlu0 2
      %839 = vperm.xlu0 %838, %v369
      %v840 = vpop.permute.xlu0 %839
      %843 = vset.pattern.permute.xlu0 2
      %844 = vperm.xlu0 %843, %v370
      %v845 = vpop.permute.xlu0 %844
      %848 = vset.pattern.permute.xlu0 2
      %849 = vperm.xlu0 %848, %v371
      %v850 = vpop.permute.xlu0 %849
      %853 = vset.pattern.permute.xlu0 2
      %854 = vperm.xlu0 %853, %v372
      %v855 = vpop.permute.xlu0 %854
      %858 = vset.pattern.permute.xlu0 2
      %859 = vperm.xlu0 %858, %v373
      %v860 = vpop.permute.xlu0 %859
      %863 = vset.pattern.permute.xlu0 2
      %864 = vperm.xlu0 %863, %v374
      %v865 = vpop.permute.xlu0 %864
      %v867 = vperm.slane %v382, 2
      %v868 = vadd.f32 %v790, %v867
      %v869 = vadd.f32 %v795, %v867
      %v870 = vadd.f32 %v800, %v867
      %v871 = vadd.f32 %v805, %v867
      %v872 = vadd.f32 %v810, %v867
      %v873 = vadd.f32 %v815, %v867
      %v874 = vadd.f32 %v820, %v867
      %v875 = vadd.f32 %v825, %v867
      %v876 = vadd.f32 %v830, %v867
      %v877 = vadd.f32 %v835, %v867
      %v878 = vadd.f32 %v840, %v867
      %v879 = vadd.f32 %v845, %v867
      %v880 = vadd.f32 %v850, %v867
      %v881 = vadd.f32 %v855, %v867
      %v882 = vadd.f32 %v860, %v867
      %v883 = vadd.f32 %v865, %v867
      %v884 = vsub.f32 %v868, %v771
      %v885 = vsub.f32 %v869, %v772
      %v886 = vsub.f32 %v870, %v773
      %v887 = vsub.f32 %v871, %v774
      %v888 = vsub.f32 %v872, %v775
      %v889 = vsub.f32 %v873, %v776
      %v890 = vsub.f32 %v874, %v777
      %v891 = vsub.f32 %v875, %v778
      %v892 = vsub.f32 %v876, %v779
      %v893 = vsub.f32 %v877, %v780
      %v894 = vsub.f32 %v878, %v781
      %v895 = vsub.f32 %v879, %v782
      %v896 = vsub.f32 %v880, %v783
      %v897 = vsub.f32 %v881, %v784
      %v898 = vsub.f32 %v882, %v785
      %v899 = vsub.f32 %v883, %v786
      %v900 = vmax.f32 %v884, 1e-09
      %v901 = vmax.f32 %v885, 1e-09
      %v902 = vmax.f32 %v886, 1e-09
      %v903 = vmax.f32 %v887, 1e-09
      %v904 = vmax.f32 %v888, 1e-09
      %v905 = vmax.f32 %v889, 1e-09
      %v906 = vmax.f32 %v890, 1e-09
      %v907 = vmax.f32 %v891, 1e-09
      %v908 = vmax.f32 %v892, 1e-09
      %v909 = vmax.f32 %v893, 1e-09
      %v910 = vmax.f32 %v894, 1e-09
      %v911 = vmax.f32 %v895, 1e-09
      %v912 = vmax.f32 %v896, 1e-09
      %v913 = vmax.f32 %v897, 1e-09
      %v914 = vmax.f32 %v898, 1e-09
      %v915 = vmax.f32 %v899, 1e-09
      %v916 = vrcp.pop %v900
      %v917 = vmul.f32 %v900, %v916
      %v918 = vsub.f32 1.0, %v917
      %v919 = vmul.f32 %v916, %v918
      %v920 = vadd.f32 %v916, %v919
      %vm921 = vweird.f32 %v900
      %vm922 = vweird.f32 %v916
      %vm923 = vmor %vm921, %vm922
      %v924 = vsel %vm923, %v916, %v920
      %v925 = vand.u32 2147483647, %v900
      %vm926 = vcmp.eq.f32.partialorder %v925, 8.507059e+37
      %v927 = vand.u32 %v900, 2147483648
      %v928 = vor.u32 1.1754944e-38, %v927
      %v929 = vsel %vm926, %v928, %v924
      %v930 = vmul.f32 %v771, %v929
      %v931 = vrcp.pop %v901
      %v932 = vmul.f32 %v901, %v931
      %v933 = vsub.f32 1.0, %v932
      %v934 = vmul.f32 %v931, %v933
      %v935 = vadd.f32 %v931, %v934
      %vm936 = vweird.f32 %v901
      %vm937 = vweird.f32 %v931
      %vm938 = vmor %vm936, %vm937
      %v939 = vsel %vm938, %v931, %v935
      %v940 = vand.u32 2147483647, %v901
      %vm941 = vcmp.eq.f32.partialorder %v940, 8.507059e+37
      %v942 = vand.u32 %v901, 2147483648
      %v943 = vor.u32 1.1754944e-38, %v942
      %v944 = vsel %vm941, %v943, %v939
      %v945 = vmul.f32 %v772, %v944
      %v946 = vrcp.pop %v902
      %v947 = vmul.f32 %v902, %v946
      %v948 = vsub.f32 1.0, %v947
      %v949 = vmul.f32 %v946, %v948
      %v950 = vadd.f32 %v946, %v949
      %vm951 = vweird.f32 %v902
      %vm952 = vweird.f32 %v946
      %vm953 = vmor %vm951, %vm952
      %v954 = vsel %vm953, %v946, %v950
      %v955 = vand.u32 2147483647, %v902
      %vm956 = vcmp.eq.f32.partialorder %v955, 8.507059e+37
      %v957 = vand.u32 %v902, 2147483648
      %v958 = vor.u32 1.1754944e-38, %v957
      %v959 = vsel %vm956, %v958, %v954
      %v960 = vmul.f32 %v773, %v959
      %v961 = vrcp.pop %v903
      %v962 = vmul.f32 %v903, %v961
      %v963 = vsub.f32 1.0, %v962
      %v964 = vmul.f32 %v961, %v963
      %v965 = vadd.f32 %v961, %v964
      %vm966 = vweird.f32 %v903
      %vm967 = vweird.f32 %v961
      %vm968 = vmor %vm966, %vm967
      %v969 = vsel %vm968, %v961, %v965
      %v970 = vand.u32 2147483647, %v903
      %vm971 = vcmp.eq.f32.partialorder %v970, 8.507059e+37
      %v972 = vand.u32 %v903, 2147483648
      %v973 = vor.u32 1.1754944e-38, %v972
      %v974 = vsel %vm971, %v973, %v969
      %v975 = vmul.f32 %v774, %v974
      %v976 = vrcp.pop %v904
      %v977 = vmul.f32 %v904, %v976
      %v978 = vsub.f32 1.0, %v977
      %v979 = vmul.f32 %v976, %v978
      %v980 = vadd.f32 %v976, %v979
      %vm981 = vweird.f32 %v904
      %vm982 = vweird.f32 %v976
      %vm983 = vmor %vm981, %vm982
      %v984 = vsel %vm983, %v976, %v980
      %v985 = vand.u32 2147483647, %v904
      %vm986 = vcmp.eq.f32.partialorder %v985, 8.507059e+37
      %v987 = vand.u32 %v904, 2147483648
      %v988 = vor.u32 1.1754944e-38, %v987
      %v989 = vsel %vm986, %v988, %v984
      %v990 = vmul.f32 %v775, %v989
      %v991 = vrcp.pop %v905
      %v992 = vmul.f32 %v905, %v991
      %v993 = vsub.f32 1.0, %v992
      %v994 = vmul.f32 %v991, %v993
      %v995 = vadd.f32 %v991, %v994
      %vm996 = vweird.f32 %v905
      %vm997 = vweird.f32 %v991
      %vm998 = vmor %vm996, %vm997
      %v999 = vsel %vm998, %v991, %v995
      %v1000 = vand.u32 2147483647, %v905
      %vm1001 = vcmp.eq.f32.partialorder %v1000, 8.507059e+37
      %v1002 = vand.u32 %v905, 2147483648
      %v1003 = vor.u32 1.1754944e-38, %v1002
      %v1004 = vsel %vm1001, %v1003, %v999
      %v1005 = vmul.f32 %v776, %v1004
      %v1006 = vrcp.pop %v906
      %v1007 = vmul.f32 %v906, %v1006
      %v1008 = vsub.f32 1.0, %v1007
      %v1009 = vmul.f32 %v1006, %v1008
      %v1010 = vadd.f32 %v1006, %v1009
      %vm1011 = vweird.f32 %v906
      %vm1012 = vweird.f32 %v1006
      %vm1013 = vmor %vm1011, %vm1012
      %v1014 = vsel %vm1013, %v1006, %v1010
      %v1015 = vand.u32 2147483647, %v906
      %vm1016 = vcmp.eq.f32.partialorder %v1015, 8.507059e+37
      %v1017 = vand.u32 %v906, 2147483648
      %v1018 = vor.u32 1.1754944e-38, %v1017
      %v1019 = vsel %vm1016, %v1018, %v1014
      %v1020 = vmul.f32 %v777, %v1019
      %v1021 = vrcp.pop %v907
      %v1022 = vmul.f32 %v907, %v1021
      %v1023 = vsub.f32 1.0, %v1022
      %v1024 = vmul.f32 %v1021, %v1023
      %v1025 = vadd.f32 %v1021, %v1024
      %vm1026 = vweird.f32 %v907
      %vm1027 = vweird.f32 %v1021
      %vm1028 = vmor %vm1026, %vm1027
      %v1029 = vsel %vm1028, %v1021, %v1025
      %v1030 = vand.u32 2147483647, %v907
      %vm1031 = vcmp.eq.f32.partialorder %v1030, 8.507059e+37
      %v1032 = vand.u32 %v907, 2147483648
      %v1033 = vor.u32 1.1754944e-38, %v1032
      %v1034 = vsel %vm1031, %v1033, %v1029
      %v1035 = vmul.f32 %v778, %v1034
      %v1036 = vrcp.pop %v908
      %v1037 = vmul.f32 %v908, %v1036
      %v1038 = vsub.f32 1.0, %v1037
      %v1039 = vmul.f32 %v1036, %v1038
      %v1040 = vadd.f32 %v1036, %v1039
      %vm1041 = vweird.f32 %v908
      %vm1042 = vweird.f32 %v1036
      %vm1043 = vmor %vm1041, %vm1042
      %v1044 = vsel %vm1043, %v1036, %v1040
      %v1045 = vand.u32 2147483647, %v908
      %vm1046 = vcmp.eq.f32.partialorder %v1045, 8.507059e+37
      %v1047 = vand.u32 %v908, 2147483648
      %v1048 = vor.u32 1.1754944e-38, %v1047
      %v1049 = vsel %vm1046, %v1048, %v1044
      %v1050 = vmul.f32 %v779, %v1049
      %v1051 = vrcp.pop %v909
      %v1052 = vmul.f32 %v909, %v1051
      %v1053 = vsub.f32 1.0, %v1052
      %v1054 = vmul.f32 %v1051, %v1053
      %v1055 = vadd.f32 %v1051, %v1054
      %vm1056 = vweird.f32 %v909
      %vm1057 = vweird.f32 %v1051
      %vm1058 = vmor %vm1056, %vm1057
      %v1059 = vsel %vm1058, %v1051, %v1055
      %v1060 = vand.u32 2147483647, %v909
      %vm1061 = vcmp.eq.f32.partialorder %v1060, 8.507059e+37
      %v1062 = vand.u32 %v909, 2147483648
      %v1063 = vor.u32 1.1754944e-38, %v1062
      %v1064 = vsel %vm1061, %v1063, %v1059
      %v1065 = vmul.f32 %v780, %v1064
      %v1066 = vrcp.pop %v910
      %v1067 = vmul.f32 %v910, %v1066
      %v1068 = vsub.f32 1.0, %v1067
      %v1069 = vmul.f32 %v1066, %v1068
      %v1070 = vadd.f32 %v1066, %v1069
      %vm1071 = vweird.f32 %v910
      %vm1072 = vweird.f32 %v1066
      %vm1073 = vmor %vm1071, %vm1072
      %v1074 = vsel %vm1073, %v1066, %v1070
      %v1075 = vand.u32 2147483647, %v910
      %vm1076 = vcmp.eq.f32.partialorder %v1075, 8.507059e+37
      %v1077 = vand.u32 %v910, 2147483648
      %v1078 = vor.u32 1.1754944e-38, %v1077
      %v1079 = vsel %vm1076, %v1078, %v1074
      %v1080 = vmul.f32 %v781, %v1079
      %v1081 = vrcp.pop %v911
      %v1082 = vmul.f32 %v911, %v1081
      %v1083 = vsub.f32 1.0, %v1082
      %v1084 = vmul.f32 %v1081, %v1083
      %v1085 = vadd.f32 %v1081, %v1084
      %vm1086 = vweird.f32 %v911
      %vm1087 = vweird.f32 %v1081
      %vm1088 = vmor %vm1086, %vm1087
      %v1089 = vsel %vm1088, %v1081, %v1085
      %v1090 = vand.u32 2147483647, %v911
      %vm1091 = vcmp.eq.f32.partialorder %v1090, 8.507059e+37
      %v1092 = vand.u32 %v911, 2147483648
      %v1093 = vor.u32 1.1754944e-38, %v1092
      %v1094 = vsel %vm1091, %v1093, %v1089
      %v1095 = vmul.f32 %v782, %v1094
      %v1096 = vrcp.pop %v912
      %v1097 = vmul.f32 %v912, %v1096
      %v1098 = vsub.f32 1.0, %v1097
      %v1099 = vmul.f32 %v1096, %v1098
      %v1100 = vadd.f32 %v1096, %v1099
      %vm1101 = vweird.f32 %v912
      %vm1102 = vweird.f32 %v1096
      %vm1103 = vmor %vm1101, %vm1102
      %v1104 = vsel %vm1103, %v1096, %v1100
      %v1105 = vand.u32 2147483647, %v912
      %vm1106 = vcmp.eq.f32.partialorder %v1105, 8.507059e+37
      %v1107 = vand.u32 %v912, 2147483648
      %v1108 = vor.u32 1.1754944e-38, %v1107
      %v1109 = vsel %vm1106, %v1108, %v1104
      %v1110 = vmul.f32 %v783, %v1109
      %v1111 = vrcp.pop %v913
      %v1112 = vmul.f32 %v913, %v1111
      %v1113 = vsub.f32 1.0, %v1112
      %v1114 = vmul.f32 %v1111, %v1113
      %v1115 = vadd.f32 %v1111, %v1114
      %vm1116 = vweird.f32 %v913
      %vm1117 = vweird.f32 %v1111
      %vm1118 = vmor %vm1116, %vm1117
      %v1119 = vsel %vm1118, %v1111, %v1115
      %v1120 = vand.u32 2147483647, %v913
      %vm1121 = vcmp.eq.f32.partialorder %v1120, 8.507059e+37
      %v1122 = vand.u32 %v913, 2147483648
      %v1123 = vor.u32 1.1754944e-38, %v1122
      %v1124 = vsel %vm1121, %v1123, %v1119
      %v1125 = vmul.f32 %v784, %v1124
      %v1126 = vrcp.pop %v914
      %v1127 = vmul.f32 %v914, %v1126
      %v1128 = vsub.f32 1.0, %v1127
      %v1129 = vmul.f32 %v1126, %v1128
      %v1130 = vadd.f32 %v1126, %v1129
      %vm1131 = vweird.f32 %v914
      %vm1132 = vweird.f32 %v1126
      %vm1133 = vmor %vm1131, %vm1132
      %v1134 = vsel %vm1133, %v1126, %v1130
      %v1135 = vand.u32 2147483647, %v914
      %vm1136 = vcmp.eq.f32.partialorder %v1135, 8.507059e+37
      %v1137 = vand.u32 %v914, 2147483648
      %v1138 = vor.u32 1.1754944e-38, %v1137
      %v1139 = vsel %vm1136, %v1138, %v1134
      %v1140 = vmul.f32 %v785, %v1139
      %v1141 = vrcp.pop %v915
      %v1142 = vmul.f32 %v915, %v1141
      %v1143 = vsub.f32 1.0, %v1142
      %v1144 = vmul.f32 %v1141, %v1143
      %v1145 = vadd.f32 %v1141, %v1144
      %vm1146 = vweird.f32 %v915
      %vm1147 = vweird.f32 %v1141
      %vm1148 = vmor %vm1146, %vm1147
      %v1149 = vsel %vm1148, %v1141, %v1145
      %v1150 = vand.u32 2147483647, %v915
      %vm1151 = vcmp.eq.f32.partialorder %v1150, 8.507059e+37
      %v1152 = vand.u32 %v915, 2147483648
      %v1153 = vor.u32 1.1754944e-38, %v1152
      %v1154 = vsel %vm1151, %v1153, %v1149
      %v1155 = vmul.f32 %v786, %v1154
      %1156 = vst [vmem:[#allocation2] sm:$0xff] %v930
      %1157 = vst [vmem:[#allocation2 + $0x8] sm:$0xff] %v945
      %1158 = vst [vmem:[#allocation2 + $0x10] sm:$0xff] %v960
      %1159 = vst [vmem:[#allocation2 + $0x18] sm:$0xff] %v975
      %1160 = vst [vmem:[#allocation2 + $0x20] sm:$0xff] %v990
      %1161 = vst [vmem:[#allocation2 + $0x28] sm:$0xff] %v1005
      %1162 = vst [vmem:[#allocation2 + $0x30] sm:$0xff] %v1020
      %1163 = vst [vmem:[#allocation2 + $0x38] sm:$0xff] %v1035
      %1164 = vst [vmem:[#allocation2 + $0x40] sm:$0xff] %v1050
      %1165 = vst [vmem:[#allocation2 + $0x48] sm:$0xff] %v1065
      %1166 = vst [vmem:[#allocation2 + $0x50] sm:$0xff] %v1080
      %1167 = vst [vmem:[#allocation2 + $0x58] sm:$0xff] %v1095
      %1168 = vst [vmem:[#allocation2 + $0x60] sm:$0xff] %v1110
      %1169 = vst [vmem:[#allocation2 + $0x68] sm:$0xff] %v1125
      %1170 = vst [vmem:[#allocation2 + $0x70] sm:$0xff] %v1140
      %1171 = vst [vmem:[#allocation2 + $0x78] sm:$0xff] %v1155
      %v1172 = vlaneseq
      %v1173 = vand.u32 %v1172, 127
      %v1174 = vld [vmem:[%s194] sm:$0x1]
      loop: start=0, step=1, limit=128
      $region33: #{_forward_device.7} parent=31 // loop_pre_header
        _
      $region34: #{_forward_device.7} parent=31 // loop_header
        %s1176 = sphi 0, %s1180
        %p1177 = scmp.ge.s32.totalorder %s1176, 128
        %v1181 = vphi %v1174, %v1199
      $region35: #{_forward_device.7} parent=31 // loop_header_branch
        %1179 = sbr.rel (%p1177) target = $region39
      $region36: #{_forward_device.7} parent=31 // loop_body
        %s1182 = scalar_lea.vmem [#allocation2], %s1176
        %v1183 = vld [vmem:[%s1182] sm:$0x1]
        %v1184 = vstv %s1176
        %vm1185 = vcmp.eq.s32.totalorder %v1173, %v1184
        %v1186 = vsel %vm1185, 1, 0
        %v1187 = vcvt.s32.f32 %v1186
        %v1188 = vmul.f32 %v1181, %v1187
        %vm1189 = vcmask 1040384
        %v1190 = vsel %vm1189, %v1188, 0.0
        %1191 = vadd.xlane.f32.xlu0 %v1190
        %v1192 = vpop.xlane.xlu0 %1191
        %vm1193 = vcmp.gt.f32.partialorder %v1183, 0.7
        %vm1194 = vcmp.gt.s32.totalorder %v1173, %v1184
        %vm1195 = vmand %vm1193, %vm1194
        %v1196 = vsel %vm1195, 1.0, 0.0
        %v1197 = vmul.f32 %v1196, %v1192
        %v1198 = vsub.f32 1.0, %v1197
        %v1199 = vmul.f32 %v1181, %v1198
      $region37: #{_forward_device.7} parent=31 // loop_footer
        %s1180 = sadd.s32 1, %s1176
      $region38: #{_forward_device.7} parent=31 // loop_footer_branch
        %1175 = sbr.rel target = $region34
      $region39: #{_forward_device.7} parent=31 // loop_exit
        _
      %1200 = vst [vmem:[%s197] sm:$0x1] %v1181
      %p1201 = scmp.lt.s32.totalorder %s14, 1
      %s1202 = scalar_select %p1201, %s14, 1
      %s1203 = scalar_lea.vmem %s3, %s1202
      // Predicated region
      $region40: #{_forward_device.7} parent=31 // pred_check
        %p1204 = pneg %p110
      $region41: #{_forward_device.7} parent=31 // pred_check_branch
        %1206 = sbr.rel (%p1204) target = $region43
      $region42: #{_forward_device.7} parent=31 // pred_region
        _
      $region43: #{_forward_device.7} parent=31 // pred_fallthru
        _
    $region32: #{_forward_device.7} parent=5 // pred_fallthru
      _
    %p1207 = scmp.le.s32.totalorder 2, %s9
    // Predicated region
    $region44: #{_forward_device.7} parent=5 // pred_check
      %p1208 = pneg %p1207
    $region45: #{_forward_device.7} parent=5 // pred_check_branch
      %1210 = sbr.rel (%p1208) target = $region47
    $region46: #{_forward_device.7} parent=5 // pred_region
      %s1211 = ssub.s32 %s9, 2
      // Predicated region
      $region48: #{_forward_device.7} parent=46 // pred_check
        %p1212 = pneg %p116
      $region49: #{_forward_device.7} parent=46 // pred_check_branch
        %1214 = sbr.rel (%p1212) target = $region51
      $region50: #{_forward_device.7} parent=46 // pred_region
        %p1215 = scmp.lt.s32.totalorder %s15, 1
        %s1216 = scalar_select %p1215, %s15, 1
        %s1217 = scalar_lea.vmem %s3, %s1216
      $region51: #{_forward_device.7} parent=46 // pred_fallthru
        _
    $region47: #{_forward_device.7} parent=5 // pred_fallthru
      _
  $region6: #{_forward_device.7} parent=0 // loop_footer
    %s13 = sadd.s32 1, %s9
  $region7: #{_forward_device.7} parent=0 // loop_footer_branch
    %8 = sbr.rel target = $region3
  $region8: #{_forward_device.7} parent=0 // loop_exit
    _

// kernel: _forward_device.8
$region0: #{_forward_device.8}
  #allocation0 [shape = 'u32[]', space=smem, size = 0x4, offset = 0x4, fixed_abs, tag = 'smem constant byte address 0x4 - core index']
  #allocation1 [shape = 'u32[72,128]{1,0:T(1,128)}', space=vmem, size = 0x9000, scoped, tag = 'internal scratch']
  %s0 = inlined_call_operand.vmem [shape: f32[64,64], index: 0, kind: input, shape index: {}]
  %s1 = inlined_call_operand.vmem [shape: f32[64,1], index: 1, kind: input, shape index: {}]
  %s2 = inlined_call_operand.vmem [shape: f32[64,4], index: 2, kind: input, shape index: {}]
  %s3 = inlined_call_operand.vmem [shape: bf16[64,32], index: 3, kind: input, shape index: {}]
  %s4 = inlined_call_operand.vmem [shape: f32[1,32], index: 4, kind: input, shape index: {}]
  %s5 = inlined_call_operand.vmem [shape: bf16[32,32], index: 5, kind: input, shape index: {}]
  %s6 = inlined_call_operand.vmem [shape: f32[1,32], index: 6, kind: input, shape index: {}]
  %s7 = inlined_call_operand.vmem [shape: bf16[32,20], index: 7, kind: input, shape index: {}]
  %s8 = inlined_call_operand.vmem [shape: f32[1,20], index: 8, kind: input, shape index: {}]
  %s9 = inlined_call_operand.vmem [shape: f32[64,128], index: 9, kind: output, shape index: {}]
  %s10 = sld [smem:[#allocation0]]
  $region46: #{_forward_device.8} parent=0
    _
  %s12 = ssub.s32 1, %s10
  %s13 = scalar_select 0, %s12, %s10
  // Predicated region
  $region2: #{_forward_device.8} parent=0 // pred_check
    _
  $region3: #{_forward_device.8} parent=0 // pred_check_branch
    %15 = sbr.rel (0) target = $region5
  $region4: #{_forward_device.8} parent=0 // pred_region
    _
  $region5: #{_forward_device.8} parent=0 // pred_fallthru
    _
  // Predicated region
  $region6: #{_forward_device.8} parent=0 // pred_check
    _
  $region7: #{_forward_device.8} parent=0 // pred_check_branch
    %17 = sbr.rel (0) target = $region9
  $region8: #{_forward_device.8} parent=0 // pred_region
    _
  $region9: #{_forward_device.8} parent=0 // pred_fallthru
    _
  // Predicated region
  $region10: #{_forward_device.8} parent=0 // pred_check
    _
  $region11: #{_forward_device.8} parent=0 // pred_check_branch
    %19 = sbr.rel (0) target = $region13
  $region12: #{_forward_device.8} parent=0 // pred_region
    _
  $region13: #{_forward_device.8} parent=0 // pred_fallthru
    _
  // Predicated region
  $region14: #{_forward_device.8} parent=0 // pred_check
    _
  $region15: #{_forward_device.8} parent=0 // pred_check_branch
    %21 = sbr.rel (0) target = $region17
  $region16: #{_forward_device.8} parent=0 // pred_region
    _
  $region17: #{_forward_device.8} parent=0 // pred_fallthru
    _
  // Predicated region
  $region18: #{_forward_device.8} parent=0 // pred_check
    _
  $region19: #{_forward_device.8} parent=0 // pred_check_branch
    %23 = sbr.rel (0) target = $region21
  $region20: #{_forward_device.8} parent=0 // pred_region
    _
  $region21: #{_forward_device.8} parent=0 // pred_fallthru
    _
  // Predicated region
  $region22: #{_forward_device.8} parent=0 // pred_check
    _
  $region23: #{_forward_device.8} parent=0 // pred_check_branch
    %25 = sbr.rel (0) target = $region25
  $region24: #{_forward_device.8} parent=0 // pred_region
    _
  $region25: #{_forward_device.8} parent=0 // pred_fallthru
    _
  // Predicated region
  $region26: #{_forward_device.8} parent=0 // pred_check
    _
  $region27: #{_forward_device.8} parent=0 // pred_check_branch
    %27 = sbr.rel (0) target = $region29
  $region28: #{_forward_device.8} parent=0 // pred_region
    _
  $region29: #{_forward_device.8} parent=0 // pred_fallthru
    _
  // Predicated region
  $region30: #{_forward_device.8} parent=0 // pred_check
    _
  $region31: #{_forward_device.8} parent=0 // pred_check_branch
    %29 = sbr.rel (0) target = $region33
  $region32: #{_forward_device.8} parent=0 // pred_region
    _
  $region33: #{_forward_device.8} parent=0 // pred_fallthru
    _
  // Predicated region
  $region34: #{_forward_device.8} parent=0 // pred_check
    _
  $region35: #{_forward_device.8} parent=0 // pred_check_branch
    %31 = sbr.rel (0) target = $region37
  $region36: #{_forward_device.8} parent=0 // pred_region
    _
  $region37: #{_forward_device.8} parent=0 // pred_fallthru
    _
  %v33 = vld [vmem:[%s0] sm:$0xff]
  %v34 = vld [vmem:[%s0 + $0x8] sm:$0xff]
  %v35 = vld [vmem:[%s0 + $0x10] sm:$0xff]
  %v36 = vld [vmem:[%s0 + $0x18] sm:$0xff]
  %v37 = vld [vmem:[%s0 + $0x20] sm:$0xff]
  %v38 = vld [vmem:[%s0 + $0x28] sm:$0xff]
  %v39 = vld [vmem:[%s0 + $0x30] sm:$0xff]
  %v40 = vld [vmem:[%s0 + $0x38] sm:$0xff]
  %v41 = vpack.c.bf16 %v34, %v33
  %v42 = vpack.c.bf16 %v36, %v35
  %v43 = vpack.c.bf16 %v38, %v37
  %v44 = vpack.c.bf16 %v40, %v39
  %v45 = vld [vmem:[%s3] sm:$0xf]
  %v46 = vld [vmem:[%s3 + $0x4] sm:$0xf]
  %v47 = vld [vmem:[%s3 + $0x8] sm:$0xf]
  %v48 = vld [vmem:[%s3 + $0xc] sm:$0xf]
  %v49 = vld [vmem:[%s3 + $0x10] sm:$0xf]
  %v50 = vld [vmem:[%s3 + $0x14] sm:$0xf]
  %v51 = vld [vmem:[%s3 + $0x18] sm:$0xf]
  %v52 = vld [vmem:[%s3 + $0x1c] sm:$0xf]
  %v53 = vld [vmem:[%s4] sm:$0x1]
  %v55 = vperm.slane %v53, 0
  %v65 = vunpack.c.l.b16 %v45
  %v66 = vunpack.c.l.b16 %v46
  %v67 = vunpack.c.l.b16 %v47
  %v68 = vunpack.c.l.b16 %v48
  %v69 = vunpack.c.l.b16 %v49
  %v70 = vunpack.c.l.b16 %v50
  %v71 = vunpack.c.l.b16 %v51
  %v72 = vunpack.c.l.b16 %v52
  %v73 = vpack.c.b16 %v66, %v65
  %v74 = vpack.c.b16 %v68, %v67
  %v75 = vpack.c.b16 %v70, %v69
  %v76 = vpack.c.b16 %v72, %v71
  %vm81 = vcmask 523264
  %v83 = vsel %vm81, %v41, 0
  %v86 = vsel %vm81, %v42, 0
  %v89 = vsel %vm81, %v43, 0
  %v92 = vsel %vm81, %v44, 0
  %94 = vmatpush.bf16.msra.mxu0 0
  %95 = vmatpush.bf16.msra.mxu0 0
  %96 = vmatpush.bf16.msra.mxu0 0
  %97 = vmatpush.bf16.msra.mxu0 0
  %98 = vmatpush.bf16.msra.mxu0 %v76
  %99 = vmatpush.bf16.msra.mxu0 %v75
  %100 = vmatpush.bf16.msra.mxu0 %v74
  %101 = vmatpush.bf16.msra.mxu0 %v73
  %102 = vmatmul.bf16.gmra.mxu0 %v83
  %v103 = vpop.f32.mrf.mxu0
  %v104 = vadd.f32 %v55, %v103
  %v105 = vpop.f32.mrf.mxu0
  %v106 = vadd.f32 %v55, %v105
  %107 = vmatmul.bf16.gmra.mxu0 %v86
  %v108 = vpop.f32.mrf.mxu0
  %v109 = vadd.f32 %v55, %v108
  %v110 = vpop.f32.mrf.mxu0
  %v111 = vadd.f32 %v55, %v110
  %112 = vmatmul.bf16.gmra.mxu0 %v89
  %v113 = vpop.f32.mrf.mxu0
  %v114 = vadd.f32 %v55, %v113
  %v115 = vpop.f32.mrf.mxu0
  %v116 = vadd.f32 %v55, %v115
  %117 = vmatmul.bf16.gmra.mxu0 %v92
  %v118 = vpop.f32.mrf.mxu0
  %v119 = vadd.f32 %v55, %v118
  %v120 = vpop.f32.mrf.mxu0
  %v121 = vadd.f32 %v55, %v120
  %122 = vdwg.mxu0
  %v123 = vmax.f32 %v104, 0.0
  %v124 = vmax.f32 %v106, 0.0
  %v125 = vmax.f32 %v109, 0.0
  %v126 = vmax.f32 %v111, 0.0
  %v127 = vmax.f32 %v114, 0.0
  %v128 = vmax.f32 %v116, 0.0
  %v129 = vmax.f32 %v119, 0.0
  %v130 = vmax.f32 %v121, 0.0
  %v131 = vpack.c.bf16 %v124, %v123
  %v132 = vpack.c.bf16 %v126, %v125
  %v133 = vpack.c.bf16 %v128, %v127
  %v134 = vpack.c.bf16 %v130, %v129
  %v135 = vld [vmem:[%s5] sm:$0xf]
  %v136 = vld [vmem:[%s5 + $0x4] sm:$0xf]
  %v137 = vld [vmem:[%s5 + $0x8] sm:$0xf]
  %v138 = vld [vmem:[%s5 + $0xc] sm:$0xf]
  %v139 = vld [vmem:[%s6] sm:$0x1]
  %v141 = vperm.slane %v139, 0
  %v147 = vunpack.c.l.b16 %v135
  %v148 = vunpack.c.l.b16 %v136
  %v149 = vunpack.c.l.b16 %v137
  %v150 = vunpack.c.l.b16 %v138
  %v151 = vpack.c.b16 %v148, %v147
  %v152 = vpack.c.b16 %v150, %v149
  %vm155 = vcmask 261120
  %v157 = vsel %vm155, %v131, 0
  %v160 = vsel %vm155, %v132, 0
  %v163 = vsel %vm155, %v133, 0
  %v166 = vsel %vm155, %v134, 0
  %168 = vmatpush.bf16.msra.mxu0 0
  %169 = vmatpush.bf16.msra.mxu0 0
  %170 = vmatpush.bf16.msra.mxu0 0
  %171 = vmatpush.bf16.msra.mxu0 0
  %172 = vmatpush.bf16.msra.mxu0 0
  %173 = vmatpush.bf16.msra.mxu0 0
  %174 = vmatpush.bf16.msra.mxu0 %v152
  %175 = vmatpush.bf16.msra.mxu0 %v151
  %176 = vmatmul.bf16.gmra.mxu0 %v157
  %v177 = vpop.f32.mrf.mxu0
  %v178 = vadd.f32 %v141, %v177
  %v179 = vpop.f32.mrf.mxu0
  %v180 = vadd.f32 %v141, %v179
  %181 = vmatmul.bf16.gmra.mxu0 %v160
  %v182 = vpop.f32.mrf.mxu0
  %v183 = vadd.f32 %v141, %v182
  %v184 = vpop.f32.mrf.mxu0
  %v185 = vadd.f32 %v141, %v184
  %186 = vmatmul.bf16.gmra.mxu0 %v163
  %v187 = vpop.f32.mrf.mxu0
  %v188 = vadd.f32 %v141, %v187
  %v189 = vpop.f32.mrf.mxu0
  %v190 = vadd.f32 %v141, %v189
  %191 = vmatmul.bf16.gmra.mxu0 %v166
  %v192 = vpop.f32.mrf.mxu0
  %v193 = vadd.f32 %v141, %v192
  %v194 = vpop.f32.mrf.mxu0
  %v195 = vadd.f32 %v141, %v194
  %196 = vdwg.mxu0
  %v197 = vmax.f32 %v178, 0.0
  %v198 = vmax.f32 %v180, 0.0
  %v199 = vmax.f32 %v183, 0.0
  %v200 = vmax.f32 %v185, 0.0
  %v201 = vmax.f32 %v188, 0.0
  %v202 = vmax.f32 %v190, 0.0
  %v203 = vmax.f32 %v193, 0.0
  %v204 = vmax.f32 %v195, 0.0
  %v205 = vpack.c.bf16 %v198, %v197
  %v206 = vpack.c.bf16 %v200, %v199
  %v207 = vpack.c.bf16 %v202, %v201
  %v208 = vpack.c.bf16 %v204, %v203
  %v209 = vld [vmem:[%s7] sm:$0xf]
  %v210 = vld [vmem:[%s7 + $0x4] sm:$0xf]
  %v211 = vld [vmem:[%s7 + $0x8] sm:$0xf]
  %v212 = vld [vmem:[%s7 + $0xc] sm:$0xf]
  %v213 = vld [vmem:[%s8] sm:$0x1]
  %v215 = vperm.slane %v213, 0
  %v221 = vunpack.c.l.b16 %v209
  %v222 = vunpack.c.l.b16 %v210
  %v223 = vunpack.c.l.b16 %v211
  %v224 = vunpack.c.l.b16 %v212
  %v225 = vpack.c.b16 %v222, %v221
  %v226 = vpack.c.b16 %v224, %v223
  %v230 = vsel %vm155, %v205, 0
  %v233 = vsel %vm155, %v206, 0
  %v236 = vsel %vm155, %v207, 0
  %v239 = vsel %vm155, %v208, 0
  %241 = vmatpush.bf16.msra.mxu0 0
  %242 = vmatpush.bf16.msra.mxu0 0
  %243 = vmatpush.bf16.msra.mxu0 0
  %244 = vmatpush.bf16.msra.mxu0 0
  %245 = vmatpush.bf16.msra.mxu0 0
  %246 = vmatpush.bf16.msra.mxu0 0
  %247 = vmatpush.bf16.msra.mxu0 %v226
  %248 = vmatpush.bf16.msra.mxu0 %v225
  %249 = vmatmul.bf16.gmra.mxu0 %v230
  %v250 = vpop.f32.mrf.mxu0
  %v251 = vadd.f32 %v215, %v250
  %v252 = vpop.f32.mrf.mxu0
  %v253 = vadd.f32 %v215, %v252
  %254 = vmatmul.bf16.gmra.mxu0 %v233
  %v255 = vpop.f32.mrf.mxu0
  %v256 = vadd.f32 %v215, %v255
  %v257 = vpop.f32.mrf.mxu0
  %v258 = vadd.f32 %v215, %v257
  %259 = vmatmul.bf16.gmra.mxu0 %v236
  %v260 = vpop.f32.mrf.mxu0
  %v261 = vadd.f32 %v215, %v260
  %v262 = vpop.f32.mrf.mxu0
  %v263 = vadd.f32 %v215, %v262
  %264 = vmatmul.bf16.gmra.mxu0 %v239
  %v265 = vpop.f32.mrf.mxu0
  %v266 = vadd.f32 %v215, %v265
  %v267 = vpop.f32.mrf.mxu0
  %v268 = vadd.f32 %v215, %v267
  %269 = vdwg.mxu0
  %vm270 = vcmask 31744
  %v271 = vsel %vm270, %v251, -inf
  %272 = vmax.xlane.f32.xlu0 %v271
  %v273 = vpop.xlane.xlu0 %272
  %v274 = vsel %vm270, %v253, -inf
  %275 = vmax.xlane.f32.xlu0 %v274
  %v276 = vpop.xlane.xlu0 %275
  %v277 = vsel %vm270, %v256, -inf
  %278 = vmax.xlane.f32.xlu0 %v277
  %v279 = vpop.xlane.xlu0 %278
  %v280 = vsel %vm270, %v258, -inf
  %281 = vmax.xlane.f32.xlu0 %v280
  %v282 = vpop.xlane.xlu0 %281
  %v283 = vsel %vm270, %v261, -inf
  %284 = vmax.xlane.f32.xlu0 %v283
  %v285 = vpop.xlane.xlu0 %284
  %v286 = vsel %vm270, %v263, -inf
  %287 = vmax.xlane.f32.xlu0 %v286
  %v288 = vpop.xlane.xlu0 %287
  %v289 = vsel %vm270, %v266, -inf
  %290 = vmax.xlane.f32.xlu0 %v289
  %v291 = vpop.xlane.xlu0 %290
  %v292 = vsel %vm270, %v268, -inf
  %293 = vmax.xlane.f32.xlu0 %v292
  %v294 = vpop.xlane.xlu0 %293
  %v295 = vsub.f32 %v251, %v273
  %v296 = vsub.f32 %v253, %v276
  %v297 = vsub.f32 %v256, %v279
  %v298 = vsub.f32 %v258, %v282
  %v299 = vsub.f32 %v261, %v285
  %v300 = vsub.f32 %v263, %v288
  %v301 = vsub.f32 %v266, %v291
  %v302 = vsub.f32 %v268, %v294
  %v303 = vmul.f32 %v295, 1.442695
  %v304 = vpow.pop %v303
  %v305 = vmul.f32 %v296, 1.442695
  %v306 = vpow.pop %v305
  %v307 = vmul.f32 %v297, 1.442695
  %v308 = vpow.pop %v307
  %v309 = vmul.f32 %v298, 1.442695
  %v310 = vpow.pop %v309
  %v311 = vmul.f32 %v299, 1.442695
  %v312 = vpow.pop %v311
  %v313 = vmul.f32 %v300, 1.442695
  %v314 = vpow.pop %v313
  %v315 = vmul.f32 %v301, 1.442695
  %v316 = vpow.pop %v315
  %v317 = vmul.f32 %v302, 1.442695
  %v318 = vpow.pop %v317
  %v319 = vsel %vm270, %v304, 0.0
  %320 = vadd.xlane.f32.xlu0 %v319
  %v321 = vpop.xlane.xlu0 %320
  %v322 = vsel %vm270, %v306, 0.0
  %323 = vadd.xlane.f32.xlu0 %v322
  %v324 = vpop.xlane.xlu0 %323
  %v325 = vsel %vm270, %v308, 0.0
  %326 = vadd.xlane.f32.xlu0 %v325
  %v327 = vpop.xlane.xlu0 %326
  %v328 = vsel %vm270, %v310, 0.0
  %329 = vadd.xlane.f32.xlu0 %v328
  %v330 = vpop.xlane.xlu0 %329
  %v331 = vsel %vm270, %v312, 0.0
  %332 = vadd.xlane.f32.xlu0 %v331
  %v333 = vpop.xlane.xlu0 %332
  %v334 = vsel %vm270, %v314, 0.0
  %335 = vadd.xlane.f32.xlu0 %v334
  %v336 = vpop.xlane.xlu0 %335
  %v337 = vsel %vm270, %v316, 0.0
  %338 = vadd.xlane.f32.xlu0 %v337
  %v339 = vpop.xlane.xlu0 %338
  %v340 = vsel %vm270, %v318, 0.0
  %341 = vadd.xlane.f32.xlu0 %v340
  %v342 = vpop.xlane.xlu0 %341
  %v343 = vrcp.pop %v321
  %v344 = vmul.f32 %v321, %v343
  %v345 = vsub.f32 1.0, %v344
  %v346 = vmul.f32 %v343, %v345
  %v347 = vadd.f32 %v343, %v346
  %vm348 = vweird.f32 %v321
  %vm349 = vweird.f32 %v343
  %vm350 = vmor %vm348, %vm349
  %v351 = vsel %vm350, %v343, %v347
  %v352 = vand.u32 2147483647, %v321
  %vm353 = vcmp.eq.f32.partialorder %v352, 8.507059e+37
  %v354 = vand.u32 %v321, 2147483648
  %v355 = vor.u32 1.1754944e-38, %v354
  %v356 = vsel %vm353, %v355, %v351
  %v357 = vmul.f32 %v304, %v356
  %v358 = vrcp.pop %v324
  %v359 = vmul.f32 %v324, %v358
  %v360 = vsub.f32 1.0, %v359
  %v361 = vmul.f32 %v358, %v360
  %v362 = vadd.f32 %v358, %v361
  %vm363 = vweird.f32 %v324
  %vm364 = vweird.f32 %v358
  %vm365 = vmor %vm363, %vm364
  %v366 = vsel %vm365, %v358, %v362
  %v367 = vand.u32 2147483647, %v324
  %vm368 = vcmp.eq.f32.partialorder %v367, 8.507059e+37
  %v369 = vand.u32 %v324, 2147483648
  %v370 = vor.u32 1.1754944e-38, %v369
  %v371 = vsel %vm368, %v370, %v366
  %v372 = vmul.f32 %v306, %v371
  %v373 = vrcp.pop %v327
  %v374 = vmul.f32 %v327, %v373
  %v375 = vsub.f32 1.0, %v374
  %v376 = vmul.f32 %v373, %v375
  %v377 = vadd.f32 %v373, %v376
  %vm378 = vweird.f32 %v327
  %vm379 = vweird.f32 %v373
  %vm380 = vmor %vm378, %vm379
  %v381 = vsel %vm380, %v373, %v377
  %v382 = vand.u32 2147483647, %v327
  %vm383 = vcmp.eq.f32.partialorder %v382, 8.507059e+37
  %v384 = vand.u32 %v327, 2147483648
  %v385 = vor.u32 1.1754944e-38, %v384
  %v386 = vsel %vm383, %v385, %v381
  %v387 = vmul.f32 %v308, %v386
  %v388 = vrcp.pop %v330
  %v389 = vmul.f32 %v330, %v388
  %v390 = vsub.f32 1.0, %v389
  %v391 = vmul.f32 %v388, %v390
  %v392 = vadd.f32 %v388, %v391
  %vm393 = vweird.f32 %v330
  %vm394 = vweird.f32 %v388
  %vm395 = vmor %vm393, %vm394
  %v396 = vsel %vm395, %v388, %v392
  %v397 = vand.u32 2147483647, %v330
  %vm398 = vcmp.eq.f32.partialorder %v397, 8.507059e+37
  %v399 = vand.u32 %v330, 2147483648
  %v400 = vor.u32 1.1754944e-38, %v399
  %v401 = vsel %vm398, %v400, %v396
  %v402 = vmul.f32 %v310, %v401
  %v403 = vrcp.pop %v333
  %v404 = vmul.f32 %v333, %v403
  %v405 = vsub.f32 1.0, %v404
  %v406 = vmul.f32 %v403, %v405
  %v407 = vadd.f32 %v403, %v406
  %vm408 = vweird.f32 %v333
  %vm409 = vweird.f32 %v403
  %vm410 = vmor %vm408, %vm409
  %v411 = vsel %vm410, %v403, %v407
  %v412 = vand.u32 2147483647, %v333
  %vm413 = vcmp.eq.f32.partialorder %v412, 8.507059e+37
  %v414 = vand.u32 %v333, 2147483648
  %v415 = vor.u32 1.1754944e-38, %v414
  %v416 = vsel %vm413, %v415, %v411
  %v417 = vmul.f32 %v312, %v416
  %v418 = vrcp.pop %v336
  %v419 = vmul.f32 %v336, %v418
  %v420 = vsub.f32 1.0, %v419
  %v421 = vmul.f32 %v418, %v420
  %v422 = vadd.f32 %v418, %v421
  %vm423 = vweird.f32 %v336
  %vm424 = vweird.f32 %v418
  %vm425 = vmor %vm423, %vm424
  %v426 = vsel %vm425, %v418, %v422
  %v427 = vand.u32 2147483647, %v336
  %vm428 = vcmp.eq.f32.partialorder %v427, 8.507059e+37
  %v429 = vand.u32 %v336, 2147483648
  %v430 = vor.u32 1.1754944e-38, %v429
  %v431 = vsel %vm428, %v430, %v426
  %v432 = vmul.f32 %v314, %v431
  %v433 = vrcp.pop %v339
  %v434 = vmul.f32 %v339, %v433
  %v435 = vsub.f32 1.0, %v434
  %v436 = vmul.f32 %v433, %v435
  %v437 = vadd.f32 %v433, %v436
  %vm438 = vweird.f32 %v339
  %vm439 = vweird.f32 %v433
  %vm440 = vmor %vm438, %vm439
  %v441 = vsel %vm440, %v433, %v437
  %v442 = vand.u32 2147483647, %v339
  %vm443 = vcmp.eq.f32.partialorder %v442, 8.507059e+37
  %v444 = vand.u32 %v339, 2147483648
  %v445 = vor.u32 1.1754944e-38, %v444
  %v446 = vsel %vm443, %v445, %v441
  %v447 = vmul.f32 %v316, %v446
  %v448 = vrcp.pop %v342
  %v449 = vmul.f32 %v342, %v448
  %v450 = vsub.f32 1.0, %v449
  %v451 = vmul.f32 %v448, %v450
  %v452 = vadd.f32 %v448, %v451
  %vm453 = vweird.f32 %v342
  %vm454 = vweird.f32 %v448
  %vm455 = vmor %vm453, %vm454
  %v456 = vsel %vm455, %v448, %v452
  %v457 = vand.u32 2147483647, %v342
  %vm458 = vcmp.eq.f32.partialorder %v457, 8.507059e+37
  %v459 = vand.u32 %v342, 2147483648
  %v460 = vor.u32 1.1754944e-38, %v459
  %v461 = vsel %vm458, %v460, %v456
  %v462 = vmul.f32 %v318, %v461
  %v463 = vld [vmem:[%s1] sm:$0xff]
  %v464 = vld [vmem:[%s1 + $0x8] sm:$0xff]
  %v465 = vld [vmem:[%s1 + $0x10] sm:$0xff]
  %v466 = vld [vmem:[%s1 + $0x18] sm:$0xff]
  %v467 = vld [vmem:[%s1 + $0x20] sm:$0xff]
  %v468 = vld [vmem:[%s1 + $0x28] sm:$0xff]
  %v469 = vld [vmem:[%s1 + $0x30] sm:$0xff]
  %v470 = vld [vmem:[%s1 + $0x38] sm:$0xff]
  %472 = vset.pattern.permute.xlu0 0
  %473 = vperm.xlu0 %472, %v463
  %v474 = vpop.permute.xlu0 %473
  %477 = vset.pattern.permute.xlu0 0
  %478 = vperm.xlu0 %477, %v464
  %v479 = vpop.permute.xlu0 %478
  %482 = vset.pattern.permute.xlu0 0
  %483 = vperm.xlu0 %482, %v465
  %v484 = vpop.permute.xlu0 %483
  %487 = vset.pattern.permute.xlu0 0
  %488 = vperm.xlu0 %487, %v466
  %v489 = vpop.permute.xlu0 %488
  %492 = vset.pattern.permute.xlu0 0
  %493 = vperm.xlu0 %492, %v467
  %v494 = vpop.permute.xlu0 %493
  %497 = vset.pattern.permute.xlu0 0
  %498 = vperm.xlu0 %497, %v468
  %v499 = vpop.permute.xlu0 %498
  %502 = vset.pattern.permute.xlu0 0
  %503 = vperm.xlu0 %502, %v469
  %v504 = vpop.permute.xlu0 %503
  %507 = vset.pattern.permute.xlu0 0
  %508 = vperm.xlu0 %507, %v470
  %v509 = vpop.permute.xlu0 %508
  %v511 = vmul.f32 %v357, %v474
  %v512 = vmul.f32 %v372, %v479
  %v513 = vmul.f32 %v387, %v484
  %v514 = vmul.f32 %v402, %v489
  %v515 = vmul.f32 %v417, %v494
  %v516 = vmul.f32 %v432, %v499
  %v517 = vmul.f32 %v447, %v504
  %v518 = vmul.f32 %v462, %v509
  %v519 = vld [vmem:[%s2] sm:$0xff]
  %v520 = vld [vmem:[%s2 + $0x8] sm:$0xff]
  %v521 = vld [vmem:[%s2 + $0x10] sm:$0xff]
  %v522 = vld [vmem:[%s2 + $0x18] sm:$0xff]
  %v523 = vld [vmem:[%s2 + $0x20] sm:$0xff]
  %v524 = vld [vmem:[%s2 + $0x28] sm:$0xff]
  %v525 = vld [vmem:[%s2 + $0x30] sm:$0xff]
  %v526 = vld [vmem:[%s2 + $0x38] sm:$0xff]
  %535 = vrot.lane.b32.xlu0 %v519, 2
  %v536 = vpop.permute.xlu0 %535
  %537 = vrot.lane.b32.xlu0 %v520, 2
  %v538 = vpop.permute.xlu0 %537
  %539 = vrot.lane.b32.xlu0 %v521, 2
  %v540 = vpop.permute.xlu0 %539
  %541 = vrot.lane.b32.xlu0 %v522, 2
  %v542 = vpop.permute.xlu0 %541
  %543 = vrot.lane.b32.xlu0 %v523, 2
  %v544 = vpop.permute.xlu0 %543
  %545 = vrot.lane.b32.xlu0 %v524, 2
  %v546 = vpop.permute.xlu0 %545
  %547 = vrot.lane.b32.xlu0 %v525, 2
  %v548 = vpop.permute.xlu0 %547
  %549 = vrot.lane.b32.xlu0 %v526, 2
  %v550 = vpop.permute.xlu0 %549
  %v559 = vsub.f32 %v519, %v536
  %v560 = vsub.f32 %v520, %v538
  %v561 = vsub.f32 %v521, %v540
  %v562 = vsub.f32 %v522, %v542
  %v563 = vsub.f32 %v523, %v544
  %v564 = vsub.f32 %v524, %v546
  %v565 = vsub.f32 %v525, %v548
  %v566 = vsub.f32 %v526, %v550
  %v567 = vmul.f32 %v559, 0.5
  %v568 = vmul.f32 %v560, 0.5
  %v569 = vmul.f32 %v561, 0.5
  %v570 = vmul.f32 %v562, 0.5
  %v571 = vmul.f32 %v563, 0.5
  %v572 = vmul.f32 %v564, 0.5
  %v573 = vmul.f32 %v565, 0.5
  %v574 = vmul.f32 %v566, 0.5
  %583 = vrot.lane.b32.xlu0 %v567, 126
  %v584 = vpop.permute.xlu0 %583
  %585 = vrot.lane.b32.xlu0 %v568, 126
  %v586 = vpop.permute.xlu0 %585
  %587 = vrot.lane.b32.xlu0 %v569, 126
  %v588 = vpop.permute.xlu0 %587
  %589 = vrot.lane.b32.xlu0 %v570, 126
  %v590 = vpop.permute.xlu0 %589
  %591 = vrot.lane.b32.xlu0 %v571, 126
  %v592 = vpop.permute.xlu0 %591
  %593 = vrot.lane.b32.xlu0 %v572, 126
  %v594 = vpop.permute.xlu0 %593
  %595 = vrot.lane.b32.xlu0 %v573, 126
  %v596 = vpop.permute.xlu0 %595
  %597 = vrot.lane.b32.xlu0 %v574, 126
  %v598 = vpop.permute.xlu0 %597
  %v607 = vadd.f32 %v519, %v584
  %v608 = vadd.f32 %v520, %v586
  %v609 = vadd.f32 %v521, %v588
  %v610 = vadd.f32 %v522, %v590
  %v611 = vadd.f32 %v523, %v592
  %v612 = vadd.f32 %v524, %v594
  %v613 = vadd.f32 %v525, %v596
  %v614 = vadd.f32 %v526, %v598
  %616 = vset.pattern.permute.xlu0 2
  %617 = vperm.xlu0 %616, %v559
  %v618 = vpop.permute.xlu0 %617
  %621 = vset.pattern.permute.xlu0 2
  %622 = vperm.xlu0 %621, %v560
  %v623 = vpop.permute.xlu0 %622
  %626 = vset.pattern.permute.xlu0 2
  %627 = vperm.xlu0 %626, %v561
  %v628 = vpop.permute.xlu0 %627
  %631 = vset.pattern.permute.xlu0 2
  %632 = vperm.xlu0 %631, %v562
  %v633 = vpop.permute.xlu0 %632
  %636 = vset.pattern.permute.xlu0 2
  %637 = vperm.xlu0 %636, %v563
  %v638 = vpop.permute.xlu0 %637
  %641 = vset.pattern.permute.xlu0 2
  %642 = vperm.xlu0 %641, %v564
  %v643 = vpop.permute.xlu0 %642
  %646 = vset.pattern.permute.xlu0 2
  %647 = vperm.xlu0 %646, %v565
  %v648 = vpop.permute.xlu0 %647
  %651 = vset.pattern.permute.xlu0 2
  %652 = vperm.xlu0 %651, %v566
  %v653 = vpop.permute.xlu0 %652
  %v655 = vmul.f32 %v251, %v618
  %v656 = vmul.f32 %v253, %v623
  %v657 = vmul.f32 %v256, %v628
  %v658 = vmul.f32 %v258, %v633
  %v659 = vmul.f32 %v261, %v638
  %v660 = vmul.f32 %v263, %v643
  %v661 = vmul.f32 %v266, %v648
  %v662 = vmul.f32 %v268, %v653
  %664 = vset.pattern.permute.xlu0 0
  %665 = vperm.xlu0 %664, %v607
  %v666 = vpop.permute.xlu0 %665
  %669 = vset.pattern.permute.xlu0 0
  %670 = vperm.xlu0 %669, %v608
  %v671 = vpop.permute.xlu0 %670
  %674 = vset.pattern.permute.xlu0 0
  %675 = vperm.xlu0 %674, %v609
  %v676 = vpop.permute.xlu0 %675
  %679 = vset.pattern.permute.xlu0 0
  %680 = vperm.xlu0 %679, %v610
  %v681 = vpop.permute.xlu0 %680
  %684 = vset.pattern.permute.xlu0 0
  %685 = vperm.xlu0 %684, %v611
  %v686 = vpop.permute.xlu0 %685
  %689 = vset.pattern.permute.xlu0 0
  %690 = vperm.xlu0 %689, %v612
  %v691 = vpop.permute.xlu0 %690
  %694 = vset.pattern.permute.xlu0 0
  %695 = vperm.xlu0 %694, %v613
  %v696 = vpop.permute.xlu0 %695
  %699 = vset.pattern.permute.xlu0 0
  %700 = vperm.xlu0 %699, %v614
  %v701 = vpop.permute.xlu0 %700
  %v703 = vadd.f32 %v655, %v666
  %v704 = vadd.f32 %v656, %v671
  %v705 = vadd.f32 %v657, %v676
  %v706 = vadd.f32 %v658, %v681
  %v707 = vadd.f32 %v659, %v686
  %v708 = vadd.f32 %v660, %v691
  %v709 = vadd.f32 %v661, %v696
  %v710 = vadd.f32 %v662, %v701
  %711 = vset.pattern.permute.xlu0 3
  %712 = vperm.xlu0 %711, %v559
  %v713 = vpop.permute.xlu0 %712
  %715 = vset.pattern.permute.xlu0 3
  %716 = vperm.xlu0 %715, %v560
  %v717 = vpop.permute.xlu0 %716
  %719 = vset.pattern.permute.xlu0 3
  %720 = vperm.xlu0 %719, %v561
  %v721 = vpop.permute.xlu0 %720
  %723 = vset.pattern.permute.xlu0 3
  %724 = vperm.xlu0 %723, %v562
  %v725 = vpop.permute.xlu0 %724
  %727 = vset.pattern.permute.xlu0 3
  %728 = vperm.xlu0 %727, %v563
  %v729 = vpop.permute.xlu0 %728
  %731 = vset.pattern.permute.xlu0 3
  %732 = vperm.xlu0 %731, %v564
  %v733 = vpop.permute.xlu0 %732
  %735 = vset.pattern.permute.xlu0 3
  %736 = vperm.xlu0 %735, %v565
  %v737 = vpop.permute.xlu0 %736
  %739 = vset.pattern.permute.xlu0 3
  %740 = vperm.xlu0 %739, %v566
  %v741 = vpop.permute.xlu0 %740
  %v743 = vmul.f32 %v251, %v713
  %v744 = vmul.f32 %v253, %v717
  %v745 = vmul.f32 %v256, %v721
  %v746 = vmul.f32 %v258, %v725
  %v747 = vmul.f32 %v261, %v729
  %v748 = vmul.f32 %v263, %v733
  %v749 = vmul.f32 %v266, %v737
  %v750 = vmul.f32 %v268, %v741
  %751 = vset.pattern.permute.xlu0 1
  %752 = vperm.xlu0 %751, %v607
  %v753 = vpop.permute.xlu0 %752
  %755 = vset.pattern.permute.xlu0 1
  %756 = vperm.xlu0 %755, %v608
  %v757 = vpop.permute.xlu0 %756
  %759 = vset.pattern.permute.xlu0 1
  %760 = vperm.xlu0 %759, %v609
  %v761 = vpop.permute.xlu0 %760
  %763 = vset.pattern.permute.xlu0 1
  %764 = vperm.xlu0 %763, %v610
  %v765 = vpop.permute.xlu0 %764
  %767 = vset.pattern.permute.xlu0 1
  %768 = vperm.xlu0 %767, %v611
  %v769 = vpop.permute.xlu0 %768
  %771 = vset.pattern.permute.xlu0 1
  %772 = vperm.xlu0 %771, %v612
  %v773 = vpop.permute.xlu0 %772
  %775 = vset.pattern.permute.xlu0 1
  %776 = vperm.xlu0 %775, %v613
  %v777 = vpop.permute.xlu0 %776
  %779 = vset.pattern.permute.xlu0 1
  %780 = vperm.xlu0 %779, %v614
  %v781 = vpop.permute.xlu0 %780
  %v783 = vadd.f32 %v743, %v753
  %v784 = vadd.f32 %v744, %v757
  %v785 = vadd.f32 %v745, %v761
  %v786 = vadd.f32 %v746, %v765
  %v787 = vadd.f32 %v747, %v769
  %v788 = vadd.f32 %v748, %v773
  %v789 = vadd.f32 %v749, %v777
  %v790 = vadd.f32 %v750, %v781
  %v791 = vmul.f32 %v251, 1.442695
  %v792 = vpow.pop %v791
  %v793 = vmul.f32 %v253, 1.442695
  %v794 = vpow.pop %v793
  %v795 = vmul.f32 %v256, 1.442695
  %v796 = vpow.pop %v795
  %v797 = vmul.f32 %v258, 1.442695
  %v798 = vpow.pop %v797
  %v799 = vmul.f32 %v261, 1.442695
  %v800 = vpow.pop %v799
  %v801 = vmul.f32 %v263, 1.442695
  %v802 = vpow.pop %v801
  %v803 = vmul.f32 %v266, 1.442695
  %v804 = vpow.pop %v803
  %v805 = vmul.f32 %v268, 1.442695
  %v806 = vpow.pop %v805
  %v807 = vmul.f32 %v792, %v618
  %v808 = vmul.f32 %v794, %v623
  %v809 = vmul.f32 %v796, %v628
  %v810 = vmul.f32 %v798, %v633
  %v811 = vmul.f32 %v800, %v638
  %v812 = vmul.f32 %v802, %v643
  %v813 = vmul.f32 %v804, %v648
  %v814 = vmul.f32 %v806, %v653
  %v815 = vmul.f32 %v792, %v713
  %v816 = vmul.f32 %v794, %v717
  %v817 = vmul.f32 %v796, %v721
  %v818 = vmul.f32 %v798, %v725
  %v819 = vmul.f32 %v800, %v729
  %v820 = vmul.f32 %v802, %v733
  %v821 = vmul.f32 %v804, %v737
  %v822 = vmul.f32 %v806, %v741
  %v823 = vmul.f32 %v807, 0.5
  %v824 = vmul.f32 %v808, 0.5
  %v825 = vmul.f32 %v809, 0.5
  %v826 = vmul.f32 %v810, 0.5
  %v827 = vmul.f32 %v811, 0.5
  %v828 = vmul.f32 %v812, 0.5
  %v829 = vmul.f32 %v813, 0.5
  %v830 = vmul.f32 %v814, 0.5
  %839 = vrot.lane.b32.xlu0 %v823, 120
  %v840 = vpop.permute.xlu0 %839
  %841 = vrot.lane.b32.xlu0 %v824, 120
  %v842 = vpop.permute.xlu0 %841
  %843 = vrot.lane.b32.xlu0 %v825, 120
  %v844 = vpop.permute.xlu0 %843
  %845 = vrot.lane.b32.xlu0 %v826, 120
  %v846 = vpop.permute.xlu0 %845
  %847 = vrot.lane.b32.xlu0 %v827, 120
  %v848 = vpop.permute.xlu0 %847
  %849 = vrot.lane.b32.xlu0 %v828, 120
  %v850 = vpop.permute.xlu0 %849
  %851 = vrot.lane.b32.xlu0 %v829, 120
  %v852 = vpop.permute.xlu0 %851
  %853 = vrot.lane.b32.xlu0 %v830, 120
  %v854 = vpop.permute.xlu0 %853
  %v863 = vsub.f32 %v703, %v840
  %v864 = vsub.f32 %v704, %v842
  %v865 = vsub.f32 %v705, %v844
  %v866 = vsub.f32 %v706, %v846
  %v867 = vsub.f32 %v707, %v848
  %v868 = vsub.f32 %v708, %v850
  %v869 = vsub.f32 %v709, %v852
  %v870 = vsub.f32 %v710, %v854
  %v871 = vmax.f32 %v863, 0.0
  %v872 = vmax.f32 %v864, 0.0
  %v873 = vmax.f32 %v865, 0.0
  %v874 = vmax.f32 %v866, 0.0
  %v875 = vmax.f32 %v867, 0.0
  %v876 = vmax.f32 %v868, 0.0
  %v877 = vmax.f32 %v869, 0.0
  %v878 = vmax.f32 %v870, 0.0
  %v879 = vmin.f32 %v871, 32.0
  %v880 = vmin.f32 %v872, 32.0
  %v881 = vmin.f32 %v873, 32.0
  %v882 = vmin.f32 %v874, 32.0
  %v883 = vmin.f32 %v875, 32.0
  %v884 = vmin.f32 %v876, 32.0
  %v885 = vmin.f32 %v877, 32.0
  %v886 = vmin.f32 %v878, 32.0
  %v887 = vmul.f32 %v815, 0.5
  %v888 = vmul.f32 %v816, 0.5
  %v889 = vmul.f32 %v817, 0.5
  %v890 = vmul.f32 %v818, 0.5
  %v891 = vmul.f32 %v819, 0.5
  %v892 = vmul.f32 %v820, 0.5
  %v893 = vmul.f32 %v821, 0.5
  %v894 = vmul.f32 %v822, 0.5
  %903 = vrot.lane.b32.xlu0 %v887, 120
  %v904 = vpop.permute.xlu0 %903
  %905 = vrot.lane.b32.xlu0 %v888, 120
  %v906 = vpop.permute.xlu0 %905
  %907 = vrot.lane.b32.xlu0 %v889, 120
  %v908 = vpop.permute.xlu0 %907
  %909 = vrot.lane.b32.xlu0 %v890, 120
  %v910 = vpop.permute.xlu0 %909
  %911 = vrot.lane.b32.xlu0 %v891, 120
  %v912 = vpop.permute.xlu0 %911
  %913 = vrot.lane.b32.xlu0 %v892, 120
  %v914 = vpop.permute.xlu0 %913
  %915 = vrot.lane.b32.xlu0 %v893, 120
  %v916 = vpop.permute.xlu0 %915
  %917 = vrot.lane.b32.xlu0 %v894, 120
  %v918 = vpop.permute.xlu0 %917
  %v927 = vsub.f32 %v783, %v904
  %v928 = vsub.f32 %v784, %v906
  %v929 = vsub.f32 %v785, %v908
  %v930 = vsub.f32 %v786, %v910
  %v931 = vsub.f32 %v787, %v912
  %v932 = vsub.f32 %v788, %v914
  %v933 = vsub.f32 %v789, %v916
  %v934 = vsub.f32 %v790, %v918
  %v935 = vmax.f32 %v927, 0.0
  %v936 = vmax.f32 %v928, 0.0
  %v937 = vmax.f32 %v929, 0.0
  %v938 = vmax.f32 %v930, 0.0
  %v939 = vmax.f32 %v931, 0.0
  %v940 = vmax.f32 %v932, 0.0
  %v941 = vmax.f32 %v933, 0.0
  %v942 = vmax.f32 %v934, 0.0
  %v943 = vmin.f32 %v935, 32.0
  %v944 = vmin.f32 %v936, 32.0
  %v945 = vmin.f32 %v937, 32.0
  %v946 = vmin.f32 %v938, 32.0
  %v947 = vmin.f32 %v939, 32.0
  %v948 = vmin.f32 %v940, 32.0
  %v949 = vmin.f32 %v941, 32.0
  %v950 = vmin.f32 %v942, 32.0
  %v951 = vadd.f32 %v703, %v840
  %v952 = vadd.f32 %v704, %v842
  %v953 = vadd.f32 %v705, %v844
  %v954 = vadd.f32 %v706, %v846
  %v955 = vadd.f32 %v707, %v848
  %v956 = vadd.f32 %v708, %v850
  %v957 = vadd.f32 %v709, %v852
  %v958 = vadd.f32 %v710, %v854
  %v959 = vmax.f32 %v951, 0.0
  %v960 = vmax.f32 %v952, 0.0
  %v961 = vmax.f32 %v953, 0.0
  %v962 = vmax.f32 %v954, 0.0
  %v963 = vmax.f32 %v955, 0.0
  %v964 = vmax.f32 %v956, 0.0
  %v965 = vmax.f32 %v957, 0.0
  %v966 = vmax.f32 %v958, 0.0
  %v967 = vmin.f32 %v959, 32.0
  %v968 = vmin.f32 %v960, 32.0
  %v969 = vmin.f32 %v961, 32.0
  %v970 = vmin.f32 %v962, 32.0
  %v971 = vmin.f32 %v963, 32.0
  %v972 = vmin.f32 %v964, 32.0
  %v973 = vmin.f32 %v965, 32.0
  %v974 = vmin.f32 %v966, 32.0
  %v975 = vadd.f32 %v783, %v904
  %v976 = vadd.f32 %v784, %v906
  %v977 = vadd.f32 %v785, %v908
  %v978 = vadd.f32 %v786, %v910
  %v979 = vadd.f32 %v787, %v912
  %v980 = vadd.f32 %v788, %v914
  %v981 = vadd.f32 %v789, %v916
  %v982 = vadd.f32 %v790, %v918
  %v983 = vmax.f32 %v975, 0.0
  %v984 = vmax.f32 %v976, 0.0
  %v985 = vmax.f32 %v977, 0.0
  %v986 = vmax.f32 %v978, 0.0
  %v987 = vmax.f32 %v979, 0.0
  %v988 = vmax.f32 %v980, 0.0
  %v989 = vmax.f32 %v981, 0.0
  %v990 = vmax.f32 %v982, 0.0
  %v991 = vmin.f32 %v983, 32.0
  %v992 = vmin.f32 %v984, 32.0
  %v993 = vmin.f32 %v985, 32.0
  %v994 = vmin.f32 %v986, 32.0
  %v995 = vmin.f32 %v987, 32.0
  %v996 = vmin.f32 %v988, 32.0
  %v997 = vmin.f32 %v989, 32.0
  %v998 = vmin.f32 %v990, 32.0
  %1007 = vrot.lane.b32.xlu0 %v967, 8
  %v1008 = vpop.permute.xlu0 %1007
  %1009 = vrot.lane.b32.xlu0 %v968, 8
  %v1010 = vpop.permute.xlu0 %1009
  %1011 = vrot.lane.b32.xlu0 %v969, 8
  %v1012 = vpop.permute.xlu0 %1011
  %1013 = vrot.lane.b32.xlu0 %v970, 8
  %v1014 = vpop.permute.xlu0 %1013
  %1015 = vrot.lane.b32.xlu0 %v971, 8
  %v1016 = vpop.permute.xlu0 %1015
  %1017 = vrot.lane.b32.xlu0 %v972, 8
  %v1018 = vpop.permute.xlu0 %1017
  %1019 = vrot.lane.b32.xlu0 %v973, 8
  %v1020 = vpop.permute.xlu0 %1019
  %1021 = vrot.lane.b32.xlu0 %v974, 8
  %v1022 = vpop.permute.xlu0 %1021
  %1039 = vrot.lane.b32.xlu0 %v991, 8
  %v1040 = vpop.permute.xlu0 %1039
  %1041 = vrot.lane.b32.xlu0 %v992, 8
  %v1042 = vpop.permute.xlu0 %1041
  %1043 = vrot.lane.b32.xlu0 %v993, 8
  %v1044 = vpop.permute.xlu0 %1043
  %1045 = vrot.lane.b32.xlu0 %v994, 8
  %v1046 = vpop.permute.xlu0 %1045
  %1047 = vrot.lane.b32.xlu0 %v995, 8
  %v1048 = vpop.permute.xlu0 %1047
  %1049 = vrot.lane.b32.xlu0 %v996, 8
  %v1050 = vpop.permute.xlu0 %1049
  %1051 = vrot.lane.b32.xlu0 %v997, 8
  %v1052 = vpop.permute.xlu0 %1051
  %1053 = vrot.lane.b32.xlu0 %v998, 8
  %v1054 = vpop.permute.xlu0 %1053
  %v1063 = vsel %vm270, %v511, %v879
  %v1064 = vsel %vm270, %v512, %v880
  %v1065 = vsel %vm270, %v513, %v881
  %v1066 = vsel %vm270, %v514, %v882
  %v1067 = vsel %vm270, %v515, %v883
  %v1068 = vsel %vm270, %v516, %v884
  %v1069 = vsel %vm270, %v517, %v885
  %v1070 = vsel %vm270, %v518, %v886
  %vm1071 = vcmask 64512
  %v1072 = vsel %vm1071, %v1063, %v943
  %v1073 = vsel %vm1071, %v1064, %v944
  %v1074 = vsel %vm1071, %v1065, %v945
  %v1075 = vsel %vm1071, %v1066, %v946
  %v1076 = vsel %vm1071, %v1067, %v947
  %v1077 = vsel %vm1071, %v1068, %v948
  %v1078 = vsel %vm1071, %v1069, %v949
  %v1079 = vsel %vm1071, %v1070, %v950
  %vm1080 = vcmask 97280
  %v1081 = vsel %vm1080, %v1072, %v1008
  %v1082 = vsel %vm1080, %v1073, %v1010
  %v1083 = vsel %vm1080, %v1074, %v1012
  %v1084 = vsel %vm1080, %v1075, %v1014
  %v1085 = vsel %vm1080, %v1076, %v1016
  %v1086 = vsel %vm1080, %v1077, %v1018
  %v1087 = vsel %vm1080, %v1078, %v1020
  %v1088 = vsel %vm1080, %v1079, %v1022
  %vm1089 = vcmask 130048
  %v1090 = vsel %vm1089, %v1081, %v1040
  %v1091 = vsel %vm1089, %v1082, %v1042
  %v1092 = vsel %vm1089, %v1083, %v1044
  %v1093 = vsel %vm1089, %v1084, %v1046
  %v1094 = vsel %vm1089, %v1085, %v1048
  %v1095 = vsel %vm1089, %v1086, %v1050
  %v1096 = vsel %vm1089, %v1087, %v1052
  %v1097 = vsel %vm1089, %v1088, %v1054
  %vm1098 = vcmask 162816
  %v1099 = vsel %vm1098, %v1090, 0.0
  %v1100 = vsel %vm1098, %v1091, 0.0
  %v1101 = vsel %vm1098, %v1092, 0.0
  %v1102 = vsel %vm1098, %v1093, 0.0
  %v1103 = vsel %vm1098, %v1094, 0.0
  %v1104 = vsel %vm1098, %v1095, 0.0
  %v1105 = vsel %vm1098, %v1096, 0.0
  %v1106 = vsel %vm1098, %v1097, 0.0
  %1107 = vst [vmem:[%s9] sm:$0xff] %v1099
  %1108 = vst [vmem:[%s9 + $0x8] sm:$0xff] %v1100
  %1109 = vst [vmem:[%s9 + $0x10] sm:$0xff] %v1101
  %1110 = vst [vmem:[%s9 + $0x18] sm:$0xff] %v1102
  %1111 = vst [vmem:[%s9 + $0x20] sm:$0xff] %v1103
  %1112 = vst [vmem:[%s9 + $0x28] sm:$0xff] %v1104
  %1113 = vst [vmem:[%s9 + $0x30] sm:$0xff] %v1105
  %1114 = vst [vmem:[%s9 + $0x38] sm:$0xff] %v1106
  // Predicated region
  $region38: #{_forward_device.8} parent=0 // pred_check
    _
  $region39: #{_forward_device.8} parent=0 // pred_check_branch
    %1116 = sbr.rel (0) target = $region41
  $region40: #{_forward_device.8} parent=0 // pred_region
    _
  $region41: #{_forward_device.8} parent=0 // pred_fallthru
    _
  // Predicated region
  $region42: #{_forward_device.8} parent=0 // pred_check
    _
  $region43: #{_forward_device.8} parent=0 // pred_check_branch
    %1118 = sbr.rel (0) target = $region45
  $region44: #{_forward_device.8} parent=0 // pred_region
    _
  $region45: #{_forward_device.8} parent=0 // pred_fallthru
    _

// kernel: _forward_device.9
$region0: #{_forward_device.9}
  #allocation0 [shape = 'u32[]', space=smem, size = 0x4, offset = 0x4, fixed_abs, tag = 'smem constant byte address 0x4 - core index']
  #allocation1 [shape = 'u32[72,128]{1,0:T(1,128)}', space=vmem, size = 0x9000, scoped, tag = 'internal scratch']
  #allocation2 [shape = 'f32[128,128]{1,0:T(8,128)}', space=vmem, size = 0x10000, scoped, tag = 'scratch operand']
  %s0 = inlined_call_operand.vmem [shape: f32[6,128,4], index: 0, kind: input, shape index: {}]
  %s1 = inlined_call_operand.vmem [shape: f32[6,4,128], index: 1, kind: input, shape index: {}]
  %s2 = inlined_call_operand.vmem [shape: f32[6,1,128], index: 2, kind: input, shape index: {}]
  %s3 = inlined_call_operand.vmem [shape: f32[6,1,128], index: 3, kind: output, shape index: {}]
  %s4 = sld [smem:[#allocation0]]
  $region52: #{_forward_device.9} parent=0
    _
  %s6 = ssub.s32 1, %s4
  %s7 = scalar_select 0, %s6, %s4
  loop: start=0, step=1, limit=8
  $region2: #{_forward_device.9} parent=0 // loop_pre_header
    _
  $region3: #{_forward_device.9} parent=0 // loop_header
    %s9 = sphi 0, %s13
    %p10 = scmp.ge.s32.totalorder %s9, 8
    %s19 = sphi 0, %s21
    %s22 = sphi 0, %s19
    %s23 = sphi 0, %s22
    %s39 = sphi 0, %s23
    %s45 = sphi 0, %s47
    %s48 = sphi 0, %s45
    %s49 = sphi 0, %s48
    %s65 = sphi 0, %s49
    %s71 = sphi 0, %s73
    %s74 = sphi 0, %s71
    %s75 = sphi 0, %s74
    %s91 = sphi 0, %s75
    %s97 = sphi 0, %s99
    %s100 = sphi 0, %s97
    %s101 = sphi 0, %s100
    %s117 = sphi 0, %s101
  $region4: #{_forward_device.9} parent=0 // loop_header_branch
    %12 = sbr.rel (%p10) target = $region8
  $region5: #{_forward_device.9} parent=0 // loop_body
    %s14 = ssub.s32 %s9, 1
    %s15 = ssub.s32 %s9, 2
    %s16 = sadd.s32 %s9, 1
    %s17 = ssub.s32 %s9, %s16
    %p18 = scmp.eq.s32.totalorder %s17, 0
    %s20 = sadd.s32 %s19, 1
    %s21 = scalar_select %p18, %s19, %s20
    %p24 = pneg %p18
    %p25 = scmp.eq.s32.totalorder %s9, 5
    %p26 = por %p24, %p25
    %p27 = scmp.ne.s32.totalorder %s19, %s22
    %p28 = scmp.eq.s32.totalorder %s9, 0
    %p29 = por %p27, %p28
    %p30 = scmp.ne.s32.totalorder %s19, %s22
    %p31 = scmp.eq.s32.totalorder %s14, 5
    %p32 = por %p30, %p31
    %p33 = scmp.ne.s32.totalorder %s22, %s23
    %p34 = scmp.eq.s32.totalorder %s14, 0
    %p35 = por %p33, %p34
    %p36 = scmp.ne.s32.totalorder %s22, %s23
    %p37 = scmp.eq.s32.totalorder %s15, 5
    %p38 = por %p36, %p37
    %p40 = scmp.ne.s32.totalorder %s23, %s39
    %p41 = scmp.eq.s32.totalorder %s15, 0
    %p42 = por %p40, %p41
    %s43 = ssub.s32 %s9, %s16
    %p44 = scmp.eq.s32.totalorder %s43, 0
    %s46 = sadd.s32 %s45, 1
    %s47 = scalar_select %p44, %s45, %s46
    %p50 = pneg %p44
    %p51 = scmp.eq.s32.totalorder %s9, 5
    %p52 = por %p50, %p51
    %p53 = scmp.ne.s32.totalorder %s45, %s48
    %p54 = scmp.eq.s32.totalorder %s9, 0
    %p55 = por %p53, %p54
    %p56 = scmp.ne.s32.totalorder %s45, %s48
    %p57 = scmp.eq.s32.totalorder %s14, 5
    %p58 = por %p56, %p57
    %p59 = scmp.ne.s32.totalorder %s48, %s49
    %p60 = scmp.eq.s32.totalorder %s14, 0
    %p61 = por %p59, %p60
    %p62 = scmp.ne.s32.totalorder %s48, %s49
    %p63 = scmp.eq.s32.totalorder %s15, 5
    %p64 = por %p62, %p63
    %p66 = scmp.ne.s32.totalorder %s49, %s65
    %p67 = scmp.eq.s32.totalorder %s15, 0
    %p68 = por %p66, %p67
    %s69 = ssub.s32 %s9, %s16
    %p70 = scmp.eq.s32.totalorder %s69, 0
    %s72 = sadd.s32 %s71, 1
    %s73 = scalar_select %p70, %s71, %s72
    %p76 = pneg %p70
    %p77 = scmp.eq.s32.totalorder %s9, 5
    %p78 = por %p76, %p77
    %p79 = scmp.ne.s32.totalorder %s71, %s74
    %p80 = scmp.eq.s32.totalorder %s9, 0
    %p81 = por %p79, %p80
    %p82 = scmp.ne.s32.totalorder %s71, %s74
    %p83 = scmp.eq.s32.totalorder %s14, 5
    %p84 = por %p82, %p83
    %p85 = scmp.ne.s32.totalorder %s74, %s75
    %p86 = scmp.eq.s32.totalorder %s14, 0
    %p87 = por %p85, %p86
    %p88 = scmp.ne.s32.totalorder %s74, %s75
    %p89 = scmp.eq.s32.totalorder %s15, 5
    %p90 = por %p88, %p89
    %p92 = scmp.ne.s32.totalorder %s75, %s91
    %p93 = scmp.eq.s32.totalorder %s15, 0
    %p94 = por %p92, %p93
    %s95 = ssub.s32 %s9, %s16
    %p96 = scmp.eq.s32.totalorder %s95, 0
    %s98 = sadd.s32 %s97, 1
    %s99 = scalar_select %p96, %s97, %s98
    %p102 = pneg %p96
    %p103 = scmp.eq.s32.totalorder %s9, 5
    %p104 = por %p102, %p103
    %p105 = scmp.ne.s32.totalorder %s97, %s100
    %p106 = scmp.eq.s32.totalorder %s9, 0
    %p107 = por %p105, %p106
    %p108 = scmp.ne.s32.totalorder %s97, %s100
    %p109 = scmp.eq.s32.totalorder %s14, 5
    %p110 = por %p108, %p109
    %p111 = scmp.ne.s32.totalorder %s100, %s101
    %p112 = scmp.eq.s32.totalorder %s14, 0
    %p113 = por %p111, %p112
    %p114 = scmp.ne.s32.totalorder %s100, %s101
    %p115 = scmp.eq.s32.totalorder %s15, 5
    %p116 = por %p114, %p115
    %p118 = scmp.ne.s32.totalorder %s101, %s117
    %p119 = scmp.eq.s32.totalorder %s15, 0
    %p120 = por %p118, %p119
    %p121 = scmp.le.s32.totalorder 1, %s9
    %p122 = scmp.lt.s32.totalorder %s9, 7
    %p123 = pnand %p121, %p122
    %p124 = pneg %p123
    // Predicated region
    $region9: #{_forward_device.9} parent=5 // pred_check
      _
    $region10: #{_forward_device.9} parent=5 // pred_check_branch
      %126 = sbr.rel (%p123) target = $region12
    $region11: #{_forward_device.9} parent=5 // pred_region
      %s127 = ssub.s32 %s9, 1
    $region12: #{_forward_device.9} parent=5 // pred_fallthru
      _
    %p128 = scmp.lt.s32.totalorder %s9, 6
    // Predicated region
    $region13: #{_forward_device.9} parent=5 // pred_check
      %p129 = pneg %p128
    $region14: #{_forward_device.9} parent=5 // pred_check_branch
      %131 = sbr.rel (%p129) target = $region16
    $region15: #{_forward_device.9} parent=5 // pred_region
      // Predicated region
      $region17: #{_forward_device.9} parent=15 // pred_check
        %p132 = pneg %p29
      $region18: #{_forward_device.9} parent=15 // pred_check_branch
        %134 = sbr.rel (%p132) target = $region20
      $region19: #{_forward_device.9} parent=15 // pred_region
        %p135 = scmp.lt.s32.totalorder %s9, 5
        %s136 = scalar_select %p135, %s9, 5
        %s137 = smul.addr %s136, 16
        %s138 = smul.addr %s137, 8
        %s139 = scalar_lea.vmem %s0, %s138
      $region20: #{_forward_device.9} parent=15 // pred_fallthru
        _
      // Predicated region
      $region21: #{_forward_device.9} parent=15 // pred_check
        %p140 = pneg %p55
      $region22: #{_forward_device.9} parent=15 // pred_check_branch
        %142 = sbr.rel (%p140) target = $region24
      $region23: #{_forward_device.9} parent=15 // pred_region
        %p143 = scmp.lt.s32.totalorder %s9, 5
        %s144 = scalar_select %p143, %s9, 5
        %s145 = smul.addr %s144, 4
        %s146 = scalar_lea.vmem %s1, %s145
      $region24: #{_forward_device.9} parent=15 // pred_fallthru
        _
      // Predicated region
      $region25: #{_forward_device.9} parent=15 // pred_check
        %p147 = pneg %p81
      $region26: #{_forward_device.9} parent=15 // pred_check_branch
        %149 = sbr.rel (%p147) target = $region28
      $region27: #{_forward_device.9} parent=15 // pred_region
        %p150 = scmp.lt.s32.totalorder %s9, 5
        %s151 = scalar_select %p150, %s9, 5
        %s152 = scalar_lea.vmem %s2, %s151
      $region28: #{_forward_device.9} parent=15 // pred_fallthru
        _
    $region16: #{_forward_device.9} parent=5 // pred_fallthru
      _
    %p153 = scmp.le.s32.totalorder 1, %s9
    %p154 = scmp.lt.s32.totalorder %s9, 7
    %p155 = pnand %p153, %p154
    %p156 = pneg %p155
    // Predicated region
    $region29: #{_forward_device.9} parent=5 // pred_check
      _
    $region30: #{_forward_device.9} parent=5 // pred_check_branch
      %158 = sbr.rel (%p155) target = $region32
    $region31: #{_forward_device.9} parent=5 // pred_region
      %s159 = ssub.s32 %s9, 1
      %p160 = scmp.lt.s32.totalorder %s14, 5
      %s161 = scalar_select %p160, %s14, 5
      %s162 = smul.addr %s161, 16
      %s163 = smul.addr %s162, 8
      %s164 = scalar_lea.vmem %s0, %s163
      %p165 = pneg %p35
      %p166 = pneg %p32
      %p167 = scmp.lt.s32.totalorder %s14, 5
      %s168 = scalar_select %p167, %s14, 5
      %s169 = smul.addr %s168, 4
      %s170 = scalar_lea.vmem %s1, %s169
      %p171 = pneg %p61
      %p172 = pneg %p58
      %p173 = scmp.lt.s32.totalorder %s14, 5
      %s174 = scalar_select %p173, %s14, 5
      %s175 = scalar_lea.vmem %s2, %s174
      %p176 = pneg %p87
      %p177 = pneg %p84
      %p178 = pneg %p113
      %p179 = pneg %p110
      %p180 = scmp.lt.s32.totalorder %s14, 5
      %s181 = scalar_select %p180, %s14, 5
      %s182 = scalar_lea.vmem %s3, %s181
      %p183 = scmp.lt.s32.totalorder %s14, 5
      %s184 = scalar_select %p183, %s14, 5
      %s185 = smul.addr %s184, 16
      %s186 = smul.addr %s185, 8
      %s187 = scalar_lea.vmem %s0, %s186
      %p188 = scmp.lt.s32.totalorder %s14, 5
      %s189 = scalar_select %p188, %s14, 5
      %s190 = smul.addr %s189, 4
      %s191 = scalar_lea.vmem %s1, %s190
      %p192 = scmp.lt.s32.totalorder %s14, 5
      %s193 = scalar_select %p192, %s14, 5
      %s194 = scalar_lea.vmem %s2, %s193
      %p195 = scmp.lt.s32.totalorder %s14, 5
      %s196 = scalar_select %p195, %s14, 5
      %s197 = scalar_lea.vmem %s3, %s196
      %v198 = vld [vmem:[%s187] sm:$0xff]
      %v199 = vld [vmem:[%s187 + $0x8] sm:$0xff]
      %v200 = vld [vmem:[%s187 + $0x10] sm:$0xff]
      %v201 = vld [vmem:[%s187 + $0x18] sm:$0xff]
      %v202 = vld [vmem:[%s187 + $0x20] sm:$0xff]
      %v203 = vld [vmem:[%s187 + $0x28] sm:$0xff]
      %v204 = vld [vmem:[%s187 + $0x30] sm:$0xff]
      %v205 = vld [vmem:[%s187 + $0x38] sm:$0xff]
      %v206 = vld [vmem:[%s187 + $0x40] sm:$0xff]
      %v207 = vld [vmem:[%s187 + $0x48] sm:$0xff]
      %v208 = vld [vmem:[%s187 + $0x50] sm:$0xff]
      %v209 = vld [vmem:[%s187 + $0x58] sm:$0xff]
      %v210 = vld [vmem:[%s187 + $0x60] sm:$0xff]
      %v211 = vld [vmem:[%s187 + $0x68] sm:$0xff]
      %v212 = vld [vmem:[%s187 + $0x70] sm:$0xff]
      %v213 = vld [vmem:[%s187 + $0x78] sm:$0xff]
      %v214 = vld [vmem:[%s191] sm:$0xf]
      %231 = vrot.lane.b32.xlu0 %v198, 2
      %v232 = vpop.permute.xlu0 %231
      %233 = vrot.lane.b32.xlu0 %v199, 2
      %v234 = vpop.permute.xlu0 %233
      %235 = vrot.lane.b32.xlu0 %v200, 2
      %v236 = vpop.permute.xlu0 %235
      %237 = vrot.lane.b32.xlu0 %v201, 2
      %v238 = vpop.permute.xlu0 %237
      %239 = vrot.lane.b32.xlu0 %v202, 2
      %v240 = vpop.permute.xlu0 %239
      %241 = vrot.lane.b32.xlu0 %v203, 2
      %v242 = vpop.permute.xlu0 %241
      %243 = vrot.lane.b32.xlu0 %v204, 2
      %v244 = vpop.permute.xlu0 %243
      %245 = vrot.lane.b32.xlu0 %v205, 2
      %v246 = vpop.permute.xlu0 %245
      %247 = vrot.lane.b32.xlu0 %v206, 2
      %v248 = vpop.permute.xlu0 %247
      %249 = vrot.lane.b32.xlu0 %v207, 2
      %v250 = vpop.permute.xlu0 %249
      %251 = vrot.lane.b32.xlu0 %v208, 2
      %v252 = vpop.permute.xlu0 %251
      %253 = vrot.lane.b32.xlu0 %v209, 2
      %v254 = vpop.permute.xlu0 %253
      %255 = vrot.lane.b32.xlu0 %v210, 2
      %v256 = vpop.permute.xlu0 %255
      %257 = vrot.lane.b32.xlu0 %v211, 2
      %v258 = vpop.permute.xlu0 %257
      %259 = vrot.lane.b32.xlu0 %v212, 2
      %v260 = vpop.permute.xlu0 %259
      %261 = vrot.lane.b32.xlu0 %v213, 2
      %v262 = vpop.permute.xlu0 %261
      %v279 = vsub.f32 %v198, %v232
      %v280 = vsub.f32 %v199, %v234
      %v281 = vsub.f32 %v200, %v236
      %v282 = vsub.f32 %v201, %v238
      %v283 = vsub.f32 %v202, %v240
      %v284 = vsub.f32 %v203, %v242
      %v285 = vsub.f32 %v204, %v244
      %v286 = vsub.f32 %v205, %v246
      %v287 = vsub.f32 %v206, %v248
      %v288 = vsub.f32 %v207, %v250
      %v289 = vsub.f32 %v208, %v252
      %v290 = vsub.f32 %v209, %v254
      %v291 = vsub.f32 %v210, %v256
      %v292 = vsub.f32 %v211, %v258
      %v293 = vsub.f32 %v212, %v260
      %v294 = vsub.f32 %v213, %v262
      %311 = vrot.lane.b32.xlu0 %v279, 127
      %v312 = vpop.permute.xlu0 %311
      %313 = vrot.lane.b32.xlu0 %v280, 127
      %v314 = vpop.permute.xlu0 %313
      %315 = vrot.lane.b32.xlu0 %v281, 127
      %v316 = vpop.permute.xlu0 %315
      %317 = vrot.lane.b32.xlu0 %v282, 127
      %v318 = vpop.permute.xlu0 %317
      %319 = vrot.lane.b32.xlu0 %v283, 127
      %v320 = vpop.permute.xlu0 %319
      %321 = vrot.lane.b32.xlu0 %v284, 127
      %v322 = vpop.permute.xlu0 %321
      %323 = vrot.lane.b32.xlu0 %v285, 127
      %v324 = vpop.permute.xlu0 %323
      %325 = vrot.lane.b32.xlu0 %v286, 127
      %v326 = vpop.permute.xlu0 %325
      %327 = vrot.lane.b32.xlu0 %v287, 127
      %v328 = vpop.permute.xlu0 %327
      %329 = vrot.lane.b32.xlu0 %v288, 127
      %v330 = vpop.permute.xlu0 %329
      %331 = vrot.lane.b32.xlu0 %v289, 127
      %v332 = vpop.permute.xlu0 %331
      %333 = vrot.lane.b32.xlu0 %v290, 127
      %v334 = vpop.permute.xlu0 %333
      %335 = vrot.lane.b32.xlu0 %v291, 127
      %v336 = vpop.permute.xlu0 %335
      %337 = vrot.lane.b32.xlu0 %v292, 127
      %v338 = vpop.permute.xlu0 %337
      %339 = vrot.lane.b32.xlu0 %v293, 127
      %v340 = vpop.permute.xlu0 %339
      %341 = vrot.lane.b32.xlu0 %v294, 127
      %v342 = vpop.permute.xlu0 %341
      %v359 = vmul.f32 %v279, %v312
      %v360 = vmul.f32 %v280, %v314
      %v361 = vmul.f32 %v281, %v316
      %v362 = vmul.f32 %v282, %v318
      %v363 = vmul.f32 %v283, %v320
      %v364 = vmul.f32 %v284, %v322
      %v365 = vmul.f32 %v285, %v324
      %v366 = vmul.f32 %v286, %v326
      %v367 = vmul.f32 %v287, %v328
      %v368 = vmul.f32 %v288, %v330
      %v369 = vmul.f32 %v289, %v332
      %v370 = vmul.f32 %v290, %v334
      %v371 = vmul.f32 %v291, %v336
      %v372 = vmul.f32 %v292, %v338
      %v373 = vmul.f32 %v293, %v340
      %v374 = vmul.f32 %v294, %v342
      %v376 = vrot.slane %v214, 6
      %v378 = vsub.f32 %v214, %v376
      %v380 = vrot.slane %v378, 1
      %v382 = vmul.f32 %v378, %v380
      %383 = vset.pattern.permute.xlu0 2
      %384 = vperm.xlu0 %383, %v198
      %v385 = vpop.permute.xlu0 %384
      %387 = vset.pattern.permute.xlu0 2
      %388 = vperm.xlu0 %387, %v199
      %v389 = vpop.permute.xlu0 %388
      %391 = vset.pattern.permute.xlu0 2
      %392 = vperm.xlu0 %391, %v200
      %v393 = vpop.permute.xlu0 %392
      %395 = vset.pattern.permute.xlu0 2
      %396 = vperm.xlu0 %395, %v201
      %v397 = vpop.permute.xlu0 %396
      %399 = vset.pattern.permute.xlu0 2
      %400 = vperm.xlu0 %399, %v202
      %v401 = vpop.permute.xlu0 %400
      %403 = vset.pattern.permute.xlu0 2
      %404 = vperm.xlu0 %403, %v203
      %v405 = vpop.permute.xlu0 %404
      %407 = vset.pattern.permute.xlu0 2
      %408 = vperm.xlu0 %407, %v204
      %v409 = vpop.permute.xlu0 %408
      %411 = vset.pattern.permute.xlu0 2
      %412 = vperm.xlu0 %411, %v205
      %v413 = vpop.permute.xlu0 %412
      %415 = vset.pattern.permute.xlu0 2
      %416 = vperm.xlu0 %415, %v206
      %v417 = vpop.permute.xlu0 %416
      %419 = vset.pattern.permute.xlu0 2
      %420 = vperm.xlu0 %419, %v207
      %v421 = vpop.permute.xlu0 %420
      %423 = vset.pattern.permute.xlu0 2
      %424 = vperm.xlu0 %423, %v208
      %v425 = vpop.permute.xlu0 %424
      %427 = vset.pattern.permute.xlu0 2
      %428 = vperm.xlu0 %427, %v209
      %v429 = vpop.permute.xlu0 %428
      %431 = vset.pattern.permute.xlu0 2
      %432 = vperm.xlu0 %431, %v210
      %v433 = vpop.permute.xlu0 %432
      %435 = vset.pattern.permute.xlu0 2
      %436 = vperm.xlu0 %435, %v211
      %v437 = vpop.permute.xlu0 %436
      %439 = vset.pattern.permute.xlu0 2
      %440 = vperm.xlu0 %439, %v212
      %v441 = vpop.permute.xlu0 %440
      %443 = vset.pattern.permute.xlu0 2
      %444 = vperm.xlu0 %443, %v213
      %v445 = vpop.permute.xlu0 %444
      %v447 = vperm.slane %v214, 2
      %v448 = vmin.f32 %v385, %v447
      %v449 = vmin.f32 %v389, %v447
      %v450 = vmin.f32 %v393, %v447
      %v451 = vmin.f32 %v397, %v447
      %v452 = vmin.f32 %v401, %v447
      %v453 = vmin.f32 %v405, %v447
      %v454 = vmin.f32 %v409, %v447
      %v455 = vmin.f32 %v413, %v447
      %v456 = vmin.f32 %v417, %v447
      %v457 = vmin.f32 %v421, %v447
      %v458 = vmin.f32 %v425, %v447
      %v459 = vmin.f32 %v429, %v447
      %v460 = vmin.f32 %v433, %v447
      %v461 = vmin.f32 %v437, %v447
      %v462 = vmin.f32 %v441, %v447
      %v463 = vmin.f32 %v445, %v447
      %464 = vset.pattern.permute.xlu0 0
      %465 = vperm.xlu0 %464, %v198
      %v466 = vpop.permute.xlu0 %465
      %468 = vset.pattern.permute.xlu0 0
      %469 = vperm.xlu0 %468, %v199
      %v470 = vpop.permute.xlu0 %469
      %472 = vset.pattern.permute.xlu0 0
      %473 = vperm.xlu0 %472, %v200
      %v474 = vpop.permute.xlu0 %473
      %476 = vset.pattern.permute.xlu0 0
      %477 = vperm.xlu0 %476, %v201
      %v478 = vpop.permute.xlu0 %477
      %480 = vset.pattern.permute.xlu0 0
      %481 = vperm.xlu0 %480, %v202
      %v482 = vpop.permute.xlu0 %481
      %484 = vset.pattern.permute.xlu0 0
      %485 = vperm.xlu0 %484, %v203
      %v486 = vpop.permute.xlu0 %485
      %488 = vset.pattern.permute.xlu0 0
      %489 = vperm.xlu0 %488, %v204
      %v490 = vpop.permute.xlu0 %489
      %492 = vset.pattern.permute.xlu0 0
      %493 = vperm.xlu0 %492, %v205
      %v494 = vpop.permute.xlu0 %493
      %496 = vset.pattern.permute.xlu0 0
      %497 = vperm.xlu0 %496, %v206
      %v498 = vpop.permute.xlu0 %497
      %500 = vset.pattern.permute.xlu0 0
      %501 = vperm.xlu0 %500, %v207
      %v502 = vpop.permute.xlu0 %501
      %504 = vset.pattern.permute.xlu0 0
      %505 = vperm.xlu0 %504, %v208
      %v506 = vpop.permute.xlu0 %505
      %508 = vset.pattern.permute.xlu0 0
      %509 = vperm.xlu0 %508, %v209
      %v510 = vpop.permute.xlu0 %509
      %512 = vset.pattern.permute.xlu0 0
      %513 = vperm.xlu0 %512, %v210
      %v514 = vpop.permute.xlu0 %513
      %516 = vset.pattern.permute.xlu0 0
      %517 = vperm.xlu0 %516, %v211
      %v518 = vpop.permute.xlu0 %517
      %520 = vset.pattern.permute.xlu0 0
      %521 = vperm.xlu0 %520, %v212
      %v522 = vpop.permute.xlu0 %521
      %524 = vset.pattern.permute.xlu0 0
      %525 = vperm.xlu0 %524, %v213
      %v526 = vpop.permute.xlu0 %525
      %v528 = vperm.slane %v214, 0
      %v529 = vmax.f32 %v466, %v528
      %v530 = vmax.f32 %v470, %v528
      %v531 = vmax.f32 %v474, %v528
      %v532 = vmax.f32 %v478, %v528
      %v533 = vmax.f32 %v482, %v528
      %v534 = vmax.f32 %v486, %v528
      %v535 = vmax.f32 %v490, %v528
      %v536 = vmax.f32 %v494, %v528
      %v537 = vmax.f32 %v498, %v528
      %v538 = vmax.f32 %v502, %v528
      %v539 = vmax.f32 %v506, %v528
      %v540 = vmax.f32 %v510, %v528
      %v541 = vmax.f32 %v514, %v528
      %v542 = vmax.f32 %v518, %v528
      %v543 = vmax.f32 %v522, %v528
      %v544 = vmax.f32 %v526, %v528
      %v545 = vsub.f32 %v448, %v529
      %v546 = vsub.f32 %v449, %v530
      %v547 = vsub.f32 %v450, %v531
      %v548 = vsub.f32 %v451, %v532
      %v549 = vsub.f32 %v452, %v533
      %v550 = vsub.f32 %v453, %v534
      %v551 = vsub.f32 %v454, %v535
      %v552 = vsub.f32 %v455, %v536
      %v553 = vsub.f32 %v456, %v537
      %v554 = vsub.f32 %v457, %v538
      %v555 = vsub.f32 %v458, %v539
      %v556 = vsub.f32 %v459, %v540
      %v557 = vsub.f32 %v460, %v541
      %v558 = vsub.f32 %v461, %v542
      %v559 = vsub.f32 %v462, %v543
      %v560 = vsub.f32 %v463, %v544
      %v561 = vmax.f32 %v545, 0.0
      %v562 = vmax.f32 %v546, 0.0
      %v563 = vmax.f32 %v547, 0.0
      %v564 = vmax.f32 %v548, 0.0
      %v565 = vmax.f32 %v549, 0.0
      %v566 = vmax.f32 %v550, 0.0
      %v567 = vmax.f32 %v551, 0.0
      %v568 = vmax.f32 %v552, 0.0
      %v569 = vmax.f32 %v553, 0.0
      %v570 = vmax.f32 %v554, 0.0
      %v571 = vmax.f32 %v555, 0.0
      %v572 = vmax.f32 %v556, 0.0
      %v573 = vmax.f32 %v557, 0.0
      %v574 = vmax.f32 %v558, 0.0
      %v575 = vmax.f32 %v559, 0.0
      %v576 = vmax.f32 %v560, 0.0
      %577 = vset.pattern.permute.xlu0 3
      %578 = vperm.xlu0 %577, %v198
      %v579 = vpop.permute.xlu0 %578
      %581 = vset.pattern.permute.xlu0 3
      %582 = vperm.xlu0 %581, %v199
      %v583 = vpop.permute.xlu0 %582
      %585 = vset.pattern.permute.xlu0 3
      %586 = vperm.xlu0 %585, %v200
      %v587 = vpop.permute.xlu0 %586
      %589 = vset.pattern.permute.xlu0 3
      %590 = vperm.xlu0 %589, %v201
      %v591 = vpop.permute.xlu0 %590
      %593 = vset.pattern.permute.xlu0 3
      %594 = vperm.xlu0 %593, %v202
      %v595 = vpop.permute.xlu0 %594
      %597 = vset.pattern.permute.xlu0 3
      %598 = vperm.xlu0 %597, %v203
      %v599 = vpop.permute.xlu0 %598
      %601 = vset.pattern.permute.xlu0 3
      %602 = vperm.xlu0 %601, %v204
      %v603 = vpop.permute.xlu0 %602
      %605 = vset.pattern.permute.xlu0 3
      %606 = vperm.xlu0 %605, %v205
      %v607 = vpop.permute.xlu0 %606
      %609 = vset.pattern.permute.xlu0 3
      %610 = vperm.xlu0 %609, %v206
      %v611 = vpop.permute.xlu0 %610
      %613 = vset.pattern.permute.xlu0 3
      %614 = vperm.xlu0 %613, %v207
      %v615 = vpop.permute.xlu0 %614
      %617 = vset.pattern.permute.xlu0 3
      %618 = vperm.xlu0 %617, %v208
      %v619 = vpop.permute.xlu0 %618
      %621 = vset.pattern.permute.xlu0 3
      %622 = vperm.xlu0 %621, %v209
      %v623 = vpop.permute.xlu0 %622
      %625 = vset.pattern.permute.xlu0 3
      %626 = vperm.xlu0 %625, %v210
      %v627 = vpop.permute.xlu0 %626
      %629 = vset.pattern.permute.xlu0 3
      %630 = vperm.xlu0 %629, %v211
      %v631 = vpop.permute.xlu0 %630
      %633 = vset.pattern.permute.xlu0 3
      %634 = vperm.xlu0 %633, %v212
      %v635 = vpop.permute.xlu0 %634
      %637 = vset.pattern.permute.xlu0 3
      %638 = vperm.xlu0 %637, %v213
      %v639 = vpop.permute.xlu0 %638
      %v641 = vperm.slane %v214, 3
      %v642 = vmin.f32 %v579, %v641
      %v643 = vmin.f32 %v583, %v641
      %v644 = vmin.f32 %v587, %v641
      %v645 = vmin.f32 %v591, %v641
      %v646 = vmin.f32 %v595, %v641
      %v647 = vmin.f32 %v599, %v641
      %v648 = vmin.f32 %v603, %v641
      %v649 = vmin.f32 %v607, %v641
      %v650 = vmin.f32 %v611, %v641
      %v651 = vmin.f32 %v615, %v641
      %v652 = vmin.f32 %v619, %v641
      %v653 = vmin.f32 %v623, %v641
      %v654 = vmin.f32 %v627, %v641
      %v655 = vmin.f32 %v631, %v641
      %v656 = vmin.f32 %v635, %v641
      %v657 = vmin.f32 %v639, %v641
      %658 = vset.pattern.permute.xlu0 1
      %659 = vperm.xlu0 %658, %v198
      %v660 = vpop.permute.xlu0 %659
      %662 = vset.pattern.permute.xlu0 1
      %663 = vperm.xlu0 %662, %v199
      %v664 = vpop.permute.xlu0 %663
      %666 = vset.pattern.permute.xlu0 1
      %667 = vperm.xlu0 %666, %v200
      %v668 = vpop.permute.xlu0 %667
      %670 = vset.pattern.permute.xlu0 1
      %671 = vperm.xlu0 %670, %v201
      %v672 = vpop.permute.xlu0 %671
      %674 = vset.pattern.permute.xlu0 1
      %675 = vperm.xlu0 %674, %v202
      %v676 = vpop.permute.xlu0 %675
      %678 = vset.pattern.permute.xlu0 1
      %679 = vperm.xlu0 %678, %v203
      %v680 = vpop.permute.xlu0 %679
      %682 = vset.pattern.permute.xlu0 1
      %683 = vperm.xlu0 %682, %v204
      %v684 = vpop.permute.xlu0 %683
      %686 = vset.pattern.permute.xlu0 1
      %687 = vperm.xlu0 %686, %v205
      %v688 = vpop.permute.xlu0 %687
      %690 = vset.pattern.permute.xlu0 1
      %691 = vperm.xlu0 %690, %v206
      %v692 = vpop.permute.xlu0 %691
      %694 = vset.pattern.permute.xlu0 1
      %695 = vperm.xlu0 %694, %v207
      %v696 = vpop.permute.xlu0 %695
      %698 = vset.pattern.permute.xlu0 1
      %699 = vperm.xlu0 %698, %v208
      %v700 = vpop.permute.xlu0 %699
      %702 = vset.pattern.permute.xlu0 1
      %703 = vperm.xlu0 %702, %v209
      %v704 = vpop.permute.xlu0 %703
      %706 = vset.pattern.permute.xlu0 1
      %707 = vperm.xlu0 %706, %v210
      %v708 = vpop.permute.xlu0 %707
      %710 = vset.pattern.permute.xlu0 1
      %711 = vperm.xlu0 %710, %v211
      %v712 = vpop.permute.xlu0 %711
      %714 = vset.pattern.permute.xlu0 1
      %715 = vperm.xlu0 %714, %v212
      %v716 = vpop.permute.xlu0 %715
      %718 = vset.pattern.permute.xlu0 1
      %719 = vperm.xlu0 %718, %v213
      %v720 = vpop.permute.xlu0 %719
      %v722 = vperm.slane %v214, 1
      %v723 = vmax.f32 %v660, %v722
      %v724 = vmax.f32 %v664, %v722
      %v725 = vmax.f32 %v668, %v722
      %v726 = vmax.f32 %v672, %v722
      %v727 = vmax.f32 %v676, %v722
      %v728 = vmax.f32 %v680, %v722
      %v729 = vmax.f32 %v684, %v722
      %v730 = vmax.f32 %v688, %v722
      %v731 = vmax.f32 %v692, %v722
      %v732 = vmax.f32 %v696, %v722
      %v733 = vmax.f32 %v700, %v722
      %v734 = vmax.f32 %v704, %v722
      %v735 = vmax.f32 %v708, %v722
      %v736 = vmax.f32 %v712, %v722
      %v737 = vmax.f32 %v716, %v722
      %v738 = vmax.f32 %v720, %v722
      %v739 = vsub.f32 %v642, %v723
      %v740 = vsub.f32 %v643, %v724
      %v741 = vsub.f32 %v644, %v725
      %v742 = vsub.f32 %v645, %v726
      %v743 = vsub.f32 %v646, %v727
      %v744 = vsub.f32 %v647, %v728
      %v745 = vsub.f32 %v648, %v729
      %v746 = vsub.f32 %v649, %v730
      %v747 = vsub.f32 %v650, %v731
      %v748 = vsub.f32 %v651, %v732
      %v749 = vsub.f32 %v652, %v733
      %v750 = vsub.f32 %v653, %v734
      %v751 = vsub.f32 %v654, %v735
      %v752 = vsub.f32 %v655, %v736
      %v753 = vsub.f32 %v656, %v737
      %v754 = vsub.f32 %v657, %v738
      %v755 = vmax.f32 %v739, 0.0
      %v756 = vmax.f32 %v740, 0.0
      %v757 = vmax.f32 %v741, 0.0
      %v758 = vmax.f32 %v742, 0.0
      %v759 = vmax.f32 %v743, 0.0
      %v760 = vmax.f32 %v744, 0.0
      %v761 = vmax.f32 %v745, 0.0
      %v762 = vmax.f32 %v746, 0.0
      %v763 = vmax.f32 %v747, 0.0
      %v764 = vmax.f32 %v748, 0.0
      %v765 = vmax.f32 %v749, 0.0
      %v766 = vmax.f32 %v750, 0.0
      %v767 = vmax.f32 %v751, 0.0
      %v768 = vmax.f32 %v752, 0.0
      %v769 = vmax.f32 %v753, 0.0
      %v770 = vmax.f32 %v754, 0.0
      %v771 = vmul.f32 %v561, %v755
      %v772 = vmul.f32 %v562, %v756
      %v773 = vmul.f32 %v563, %v757
      %v774 = vmul.f32 %v564, %v758
      %v775 = vmul.f32 %v565, %v759
      %v776 = vmul.f32 %v566, %v760
      %v777 = vmul.f32 %v567, %v761
      %v778 = vmul.f32 %v568, %v762
      %v779 = vmul.f32 %v569, %v763
      %v780 = vmul.f32 %v570, %v764
      %v781 = vmul.f32 %v571, %v765
      %v782 = vmul.f32 %v572, %v766
      %v783 = vmul.f32 %v573, %v767
      %v784 = vmul.f32 %v574, %v768
      %v785 = vmul.f32 %v575, %v769
      %v786 = vmul.f32 %v576, %v770
      %788 = vset.pattern.permute.xlu0 2
      %789 = vperm.xlu0 %788, %v359
      %v790 = vpop.permute.xlu0 %789
      %793 = vset.pattern.permute.xlu0 2
      %794 = vperm.xlu0 %793, %v360
      %v795 = vpop.permute.xlu0 %794
      %798 = vset.pattern.permute.xlu0 2
      %799 = vperm.xlu0 %798, %v361
      %v800 = vpop.permute.xlu0 %799
      %803 = vset.pattern.permute.xlu0 2
      %804 = vperm.xlu0 %803, %v362
      %v805 = vpop.permute.xlu0 %804
      %808 = vset.pattern.permute.xlu0 2
      %809 = vperm.xlu0 %808, %v363
      %v810 = vpop.permute.xlu0 %809
      %813 = vset.pattern.permute.xlu0 2
      %814 = vperm.xlu0 %813, %v364
      %v815 = vpop.permute.xlu0 %814
      %818 = vset.pattern.permute.xlu0 2
      %819 = vperm.xlu0 %818, %v365
      %v820 = vpop.permute.xlu0 %819
      %823 = vset.pattern.permute.xlu0 2
      %824 = vperm.xlu0 %823, %v366
      %v825 = vpop.permute.xlu0 %824
      %828 = vset.pattern.permute.xlu0 2
      %829 = vperm.xlu0 %828, %v367
      %v830 = vpop.permute.xlu0 %829
      %833 = vset.pattern.permute.xlu0 2
      %834 = vperm.xlu0 %833, %v368
      %v835 = vpop.permute.xlu0 %834
      %838 = vset.pattern.permute.xlu0 2
      %839 = vperm.xlu0 %838, %v369
      %v840 = vpop.permute.xlu0 %839
      %843 = vset.pattern.permute.xlu0 2
      %844 = vperm.xlu0 %843, %v370
      %v845 = vpop.permute.xlu0 %844
      %848 = vset.pattern.permute.xlu0 2
      %849 = vperm.xlu0 %848, %v371
      %v850 = vpop.permute.xlu0 %849
      %853 = vset.pattern.permute.xlu0 2
      %854 = vperm.xlu0 %853, %v372
      %v855 = vpop.permute.xlu0 %854
      %858 = vset.pattern.permute.xlu0 2
      %859 = vperm.xlu0 %858, %v373
      %v860 = vpop.permute.xlu0 %859
      %863 = vset.pattern.permute.xlu0 2
      %864 = vperm.xlu0 %863, %v374
      %v865 = vpop.permute.xlu0 %864
      %v867 = vperm.slane %v382, 2
      %v868 = vadd.f32 %v790, %v867
      %v869 = vadd.f32 %v795, %v867
      %v870 = vadd.f32 %v800, %v867
      %v871 = vadd.f32 %v805, %v867
      %v872 = vadd.f32 %v810, %v867
      %v873 = vadd.f32 %v815, %v867
      %v874 = vadd.f32 %v820, %v867
      %v875 = vadd.f32 %v825, %v867
      %v876 = vadd.f32 %v830, %v867
      %v877 = vadd.f32 %v835, %v867
      %v878 = vadd.f32 %v840, %v867
      %v879 = vadd.f32 %v845, %v867
      %v880 = vadd.f32 %v850, %v867
      %v881 = vadd.f32 %v855, %v867
      %v882 = vadd.f32 %v860, %v867
      %v883 = vadd.f32 %v865, %v867
      %v884 = vsub.f32 %v868, %v771
      %v885 = vsub.f32 %v869, %v772
      %v886 = vsub.f32 %v870, %v773
      %v887 = vsub.f32 %v871, %v774
      %v888 = vsub.f32 %v872, %v775
      %v889 = vsub.f32 %v873, %v776
      %v890 = vsub.f32 %v874, %v777
      %v891 = vsub.f32 %v875, %v778
      %v892 = vsub.f32 %v876, %v779
      %v893 = vsub.f32 %v877, %v780
      %v894 = vsub.f32 %v878, %v781
      %v895 = vsub.f32 %v879, %v782
      %v896 = vsub.f32 %v880, %v783
      %v897 = vsub.f32 %v881, %v784
      %v898 = vsub.f32 %v882, %v785
      %v899 = vsub.f32 %v883, %v786
      %v900 = vmax.f32 %v884, 1e-09
      %v901 = vmax.f32 %v885, 1e-09
      %v902 = vmax.f32 %v886, 1e-09
      %v903 = vmax.f32 %v887, 1e-09
      %v904 = vmax.f32 %v888, 1e-09
      %v905 = vmax.f32 %v889, 1e-09
      %v906 = vmax.f32 %v890, 1e-09
      %v907 = vmax.f32 %v891, 1e-09
      %v908 = vmax.f32 %v892, 1e-09
      %v909 = vmax.f32 %v893, 1e-09
      %v910 = vmax.f32 %v894, 1e-09
      %v911 = vmax.f32 %v895, 1e-09
      %v912 = vmax.f32 %v896, 1e-09
      %v913 = vmax.f32 %v897, 1e-09
      %v914 = vmax.f32 %v898, 1e-09
      %v915 = vmax.f32 %v899, 1e-09
      %v916 = vrcp.pop %v900
      %v917 = vmul.f32 %v900, %v916
      %v918 = vsub.f32 1.0, %v917
      %v919 = vmul.f32 %v916, %v918
      %v920 = vadd.f32 %v916, %v919
      %vm921 = vweird.f32 %v900
      %vm922 = vweird.f32 %v916
      %vm923 = vmor %vm921, %vm922
      %v924 = vsel %vm923, %v916, %v920
      %v925 = vand.u32 2147483647, %v900
      %vm926 = vcmp.eq.f32.partialorder %v925, 8.507059e+37
      %v927 = vand.u32 %v900, 2147483648
      %v928 = vor.u32 1.1754944e-38, %v927
      %v929 = vsel %vm926, %v928, %v924
      %v930 = vmul.f32 %v771, %v929
      %v931 = vrcp.pop %v901
      %v932 = vmul.f32 %v901, %v931
      %v933 = vsub.f32 1.0, %v932
      %v934 = vmul.f32 %v931, %v933
      %v935 = vadd.f32 %v931, %v934
      %vm936 = vweird.f32 %v901
      %vm937 = vweird.f32 %v931
      %vm938 = vmor %vm936, %vm937
      %v939 = vsel %vm938, %v931, %v935
      %v940 = vand.u32 2147483647, %v901
      %vm941 = vcmp.eq.f32.partialorder %v940, 8.507059e+37
      %v942 = vand.u32 %v901, 2147483648
      %v943 = vor.u32 1.1754944e-38, %v942
      %v944 = vsel %vm941, %v943, %v939
      %v945 = vmul.f32 %v772, %v944
      %v946 = vrcp.pop %v902
      %v947 = vmul.f32 %v902, %v946
      %v948 = vsub.f32 1.0, %v947
      %v949 = vmul.f32 %v946, %v948
      %v950 = vadd.f32 %v946, %v949
      %vm951 = vweird.f32 %v902
      %vm952 = vweird.f32 %v946
      %vm953 = vmor %vm951, %vm952
      %v954 = vsel %vm953, %v946, %v950
      %v955 = vand.u32 2147483647, %v902
      %vm956 = vcmp.eq.f32.partialorder %v955, 8.507059e+37
      %v957 = vand.u32 %v902, 2147483648
      %v958 = vor.u32 1.1754944e-38, %v957
      %v959 = vsel %vm956, %v958, %v954
      %v960 = vmul.f32 %v773, %v959
      %v961 = vrcp.pop %v903
      %v962 = vmul.f32 %v903, %v961
      %v963 = vsub.f32 1.0, %v962
      %v964 = vmul.f32 %v961, %v963
      %v965 = vadd.f32 %v961, %v964
      %vm966 = vweird.f32 %v903
      %vm967 = vweird.f32 %v961
      %vm968 = vmor %vm966, %vm967
      %v969 = vsel %vm968, %v961, %v965
      %v970 = vand.u32 2147483647, %v903
      %vm971 = vcmp.eq.f32.partialorder %v970, 8.507059e+37
      %v972 = vand.u32 %v903, 2147483648
      %v973 = vor.u32 1.1754944e-38, %v972
      %v974 = vsel %vm971, %v973, %v969
      %v975 = vmul.f32 %v774, %v974
      %v976 = vrcp.pop %v904
      %v977 = vmul.f32 %v904, %v976
      %v978 = vsub.f32 1.0, %v977
      %v979 = vmul.f32 %v976, %v978
      %v980 = vadd.f32 %v976, %v979
      %vm981 = vweird.f32 %v904
      %vm982 = vweird.f32 %v976
      %vm983 = vmor %vm981, %vm982
      %v984 = vsel %vm983, %v976, %v980
      %v985 = vand.u32 2147483647, %v904
      %vm986 = vcmp.eq.f32.partialorder %v985, 8.507059e+37
      %v987 = vand.u32 %v904, 2147483648
      %v988 = vor.u32 1.1754944e-38, %v987
      %v989 = vsel %vm986, %v988, %v984
      %v990 = vmul.f32 %v775, %v989
      %v991 = vrcp.pop %v905
      %v992 = vmul.f32 %v905, %v991
      %v993 = vsub.f32 1.0, %v992
      %v994 = vmul.f32 %v991, %v993
      %v995 = vadd.f32 %v991, %v994
      %vm996 = vweird.f32 %v905
      %vm997 = vweird.f32 %v991
      %vm998 = vmor %vm996, %vm997
      %v999 = vsel %vm998, %v991, %v995
      %v1000 = vand.u32 2147483647, %v905
      %vm1001 = vcmp.eq.f32.partialorder %v1000, 8.507059e+37
      %v1002 = vand.u32 %v905, 2147483648
      %v1003 = vor.u32 1.1754944e-38, %v1002
      %v1004 = vsel %vm1001, %v1003, %v999
      %v1005 = vmul.f32 %v776, %v1004
      %v1006 = vrcp.pop %v906
      %v1007 = vmul.f32 %v906, %v1006
      %v1008 = vsub.f32 1.0, %v1007
      %v1009 = vmul.f32 %v1006, %v1008
      %v1010 = vadd.f32 %v1006, %v1009
      %vm1011 = vweird.f32 %v906
      %vm1012 = vweird.f32 %v1006
      %vm1013 = vmor %vm1011, %vm1012
      %v1014 = vsel %vm1013, %v1006, %v1010
      %v1015 = vand.u32 2147483647, %v906
      %vm1016 = vcmp.eq.f32.partialorder %v1015, 8.507059e+37
      %v1017 = vand.u32 %v906, 2147483648
      %v1018 = vor.u32 1.1754944e-38, %v1017
      %v1019 = vsel %vm1016, %v1018, %v1014
      %v1020 = vmul.f32 %v777, %v1019
      %v1021 = vrcp.pop %v907
      %v1022 = vmul.f32 %v907, %v1021
      %v1023 = vsub.f32 1.0, %v1022
      %v1024 = vmul.f32 %v1021, %v1023
      %v1025 = vadd.f32 %v1021, %v1024
      %vm1026 = vweird.f32 %v907
      %vm1027 = vweird.f32 %v1021
      %vm1028 = vmor %vm1026, %vm1027
      %v1029 = vsel %vm1028, %v1021, %v1025
      %v1030 = vand.u32 2147483647, %v907
      %vm1031 = vcmp.eq.f32.partialorder %v1030, 8.507059e+37
      %v1032 = vand.u32 %v907, 2147483648
      %v1033 = vor.u32 1.1754944e-38, %v1032
      %v1034 = vsel %vm1031, %v1033, %v1029
      %v1035 = vmul.f32 %v778, %v1034
      %v1036 = vrcp.pop %v908
      %v1037 = vmul.f32 %v908, %v1036
      %v1038 = vsub.f32 1.0, %v1037
      %v1039 = vmul.f32 %v1036, %v1038
      %v1040 = vadd.f32 %v1036, %v1039
      %vm1041 = vweird.f32 %v908
      %vm1042 = vweird.f32 %v1036
      %vm1043 = vmor %vm1041, %vm1042
      %v1044 = vsel %vm1043, %v1036, %v1040
      %v1045 = vand.u32 2147483647, %v908
      %vm1046 = vcmp.eq.f32.partialorder %v1045, 8.507059e+37
      %v1047 = vand.u32 %v908, 2147483648
      %v1048 = vor.u32 1.1754944e-38, %v1047
      %v1049 = vsel %vm1046, %v1048, %v1044
      %v1050 = vmul.f32 %v779, %v1049
      %v1051 = vrcp.pop %v909
      %v1052 = vmul.f32 %v909, %v1051
      %v1053 = vsub.f32 1.0, %v1052
      %v1054 = vmul.f32 %v1051, %v1053
      %v1055 = vadd.f32 %v1051, %v1054
      %vm1056 = vweird.f32 %v909
      %vm1057 = vweird.f32 %v1051
      %vm1058 = vmor %vm1056, %vm1057
      %v1059 = vsel %vm1058, %v1051, %v1055
      %v1060 = vand.u32 2147483647, %v909
      %vm1061 = vcmp.eq.f32.partialorder %v1060, 8.507059e+37
      %v1062 = vand.u32 %v909, 2147483648
      %v1063 = vor.u32 1.1754944e-38, %v1062
      %v1064 = vsel %vm1061, %v1063, %v1059
      %v1065 = vmul.f32 %v780, %v1064
      %v1066 = vrcp.pop %v910
      %v1067 = vmul.f32 %v910, %v1066
      %v1068 = vsub.f32 1.0, %v1067
      %v1069 = vmul.f32 %v1066, %v1068
      %v1070 = vadd.f32 %v1066, %v1069
      %vm1071 = vweird.f32 %v910
      %vm1072 = vweird.f32 %v1066
      %vm1073 = vmor %vm1071, %vm1072
      %v1074 = vsel %vm1073, %v1066, %v1070
      %v1075 = vand.u32 2147483647, %v910
      %vm1076 = vcmp.eq.f32.partialorder %v1075, 8.507059e+37
      %v1077 = vand.u32 %v910, 2147483648
      %v1078 = vor.u32 1.1754944e-38, %v1077
      %v1079 = vsel %vm1076, %v1078, %v1074
      %v1080 = vmul.f32 %v781, %v1079
      %v1081 = vrcp.pop %v911
      %v1082 = vmul.f32 %v911, %v1081
      %v1083 = vsub.f32 1.0, %v1082
      %v1084 = vmul.f32 %v1081, %v1083
      %v1085 = vadd.f32 %v1081, %v1084
      %vm1086 = vweird.f32 %v911
      %vm1087 = vweird.f32 %v1081
      %vm1088 = vmor %vm1086, %vm1087
      %v1089 = vsel %vm1088, %v1081, %v1085
      %v1090 = vand.u32 2147483647, %v911
      %vm1091 = vcmp.eq.f32.partialorder %v1090, 8.507059e+37
      %v1092 = vand.u32 %v911, 2147483648
      %v1093 = vor.u32 1.1754944e-38, %v1092
      %v1094 = vsel %vm1091, %v1093, %v1089
      %v1095 = vmul.f32 %v782, %v1094
      %v1096 = vrcp.pop %v912
      %v1097 = vmul.f32 %v912, %v1096
      %v1098 = vsub.f32 1.0, %v1097
      %v1099 = vmul.f32 %v1096, %v1098
      %v1100 = vadd.f32 %v1096, %v1099
      %vm1101 = vweird.f32 %v912
      %vm1102 = vweird.f32 %v1096
      %vm1103 = vmor %vm1101, %vm1102
      %v1104 = vsel %vm1103, %v1096, %v1100
      %v1105 = vand.u32 2147483647, %v912
      %vm1106 = vcmp.eq.f32.partialorder %v1105, 8.507059e+37
      %v1107 = vand.u32 %v912, 2147483648
      %v1108 = vor.u32 1.1754944e-38, %v1107
      %v1109 = vsel %vm1106, %v1108, %v1104
      %v1110 = vmul.f32 %v783, %v1109
      %v1111 = vrcp.pop %v913
      %v1112 = vmul.f32 %v913, %v1111
      %v1113 = vsub.f32 1.0, %v1112
      %v1114 = vmul.f32 %v1111, %v1113
      %v1115 = vadd.f32 %v1111, %v1114
      %vm1116 = vweird.f32 %v913
      %vm1117 = vweird.f32 %v1111
      %vm1118 = vmor %vm1116, %vm1117
      %v1119 = vsel %vm1118, %v1111, %v1115
      %v1120 = vand.u32 2147483647, %v913
      %vm1121 = vcmp.eq.f32.partialorder %v1120, 8.507059e+37
      %v1122 = vand.u32 %v913, 2147483648
      %v1123 = vor.u32 1.1754944e-38, %v1122
      %v1124 = vsel %vm1121, %v1123, %v1119
      %v1125 = vmul.f32 %v784, %v1124
      %v1126 = vrcp.pop %v914
      %v1127 = vmul.f32 %v914, %v1126
      %v1128 = vsub.f32 1.0, %v1127
      %v1129 = vmul.f32 %v1126, %v1128
      %v1130 = vadd.f32 %v1126, %v1129
      %vm1131 = vweird.f32 %v914
      %vm1132 = vweird.f32 %v1126
      %vm1133 = vmor %vm1131, %vm1132
      %v1134 = vsel %vm1133, %v1126, %v1130
      %v1135 = vand.u32 2147483647, %v914
      %vm1136 = vcmp.eq.f32.partialorder %v1135, 8.507059e+37
      %v1137 = vand.u32 %v914, 2147483648
      %v1138 = vor.u32 1.1754944e-38, %v1137
      %v1139 = vsel %vm1136, %v1138, %v1134
      %v1140 = vmul.f32 %v785, %v1139
      %v1141 = vrcp.pop %v915
      %v1142 = vmul.f32 %v915, %v1141
      %v1143 = vsub.f32 1.0, %v1142
      %v1144 = vmul.f32 %v1141, %v1143
      %v1145 = vadd.f32 %v1141, %v1144
      %vm1146 = vweird.f32 %v915
      %vm1147 = vweird.f32 %v1141
      %vm1148 = vmor %vm1146, %vm1147
      %v1149 = vsel %vm1148, %v1141, %v1145
      %v1150 = vand.u32 2147483647, %v915
      %vm1151 = vcmp.eq.f32.partialorder %v1150, 8.507059e+37
      %v1152 = vand.u32 %v915, 2147483648
      %v1153 = vor.u32 1.1754944e-38, %v1152
      %v1154 = vsel %vm1151, %v1153, %v1149
      %v1155 = vmul.f32 %v786, %v1154
      %1156 = vst [vmem:[#allocation2] sm:$0xff] %v930
      %1157 = vst [vmem:[#allocation2 + $0x8] sm:$0xff] %v945
      %1158 = vst [vmem:[#allocation2 + $0x10] sm:$0xff] %v960
      %1159 = vst [vmem:[#allocation2 + $0x18] sm:$0xff] %v975
      %1160 = vst [vmem:[#allocation2 + $0x20] sm:$0xff] %v990
      %1161 = vst [vmem:[#allocation2 + $0x28] sm:$0xff] %v1005
      %1162 = vst [vmem:[#allocation2 + $0x30] sm:$0xff] %v1020
      %1163 = vst [vmem:[#allocation2 + $0x38] sm:$0xff] %v1035
      %1164 = vst [vmem:[#allocation2 + $0x40] sm:$0xff] %v1050
      %1165 = vst [vmem:[#allocation2 + $0x48] sm:$0xff] %v1065
      %1166 = vst [vmem:[#allocation2 + $0x50] sm:$0xff] %v1080
      %1167 = vst [vmem:[#allocation2 + $0x58] sm:$0xff] %v1095
      %1168 = vst [vmem:[#allocation2 + $0x60] sm:$0xff] %v1110
      %1169 = vst [vmem:[#allocation2 + $0x68] sm:$0xff] %v1125
      %1170 = vst [vmem:[#allocation2 + $0x70] sm:$0xff] %v1140
      %1171 = vst [vmem:[#allocation2 + $0x78] sm:$0xff] %v1155
      %v1172 = vlaneseq
      %v1173 = vand.u32 %v1172, 127
      %v1174 = vld [vmem:[%s194] sm:$0x1]
      loop: start=0, step=1, limit=128
      $region33: #{_forward_device.9} parent=31 // loop_pre_header
        _
      $region34: #{_forward_device.9} parent=31 // loop_header
        %s1176 = sphi 0, %s1180
        %p1177 = scmp.ge.s32.totalorder %s1176, 128
        %v1181 = vphi %v1174, %v1199
      $region35: #{_forward_device.9} parent=31 // loop_header_branch
        %1179 = sbr.rel (%p1177) target = $region39
      $region36: #{_forward_device.9} parent=31 // loop_body
        %s1182 = scalar_lea.vmem [#allocation2], %s1176
        %v1183 = vld [vmem:[%s1182] sm:$0x1]
        %v1184 = vstv %s1176
        %vm1185 = vcmp.eq.s32.totalorder %v1173, %v1184
        %v1186 = vsel %vm1185, 1, 0
        %v1187 = vcvt.s32.f32 %v1186
        %v1188 = vmul.f32 %v1181, %v1187
        %vm1189 = vcmask 1040384
        %v1190 = vsel %vm1189, %v1188, 0.0
        %1191 = vadd.xlane.f32.xlu0 %v1190
        %v1192 = vpop.xlane.xlu0 %1191
        %vm1193 = vcmp.gt.f32.partialorder %v1183, 0.5
        %vm1194 = vcmp.gt.s32.totalorder %v1173, %v1184
        %vm1195 = vmand %vm1193, %vm1194
        %v1196 = vsel %vm1195, 1.0, 0.0
        %v1197 = vmul.f32 %v1196, %v1192
        %v1198 = vsub.f32 1.0, %v1197
        %v1199 = vmul.f32 %v1181, %v1198
      $region37: #{_forward_device.9} parent=31 // loop_footer
        %s1180 = sadd.s32 1, %s1176
      $region38: #{_forward_device.9} parent=31 // loop_footer_branch
        %1175 = sbr.rel target = $region34
      $region39: #{_forward_device.9} parent=31 // loop_exit
        _
      %1200 = vst [vmem:[%s197] sm:$0x1] %v1181
      %p1201 = scmp.lt.s32.totalorder %s14, 5
      %s1202 = scalar_select %p1201, %s14, 5
      %s1203 = scalar_lea.vmem %s3, %s1202
      // Predicated region
      $region40: #{_forward_device.9} parent=31 // pred_check
        %p1204 = pneg %p110
      $region41: #{_forward_device.9} parent=31 // pred_check_branch
        %1206 = sbr.rel (%p1204) target = $region43
      $region42: #{_forward_device.9} parent=31 // pred_region
        _
      $region43: #{_forward_device.9} parent=31 // pred_fallthru
        _
    $region32: #{_forward_device.9} parent=5 // pred_fallthru
      _
    %p1207 = scmp.le.s32.totalorder 2, %s9
    // Predicated region
    $region44: #{_forward_device.9} parent=5 // pred_check
      %p1208 = pneg %p1207
    $region45: #{_forward_device.9} parent=5 // pred_check_branch
      %1210 = sbr.rel (%p1208) target = $region47
    $region46: #{_forward_device.9} parent=5 // pred_region
      %s1211 = ssub.s32 %s9, 2
      // Predicated region
      $region48: #{_forward_device.9} parent=46 // pred_check
        %p1212 = pneg %p116
      $region49: #{_forward_device.9} parent=46 // pred_check_branch
        %1214 = sbr.rel (%p1212) target = $region51
      $region50: #{_forward_device.9} parent=46 // pred_region
        %p1215 = scmp.lt.s32.totalorder %s15, 5
        %s1216 = scalar_select %p1215, %s15, 5
        %s1217 = scalar_lea.vmem %s3, %s1216
      $region51: #{_forward_device.9} parent=46 // pred_fallthru
        _
    $region47: #{_forward_device.9} parent=5 // pred_fallthru
      _
  $region6: #{_forward_device.9} parent=0 // loop_footer
    %s13 = sadd.s32 1, %s9
  $region7: #{_forward_device.9} parent=0 // loop_footer_branch
    %8 = sbr.rel target = $region3
  $region8: #{_forward_device.9} parent=0 // loop_exit
    _

</llo_original>
